<compile_context>
chip_gen: v5e
topology: v5e:2x2
jax: 0.10.0
libtpu: 0.0.40
codegen_flags: <defaults>
</compile_context>

<pallas_src>
import math

import jax
import jax.numpy as jnp
from jax.experimental import pallas as pl
from jax.experimental.pallas import tpu as pltpu

BN_EPS = 1e-5

# dot_general dimension numbers for "A @ B.T" (contract both operands on dim 1).
NT_DIM_NUMBERS = (((1,), (1,)), ((), ()))


# ----------------------------------------------------------------------------- kernel

def convblock_kernel(x_ref, w1_ref, b1_ref, w2t_ref, b2_ref, o_ref, xp_ref, y1p_ref):
    """Fused ConvBlock: conv3x3+BN+ReLU -> conv3x3+BN+ReLU, all in VMEM.

    x_ref  : (N, H, W, Cin)   bf16   NHWC input (whole batch, one grid step)
    w1_ref : (9*Cin, Cmid)    bf16   conv1 weights (taps ordered dy*3+dx, BN folded)
    b1_ref : (1, Cmid)        f32    conv1 bias (BN folded)
    w2t_ref: (Cout, 9*Cmid)   bf16   conv2 weights, transposed for NT matmul (BN folded)
    b2_ref : (Cout, 1)        f32    conv2 bias (BN folded)
    o_ref  : (N, Cout, H*W)   f32    channels-major flat output (lane-dense stores)
    xp_ref : VMEM (N, H+2, W+2, Cin)  bf16  zero-padded input scratch
    y1p_ref: VMEM (N, H+2, W+2, Cmid) bf16  zero-padded intermediate scratch
    """
    N, H, W, Cin = x_ref.shape
    Cmid = y1p_ref.shape[-1]
    HW = H * W

    # ---- zero ONLY the 1-pixel halo (the interior is fully overwritten below) ----
    def zero_halo(pad_ref, C):
        row = jnp.zeros((N, 1, W + 2, C), pad_ref.dtype)
        col = jnp.zeros((N, H + 2, 1, C), pad_ref.dtype)
        pad_ref[:, 0:1, :, :] = row
        pad_ref[:, H + 1:H + 2, :, :] = row
        pad_ref[:, :, 0:1, :] = col
        pad_ref[:, :, W + 1:W + 2, :] = col

    zero_halo(xp_ref, Cin)
    zero_halo(y1p_ref, Cmid)

    # Build the halo'd input in VMEM (no wrapper-side jnp.pad / HBM round trip).
    xp_ref[:, 1:H + 1, 1:W + 1, :] = x_ref[...]

    def im2col_3x3(pad_ref, C):
        # Hoist the dx (width / sublane-axis, misaligned) shift: only 3 shifted
        # copies are materialized; the dy taps are outer-axis (H) slices of those
        # values (address-only).  Channel blocks are 128-lane aligned, so the
        # 9-way lane concat is cheap.
        shifted = [pad_ref[:, :, dx:dx + W, :] for dx in range(3)]  # (N, H+2, W, C)
        patches = jnp.concatenate(
            [shifted[dx][:, dy:dy + H, :, :] for dy in range(3) for dx in range(3)],
            axis=-1,
        )                                                           # (N, H, W, 9C)
        return patches.reshape(N * HW, 9 * C)                       # bf16

    # ---- conv1 + folded BN + ReLU: one im2col matmul, M=N*H*W, K=9*Cin ----
    p1 = im2col_3x3(xp_ref, Cin)
    y1 = jnp.dot(p1, w1_ref[...], preferred_element_type=jnp.float32)   # f32
    y1 = jnp.maximum(y1 + b1_ref[0], 0.0)                               # bias/ReLU in f32
    y1p_ref[:, 1:H + 1, 1:W + 1, :] = (
        y1.astype(y1p_ref.dtype).reshape(N, H, W, Cmid))                # single bf16 cast

    # ---- conv2 + folded BN + ReLU: im2col + transposed-RHS matmul ----
    # Result is channels-major (Cout, N*H*W) so every output store is lane-dense.
    p2 = im2col_3x3(y1p_ref, Cmid)
    y2 = jax.lax.dot_general(
        w2t_ref[...], p2, NT_DIM_NUMBERS, preferred_element_type=jnp.float32)
    y2 = jnp.maximum(y2 + b2_ref[...], 0.0)                             # f32 (Cout, N*HW)
    for n in range(N):  # static unroll; lane slices at multiples of 128 are free
        o_ref[n] = y2[:, n * HW:(n + 1) * HW]


# ----------------------------------------------------------------------------- wrapper

def bottleneck_forward(x_nchw, p):
    """PyTorch-style NCHW in, NCHW out."""
    N, Cin, H, W = x_nchw.shape
    Cmid = p["b1"].shape[1]
    Cout = p["b2"].shape[0]

    # NCHW -> NHWC, bf16 operands (f32 accumulation happens inside the kernel).
    x = jnp.transpose(x_nchw, (0, 2, 3, 1)).astype(jnp.bfloat16)

    out_flat = pl.pallas_call(
        convblock_kernel,
        out_shape=jax.ShapeDtypeStruct((N, Cout, H * W), jnp.float32),
        grid=(1,),  # whole batch in one step: single-TC chips gain nothing from grid=(N,)
        in_specs=[
            pl.BlockSpec((N, H, W, Cin), lambda i: (0, 0, 0, 0)),
            pl.BlockSpec((9 * Cin, Cmid), lambda i: (0, 0)),
            pl.BlockSpec((1, Cmid), lambda i: (0, 0)),
            pl.BlockSpec((Cout, 9 * Cmid), lambda i: (0, 0)),
            pl.BlockSpec((Cout, 1), lambda i: (0, 0)),
        ],
        out_specs=pl.BlockSpec((N, Cout, H * W), lambda i: (0, 0, 0)),
        scratch_shapes=[
            pltpu.VMEM((N, H + 2, W + 2, Cin), jnp.bfloat16),
            pltpu.VMEM((N, H + 2, W + 2, Cmid), jnp.bfloat16),
        ],
        compiler_params=pltpu.CompilerParams(
            dimension_semantics=("arbitrary",),
            # Actual usage ~5 MiB (bf16 scratches + patches + double-buffered I/O);
            # 32 MiB also covers v5e's 16 MiB default scoped limit and stays well
            # under v7x's 64 MiB physical VMEM.
            vmem_limit_bytes=32 * 1024 * 1024,
        ),
    )(x, p["w1"], p["b1"], p["w2t"], p["b2"])

    # Kernel already wrote channels-major per image; only a reshape is needed.
    return out_flat.reshape(N, Cout, H, W)


# ----------------------------------------------------------------------------- params

def _init_conv3x3(key, cin, cout):
    # Same distribution as PyTorch Conv2d defaults (fan_in-based uniform bound),
    # generated directly in (dy, dx, cin, cout) tap-major layout.
    kw, kb = jax.random.split(key)
    bound = 1.0 / math.sqrt(cin * 9)
    w = jax.random.uniform(kw, (3, 3, cin, cout), jnp.float32, -bound, bound)
    b = jax.random.uniform(kb, (cout,), jnp.float32, -bound, bound)
    return w, b


def _init_bn(key, c):
    # NOTE: a freshly constructed PyTorch BatchNorm2d has gamma=1, beta=0,
    # running_mean=0, running_var=1; non-trivial (but modest) values are used here so
    # the per-channel BN fold is actually exercised by the numerical checks.
    kg, kb, km, kv = jax.random.split(key, 4)
    gamma = jax.random.uniform(kg, (c,), jnp.float32, 0.8, 1.2)
    beta = jax.random.uniform(kb, (c,), jnp.float32, -0.1, 0.1)
    mean = jax.random.uniform(km, (c,), jnp.float32, -0.2, 0.2)
    var = jax.random.uniform(kv, (c,), jnp.float32, 0.8, 1.2)
    return gamma, beta, mean, var


def _fold_bn_into_conv(w, b, gamma, beta, mean, var, eps=BN_EPS):
    """Eval-mode BN folded per-channel into conv weight/bias.

    y = gamma * (conv_w(x) + b - mean) / sqrt(var+eps) + beta
      = conv_{w*s}(x) + ((b - mean) * s + beta),   s = gamma / sqrt(var + eps)
    """
    s = gamma / jnp.sqrt(var + eps)             # (cout,)
    return w * s, (b - mean) * s + beta         # broadcast over last (cout) dim of w


def init_bottleneck_params(key, in_channels, out_channels):
    k1, k2, k3, k4 = jax.random.split(key, 4)
    w1, cb1 = _init_conv3x3(k1, in_channels, out_channels)
    w2, cb2 = _init_conv3x3(k2, out_channels, out_channels)
    bn1 = _init_bn(k3, out_channels)
    bn2 = _init_bn(k4, out_channels)

    w1f, b1f = _fold_bn_into_conv(w1, cb1, *bn1)
    w2f, b2f = _fold_bn_into_conv(w2, cb2, *bn2)

    w2t = jnp.transpose(w2f.reshape(9 * out_channels, out_channels))   # (Cout, 9*Cmid)

    return dict(
        # bf16 matmul operands (HBM-resident), f32 per-channel biases.
        w1=w1f.reshape(9 * in_channels, out_channels).astype(jnp.bfloat16),
        b1=b1f.reshape(1, out_channels),
        w2t=w2t.astype(jnp.bfloat16),
        b2=b2f.reshape(out_channels, 1),
        # Torch-layout f32 copies + raw BN parameters for the pure-JAX references.
        ref_w1=jnp.transpose(w1, (3, 2, 0, 1)), ref_b1=cb1, bn1=bn1,
        ref_w2=jnp.transpose(w2, (3, 2, 0, 1)), ref_b2=cb2, bn2=bn2,
    )


# ----------------------------------------------------------------------------- references

def bottleneck_reference_bf16(x_nchw, p):
    """Reference using the SAME bf16 operands + f32 accumulation as the kernel.

    Any difference vs the kernel is accumulation-order only, so a tight tolerance
    here catches tap-ordering / layout bugs.
    """
    x = jnp.transpose(x_nchw, (0, 2, 3, 1)).astype(jnp.bfloat16)   # NHWC bf16
    Cin = x.shape[-1]
    Cmid = p["b1"].shape[1]
    Cout = p["b2"].shape[0]
    w1 = p["w1"].reshape(3, 3, Cin, Cmid)                                   # HWIO bf16
    w2 = jnp.transpose(p["w2t"], (1, 0)).reshape(3, 3, Cmid, Cout)          # HWIO bf16

    def conv(a, w):
        return jax.lax.conv_general_dilated(
            a, w, (1, 1), ((1, 1), (1, 1)),
            dimension_numbers=("NHWC", "HWIO", "NHWC"),
            preferred_element_type=jnp.float32)

    y1 = jnp.maximum(conv(x, w1) + p["b1"][0], 0.0).astype(jnp.bfloat16)
    y2 = jnp.maximum(conv(y1, w2) + p["b2"][:, 0], 0.0)
    return jnp.transpose(y2, (0, 3, 1, 2))                                  # NCHW f32


def bottleneck_reference_f32(x_nchw, p):
    """Full-f32, unfused conv + eval-mode BN + ReLU reference of the PyTorch forward."""
    def conv_bn_relu(a, w, b, bn):
        gamma, beta, mean, var = bn
        y = jax.lax.conv_general_dilated(
            a, w, (1, 1), ((1, 1), (1, 1)),
            dimension_numbers=("NCHW", "OIHW", "NCHW"),
            precision=jax.lax.Precision.HIGHEST)
        y = y + b[None, :, None, None]
        s = gamma / jnp.sqrt(var + BN_EPS)
        y = (y - mean[None, :, None, None]) * s[None, :, None, None] \
            + beta[None, :, None, None]
        return jnp.maximum(y, 0.0)

    y = conv_bn_relu(x_nchw, p["ref_w1"], p["ref_b1"], p["bn1"])
    return conv_bn_relu(y, p["ref_w2"], p["ref_b2"], p["bn2"])


# ----------------------------------------------------------------------------- main

if __name__ == "__main__":
    key = jax.random.PRNGKey(0)
    k_param, k_input = jax.random.split(key)

    # Bottleneck carries the largest channel count in a UNet; channels are kept at a
    # multiple of 128 so every load, im2col concat and store is lane-aligned and
    # lane-dense, while batch/spatial stay small.
    N, Cin, H, W = 2, 128, 16, 16
    Cout = 128

    params = init_bottleneck_params(k_param, Cin, Cout)
    x = jax.random.normal(k_input, (N, Cin, H, W), jnp.float32)   # NCHW, like PyTorch

    fwd = jax.jit(lambda inp: bottleneck_forward(inp, params))
    out = fwd(x)
    jax.block_until_ready(out)

    assert out.shape == (N, Cout, H, W), out.shape
    assert bool(jnp.all(jnp.isfinite(out)))
    assert bool(jnp.all(out >= 0.0))  # ReLU output range

    # (a) Tight check vs the bf16-operand reference (same numerics, order-only diff).
    ref_bf16 = jax.jit(lambda inp: bottleneck_reference_bf16(inp, params))(x)
    jax.block_until_ready(ref_bf16)
    err_bf16 = float(jnp.max(jnp.abs(out - ref_bf16)))
    assert err_bf16 < 5e-3, f"max |pallas - bf16 reference| = {err_bf16}"

    # (b) Loose check vs the full-f32 unfused reference (bounded by bf16 quantization).
    ref_f32 = jax.jit(lambda inp: bottleneck_reference_f32(inp, params))(x)
    jax.block_until_ready(ref_f32)
    err_f32 = float(jnp.max(jnp.abs(out - ref_f32)))
    mean_err = float(jnp.mean(jnp.abs(out - ref_f32)))
    assert err_f32 < 5e-2, f"max |pallas - f32 reference| = {err_f32}"
    assert mean_err < 5e-3, f"mean |pallas - f32 reference| = {mean_err}"

    print("KERNEL_OK")
</pallas_src>

<mosaic_0001>
module attributes {stable_mosaic.version = 11 : i64} {
  func.func @convblock_kernel(%arg0: i32, %arg1: memref<2x16x16x128xbf16, #tpu.memory_space<vmem>>, %arg2: memref<1152x128xbf16, #tpu.memory_space<vmem>>, %arg3: memref<1x128xf32, #tpu.memory_space<vmem>>, %arg4: memref<128x1152xbf16, #tpu.memory_space<vmem>>, %arg5: memref<128x1xf32, #tpu.memory_space<vmem>>, %arg6: memref<2x128x256xf32, #tpu.memory_space<vmem>>, %arg7: memref<2x18x18x128xbf16, #tpu.memory_space<vmem>>, %arg8: memref<2x18x18x128xbf16, #tpu.memory_space<vmem>>) attributes {dimension_semantics = [#tpu.dimension_semantics<arbitrary>], iteration_bounds = array<i64: 1>, scalar_prefetch = 0 : i64, scratch_operands = 2 : i64, tpu.core_type = #tpu.core_type<tc>, window_params = [{pipeline_mode = #tpu.pipeline_mode<synchronous>, transform_indices = @transform_0, window_bounds = array<i64: 2, 16, 16, 128>}, {pipeline_mode = #tpu.pipeline_mode<synchronous>, transform_indices = @transform_1, window_bounds = array<i64: 1152, 128>}, {pipeline_mode = #tpu.pipeline_mode<synchronous>, transform_indices = @transform_2, window_bounds = array<i64: 1, 128>}, {pipeline_mode = #tpu.pipeline_mode<synchronous>, transform_indices = @transform_3, window_bounds = array<i64: 128, 1152>}, {pipeline_mode = #tpu.pipeline_mode<synchronous>, transform_indices = @transform_4, window_bounds = array<i64: 128, 1>}, {pipeline_mode = #tpu.pipeline_mode<synchronous>, transform_indices = @transform_5, window_bounds = array<i64: 2, 128, 256>}]} {
    %cst = arith.constant 0.000000e+00 : bf16
    %0 = vector.broadcast %cst : bf16 to vector<2x1x18x128xbf16>
    %cst_0 = arith.constant 0.000000e+00 : bf16
    %1 = vector.broadcast %cst_0 : bf16 to vector<2x18x1x128xbf16>
    %c0 = arith.constant 0 : index
    %c0_1 = arith.constant 0 : index
    %c0_2 = arith.constant 0 : index
    %c0_3 = arith.constant 0 : index
    %2 = vector.load %arg7[%c0, %c0_1, %c0_2, %c0_3] : memref<2x18x18x128xbf16, #tpu.memory_space<vmem>>, vector<2x1x18x128xbf16>
    tpu.vector_store %arg7[%c0, %c0_1, %c0_2, %c0_3], %0 {strides = array<i32>} : memref<2x18x18x128xbf16, #tpu.memory_space<vmem>>, vector<2x1x18x128xbf16>,
    %c0_4 = arith.constant 0 : index
    %c17 = arith.constant 17 : index
    %c0_5 = arith.constant 0 : index
    %c0_6 = arith.constant 0 : index
    %3 = vector.load %arg7[%c0_4, %c17, %c0_5, %c0_6] : memref<2x18x18x128xbf16, #tpu.memory_space<vmem>>, vector<2x1x18x128xbf16>
    tpu.vector_store %arg7[%c0_4, %c17, %c0_5, %c0_6], %0 {strides = array<i32>} : memref<2x18x18x128xbf16, #tpu.memory_space<vmem>>, vector<2x1x18x128xbf16>,
    %c0_7 = arith.constant 0 : index
    %c0_8 = arith.constant 0 : index
    %c0_9 = arith.constant 0 : index
    %c0_10 = arith.constant 0 : index
    %4 = vector.load %arg7[%c0_7, %c0_8, %c0_9, %c0_10] : memref<2x18x18x128xbf16, #tpu.memory_space<vmem>>, vector<2x18x1x128xbf16>
    tpu.vector_store %arg7[%c0_7, %c0_8, %c0_9, %c0_10], %1 {strides = array<i32>} : memref<2x18x18x128xbf16, #tpu.memory_space<vmem>>, vector<2x18x1x128xbf16>,
    %c0_11 = arith.constant 0 : index
    %c0_12 = arith.constant 0 : index
    %c17_13 = arith.constant 17 : index
    %c0_14 = arith.constant 0 : index
    %5 = vector.load %arg7[%c0_11, %c0_12, %c17_13, %c0_14] : memref<2x18x18x128xbf16, #tpu.memory_space<vmem>>, vector<2x18x1x128xbf16>
    tpu.vector_store %arg7[%c0_11, %c0_12, %c17_13, %c0_14], %1 {strides = array<i32>} : memref<2x18x18x128xbf16, #tpu.memory_space<vmem>>, vector<2x18x1x128xbf16>,
    %cst_15 = arith.constant 0.000000e+00 : bf16
    %6 = vector.broadcast %cst_15 : bf16 to vector<2x1x18x128xbf16>
    %cst_16 = arith.constant 0.000000e+00 : bf16
    %7 = vector.broadcast %cst_16 : bf16 to vector<2x18x1x128xbf16>
    %c0_17 = arith.constant 0 : index
    %c0_18 = arith.constant 0 : index
    %c0_19 = arith.constant 0 : index
    %c0_20 = arith.constant 0 : index
    %8 = vector.load %arg8[%c0_17, %c0_18, %c0_19, %c0_20] : memref<2x18x18x128xbf16, #tpu.memory_space<vmem>>, vector<2x1x18x128xbf16>
    tpu.vector_store %arg8[%c0_17, %c0_18, %c0_19, %c0_20], %6 {strides = array<i32>} : memref<2x18x18x128xbf16, #tpu.memory_space<vmem>>, vector<2x1x18x128xbf16>,
    %c0_21 = arith.constant 0 : index
    %c17_22 = arith.constant 17 : index
    %c0_23 = arith.constant 0 : index
    %c0_24 = arith.constant 0 : index
    %9 = vector.load %arg8[%c0_21, %c17_22, %c0_23, %c0_24] : memref<2x18x18x128xbf16, #tpu.memory_space<vmem>>, vector<2x1x18x128xbf16>
    tpu.vector_store %arg8[%c0_21, %c17_22, %c0_23, %c0_24], %6 {strides = array<i32>} : memref<2x18x18x128xbf16, #tpu.memory_space<vmem>>, vector<2x1x18x128xbf16>,
    %c0_25 = arith.constant 0 : index
    %c0_26 = arith.constant 0 : index
    %c0_27 = arith.constant 0 : index
    %c0_28 = arith.constant 0 : index
    %10 = vector.load %arg8[%c0_25, %c0_26, %c0_27, %c0_28] : memref<2x18x18x128xbf16, #tpu.memory_space<vmem>>, vector<2x18x1x128xbf16>
    tpu.vector_store %arg8[%c0_25, %c0_26, %c0_27, %c0_28], %7 {strides = array<i32>} : memref<2x18x18x128xbf16, #tpu.memory_space<vmem>>, vector<2x18x1x128xbf16>,
    %c0_29 = arith.constant 0 : index
    %c0_30 = arith.constant 0 : index
    %c17_31 = arith.constant 17 : index
    %c0_32 = arith.constant 0 : index
    %11 = vector.load %arg8[%c0_29, %c0_30, %c17_31, %c0_32] : memref<2x18x18x128xbf16, #tpu.memory_space<vmem>>, vector<2x18x1x128xbf16>
    tpu.vector_store %arg8[%c0_29, %c0_30, %c17_31, %c0_32], %7 {strides = array<i32>} : memref<2x18x18x128xbf16, #tpu.memory_space<vmem>>, vector<2x18x1x128xbf16>,
    %c0_33 = arith.constant 0 : index
    %c0_34 = arith.constant 0 : index
    %c0_35 = arith.constant 0 : index
    %c0_36 = arith.constant 0 : index
    %12 = vector.load %arg1[%c0_33, %c0_34, %c0_35, %c0_36] : memref<2x16x16x128xbf16, #tpu.memory_space<vmem>>, vector<2x16x16x128xbf16>
    %c0_37 = arith.constant 0 : index
    %c1 = arith.constant 1 : index
    %c1_38 = arith.constant 1 : index
    %c0_39 = arith.constant 0 : index
    %13 = vector.load %arg7[%c0_37, %c1, %c1_38, %c0_39] : memref<2x18x18x128xbf16, #tpu.memory_space<vmem>>, vector<2x16x16x128xbf16>
    tpu.vector_store %arg7[%c0_37, %c1, %c1_38, %c0_39], %12 {strides = array<i32>} : memref<2x18x18x128xbf16, #tpu.memory_space<vmem>>, vector<2x16x16x128xbf16>,
    %c0_40 = arith.constant 0 : index
    %c0_41 = arith.constant 0 : index
    %c0_42 = arith.constant 0 : index
    %c0_43 = arith.constant 0 : index
    %14 = vector.load %arg7[%c0_40, %c0_41, %c0_42, %c0_43] : memref<2x18x18x128xbf16, #tpu.memory_space<vmem>>, vector<2x18x16x128xbf16>
    %c0_44 = arith.constant 0 : index
    %c0_45 = arith.constant 0 : index
    %c1_46 = arith.constant 1 : index
    %c0_47 = arith.constant 0 : index
    %15 = vector.load %arg7[%c0_44, %c0_45, %c1_46, %c0_47] : memref<2x18x18x128xbf16, #tpu.memory_space<vmem>>, vector<2x18x16x128xbf16>
    %c0_48 = arith.constant 0 : index
    %c0_49 = arith.constant 0 : index
    %c2 = arith.constant 2 : index
    %c0_50 = arith.constant 0 : index
    %16 = vector.load %arg7[%c0_48, %c0_49, %c2, %c0_50] : memref<2x18x18x128xbf16, #tpu.memory_space<vmem>>, vector<2x18x16x128xbf16>
    %17 = vector.extract_strided_slice %14 {offsets = [0, 0, 0, 0], sizes = [2, 16, 16, 128], strides = [1, 1, 1, 1]} : vector<2x18x16x128xbf16> to vector<2x16x16x128xbf16>
    %18 = vector.extract_strided_slice %15 {offsets = [0, 0, 0, 0], sizes = [2, 16, 16, 128], strides = [1, 1, 1, 1]} : vector<2x18x16x128xbf16> to vector<2x16x16x128xbf16>
    %19 = vector.extract_strided_slice %16 {offsets = [0, 0, 0, 0], sizes = [2, 16, 16, 128], strides = [1, 1, 1, 1]} : vector<2x18x16x128xbf16> to vector<2x16x16x128xbf16>
    %20 = vector.extract_strided_slice %14 {offsets = [0, 1, 0, 0], sizes = [2, 16, 16, 128], strides = [1, 1, 1, 1]} : vector<2x18x16x128xbf16> to vector<2x16x16x128xbf16>
    %21 = vector.extract_strided_slice %15 {offsets = [0, 1, 0, 0], sizes = [2, 16, 16, 128], strides = [1, 1, 1, 1]} : vector<2x18x16x128xbf16> to vector<2x16x16x128xbf16>
    %22 = vector.extract_strided_slice %16 {offsets = [0, 1, 0, 0], sizes = [2, 16, 16, 128], strides = [1, 1, 1, 1]} : vector<2x18x16x128xbf16> to vector<2x16x16x128xbf16>
    %23 = vector.extract_strided_slice %14 {offsets = [0, 2, 0, 0], sizes = [2, 16, 16, 128], strides = [1, 1, 1, 1]} : vector<2x18x16x128xbf16> to vector<2x16x16x128xbf16>
    %24 = vector.extract_strided_slice %15 {offsets = [0, 2, 0, 0], sizes = [2, 16, 16, 128], strides = [1, 1, 1, 1]} : vector<2x18x16x128xbf16> to vector<2x16x16x128xbf16>
    %25 = vector.extract_strided_slice %16 {offsets = [0, 2, 0, 0], sizes = [2, 16, 16, 128], strides = [1, 1, 1, 1]} : vector<2x18x16x128xbf16> to vector<2x16x16x128xbf16>
    %26 = tpu.concatenate %17, %18, %19, %20, %21, %22, %23, %24, %25 in 3 : vector<2x16x16x128xbf16>, vector<2x16x16x128xbf16>, vector<2x16x16x128xbf16>, vector<2x16x16x128xbf16>, vector<2x16x16x128xbf16>, vector<2x16x16x128xbf16>, vector<2x16x16x128xbf16>, vector<2x16x16x128xbf16>, vector<2x16x16x128xbf16> -> vector<2x16x16x1152xbf16>
    %27 = vector.shape_cast %26 : vector<2x16x16x1152xbf16> to vector<512x1152xbf16>
    %c0_51 = arith.constant 0 : index
    %c0_52 = arith.constant 0 : index
    %28 = vector.load %arg2[%c0_51, %c0_52] : memref<1152x128xbf16, #tpu.memory_space<vmem>>, vector<1152x128xbf16>
    %cst_53 = arith.constant dense<0.000000e+00> : vector<512x128xf32>
    %29 = tpu.matmul %27, %28, %cst_53 {dimension_numbers = #tpu.dot_dimension_numbers<[1], [0], [0], [1], [0, 0, 1, 1], [], []>} : vector<512x1152xbf16>, vector<1152x128xbf16>, vector<512x128xf32> -> vector<512x128xf32>
    %c0_54 = arith.constant 0 : index
    %c0_55 = arith.constant 0 : index
    %30 = vector.load %arg3[%c0_54, %c0_55] : memref<1x128xf32, #tpu.memory_space<vmem>>, vector<1x128xf32>
    %31 = vector.shape_cast %30 : vector<1x128xf32> to vector<128xf32>
    %32 = vector.shape_cast %31 : vector<128xf32> to vector<1x128xf32>
    %33 = vector.broadcast %32 : vector<1x128xf32> to vector<512x128xf32>
    %34 = arith.addf %29, %33 : vector<512x128xf32>
    %cst_56 = arith.constant 0.000000e+00 : f32
    %35 = vector.broadcast %cst_56 : f32 to vector<512x128xf32>
    %36 = arith.maximumf %34, %35 : vector<512x128xf32>
    %37 = arith.truncf %36 : vector<512x128xf32> to vector<512x128xbf16>
    %38 = vector.shape_cast %37 : vector<512x128xbf16> to vector<2x16x16x128xbf16>
    %c0_57 = arith.constant 0 : index
    %c1_58 = arith.constant 1 : index
    %c1_59 = arith.constant 1 : index
    %c0_60 = arith.constant 0 : index
    %39 = vector.load %arg8[%c0_57, %c1_58, %c1_59, %c0_60] : memref<2x18x18x128xbf16, #tpu.memory_space<vmem>>, vector<2x16x16x128xbf16>
    tpu.vector_store %arg8[%c0_57, %c1_58, %c1_59, %c0_60], %38 {strides = array<i32>} : memref<2x18x18x128xbf16, #tpu.memory_space<vmem>>, vector<2x16x16x128xbf16>,
    %c0_61 = arith.constant 0 : index
    %c0_62 = arith.constant 0 : index
    %c0_63 = arith.constant 0 : index
    %c0_64 = arith.constant 0 : index
    %40 = vector.load %arg8[%c0_61, %c0_62, %c0_63, %c0_64] : memref<2x18x18x128xbf16, #tpu.memory_space<vmem>>, vector<2x18x16x128xbf16>
    %c0_65 = arith.constant 0 : index
    %c0_66 = arith.constant 0 : index
    %c1_67 = arith.constant 1 : index
    %c0_68 = arith.constant 0 : index
    %41 = vector.load %arg8[%c0_65, %c0_66, %c1_67, %c0_68] : memref<2x18x18x128xbf16, #tpu.memory_space<vmem>>, vector<2x18x16x128xbf16>
    %c0_69 = arith.constant 0 : index
    %c0_70 = arith.constant 0 : index
    %c2_71 = arith.constant 2 : index
    %c0_72 = arith.constant 0 : index
    %42 = vector.load %arg8[%c0_69, %c0_70, %c2_71, %c0_72] : memref<2x18x18x128xbf16, #tpu.memory_space<vmem>>, vector<2x18x16x128xbf16>
    %43 = vector.extract_strided_slice %40 {offsets = [0, 0, 0, 0], sizes = [2, 16, 16, 128], strides = [1, 1, 1, 1]} : vector<2x18x16x128xbf16> to vector<2x16x16x128xbf16>
    %44 = vector.extract_strided_slice %41 {offsets = [0, 0, 0, 0], sizes = [2, 16, 16, 128], strides = [1, 1, 1, 1]} : vector<2x18x16x128xbf16> to vector<2x16x16x128xbf16>
    %45 = vector.extract_strided_slice %42 {offsets = [0, 0, 0, 0], sizes = [2, 16, 16, 128], strides = [1, 1, 1, 1]} : vector<2x18x16x128xbf16> to vector<2x16x16x128xbf16>
    %46 = vector.extract_strided_slice %40 {offsets = [0, 1, 0, 0], sizes = [2, 16, 16, 128], strides = [1, 1, 1, 1]} : vector<2x18x16x128xbf16> to vector<2x16x16x128xbf16>
    %47 = vector.extract_strided_slice %41 {offsets = [0, 1, 0, 0], sizes = [2, 16, 16, 128], strides = [1, 1, 1, 1]} : vector<2x18x16x128xbf16> to vector<2x16x16x128xbf16>
    %48 = vector.extract_strided_slice %42 {offsets = [0, 1, 0, 0], sizes = [2, 16, 16, 128], strides = [1, 1, 1, 1]} : vector<2x18x16x128xbf16> to vector<2x16x16x128xbf16>
    %49 = vector.extract_strided_slice %40 {offsets = [0, 2, 0, 0], sizes = [2, 16, 16, 128], strides = [1, 1, 1, 1]} : vector<2x18x16x128xbf16> to vector<2x16x16x128xbf16>
    %50 = vector.extract_strided_slice %41 {offsets = [0, 2, 0, 0], sizes = [2, 16, 16, 128], strides = [1, 1, 1, 1]} : vector<2x18x16x128xbf16> to vector<2x16x16x128xbf16>
    %51 = vector.extract_strided_slice %42 {offsets = [0, 2, 0, 0], sizes = [2, 16, 16, 128], strides = [1, 1, 1, 1]} : vector<2x18x16x128xbf16> to vector<2x16x16x128xbf16>
    %52 = tpu.concatenate %43, %44, %45, %46, %47, %48, %49, %50, %51 in 3 : vector<2x16x16x128xbf16>, vector<2x16x16x128xbf16>, vector<2x16x16x128xbf16>, vector<2x16x16x128xbf16>, vector<2x16x16x128xbf16>, vector<2x16x16x128xbf16>, vector<2x16x16x128xbf16>, vector<2x16x16x128xbf16>, vector<2x16x16x128xbf16> -> vector<2x16x16x1152xbf16>
    %53 = vector.shape_cast %52 : vector<2x16x16x1152xbf16> to vector<512x1152xbf16>
    %c0_73 = arith.constant 0 : index
    %c0_74 = arith.constant 0 : index
    %54 = vector.load %arg4[%c0_73, %c0_74] : memref<128x1152xbf16, #tpu.memory_space<vmem>>, vector<128x1152xbf16>
    %cst_75 = arith.constant dense<0.000000e+00> : vector<128x512xf32>
    %55 = tpu.matmul %54, %53, %cst_75 {dimension_numbers = #tpu.dot_dimension_numbers<[1], [1], [0], [0], [0, 0, 1, 0], [], []>} : vector<128x1152xbf16>, vector<512x1152xbf16>, vector<128x512xf32> -> vector<128x512xf32>
    %c0_76 = arith.constant 0 : index
    %c0_77 = arith.constant 0 : index
    %56 = vector.load %arg5[%c0_76, %c0_77] : memref<128x1xf32, #tpu.memory_space<vmem>>, vector<128x1xf32>
    %57 = vector.broadcast %56 : vector<128x1xf32> to vector<128x512xf32>
    %58 = arith.addf %55, %57 : vector<128x512xf32>
    %cst_78 = arith.constant 0.000000e+00 : f32
    %59 = vector.broadcast %cst_78 : f32 to vector<128x512xf32>
    %60 = arith.maximumf %58, %59 : vector<128x512xf32>
    %61 = vector.extract_strided_slice %60 {offsets = [0, 0], sizes = [128, 256], strides = [1, 1]} : vector<128x512xf32> to vector<128x256xf32>
    %c0_79 = arith.constant 0 : index
    %c0_80 = arith.constant 0 : index
    %c0_81 = arith.constant 0 : index
    %62 = vector.load %arg6[%c0_79, %c0_80, %c0_81] : memref<2x128x256xf32, #tpu.memory_space<vmem>>, vector<1x128x256xf32>
    %63 = vector.shape_cast %62 : vector<1x128x256xf32> to vector<128x256xf32>
    %64 = vector.shape_cast %61 : vector<128x256xf32> to vector<1x128x256xf32>
    tpu.vector_store %arg6[%c0_79, %c0_80, %c0_81], %64 {strides = array<i32>} : memref<2x128x256xf32, #tpu.memory_space<vmem>>, vector<1x128x256xf32>,
    %65 = vector.extract_strided_slice %60 {offsets = [0, 256], sizes = [128, 256], strides = [1, 1]} : vector<128x512xf32> to vector<128x256xf32>
    %c1_82 = arith.constant 1 : index
    %c0_83 = arith.constant 0 : index
    %c0_84 = arith.constant 0 : index
    %66 = vector.load %arg6[%c1_82, %c0_83, %c0_84] : memref<2x128x256xf32, #tpu.memory_space<vmem>>, vector<1x128x256xf32>
    %67 = vector.shape_cast %66 : vector<1x128x256xf32> to vector<128x256xf32>
    %68 = vector.shape_cast %65 : vector<128x256xf32> to vector<1x128x256xf32>
    tpu.vector_store %arg6[%c1_82, %c0_83, %c0_84], %68 {strides = array<i32>} : memref<2x128x256xf32, #tpu.memory_space<vmem>>, vector<1x128x256xf32>,
    return
  }
  func.func @transform_0(%arg0: i32) -> (i32, i32, i32, i32) {
    %c0_i32 = arith.constant 0 : i32
    %c0_i32_0 = arith.constant 0 : i32
    %c0_i32_1 = arith.constant 0 : i32
    %c0_i32_2 = arith.constant 0 : i32
    %c0_i32_3 = arith.constant 0 : i32
    return %c0_i32, %c0_i32_0, %c0_i32_1, %c0_i32_2 : i32, i32, i32, i32
  }
  func.func @transform_1(%arg0: i32) -> (i32, i32) {
    %c0_i32 = arith.constant 0 : i32
    %c0_i32_0 = arith.constant 0 : i32
    %c0_i32_1 = arith.constant 0 : i32
    return %c0_i32, %c0_i32_0 : i32, i32
  }
  func.func @transform_2(%arg0: i32) -> (i32, i32) {
    %c0_i32 = arith.constant 0 : i32
    %c0_i32_0 = arith.constant 0 : i32
    %c0_i32_1 = arith.constant 0 : i32
    return %c0_i32, %c0_i32_0 : i32, i32
  }
  func.func @transform_3(%arg0: i32) -> (i32, i32) {
    %c0_i32 = arith.constant 0 : i32
    %c0_i32_0 = arith.constant 0 : i32
    %c0_i32_1 = arith.constant 0 : i32
    return %c0_i32, %c0_i32_0 : i32, i32
  }
  func.func @transform_4(%arg0: i32) -> (i32, i32) {
    %c0_i32 = arith.constant 0 : i32
    %c0_i32_0 = arith.constant 0 : i32
    %c0_i32_1 = arith.constant 0 : i32
    return %c0_i32, %c0_i32_0 : i32, i32
  }
  func.func @transform_5(%arg0: i32) -> (i32, i32, i32) {
    %c0_i32 = arith.constant 0 : i32
    %c0_i32_0 = arith.constant 0 : i32
    %c0_i32_1 = arith.constant 0 : i32
    %c0_i32_2 = arith.constant 0 : i32
    return %c0_i32, %c0_i32_0, %c0_i32_1 : i32, i32, i32
  }
}

</mosaic_0001>

<llo_original>
// kernel: _lambda_.1
$region0: #{_lambda_.1}
  #allocation0 [shape = 'u32[]', space=smem, size = 0x4, offset = 0x4, fixed_abs, tag = 'smem constant byte address 0x4 - core index']
  #allocation1 [shape = 'u32[72,128]{1,0:T(1,128)}', space=vmem, size = 0x9000, scoped, tag = 'internal scratch']
  #allocation2 [shape = 'bf16[2,18,18,128]{3,2,1,0:T(8,128)(2,1)}', space=vmem, size = 0x36000, scoped, tag = 'scratch operand']
  #allocation3 [shape = 'bf16[2,18,18,128]{3,2,1,0:T(8,128)(2,1)}', space=vmem, size = 0x36000, scoped, tag = 'scratch operand']
  %s0 = inlined_call_operand.vmem [shape: bf16[2,16,16,128], index: 0, kind: input, shape index: {}]
  %s1 = inlined_call_operand.hbm [shape: bf16[1152,128], index: 1, kind: input, shape index: {}]
  %s2 = inlined_call_operand.vmem [shape: f32[1,128], index: 2, kind: input, shape index: {}]
  %s3 = inlined_call_operand.vmem [shape: bf16[128,1152], index: 3, kind: input, shape index: {}]
  %s4 = inlined_call_operand.vmem [shape: f32[128,1], index: 4, kind: input, shape index: {}]
  %s5 = inlined_call_operand.vmem [shape: f32[2,128,256], index: 5, kind: output, shape index: {}]
  %s6 = sld [smem:[#allocation0]]
  $region34: #{_lambda_.1} parent=0
    _
  %s8 = ssub.s32 1, %s6
  %s9 = scalar_select 0, %s8, %s6
  $region1: #{_lambda_.1} parent=0
    #allocation4 [shape = 'u8[294912]{0}', space=vmem, size = 0x48000, scoped, tag = 'input window, operand 1, single buffered']
    #allocation5 [shape = 's32[1]{0}', space=sflag, size = 0x4, scoped, tag = 'scoped memory for _lambda_.1']
    %10 = vsyncpa [#allocation5], 0
    // Predicated region
    $region2: #{_lambda_.1} parent=1 // pred_check
      _
    $region3: #{_lambda_.1} parent=1 // pred_check_branch
      %12 = sbr.rel (0) target = $region5
    $region4: #{_lambda_.1} parent=1 // pred_region
      _
    $region5: #{_lambda_.1} parent=1 // pred_fallthru
      _
    // Predicated region
    $region6: #{_lambda_.1} parent=1 // pred_check
      _
    $region7: #{_lambda_.1} parent=1 // pred_check_branch
      %14 = sbr.rel (0) target = $region9
    $region8: #{_lambda_.1} parent=1 // pred_region
      %16 = vsyncadd [#allocation5], 0
      %s17 = sshll.u32 %s1, 4
      %s18 = int_to_ptr.hbm [resolvable:$true] %s17
      %s19 = sshll.u32 [#allocation4], 4
      %s20 = int_to_ptr.vmem [resolvable:$true] %s19
      %25 = dma.hbm_to_vmem [thread:$0]  %s18, 9216, %s20, [#allocation5], 64, 64, 4
    $region9: #{_lambda_.1} parent=1 // pred_fallthru
      _
    // Predicated region
    $region10: #{_lambda_.1} parent=1 // pred_check
      _
    $region11: #{_lambda_.1} parent=1 // pred_check_branch
      %27 = sbr.rel (0) target = $region13
    $region12: #{_lambda_.1} parent=1 // pred_region
      _
    $region13: #{_lambda_.1} parent=1 // pred_fallthru
      _
    // Predicated region
    $region14: #{_lambda_.1} parent=1 // pred_check
      _
    $region15: #{_lambda_.1} parent=1 // pred_check_branch
      %29 = sbr.rel (0) target = $region17
    $region16: #{_lambda_.1} parent=1 // pred_region
      _
    $region17: #{_lambda_.1} parent=1 // pred_fallthru
      _
    // Predicated region
    $region18: #{_lambda_.1} parent=1 // pred_check
      _
    $region19: #{_lambda_.1} parent=1 // pred_check_branch
      %31 = sbr.rel (0) target = $region21
    $region20: #{_lambda_.1} parent=1 // pred_region
      _
    $region21: #{_lambda_.1} parent=1 // pred_fallthru
      _
    // Predicated region
    $region22: #{_lambda_.1} parent=1 // pred_check
      _
    $region23: #{_lambda_.1} parent=1 // pred_check_branch
      %33 = sbr.rel (0) target = $region25
    $region24: #{_lambda_.1} parent=1 // pred_region
      %35 = dma.done [#allocation5], 9216
    $region25: #{_lambda_.1} parent=1 // pred_fallthru
      _
    %37 = vst [vmem:[#allocation2] sm:$0xf] 0
    %38 = vst [vmem:[#allocation2 + $0x4] sm:$0xf] 0
    %39 = vst [vmem:[#allocation2 + $0x8] sm:$0x1] 0
    %40 = vst [vmem:[#allocation2 + $0xd8] sm:$0xf] 0
    %41 = vst [vmem:[#allocation2 + $0xdc] sm:$0xf] 0
    %42 = vst [vmem:[#allocation2 + $0xe0] sm:$0x1] 0
    %s43 = scalar_lea.vmem [#allocation2], 204
    %44 = vst [vmem:[%s43] sm:$0xf] 0
    %45 = vst [vmem:[%s43 + $0x4] sm:$0xf] 0
    %46 = vst [vmem:[%s43 + $0x8] sm:$0x1] 0
    %47 = vst [vmem:[%s43 + $0xd8] sm:$0xf] 0
    %48 = vst [vmem:[%s43 + $0xdc] sm:$0xf] 0
    %49 = vst [vmem:[%s43 + $0xe0] sm:$0x1] 0
    %vm50 = vcmask 1040384
    %vm51 = vsmask.f32 256
    %vm52 = vmand %vm50, %vm51
    %v53 = vld [vmem:[#allocation2] sm:$0x1]
    %v54 = vsel %vm52, 0, %v53
    %55 = vst [vmem:[#allocation2] sm:$0x1] %v54
    %v56 = vld [vmem:[#allocation2 + $0xc] sm:$0x1]
    %v57 = vsel %vm52, 0, %v56
    %58 = vst [vmem:[#allocation2 + $0xc] sm:$0x1] %v57
    %v59 = vld [vmem:[#allocation2 + $0x18] sm:$0x1]
    %v60 = vsel %vm52, 0, %v59
    %61 = vst [vmem:[#allocation2 + $0x18] sm:$0x1] %v60
    %v62 = vld [vmem:[#allocation2 + $0x24] sm:$0x1]
    %v63 = vsel %vm52, 0, %v62
    %64 = vst [vmem:[#allocation2 + $0x24] sm:$0x1] %v63
    %v65 = vld [vmem:[#allocation2 + $0x30] sm:$0x1]
    %v66 = vsel %vm52, 0, %v65
    %67 = vst [vmem:[#allocation2 + $0x30] sm:$0x1] %v66
    %v68 = vld [vmem:[#allocation2 + $0x3c] sm:$0x1]
    %v69 = vsel %vm52, 0, %v68
    %70 = vst [vmem:[#allocation2 + $0x3c] sm:$0x1] %v69
    %v71 = vld [vmem:[#allocation2 + $0x48] sm:$0x1]
    %v72 = vsel %vm52, 0, %v71
    %73 = vst [vmem:[#allocation2 + $0x48] sm:$0x1] %v72
    %v74 = vld [vmem:[#allocation2 + $0x54] sm:$0x1]
    %v75 = vsel %vm52, 0, %v74
    %76 = vst [vmem:[#allocation2 + $0x54] sm:$0x1] %v75
    %v77 = vld [vmem:[#allocation2 + $0x60] sm:$0x1]
    %v78 = vsel %vm52, 0, %v77
    %79 = vst [vmem:[#allocation2 + $0x60] sm:$0x1] %v78
    %v80 = vld [vmem:[#allocation2 + $0x6c] sm:$0x1]
    %v81 = vsel %vm52, 0, %v80
    %82 = vst [vmem:[#allocation2 + $0x6c] sm:$0x1] %v81
    %v83 = vld [vmem:[#allocation2 + $0x78] sm:$0x1]
    %v84 = vsel %vm52, 0, %v83
    %85 = vst [vmem:[#allocation2 + $0x78] sm:$0x1] %v84
    %v86 = vld [vmem:[#allocation2 + $0x84] sm:$0x1]
    %v87 = vsel %vm52, 0, %v86
    %88 = vst [vmem:[#allocation2 + $0x84] sm:$0x1] %v87
    %v89 = vld [vmem:[#allocation2 + $0x90] sm:$0x1]
    %v90 = vsel %vm52, 0, %v89
    %91 = vst [vmem:[#allocation2 + $0x90] sm:$0x1] %v90
    %v92 = vld [vmem:[#allocation2 + $0x9c] sm:$0x1]
    %v93 = vsel %vm52, 0, %v92
    %94 = vst [vmem:[#allocation2 + $0x9c] sm:$0x1] %v93
    %v95 = vld [vmem:[#allocation2 + $0xa8] sm:$0x1]
    %v96 = vsel %vm52, 0, %v95
    %97 = vst [vmem:[#allocation2 + $0xa8] sm:$0x1] %v96
    %v98 = vld [vmem:[#allocation2 + $0xb4] sm:$0x1]
    %v99 = vsel %vm52, 0, %v98
    %100 = vst [vmem:[#allocation2 + $0xb4] sm:$0x1] %v99
    %v101 = vld [vmem:[#allocation2 + $0xc0] sm:$0x1]
    %v102 = vsel %vm52, 0, %v101
    %103 = vst [vmem:[#allocation2 + $0xc0] sm:$0x1] %v102
    %v104 = vld [vmem:[#allocation2 + $0xcc] sm:$0x1]
    %v105 = vsel %vm52, 0, %v104
    %106 = vst [vmem:[#allocation2 + $0xcc] sm:$0x1] %v105
    %v107 = vld [vmem:[#allocation2 + $0xd8] sm:$0x1]
    %v108 = vsel %vm52, 0, %v107
    %109 = vst [vmem:[#allocation2 + $0xd8] sm:$0x1] %v108
    %v110 = vld [vmem:[#allocation2 + $0xe4] sm:$0x1]
    %v111 = vsel %vm52, 0, %v110
    %112 = vst [vmem:[#allocation2 + $0xe4] sm:$0x1] %v111
    %v113 = vld [vmem:[#allocation2 + $0xf0] sm:$0x1]
    %v114 = vsel %vm52, 0, %v113
    %115 = vst [vmem:[#allocation2 + $0xf0] sm:$0x1] %v114
    %v116 = vld [vmem:[#allocation2 + $0xfc] sm:$0x1]
    %v117 = vsel %vm52, 0, %v116
    %118 = vst [vmem:[#allocation2 + $0xfc] sm:$0x1] %v117
    %v119 = vld [vmem:[#allocation2 + $0x108] sm:$0x1]
    %v120 = vsel %vm52, 0, %v119
    %121 = vst [vmem:[#allocation2 + $0x108] sm:$0x1] %v120
    %v122 = vld [vmem:[#allocation2 + $0x114] sm:$0x1]
    %v123 = vsel %vm52, 0, %v122
    %124 = vst [vmem:[#allocation2 + $0x114] sm:$0x1] %v123
    %v125 = vld [vmem:[#allocation2 + $0x120] sm:$0x1]
    %v126 = vsel %vm52, 0, %v125
    %127 = vst [vmem:[#allocation2 + $0x120] sm:$0x1] %v126
    %v128 = vld [vmem:[#allocation2 + $0x12c] sm:$0x1]
    %v129 = vsel %vm52, 0, %v128
    %130 = vst [vmem:[#allocation2 + $0x12c] sm:$0x1] %v129
    %v131 = vld [vmem:[#allocation2 + $0x138] sm:$0x1]
    %v132 = vsel %vm52, 0, %v131
    %133 = vst [vmem:[#allocation2 + $0x138] sm:$0x1] %v132
    %v134 = vld [vmem:[#allocation2 + $0x144] sm:$0x1]
    %v135 = vsel %vm52, 0, %v134
    %136 = vst [vmem:[#allocation2 + $0x144] sm:$0x1] %v135
    %v137 = vld [vmem:[#allocation2 + $0x150] sm:$0x1]
    %v138 = vsel %vm52, 0, %v137
    %139 = vst [vmem:[#allocation2 + $0x150] sm:$0x1] %v138
    %v140 = vld [vmem:[#allocation2 + $0x15c] sm:$0x1]
    %v141 = vsel %vm52, 0, %v140
    %142 = vst [vmem:[#allocation2 + $0x15c] sm:$0x1] %v141
    %v143 = vld [vmem:[#allocation2 + $0x168] sm:$0x1]
    %v144 = vsel %vm52, 0, %v143
    %145 = vst [vmem:[#allocation2 + $0x168] sm:$0x1] %v144
    %v146 = vld [vmem:[#allocation2 + $0x174] sm:$0x1]
    %v147 = vsel %vm52, 0, %v146
    %148 = vst [vmem:[#allocation2 + $0x174] sm:$0x1] %v147
    %v149 = vld [vmem:[#allocation2 + $0x180] sm:$0x1]
    %v150 = vsel %vm52, 0, %v149
    %151 = vst [vmem:[#allocation2 + $0x180] sm:$0x1] %v150
    %v152 = vld [vmem:[#allocation2 + $0x18c] sm:$0x1]
    %v153 = vsel %vm52, 0, %v152
    %154 = vst [vmem:[#allocation2 + $0x18c] sm:$0x1] %v153
    %v155 = vld [vmem:[#allocation2 + $0x198] sm:$0x1]
    %v156 = vsel %vm52, 0, %v155
    %157 = vst [vmem:[#allocation2 + $0x198] sm:$0x1] %v156
    %v158 = vld [vmem:[#allocation2 + $0x1a4] sm:$0x1]
    %v159 = vsel %vm52, 0, %v158
    %160 = vst [vmem:[#allocation2 + $0x1a4] sm:$0x1] %v159
    %vm161 = vsmask.f32 7938
    %vm162 = vmand %vm50, %vm161
    %v163 = vld [vmem:[#allocation2 + $0x8] sm:$0x1]
    %v164 = vsel %vm162, 0, %v163
    %165 = vst [vmem:[#allocation2 + $0x8] sm:$0x1] %v164
    %v166 = vld [vmem:[#allocation2 + $0x14] sm:$0x1]
    %v167 = vsel %vm162, 0, %v166
    %168 = vst [vmem:[#allocation2 + $0x14] sm:$0x1] %v167
    %v169 = vld [vmem:[#allocation2 + $0x20] sm:$0x1]
    %v170 = vsel %vm162, 0, %v169
    %171 = vst [vmem:[#allocation2 + $0x20] sm:$0x1] %v170
    %v172 = vld [vmem:[#allocation2 + $0x2c] sm:$0x1]
    %v173 = vsel %vm162, 0, %v172
    %174 = vst [vmem:[#allocation2 + $0x2c] sm:$0x1] %v173
    %v175 = vld [vmem:[#allocation2 + $0x38] sm:$0x1]
    %v176 = vsel %vm162, 0, %v175
    %177 = vst [vmem:[#allocation2 + $0x38] sm:$0x1] %v176
    %v178 = vld [vmem:[#allocation2 + $0x44] sm:$0x1]
    %v179 = vsel %vm162, 0, %v178
    %180 = vst [vmem:[#allocation2 + $0x44] sm:$0x1] %v179
    %v181 = vld [vmem:[#allocation2 + $0x50] sm:$0x1]
    %v182 = vsel %vm162, 0, %v181
    %183 = vst [vmem:[#allocation2 + $0x50] sm:$0x1] %v182
    %v184 = vld [vmem:[#allocation2 + $0x5c] sm:$0x1]
    %v185 = vsel %vm162, 0, %v184
    %186 = vst [vmem:[#allocation2 + $0x5c] sm:$0x1] %v185
    %v187 = vld [vmem:[#allocation2 + $0x68] sm:$0x1]
    %v188 = vsel %vm162, 0, %v187
    %189 = vst [vmem:[#allocation2 + $0x68] sm:$0x1] %v188
    %v190 = vld [vmem:[#allocation2 + $0x74] sm:$0x1]
    %v191 = vsel %vm162, 0, %v190
    %192 = vst [vmem:[#allocation2 + $0x74] sm:$0x1] %v191
    %v193 = vld [vmem:[#allocation2 + $0x80] sm:$0x1]
    %v194 = vsel %vm162, 0, %v193
    %195 = vst [vmem:[#allocation2 + $0x80] sm:$0x1] %v194
    %v196 = vld [vmem:[#allocation2 + $0x8c] sm:$0x1]
    %v197 = vsel %vm162, 0, %v196
    %198 = vst [vmem:[#allocation2 + $0x8c] sm:$0x1] %v197
    %v199 = vld [vmem:[#allocation2 + $0x98] sm:$0x1]
    %v200 = vsel %vm162, 0, %v199
    %201 = vst [vmem:[#allocation2 + $0x98] sm:$0x1] %v200
    %v202 = vld [vmem:[#allocation2 + $0xa4] sm:$0x1]
    %v203 = vsel %vm162, 0, %v202
    %204 = vst [vmem:[#allocation2 + $0xa4] sm:$0x1] %v203
    %v205 = vld [vmem:[#allocation2 + $0xb0] sm:$0x1]
    %v206 = vsel %vm162, 0, %v205
    %207 = vst [vmem:[#allocation2 + $0xb0] sm:$0x1] %v206
    %v208 = vld [vmem:[#allocation2 + $0xbc] sm:$0x1]
    %v209 = vsel %vm162, 0, %v208
    %210 = vst [vmem:[#allocation2 + $0xbc] sm:$0x1] %v209
    %v211 = vld [vmem:[#allocation2 + $0xc8] sm:$0x1]
    %v212 = vsel %vm162, 0, %v211
    %213 = vst [vmem:[#allocation2 + $0xc8] sm:$0x1] %v212
    %v214 = vld [vmem:[#allocation2 + $0xd4] sm:$0x1]
    %v215 = vsel %vm162, 0, %v214
    %216 = vst [vmem:[#allocation2 + $0xd4] sm:$0x1] %v215
    %v217 = vld [vmem:[#allocation2 + $0xe0] sm:$0x1]
    %v218 = vsel %vm162, 0, %v217
    %219 = vst [vmem:[#allocation2 + $0xe0] sm:$0x1] %v218
    %v220 = vld [vmem:[#allocation2 + $0xec] sm:$0x1]
    %v221 = vsel %vm162, 0, %v220
    %222 = vst [vmem:[#allocation2 + $0xec] sm:$0x1] %v221
    %v223 = vld [vmem:[#allocation2 + $0xf8] sm:$0x1]
    %v224 = vsel %vm162, 0, %v223
    %225 = vst [vmem:[#allocation2 + $0xf8] sm:$0x1] %v224
    %v226 = vld [vmem:[#allocation2 + $0x104] sm:$0x1]
    %v227 = vsel %vm162, 0, %v226
    %228 = vst [vmem:[#allocation2 + $0x104] sm:$0x1] %v227
    %v229 = vld [vmem:[#allocation2 + $0x110] sm:$0x1]
    %v230 = vsel %vm162, 0, %v229
    %231 = vst [vmem:[#allocation2 + $0x110] sm:$0x1] %v230
    %v232 = vld [vmem:[#allocation2 + $0x11c] sm:$0x1]
    %v233 = vsel %vm162, 0, %v232
    %234 = vst [vmem:[#allocation2 + $0x11c] sm:$0x1] %v233
    %v235 = vld [vmem:[#allocation2 + $0x128] sm:$0x1]
    %v236 = vsel %vm162, 0, %v235
    %237 = vst [vmem:[#allocation2 + $0x128] sm:$0x1] %v236
    %v238 = vld [vmem:[#allocation2 + $0x134] sm:$0x1]
    %v239 = vsel %vm162, 0, %v238
    %240 = vst [vmem:[#allocation2 + $0x134] sm:$0x1] %v239
    %v241 = vld [vmem:[#allocation2 + $0x140] sm:$0x1]
    %v242 = vsel %vm162, 0, %v241
    %243 = vst [vmem:[#allocation2 + $0x140] sm:$0x1] %v242
    %v244 = vld [vmem:[#allocation2 + $0x14c] sm:$0x1]
    %v245 = vsel %vm162, 0, %v244
    %246 = vst [vmem:[#allocation2 + $0x14c] sm:$0x1] %v245
    %v247 = vld [vmem:[#allocation2 + $0x158] sm:$0x1]
    %v248 = vsel %vm162, 0, %v247
    %249 = vst [vmem:[#allocation2 + $0x158] sm:$0x1] %v248
    %v250 = vld [vmem:[#allocation2 + $0x164] sm:$0x1]
    %v251 = vsel %vm162, 0, %v250
    %252 = vst [vmem:[#allocation2 + $0x164] sm:$0x1] %v251
    %v253 = vld [vmem:[#allocation2 + $0x170] sm:$0x1]
    %v254 = vsel %vm162, 0, %v253
    %255 = vst [vmem:[#allocation2 + $0x170] sm:$0x1] %v254
    %v256 = vld [vmem:[#allocation2 + $0x17c] sm:$0x1]
    %v257 = vsel %vm162, 0, %v256
    %258 = vst [vmem:[#allocation2 + $0x17c] sm:$0x1] %v257
    %v259 = vld [vmem:[#allocation2 + $0x188] sm:$0x1]
    %v260 = vsel %vm162, 0, %v259
    %261 = vst [vmem:[#allocation2 + $0x188] sm:$0x1] %v260
    %v262 = vld [vmem:[#allocation2 + $0x194] sm:$0x1]
    %v263 = vsel %vm162, 0, %v262
    %264 = vst [vmem:[#allocation2 + $0x194] sm:$0x1] %v263
    %v265 = vld [vmem:[#allocation2 + $0x1a0] sm:$0x1]
    %v266 = vsel %vm162, 0, %v265
    %267 = vst [vmem:[#allocation2 + $0x1a0] sm:$0x1] %v266
    %v268 = vld [vmem:[#allocation2 + $0x1ac] sm:$0x1]
    %v269 = vsel %vm162, 0, %v268
    %270 = vst [vmem:[#allocation2 + $0x1ac] sm:$0x1] %v269
    %271 = vst [vmem:[#allocation3] sm:$0xf] 0
    %272 = vst [vmem:[#allocation3 + $0x4] sm:$0xf] 0
    %273 = vst [vmem:[#allocation3 + $0x8] sm:$0x1] 0
    %274 = vst [vmem:[#allocation3 + $0xd8] sm:$0xf] 0
    %275 = vst [vmem:[#allocation3 + $0xdc] sm:$0xf] 0
    %276 = vst [vmem:[#allocation3 + $0xe0] sm:$0x1] 0
    %s277 = scalar_lea.vmem [#allocation3], 204
    %278 = vst [vmem:[%s277] sm:$0xf] 0
    %279 = vst [vmem:[%s277 + $0x4] sm:$0xf] 0
    %280 = vst [vmem:[%s277 + $0x8] sm:$0x1] 0
    %281 = vst [vmem:[%s277 + $0xd8] sm:$0xf] 0
    %282 = vst [vmem:[%s277 + $0xdc] sm:$0xf] 0
    %283 = vst [vmem:[%s277 + $0xe0] sm:$0x1] 0
    %v284 = vld [vmem:[#allocation3] sm:$0x1]
    %v285 = vsel %vm52, 0, %v284
    %286 = vst [vmem:[#allocation3] sm:$0x1] %v285
    %v287 = vld [vmem:[#allocation3 + $0xc] sm:$0x1]
    %v288 = vsel %vm52, 0, %v287
    %289 = vst [vmem:[#allocation3 + $0xc] sm:$0x1] %v288
    %v290 = vld [vmem:[#allocation3 + $0x18] sm:$0x1]
    %v291 = vsel %vm52, 0, %v290
    %292 = vst [vmem:[#allocation3 + $0x18] sm:$0x1] %v291
    %v293 = vld [vmem:[#allocation3 + $0x24] sm:$0x1]
    %v294 = vsel %vm52, 0, %v293
    %295 = vst [vmem:[#allocation3 + $0x24] sm:$0x1] %v294
    %v296 = vld [vmem:[#allocation3 + $0x30] sm:$0x1]
    %v297 = vsel %vm52, 0, %v296
    %298 = vst [vmem:[#allocation3 + $0x30] sm:$0x1] %v297
    %v299 = vld [vmem:[#allocation3 + $0x3c] sm:$0x1]
    %v300 = vsel %vm52, 0, %v299
    %301 = vst [vmem:[#allocation3 + $0x3c] sm:$0x1] %v300
    %v302 = vld [vmem:[#allocation3 + $0x48] sm:$0x1]
    %v303 = vsel %vm52, 0, %v302
    %304 = vst [vmem:[#allocation3 + $0x48] sm:$0x1] %v303
    %v305 = vld [vmem:[#allocation3 + $0x54] sm:$0x1]
    %v306 = vsel %vm52, 0, %v305
    %307 = vst [vmem:[#allocation3 + $0x54] sm:$0x1] %v306
    %v308 = vld [vmem:[#allocation3 + $0x60] sm:$0x1]
    %v309 = vsel %vm52, 0, %v308
    %310 = vst [vmem:[#allocation3 + $0x60] sm:$0x1] %v309
    %v311 = vld [vmem:[#allocation3 + $0x6c] sm:$0x1]
    %v312 = vsel %vm52, 0, %v311
    %313 = vst [vmem:[#allocation3 + $0x6c] sm:$0x1] %v312
    %v314 = vld [vmem:[#allocation3 + $0x78] sm:$0x1]
    %v315 = vsel %vm52, 0, %v314
    %316 = vst [vmem:[#allocation3 + $0x78] sm:$0x1] %v315
    %v317 = vld [vmem:[#allocation3 + $0x84] sm:$0x1]
    %v318 = vsel %vm52, 0, %v317
    %319 = vst [vmem:[#allocation3 + $0x84] sm:$0x1] %v318
    %v320 = vld [vmem:[#allocation3 + $0x90] sm:$0x1]
    %v321 = vsel %vm52, 0, %v320
    %322 = vst [vmem:[#allocation3 + $0x90] sm:$0x1] %v321
    %v323 = vld [vmem:[#allocation3 + $0x9c] sm:$0x1]
    %v324 = vsel %vm52, 0, %v323
    %325 = vst [vmem:[#allocation3 + $0x9c] sm:$0x1] %v324
    %v326 = vld [vmem:[#allocation3 + $0xa8] sm:$0x1]
    %v327 = vsel %vm52, 0, %v326
    %328 = vst [vmem:[#allocation3 + $0xa8] sm:$0x1] %v327
    %v329 = vld [vmem:[#allocation3 + $0xb4] sm:$0x1]
    %v330 = vsel %vm52, 0, %v329
    %331 = vst [vmem:[#allocation3 + $0xb4] sm:$0x1] %v330
    %v332 = vld [vmem:[#allocation3 + $0xc0] sm:$0x1]
    %v333 = vsel %vm52, 0, %v332
    %334 = vst [vmem:[#allocation3 + $0xc0] sm:$0x1] %v333
    %v335 = vld [vmem:[#allocation3 + $0xcc] sm:$0x1]
    %v336 = vsel %vm52, 0, %v335
    %337 = vst [vmem:[#allocation3 + $0xcc] sm:$0x1] %v336
    %v338 = vld [vmem:[#allocation3 + $0xd8] sm:$0x1]
    %v339 = vsel %vm52, 0, %v338
    %340 = vst [vmem:[#allocation3 + $0xd8] sm:$0x1] %v339
    %v341 = vld [vmem:[#allocation3 + $0xe4] sm:$0x1]
    %v342 = vsel %vm52, 0, %v341
    %343 = vst [vmem:[#allocation3 + $0xe4] sm:$0x1] %v342
    %v344 = vld [vmem:[#allocation3 + $0xf0] sm:$0x1]
    %v345 = vsel %vm52, 0, %v344
    %346 = vst [vmem:[#allocation3 + $0xf0] sm:$0x1] %v345
    %v347 = vld [vmem:[#allocation3 + $0xfc] sm:$0x1]
    %v348 = vsel %vm52, 0, %v347
    %349 = vst [vmem:[#allocation3 + $0xfc] sm:$0x1] %v348
    %v350 = vld [vmem:[#allocation3 + $0x108] sm:$0x1]
    %v351 = vsel %vm52, 0, %v350
    %352 = vst [vmem:[#allocation3 + $0x108] sm:$0x1] %v351
    %v353 = vld [vmem:[#allocation3 + $0x114] sm:$0x1]
    %v354 = vsel %vm52, 0, %v353
    %355 = vst [vmem:[#allocation3 + $0x114] sm:$0x1] %v354
    %v356 = vld [vmem:[#allocation3 + $0x120] sm:$0x1]
    %v357 = vsel %vm52, 0, %v356
    %358 = vst [vmem:[#allocation3 + $0x120] sm:$0x1] %v357
    %v359 = vld [vmem:[#allocation3 + $0x12c] sm:$0x1]
    %v360 = vsel %vm52, 0, %v359
    %361 = vst [vmem:[#allocation3 + $0x12c] sm:$0x1] %v360
    %v362 = vld [vmem:[#allocation3 + $0x138] sm:$0x1]
    %v363 = vsel %vm52, 0, %v362
    %364 = vst [vmem:[#allocation3 + $0x138] sm:$0x1] %v363
    %v365 = vld [vmem:[#allocation3 + $0x144] sm:$0x1]
    %v366 = vsel %vm52, 0, %v365
    %367 = vst [vmem:[#allocation3 + $0x144] sm:$0x1] %v366
    %v368 = vld [vmem:[#allocation3 + $0x150] sm:$0x1]
    %v369 = vsel %vm52, 0, %v368
    %370 = vst [vmem:[#allocation3 + $0x150] sm:$0x1] %v369
    %v371 = vld [vmem:[#allocation3 + $0x15c] sm:$0x1]
    %v372 = vsel %vm52, 0, %v371
    %373 = vst [vmem:[#allocation3 + $0x15c] sm:$0x1] %v372
    %v374 = vld [vmem:[#allocation3 + $0x168] sm:$0x1]
    %v375 = vsel %vm52, 0, %v374
    %376 = vst [vmem:[#allocation3 + $0x168] sm:$0x1] %v375
    %v377 = vld [vmem:[#allocation3 + $0x174] sm:$0x1]
    %v378 = vsel %vm52, 0, %v377
    %379 = vst [vmem:[#allocation3 + $0x174] sm:$0x1] %v378
    %v380 = vld [vmem:[#allocation3 + $0x180] sm:$0x1]
    %v381 = vsel %vm52, 0, %v380
    %382 = vst [vmem:[#allocation3 + $0x180] sm:$0x1] %v381
    %v383 = vld [vmem:[#allocation3 + $0x18c] sm:$0x1]
    %v384 = vsel %vm52, 0, %v383
    %385 = vst [vmem:[#allocation3 + $0x18c] sm:$0x1] %v384
    %v386 = vld [vmem:[#allocation3 + $0x198] sm:$0x1]
    %v387 = vsel %vm52, 0, %v386
    %388 = vst [vmem:[#allocation3 + $0x198] sm:$0x1] %v387
    %v389 = vld [vmem:[#allocation3 + $0x1a4] sm:$0x1]
    %v390 = vsel %vm52, 0, %v389
    %391 = vst [vmem:[#allocation3 + $0x1a4] sm:$0x1] %v390
    %v392 = vld [vmem:[#allocation3 + $0x8] sm:$0x1]
    %v393 = vsel %vm162, 0, %v392
    %394 = vst [vmem:[#allocation3 + $0x8] sm:$0x1] %v393
    %v395 = vld [vmem:[#allocation3 + $0x14] sm:$0x1]
    %v396 = vsel %vm162, 0, %v395
    %397 = vst [vmem:[#allocation3 + $0x14] sm:$0x1] %v396
    %v398 = vld [vmem:[#allocation3 + $0x20] sm:$0x1]
    %v399 = vsel %vm162, 0, %v398
    %400 = vst [vmem:[#allocation3 + $0x20] sm:$0x1] %v399
    %v401 = vld [vmem:[#allocation3 + $0x2c] sm:$0x1]
    %v402 = vsel %vm162, 0, %v401
    %403 = vst [vmem:[#allocation3 + $0x2c] sm:$0x1] %v402
    %v404 = vld [vmem:[#allocation3 + $0x38] sm:$0x1]
    %v405 = vsel %vm162, 0, %v404
    %406 = vst [vmem:[#allocation3 + $0x38] sm:$0x1] %v405
    %v407 = vld [vmem:[#allocation3 + $0x44] sm:$0x1]
    %v408 = vsel %vm162, 0, %v407
    %409 = vst [vmem:[#allocation3 + $0x44] sm:$0x1] %v408
    %v410 = vld [vmem:[#allocation3 + $0x50] sm:$0x1]
    %v411 = vsel %vm162, 0, %v410
    %412 = vst [vmem:[#allocation3 + $0x50] sm:$0x1] %v411
    %v413 = vld [vmem:[#allocation3 + $0x5c] sm:$0x1]
    %v414 = vsel %vm162, 0, %v413
    %415 = vst [vmem:[#allocation3 + $0x5c] sm:$0x1] %v414
    %v416 = vld [vmem:[#allocation3 + $0x68] sm:$0x1]
    %v417 = vsel %vm162, 0, %v416
    %418 = vst [vmem:[#allocation3 + $0x68] sm:$0x1] %v417
    %v419 = vld [vmem:[#allocation3 + $0x74] sm:$0x1]
    %v420 = vsel %vm162, 0, %v419
    %421 = vst [vmem:[#allocation3 + $0x74] sm:$0x1] %v420
    %v422 = vld [vmem:[#allocation3 + $0x80] sm:$0x1]
    %v423 = vsel %vm162, 0, %v422
    %424 = vst [vmem:[#allocation3 + $0x80] sm:$0x1] %v423
    %v425 = vld [vmem:[#allocation3 + $0x8c] sm:$0x1]
    %v426 = vsel %vm162, 0, %v425
    %427 = vst [vmem:[#allocation3 + $0x8c] sm:$0x1] %v426
    %v428 = vld [vmem:[#allocation3 + $0x98] sm:$0x1]
    %v429 = vsel %vm162, 0, %v428
    %430 = vst [vmem:[#allocation3 + $0x98] sm:$0x1] %v429
    %v431 = vld [vmem:[#allocation3 + $0xa4] sm:$0x1]
    %v432 = vsel %vm162, 0, %v431
    %433 = vst [vmem:[#allocation3 + $0xa4] sm:$0x1] %v432
    %v434 = vld [vmem:[#allocation3 + $0xb0] sm:$0x1]
    %v435 = vsel %vm162, 0, %v434
    %436 = vst [vmem:[#allocation3 + $0xb0] sm:$0x1] %v435
    %v437 = vld [vmem:[#allocation3 + $0xbc] sm:$0x1]
    %v438 = vsel %vm162, 0, %v437
    %439 = vst [vmem:[#allocation3 + $0xbc] sm:$0x1] %v438
    %v440 = vld [vmem:[#allocation3 + $0xc8] sm:$0x1]
    %v441 = vsel %vm162, 0, %v440
    %442 = vst [vmem:[#allocation3 + $0xc8] sm:$0x1] %v441
    %v443 = vld [vmem:[#allocation3 + $0xd4] sm:$0x1]
    %v444 = vsel %vm162, 0, %v443
    %445 = vst [vmem:[#allocation3 + $0xd4] sm:$0x1] %v444
    %v446 = vld [vmem:[#allocation3 + $0xe0] sm:$0x1]
    %v447 = vsel %vm162, 0, %v446
    %448 = vst [vmem:[#allocation3 + $0xe0] sm:$0x1] %v447
    %v449 = vld [vmem:[#allocation3 + $0xec] sm:$0x1]
    %v450 = vsel %vm162, 0, %v449
    %451 = vst [vmem:[#allocation3 + $0xec] sm:$0x1] %v450
    %v452 = vld [vmem:[#allocation3 + $0xf8] sm:$0x1]
    %v453 = vsel %vm162, 0, %v452
    %454 = vst [vmem:[#allocation3 + $0xf8] sm:$0x1] %v453
    %v455 = vld [vmem:[#allocation3 + $0x104] sm:$0x1]
    %v456 = vsel %vm162, 0, %v455
    %457 = vst [vmem:[#allocation3 + $0x104] sm:$0x1] %v456
    %v458 = vld [vmem:[#allocation3 + $0x110] sm:$0x1]
    %v459 = vsel %vm162, 0, %v458
    %460 = vst [vmem:[#allocation3 + $0x110] sm:$0x1] %v459
    %v461 = vld [vmem:[#allocation3 + $0x11c] sm:$0x1]
    %v462 = vsel %vm162, 0, %v461
    %463 = vst [vmem:[#allocation3 + $0x11c] sm:$0x1] %v462
    %v464 = vld [vmem:[#allocation3 + $0x128] sm:$0x1]
    %v465 = vsel %vm162, 0, %v464
    %466 = vst [vmem:[#allocation3 + $0x128] sm:$0x1] %v465
    %v467 = vld [vmem:[#allocation3 + $0x134] sm:$0x1]
    %v468 = vsel %vm162, 0, %v467
    %469 = vst [vmem:[#allocation3 + $0x134] sm:$0x1] %v468
    %v470 = vld [vmem:[#allocation3 + $0x140] sm:$0x1]
    %v471 = vsel %vm162, 0, %v470
    %472 = vst [vmem:[#allocation3 + $0x140] sm:$0x1] %v471
    %v473 = vld [vmem:[#allocation3 + $0x14c] sm:$0x1]
    %v474 = vsel %vm162, 0, %v473
    %475 = vst [vmem:[#allocation3 + $0x14c] sm:$0x1] %v474
    %v476 = vld [vmem:[#allocation3 + $0x158] sm:$0x1]
    %v477 = vsel %vm162, 0, %v476
    %478 = vst [vmem:[#allocation3 + $0x158] sm:$0x1] %v477
    %v479 = vld [vmem:[#allocation3 + $0x164] sm:$0x1]
    %v480 = vsel %vm162, 0, %v479
    %481 = vst [vmem:[#allocation3 + $0x164] sm:$0x1] %v480
    %v482 = vld [vmem:[#allocation3 + $0x170] sm:$0x1]
    %v483 = vsel %vm162, 0, %v482
    %484 = vst [vmem:[#allocation3 + $0x170] sm:$0x1] %v483
    %v485 = vld [vmem:[#allocation3 + $0x17c] sm:$0x1]
    %v486 = vsel %vm162, 0, %v485
    %487 = vst [vmem:[#allocation3 + $0x17c] sm:$0x1] %v486
    %v488 = vld [vmem:[#allocation3 + $0x188] sm:$0x1]
    %v489 = vsel %vm162, 0, %v488
    %490 = vst [vmem:[#allocation3 + $0x188] sm:$0x1] %v489
    %v491 = vld [vmem:[#allocation3 + $0x194] sm:$0x1]
    %v492 = vsel %vm162, 0, %v491
    %493 = vst [vmem:[#allocation3 + $0x194] sm:$0x1] %v492
    %v494 = vld [vmem:[#allocation3 + $0x1a0] sm:$0x1]
    %v495 = vsel %vm162, 0, %v494
    %496 = vst [vmem:[#allocation3 + $0x1a0] sm:$0x1] %v495
    %v497 = vld [vmem:[#allocation3 + $0x1ac] sm:$0x1]
    %v498 = vsel %vm162, 0, %v497
    %499 = vst [vmem:[#allocation3 + $0x1ac] sm:$0x1] %v498
    %v500 = vld [vmem:[%s0] sm:$0xf]
    %v501 = vld [vmem:[%s0 + $0x4] sm:$0xf]
    %v502 = vld [vmem:[%s0 + $0x8] sm:$0xf]
    %v503 = vld [vmem:[%s0 + $0xc] sm:$0xf]
    %v504 = vld [vmem:[%s0 + $0x10] sm:$0xf]
    %v505 = vld [vmem:[%s0 + $0x14] sm:$0xf]
    %v506 = vld [vmem:[%s0 + $0x18] sm:$0xf]
    %v507 = vld [vmem:[%s0 + $0x1c] sm:$0xf]
    %v508 = vld [vmem:[%s0 + $0x20] sm:$0xf]
    %v509 = vld [vmem:[%s0 + $0x24] sm:$0xf]
    %v510 = vld [vmem:[%s0 + $0x28] sm:$0xf]
    %v511 = vld [vmem:[%s0 + $0x2c] sm:$0xf]
    %v512 = vld [vmem:[%s0 + $0x30] sm:$0xf]
    %v513 = vld [vmem:[%s0 + $0x34] sm:$0xf]
    %v514 = vld [vmem:[%s0 + $0x38] sm:$0xf]
    %v515 = vld [vmem:[%s0 + $0x3c] sm:$0xf]
    %v516 = vld [vmem:[%s0 + $0x40] sm:$0xf]
    %v517 = vld [vmem:[%s0 + $0x44] sm:$0xf]
    %v518 = vld [vmem:[%s0 + $0x48] sm:$0xf]
    %v519 = vld [vmem:[%s0 + $0x4c] sm:$0xf]
    %v520 = vld [vmem:[%s0 + $0x50] sm:$0xf]
    %v521 = vld [vmem:[%s0 + $0x54] sm:$0xf]
    %v522 = vld [vmem:[%s0 + $0x58] sm:$0xf]
    %v523 = vld [vmem:[%s0 + $0x5c] sm:$0xf]
    %v524 = vld [vmem:[%s0 + $0x60] sm:$0xf]
    %v525 = vld [vmem:[%s0 + $0x64] sm:$0xf]
    %v526 = vld [vmem:[%s0 + $0x68] sm:$0xf]
    %v527 = vld [vmem:[%s0 + $0x6c] sm:$0xf]
    %v528 = vld [vmem:[%s0 + $0x70] sm:$0xf]
    %v529 = vld [vmem:[%s0 + $0x74] sm:$0xf]
    %v530 = vld [vmem:[%s0 + $0x78] sm:$0xf]
    %v531 = vld [vmem:[%s0 + $0x7c] sm:$0xf]
    %v532 = vld [vmem:[%s0 + $0x80] sm:$0xf]
    %v533 = vld [vmem:[%s0 + $0x84] sm:$0xf]
    %v534 = vld [vmem:[%s0 + $0x88] sm:$0xf]
    %v535 = vld [vmem:[%s0 + $0x8c] sm:$0xf]
    %v536 = vld [vmem:[%s0 + $0x90] sm:$0xf]
    %v537 = vld [vmem:[%s0 + $0x94] sm:$0xf]
    %v538 = vld [vmem:[%s0 + $0x98] sm:$0xf]
    %v539 = vld [vmem:[%s0 + $0x9c] sm:$0xf]
    %v540 = vld [vmem:[%s0 + $0xa0] sm:$0xf]
    %v541 = vld [vmem:[%s0 + $0xa4] sm:$0xf]
    %v542 = vld [vmem:[%s0 + $0xa8] sm:$0xf]
    %v543 = vld [vmem:[%s0 + $0xac] sm:$0xf]
    %v544 = vld [vmem:[%s0 + $0xb0] sm:$0xf]
    %v545 = vld [vmem:[%s0 + $0xb4] sm:$0xf]
    %v546 = vld [vmem:[%s0 + $0xb8] sm:$0xf]
    %v547 = vld [vmem:[%s0 + $0xbc] sm:$0xf]
    %v548 = vld [vmem:[%s0 + $0xc0] sm:$0xf]
    %v549 = vld [vmem:[%s0 + $0xc4] sm:$0xf]
    %v550 = vld [vmem:[%s0 + $0xc8] sm:$0xf]
    %v551 = vld [vmem:[%s0 + $0xcc] sm:$0xf]
    %v552 = vld [vmem:[%s0 + $0xd0] sm:$0xf]
    %v553 = vld [vmem:[%s0 + $0xd4] sm:$0xf]
    %v554 = vld [vmem:[%s0 + $0xd8] sm:$0xf]
    %v555 = vld [vmem:[%s0 + $0xdc] sm:$0xf]
    %v556 = vld [vmem:[%s0 + $0xe0] sm:$0xf]
    %v557 = vld [vmem:[%s0 + $0xe4] sm:$0xf]
    %v558 = vld [vmem:[%s0 + $0xe8] sm:$0xf]
    %v559 = vld [vmem:[%s0 + $0xec] sm:$0xf]
    %v560 = vld [vmem:[%s0 + $0xf0] sm:$0xf]
    %v561 = vld [vmem:[%s0 + $0xf4] sm:$0xf]
    %v562 = vld [vmem:[%s0 + $0xf8] sm:$0xf]
    %v563 = vld [vmem:[%s0 + $0xfc] sm:$0xf]
    %vm564 = vsmask.f32 4368
    %vm565 = vmor %vm51, %vm564
    %v567 = vshrl.u32 %v500, 16
    %v569 = vrot.slane %v567, 7
    %v570 = vshll.u32 %v500, 16
    %v572 = vor.u32 %v569, %v570
    %v573 = vrot.slane %v569, 4
    %v575 = vshrl.u32 %v501, 16
    %v577 = vrot.slane %v575, 7
    %v578 = vshll.u32 %v501, 16
    %v580 = vor.u32 %v577, %v578
    %v581 = vsel %vm565, %v573, %v580
    %v582 = vrot.slane %v577, 4
    %v584 = vshrl.u32 %v502, 16
    %v586 = vrot.slane %v584, 7
    %v587 = vshll.u32 %v502, 16
    %v589 = vor.u32 %v586, %v587
    %v590 = vrot.slane %v586, 4
    %v592 = vshrl.u32 %v503, 16
    %v594 = vrot.slane %v592, 7
    %v595 = vshll.u32 %v503, 16
    %v597 = vor.u32 %v594, %v595
    %v598 = vsel %vm565, %v590, %v597
    %v599 = vrot.slane %v594, 4
    %v601 = vshrl.u32 %v504, 16
    %v603 = vrot.slane %v601, 7
    %v604 = vshll.u32 %v504, 16
    %v606 = vor.u32 %v603, %v604
    %v607 = vrot.slane %v603, 4
    %v609 = vshrl.u32 %v505, 16
    %v611 = vrot.slane %v609, 7
    %v612 = vshll.u32 %v505, 16
    %v614 = vor.u32 %v611, %v612
    %v615 = vsel %vm565, %v607, %v614
    %v616 = vrot.slane %v611, 4
    %v618 = vshrl.u32 %v506, 16
    %v620 = vrot.slane %v618, 7
    %v621 = vshll.u32 %v506, 16
    %v623 = vor.u32 %v620, %v621
    %v624 = vrot.slane %v620, 4
    %v626 = vshrl.u32 %v507, 16
    %v628 = vrot.slane %v626, 7
    %v629 = vshll.u32 %v507, 16
    %v631 = vor.u32 %v628, %v629
    %v632 = vsel %vm565, %v624, %v631
    %v633 = vrot.slane %v628, 4
    %v635 = vshrl.u32 %v508, 16
    %v637 = vrot.slane %v635, 7
    %v638 = vshll.u32 %v508, 16
    %v640 = vor.u32 %v637, %v638
    %v641 = vrot.slane %v637, 4
    %v643 = vshrl.u32 %v509, 16
    %v645 = vrot.slane %v643, 7
    %v646 = vshll.u32 %v509, 16
    %v648 = vor.u32 %v645, %v646
    %v649 = vsel %vm565, %v641, %v648
    %v650 = vrot.slane %v645, 4
    %v652 = vshrl.u32 %v510, 16
    %v654 = vrot.slane %v652, 7
    %v655 = vshll.u32 %v510, 16
    %v657 = vor.u32 %v654, %v655
    %v658 = vrot.slane %v654, 4
    %v660 = vshrl.u32 %v511, 16
    %v662 = vrot.slane %v660, 7
    %v663 = vshll.u32 %v511, 16
    %v665 = vor.u32 %v662, %v663
    %v666 = vsel %vm565, %v658, %v665
    %v667 = vrot.slane %v662, 4
    %v669 = vshrl.u32 %v512, 16
    %v671 = vrot.slane %v669, 7
    %v672 = vshll.u32 %v512, 16
    %v674 = vor.u32 %v671, %v672
    %v675 = vrot.slane %v671, 4
    %v677 = vshrl.u32 %v513, 16
    %v679 = vrot.slane %v677, 7
    %v680 = vshll.u32 %v513, 16
    %v682 = vor.u32 %v679, %v680
    %v683 = vsel %vm565, %v675, %v682
    %v684 = vrot.slane %v679, 4
    %v686 = vshrl.u32 %v514, 16
    %v688 = vrot.slane %v686, 7
    %v689 = vshll.u32 %v514, 16
    %v691 = vor.u32 %v688, %v689
    %v692 = vrot.slane %v688, 4
    %v694 = vshrl.u32 %v515, 16
    %v696 = vrot.slane %v694, 7
    %v697 = vshll.u32 %v515, 16
    %v699 = vor.u32 %v696, %v697
    %v700 = vsel %vm565, %v692, %v699
    %v701 = vrot.slane %v696, 4
    %v703 = vshrl.u32 %v516, 16
    %v705 = vrot.slane %v703, 7
    %v706 = vshll.u32 %v516, 16
    %v708 = vor.u32 %v705, %v706
    %v709 = vrot.slane %v705, 4
    %v711 = vshrl.u32 %v517, 16
    %v713 = vrot.slane %v711, 7
    %v714 = vshll.u32 %v517, 16
    %v716 = vor.u32 %v713, %v714
    %v717 = vsel %vm565, %v709, %v716
    %v718 = vrot.slane %v713, 4
    %v720 = vshrl.u32 %v518, 16
    %v722 = vrot.slane %v720, 7
    %v723 = vshll.u32 %v518, 16
    %v725 = vor.u32 %v722, %v723
    %v726 = vrot.slane %v722, 4
    %v728 = vshrl.u32 %v519, 16
    %v730 = vrot.slane %v728, 7
    %v731 = vshll.u32 %v519, 16
    %v733 = vor.u32 %v730, %v731
    %v734 = vsel %vm565, %v726, %v733
    %v735 = vrot.slane %v730, 4
    %v737 = vshrl.u32 %v520, 16
    %v739 = vrot.slane %v737, 7
    %v740 = vshll.u32 %v520, 16
    %v742 = vor.u32 %v739, %v740
    %v743 = vrot.slane %v739, 4
    %v745 = vshrl.u32 %v521, 16
    %v747 = vrot.slane %v745, 7
    %v748 = vshll.u32 %v521, 16
    %v750 = vor.u32 %v747, %v748
    %v751 = vsel %vm565, %v743, %v750
    %v752 = vrot.slane %v747, 4
    %v754 = vshrl.u32 %v522, 16
    %v756 = vrot.slane %v754, 7
    %v757 = vshll.u32 %v522, 16
    %v759 = vor.u32 %v756, %v757
    %v760 = vrot.slane %v756, 4
    %v762 = vshrl.u32 %v523, 16
    %v764 = vrot.slane %v762, 7
    %v765 = vshll.u32 %v523, 16
    %v767 = vor.u32 %v764, %v765
    %v768 = vsel %vm565, %v760, %v767
    %v769 = vrot.slane %v764, 4
    %v771 = vshrl.u32 %v524, 16
    %v773 = vrot.slane %v771, 7
    %v774 = vshll.u32 %v524, 16
    %v776 = vor.u32 %v773, %v774
    %v777 = vrot.slane %v773, 4
    %v779 = vshrl.u32 %v525, 16
    %v781 = vrot.slane %v779, 7
    %v782 = vshll.u32 %v525, 16
    %v784 = vor.u32 %v781, %v782
    %v785 = vsel %vm565, %v777, %v784
    %v786 = vrot.slane %v781, 4
    %v788 = vshrl.u32 %v526, 16
    %v790 = vrot.slane %v788, 7
    %v791 = vshll.u32 %v526, 16
    %v793 = vor.u32 %v790, %v791
    %v794 = vrot.slane %v790, 4
    %v796 = vshrl.u32 %v527, 16
    %v798 = vrot.slane %v796, 7
    %v799 = vshll.u32 %v527, 16
    %v801 = vor.u32 %v798, %v799
    %v802 = vsel %vm565, %v794, %v801
    %v803 = vrot.slane %v798, 4
    %v805 = vshrl.u32 %v528, 16
    %v807 = vrot.slane %v805, 7
    %v808 = vshll.u32 %v528, 16
    %v810 = vor.u32 %v807, %v808
    %v811 = vrot.slane %v807, 4
    %v813 = vshrl.u32 %v529, 16
    %v815 = vrot.slane %v813, 7
    %v816 = vshll.u32 %v529, 16
    %v818 = vor.u32 %v815, %v816
    %v819 = vsel %vm565, %v811, %v818
    %v820 = vrot.slane %v815, 4
    %v822 = vshrl.u32 %v530, 16
    %v824 = vrot.slane %v822, 7
    %v825 = vshll.u32 %v530, 16
    %v827 = vor.u32 %v824, %v825
    %v828 = vrot.slane %v824, 4
    %v830 = vshrl.u32 %v531, 16
    %v832 = vrot.slane %v830, 7
    %v833 = vshll.u32 %v531, 16
    %v835 = vor.u32 %v832, %v833
    %v836 = vsel %vm565, %v828, %v835
    %v837 = vrot.slane %v832, 4
    %v839 = vshrl.u32 %v532, 16
    %v841 = vrot.slane %v839, 7
    %v842 = vshll.u32 %v532, 16
    %v844 = vor.u32 %v841, %v842
    %v845 = vrot.slane %v841, 4
    %v847 = vshrl.u32 %v533, 16
    %v849 = vrot.slane %v847, 7
    %v850 = vshll.u32 %v533, 16
    %v852 = vor.u32 %v849, %v850
    %v853 = vsel %vm565, %v845, %v852
    %v854 = vrot.slane %v849, 4
    %v856 = vshrl.u32 %v534, 16
    %v858 = vrot.slane %v856, 7
    %v859 = vshll.u32 %v534, 16
    %v861 = vor.u32 %v858, %v859
    %v862 = vrot.slane %v858, 4
    %v864 = vshrl.u32 %v535, 16
    %v866 = vrot.slane %v864, 7
    %v867 = vshll.u32 %v535, 16
    %v869 = vor.u32 %v866, %v867
    %v870 = vsel %vm565, %v862, %v869
    %v871 = vrot.slane %v866, 4
    %v873 = vshrl.u32 %v536, 16
    %v875 = vrot.slane %v873, 7
    %v876 = vshll.u32 %v536, 16
    %v878 = vor.u32 %v875, %v876
    %v879 = vrot.slane %v875, 4
    %v881 = vshrl.u32 %v537, 16
    %v883 = vrot.slane %v881, 7
    %v884 = vshll.u32 %v537, 16
    %v886 = vor.u32 %v883, %v884
    %v887 = vsel %vm565, %v879, %v886
    %v888 = vrot.slane %v883, 4
    %v890 = vshrl.u32 %v538, 16
    %v892 = vrot.slane %v890, 7
    %v893 = vshll.u32 %v538, 16
    %v895 = vor.u32 %v892, %v893
    %v896 = vrot.slane %v892, 4
    %v898 = vshrl.u32 %v539, 16
    %v900 = vrot.slane %v898, 7
    %v901 = vshll.u32 %v539, 16
    %v903 = vor.u32 %v900, %v901
    %v904 = vsel %vm565, %v896, %v903
    %v905 = vrot.slane %v900, 4
    %v907 = vshrl.u32 %v540, 16
    %v909 = vrot.slane %v907, 7
    %v910 = vshll.u32 %v540, 16
    %v912 = vor.u32 %v909, %v910
    %v913 = vrot.slane %v909, 4
    %v915 = vshrl.u32 %v541, 16
    %v917 = vrot.slane %v915, 7
    %v918 = vshll.u32 %v541, 16
    %v920 = vor.u32 %v917, %v918
    %v921 = vsel %vm565, %v913, %v920
    %v922 = vrot.slane %v917, 4
    %v924 = vshrl.u32 %v542, 16
    %v926 = vrot.slane %v924, 7
    %v927 = vshll.u32 %v542, 16
    %v929 = vor.u32 %v926, %v927
    %v930 = vrot.slane %v926, 4
    %v932 = vshrl.u32 %v543, 16
    %v934 = vrot.slane %v932, 7
    %v935 = vshll.u32 %v543, 16
    %v937 = vor.u32 %v934, %v935
    %v938 = vsel %vm565, %v930, %v937
    %v939 = vrot.slane %v934, 4
    %v941 = vshrl.u32 %v544, 16
    %v943 = vrot.slane %v941, 7
    %v944 = vshll.u32 %v544, 16
    %v946 = vor.u32 %v943, %v944
    %v947 = vrot.slane %v943, 4
    %v949 = vshrl.u32 %v545, 16
    %v951 = vrot.slane %v949, 7
    %v952 = vshll.u32 %v545, 16
    %v954 = vor.u32 %v951, %v952
    %v955 = vsel %vm565, %v947, %v954
    %v956 = vrot.slane %v951, 4
    %v958 = vshrl.u32 %v546, 16
    %v960 = vrot.slane %v958, 7
    %v961 = vshll.u32 %v546, 16
    %v963 = vor.u32 %v960, %v961
    %v964 = vrot.slane %v960, 4
    %v966 = vshrl.u32 %v547, 16
    %v968 = vrot.slane %v966, 7
    %v969 = vshll.u32 %v547, 16
    %v971 = vor.u32 %v968, %v969
    %v972 = vsel %vm565, %v964, %v971
    %v973 = vrot.slane %v968, 4
    %v975 = vshrl.u32 %v548, 16
    %v977 = vrot.slane %v975, 7
    %v978 = vshll.u32 %v548, 16
    %v980 = vor.u32 %v977, %v978
    %v981 = vrot.slane %v977, 4
    %v983 = vshrl.u32 %v549, 16
    %v985 = vrot.slane %v983, 7
    %v986 = vshll.u32 %v549, 16
    %v988 = vor.u32 %v985, %v986
    %v989 = vsel %vm565, %v981, %v988
    %v990 = vrot.slane %v985, 4
    %v992 = vshrl.u32 %v550, 16
    %v994 = vrot.slane %v992, 7
    %v995 = vshll.u32 %v550, 16
    %v997 = vor.u32 %v994, %v995
    %v998 = vrot.slane %v994, 4
    %v1000 = vshrl.u32 %v551, 16
    %v1002 = vrot.slane %v1000, 7
    %v1003 = vshll.u32 %v551, 16
    %v1005 = vor.u32 %v1002, %v1003
    %v1006 = vsel %vm565, %v998, %v1005
    %v1007 = vrot.slane %v1002, 4
    %v1009 = vshrl.u32 %v552, 16
    %v1011 = vrot.slane %v1009, 7
    %v1012 = vshll.u32 %v552, 16
    %v1014 = vor.u32 %v1011, %v1012
    %v1015 = vrot.slane %v1011, 4
    %v1017 = vshrl.u32 %v553, 16
    %v1019 = vrot.slane %v1017, 7
    %v1020 = vshll.u32 %v553, 16
    %v1022 = vor.u32 %v1019, %v1020
    %v1023 = vsel %vm565, %v1015, %v1022
    %v1024 = vrot.slane %v1019, 4
    %v1026 = vshrl.u32 %v554, 16
    %v1028 = vrot.slane %v1026, 7
    %v1029 = vshll.u32 %v554, 16
    %v1031 = vor.u32 %v1028, %v1029
    %v1032 = vrot.slane %v1028, 4
    %v1034 = vshrl.u32 %v555, 16
    %v1036 = vrot.slane %v1034, 7
    %v1037 = vshll.u32 %v555, 16
    %v1039 = vor.u32 %v1036, %v1037
    %v1040 = vsel %vm565, %v1032, %v1039
    %v1041 = vrot.slane %v1036, 4
    %v1043 = vshrl.u32 %v556, 16
    %v1045 = vrot.slane %v1043, 7
    %v1046 = vshll.u32 %v556, 16
    %v1048 = vor.u32 %v1045, %v1046
    %v1049 = vrot.slane %v1045, 4
    %v1051 = vshrl.u32 %v557, 16
    %v1053 = vrot.slane %v1051, 7
    %v1054 = vshll.u32 %v557, 16
    %v1056 = vor.u32 %v1053, %v1054
    %v1057 = vsel %vm565, %v1049, %v1056
    %v1058 = vrot.slane %v1053, 4
    %v1060 = vshrl.u32 %v558, 16
    %v1062 = vrot.slane %v1060, 7
    %v1063 = vshll.u32 %v558, 16
    %v1065 = vor.u32 %v1062, %v1063
    %v1066 = vrot.slane %v1062, 4
    %v1068 = vshrl.u32 %v559, 16
    %v1070 = vrot.slane %v1068, 7
    %v1071 = vshll.u32 %v559, 16
    %v1073 = vor.u32 %v1070, %v1071
    %v1074 = vsel %vm565, %v1066, %v1073
    %v1075 = vrot.slane %v1070, 4
    %v1077 = vshrl.u32 %v560, 16
    %v1079 = vrot.slane %v1077, 7
    %v1080 = vshll.u32 %v560, 16
    %v1082 = vor.u32 %v1079, %v1080
    %v1083 = vrot.slane %v1079, 4
    %v1085 = vshrl.u32 %v561, 16
    %v1087 = vrot.slane %v1085, 7
    %v1088 = vshll.u32 %v561, 16
    %v1090 = vor.u32 %v1087, %v1088
    %v1091 = vsel %vm565, %v1083, %v1090
    %v1092 = vrot.slane %v1087, 4
    %v1094 = vshrl.u32 %v562, 16
    %v1096 = vrot.slane %v1094, 7
    %v1097 = vshll.u32 %v562, 16
    %v1099 = vor.u32 %v1096, %v1097
    %v1100 = vrot.slane %v1096, 4
    %v1102 = vshrl.u32 %v563, 16
    %v1104 = vrot.slane %v1102, 7
    %v1105 = vshll.u32 %v563, 16
    %v1107 = vor.u32 %v1104, %v1105
    %v1108 = vsel %vm565, %v1100, %v1107
    %v1109 = vrot.slane %v1104, 4
    %s1206 = scalar_lea.vmem [#allocation2], 12
    %vm1207 = vcmask 1043456
    %vm1208 = vmand %vm1207, %vm161
    %v1209 = vld [vmem:[%s1206] sm:$0xf]
    %v1210 = vsel %vm1208, %v572, %v1209
    %1211 = vst [vmem:[%s1206] sm:$0xf] %v1210
    %1212 = vst [vmem:[%s1206 + $0x4] sm:$0xf] %v581
    %v1213 = vld [vmem:[%s1206 + $0x8] sm:$0x1]
    %v1214 = vsel %vm52, %v582, %v1213
    %1215 = vst [vmem:[%s1206 + $0x8] sm:$0x1] %v1214
    %v1216 = vld [vmem:[%s1206 + $0xc] sm:$0xf]
    %v1217 = vsel %vm1208, %v589, %v1216
    %1218 = vst [vmem:[%s1206 + $0xc] sm:$0xf] %v1217
    %1219 = vst [vmem:[%s1206 + $0x10] sm:$0xf] %v598
    %v1220 = vld [vmem:[%s1206 + $0x14] sm:$0x1]
    %v1221 = vsel %vm52, %v599, %v1220
    %1222 = vst [vmem:[%s1206 + $0x14] sm:$0x1] %v1221
    %v1223 = vld [vmem:[%s1206 + $0x18] sm:$0xf]
    %v1224 = vsel %vm1208, %v606, %v1223
    %1225 = vst [vmem:[%s1206 + $0x18] sm:$0xf] %v1224
    %1226 = vst [vmem:[%s1206 + $0x1c] sm:$0xf] %v615
    %v1227 = vld [vmem:[%s1206 + $0x20] sm:$0x1]
    %v1228 = vsel %vm52, %v616, %v1227
    %1229 = vst [vmem:[%s1206 + $0x20] sm:$0x1] %v1228
    %v1230 = vld [vmem:[%s1206 + $0x24] sm:$0xf]
    %v1231 = vsel %vm1208, %v623, %v1230
    %1232 = vst [vmem:[%s1206 + $0x24] sm:$0xf] %v1231
    %1233 = vst [vmem:[%s1206 + $0x28] sm:$0xf] %v632
    %v1234 = vld [vmem:[%s1206 + $0x2c] sm:$0x1]
    %v1235 = vsel %vm52, %v633, %v1234
    %1236 = vst [vmem:[%s1206 + $0x2c] sm:$0x1] %v1235
    %v1237 = vld [vmem:[%s1206 + $0x30] sm:$0xf]
    %v1238 = vsel %vm1208, %v640, %v1237
    %1239 = vst [vmem:[%s1206 + $0x30] sm:$0xf] %v1238
    %1240 = vst [vmem:[%s1206 + $0x34] sm:$0xf] %v649
    %v1241 = vld [vmem:[%s1206 + $0x38] sm:$0x1]
    %v1242 = vsel %vm52, %v650, %v1241
    %1243 = vst [vmem:[%s1206 + $0x38] sm:$0x1] %v1242
    %v1244 = vld [vmem:[%s1206 + $0x3c] sm:$0xf]
    %v1245 = vsel %vm1208, %v657, %v1244
    %1246 = vst [vmem:[%s1206 + $0x3c] sm:$0xf] %v1245
    %1247 = vst [vmem:[%s1206 + $0x40] sm:$0xf] %v666
    %v1248 = vld [vmem:[%s1206 + $0x44] sm:$0x1]
    %v1249 = vsel %vm52, %v667, %v1248
    %1250 = vst [vmem:[%s1206 + $0x44] sm:$0x1] %v1249
    %v1251 = vld [vmem:[%s1206 + $0x48] sm:$0xf]
    %v1252 = vsel %vm1208, %v674, %v1251
    %1253 = vst [vmem:[%s1206 + $0x48] sm:$0xf] %v1252
    %1254 = vst [vmem:[%s1206 + $0x4c] sm:$0xf] %v683
    %v1255 = vld [vmem:[%s1206 + $0x50] sm:$0x1]
    %v1256 = vsel %vm52, %v684, %v1255
    %1257 = vst [vmem:[%s1206 + $0x50] sm:$0x1] %v1256
    %v1258 = vld [vmem:[%s1206 + $0x54] sm:$0xf]
    %v1259 = vsel %vm1208, %v691, %v1258
    %1260 = vst [vmem:[%s1206 + $0x54] sm:$0xf] %v1259
    %1261 = vst [vmem:[%s1206 + $0x58] sm:$0xf] %v700
    %v1262 = vld [vmem:[%s1206 + $0x5c] sm:$0x1]
    %v1263 = vsel %vm52, %v701, %v1262
    %1264 = vst [vmem:[%s1206 + $0x5c] sm:$0x1] %v1263
    %v1265 = vld [vmem:[%s1206 + $0x60] sm:$0xf]
    %v1266 = vsel %vm1208, %v708, %v1265
    %1267 = vst [vmem:[%s1206 + $0x60] sm:$0xf] %v1266
    %1268 = vst [vmem:[%s1206 + $0x64] sm:$0xf] %v717
    %v1269 = vld [vmem:[%s1206 + $0x68] sm:$0x1]
    %v1270 = vsel %vm52, %v718, %v1269
    %1271 = vst [vmem:[%s1206 + $0x68] sm:$0x1] %v1270
    %v1272 = vld [vmem:[%s1206 + $0x6c] sm:$0xf]
    %v1273 = vsel %vm1208, %v725, %v1272
    %1274 = vst [vmem:[%s1206 + $0x6c] sm:$0xf] %v1273
    %1275 = vst [vmem:[%s1206 + $0x70] sm:$0xf] %v734
    %v1276 = vld [vmem:[%s1206 + $0x74] sm:$0x1]
    %v1277 = vsel %vm52, %v735, %v1276
    %1278 = vst [vmem:[%s1206 + $0x74] sm:$0x1] %v1277
    %v1279 = vld [vmem:[%s1206 + $0x78] sm:$0xf]
    %v1280 = vsel %vm1208, %v742, %v1279
    %1281 = vst [vmem:[%s1206 + $0x78] sm:$0xf] %v1280
    %1282 = vst [vmem:[%s1206 + $0x7c] sm:$0xf] %v751
    %v1283 = vld [vmem:[%s1206 + $0x80] sm:$0x1]
    %v1284 = vsel %vm52, %v752, %v1283
    %1285 = vst [vmem:[%s1206 + $0x80] sm:$0x1] %v1284
    %v1286 = vld [vmem:[%s1206 + $0x84] sm:$0xf]
    %v1287 = vsel %vm1208, %v759, %v1286
    %1288 = vst [vmem:[%s1206 + $0x84] sm:$0xf] %v1287
    %1289 = vst [vmem:[%s1206 + $0x88] sm:$0xf] %v768
    %v1290 = vld [vmem:[%s1206 + $0x8c] sm:$0x1]
    %v1291 = vsel %vm52, %v769, %v1290
    %1292 = vst [vmem:[%s1206 + $0x8c] sm:$0x1] %v1291
    %v1293 = vld [vmem:[%s1206 + $0x90] sm:$0xf]
    %v1294 = vsel %vm1208, %v776, %v1293
    %1295 = vst [vmem:[%s1206 + $0x90] sm:$0xf] %v1294
    %1296 = vst [vmem:[%s1206 + $0x94] sm:$0xf] %v785
    %v1297 = vld [vmem:[%s1206 + $0x98] sm:$0x1]
    %v1298 = vsel %vm52, %v786, %v1297
    %1299 = vst [vmem:[%s1206 + $0x98] sm:$0x1] %v1298
    %v1300 = vld [vmem:[%s1206 + $0x9c] sm:$0xf]
    %v1301 = vsel %vm1208, %v793, %v1300
    %1302 = vst [vmem:[%s1206 + $0x9c] sm:$0xf] %v1301
    %1303 = vst [vmem:[%s1206 + $0xa0] sm:$0xf] %v802
    %v1304 = vld [vmem:[%s1206 + $0xa4] sm:$0x1]
    %v1305 = vsel %vm52, %v803, %v1304
    %1306 = vst [vmem:[%s1206 + $0xa4] sm:$0x1] %v1305
    %v1307 = vld [vmem:[%s1206 + $0xa8] sm:$0xf]
    %v1308 = vsel %vm1208, %v810, %v1307
    %1309 = vst [vmem:[%s1206 + $0xa8] sm:$0xf] %v1308
    %1310 = vst [vmem:[%s1206 + $0xac] sm:$0xf] %v819
    %v1311 = vld [vmem:[%s1206 + $0xb0] sm:$0x1]
    %v1312 = vsel %vm52, %v820, %v1311
    %1313 = vst [vmem:[%s1206 + $0xb0] sm:$0x1] %v1312
    %v1314 = vld [vmem:[%s1206 + $0xb4] sm:$0xf]
    %v1315 = vsel %vm1208, %v827, %v1314
    %1316 = vst [vmem:[%s1206 + $0xb4] sm:$0xf] %v1315
    %1317 = vst [vmem:[%s1206 + $0xb8] sm:$0xf] %v836
    %v1318 = vld [vmem:[%s1206 + $0xbc] sm:$0x1]
    %v1319 = vsel %vm52, %v837, %v1318
    %1320 = vst [vmem:[%s1206 + $0xbc] sm:$0x1] %v1319
    %v1321 = vld [vmem:[%s1206 + $0xd8] sm:$0xf]
    %v1322 = vsel %vm1208, %v844, %v1321
    %1323 = vst [vmem:[%s1206 + $0xd8] sm:$0xf] %v1322
    %1324 = vst [vmem:[%s1206 + $0xdc] sm:$0xf] %v853
    %v1325 = vld [vmem:[%s1206 + $0xe0] sm:$0x1]
    %v1326 = vsel %vm52, %v854, %v1325
    %1327 = vst [vmem:[%s1206 + $0xe0] sm:$0x1] %v1326
    %v1328 = vld [vmem:[%s1206 + $0xe4] sm:$0xf]
    %v1329 = vsel %vm1208, %v861, %v1328
    %1330 = vst [vmem:[%s1206 + $0xe4] sm:$0xf] %v1329
    %1331 = vst [vmem:[%s1206 + $0xe8] sm:$0xf] %v870
    %v1332 = vld [vmem:[%s1206 + $0xec] sm:$0x1]
    %v1333 = vsel %vm52, %v871, %v1332
    %1334 = vst [vmem:[%s1206 + $0xec] sm:$0x1] %v1333
    %v1335 = vld [vmem:[%s1206 + $0xf0] sm:$0xf]
    %v1336 = vsel %vm1208, %v878, %v1335
    %1337 = vst [vmem:[%s1206 + $0xf0] sm:$0xf] %v1336
    %1338 = vst [vmem:[%s1206 + $0xf4] sm:$0xf] %v887
    %v1339 = vld [vmem:[%s1206 + $0xf8] sm:$0x1]
    %v1340 = vsel %vm52, %v888, %v1339
    %1341 = vst [vmem:[%s1206 + $0xf8] sm:$0x1] %v1340
    %v1342 = vld [vmem:[%s1206 + $0xfc] sm:$0xf]
    %v1343 = vsel %vm1208, %v895, %v1342
    %1344 = vst [vmem:[%s1206 + $0xfc] sm:$0xf] %v1343
    %1345 = vst [vmem:[%s1206 + $0x100] sm:$0xf] %v904
    %v1346 = vld [vmem:[%s1206 + $0x104] sm:$0x1]
    %v1347 = vsel %vm52, %v905, %v1346
    %1348 = vst [vmem:[%s1206 + $0x104] sm:$0x1] %v1347
    %v1349 = vld [vmem:[%s1206 + $0x108] sm:$0xf]
    %v1350 = vsel %vm1208, %v912, %v1349
    %1351 = vst [vmem:[%s1206 + $0x108] sm:$0xf] %v1350
    %1352 = vst [vmem:[%s1206 + $0x10c] sm:$0xf] %v921
    %v1353 = vld [vmem:[%s1206 + $0x110] sm:$0x1]
    %v1354 = vsel %vm52, %v922, %v1353
    %1355 = vst [vmem:[%s1206 + $0x110] sm:$0x1] %v1354
    %v1356 = vld [vmem:[%s1206 + $0x114] sm:$0xf]
    %v1357 = vsel %vm1208, %v929, %v1356
    %1358 = vst [vmem:[%s1206 + $0x114] sm:$0xf] %v1357
    %1359 = vst [vmem:[%s1206 + $0x118] sm:$0xf] %v938
    %v1360 = vld [vmem:[%s1206 + $0x11c] sm:$0x1]
    %v1361 = vsel %vm52, %v939, %v1360
    %1362 = vst [vmem:[%s1206 + $0x11c] sm:$0x1] %v1361
    %v1363 = vld [vmem:[%s1206 + $0x120] sm:$0xf]
    %v1364 = vsel %vm1208, %v946, %v1363
    %1365 = vst [vmem:[%s1206 + $0x120] sm:$0xf] %v1364
    %1366 = vst [vmem:[%s1206 + $0x124] sm:$0xf] %v955
    %v1367 = vld [vmem:[%s1206 + $0x128] sm:$0x1]
    %v1368 = vsel %vm52, %v956, %v1367
    %1369 = vst [vmem:[%s1206 + $0x128] sm:$0x1] %v1368
    %v1370 = vld [vmem:[%s1206 + $0x12c] sm:$0xf]
    %v1371 = vsel %vm1208, %v963, %v1370
    %1372 = vst [vmem:[%s1206 + $0x12c] sm:$0xf] %v1371
    %1373 = vst [vmem:[%s1206 + $0x130] sm:$0xf] %v972
    %v1374 = vld [vmem:[%s1206 + $0x134] sm:$0x1]
    %v1375 = vsel %vm52, %v973, %v1374
    %1376 = vst [vmem:[%s1206 + $0x134] sm:$0x1] %v1375
    %v1377 = vld [vmem:[%s1206 + $0x138] sm:$0xf]
    %v1378 = vsel %vm1208, %v980, %v1377
    %1379 = vst [vmem:[%s1206 + $0x138] sm:$0xf] %v1378
    %1380 = vst [vmem:[%s1206 + $0x13c] sm:$0xf] %v989
    %v1381 = vld [vmem:[%s1206 + $0x140] sm:$0x1]
    %v1382 = vsel %vm52, %v990, %v1381
    %1383 = vst [vmem:[%s1206 + $0x140] sm:$0x1] %v1382
    %v1384 = vld [vmem:[%s1206 + $0x144] sm:$0xf]
    %v1385 = vsel %vm1208, %v997, %v1384
    %1386 = vst [vmem:[%s1206 + $0x144] sm:$0xf] %v1385
    %1387 = vst [vmem:[%s1206 + $0x148] sm:$0xf] %v1006
    %v1388 = vld [vmem:[%s1206 + $0x14c] sm:$0x1]
    %v1389 = vsel %vm52, %v1007, %v1388
    %1390 = vst [vmem:[%s1206 + $0x14c] sm:$0x1] %v1389
    %v1391 = vld [vmem:[%s1206 + $0x150] sm:$0xf]
    %v1392 = vsel %vm1208, %v1014, %v1391
    %1393 = vst [vmem:[%s1206 + $0x150] sm:$0xf] %v1392
    %1394 = vst [vmem:[%s1206 + $0x154] sm:$0xf] %v1023
    %v1395 = vld [vmem:[%s1206 + $0x158] sm:$0x1]
    %v1396 = vsel %vm52, %v1024, %v1395
    %1397 = vst [vmem:[%s1206 + $0x158] sm:$0x1] %v1396
    %v1398 = vld [vmem:[%s1206 + $0x15c] sm:$0xf]
    %v1399 = vsel %vm1208, %v1031, %v1398
    %1400 = vst [vmem:[%s1206 + $0x15c] sm:$0xf] %v1399
    %1401 = vst [vmem:[%s1206 + $0x160] sm:$0xf] %v1040
    %v1402 = vld [vmem:[%s1206 + $0x164] sm:$0x1]
    %v1403 = vsel %vm52, %v1041, %v1402
    %1404 = vst [vmem:[%s1206 + $0x164] sm:$0x1] %v1403
    %v1405 = vld [vmem:[%s1206 + $0x168] sm:$0xf]
    %v1406 = vsel %vm1208, %v1048, %v1405
    %1407 = vst [vmem:[%s1206 + $0x168] sm:$0xf] %v1406
    %1408 = vst [vmem:[%s1206 + $0x16c] sm:$0xf] %v1057
    %v1409 = vld [vmem:[%s1206 + $0x170] sm:$0x1]
    %v1410 = vsel %vm52, %v1058, %v1409
    %1411 = vst [vmem:[%s1206 + $0x170] sm:$0x1] %v1410
    %v1412 = vld [vmem:[%s1206 + $0x174] sm:$0xf]
    %v1413 = vsel %vm1208, %v1065, %v1412
    %1414 = vst [vmem:[%s1206 + $0x174] sm:$0xf] %v1413
    %1415 = vst [vmem:[%s1206 + $0x178] sm:$0xf] %v1074
    %v1416 = vld [vmem:[%s1206 + $0x17c] sm:$0x1]
    %v1417 = vsel %vm52, %v1075, %v1416
    %1418 = vst [vmem:[%s1206 + $0x17c] sm:$0x1] %v1417
    %v1419 = vld [vmem:[%s1206 + $0x180] sm:$0xf]
    %v1420 = vsel %vm1208, %v1082, %v1419
    %1421 = vst [vmem:[%s1206 + $0x180] sm:$0xf] %v1420
    %1422 = vst [vmem:[%s1206 + $0x184] sm:$0xf] %v1091
    %v1423 = vld [vmem:[%s1206 + $0x188] sm:$0x1]
    %v1424 = vsel %vm52, %v1092, %v1423
    %1425 = vst [vmem:[%s1206 + $0x188] sm:$0x1] %v1424
    %v1426 = vld [vmem:[%s1206 + $0x18c] sm:$0xf]
    %v1427 = vsel %vm1208, %v1099, %v1426
    %1428 = vst [vmem:[%s1206 + $0x18c] sm:$0xf] %v1427
    %1429 = vst [vmem:[%s1206 + $0x190] sm:$0xf] %v1108
    %v1430 = vld [vmem:[%s1206 + $0x194] sm:$0x1]
    %v1431 = vsel %vm52, %v1109, %v1430
    %1432 = vst [vmem:[%s1206 + $0x194] sm:$0x1] %v1431
    %v1433 = vld [vmem:[#allocation2] sm:$0xf]
    %v1434 = vld [vmem:[#allocation2 + $0x4] sm:$0xf]
    %v1435 = vld [vmem:[#allocation2 + $0xc] sm:$0xf]
    %v1436 = vld [vmem:[#allocation2 + $0x10] sm:$0xf]
    %v1437 = vld [vmem:[#allocation2 + $0x18] sm:$0xf]
    %v1438 = vld [vmem:[#allocation2 + $0x1c] sm:$0xf]
    %v1439 = vld [vmem:[#allocation2 + $0x24] sm:$0xf]
    %v1440 = vld [vmem:[#allocation2 + $0x28] sm:$0xf]
    %v1441 = vld [vmem:[#allocation2 + $0x30] sm:$0xf]
    %v1442 = vld [vmem:[#allocation2 + $0x34] sm:$0xf]
    %v1443 = vld [vmem:[#allocation2 + $0x3c] sm:$0xf]
    %v1444 = vld [vmem:[#allocation2 + $0x40] sm:$0xf]
    %v1445 = vld [vmem:[#allocation2 + $0x48] sm:$0xf]
    %v1446 = vld [vmem:[#allocation2 + $0x4c] sm:$0xf]
    %v1447 = vld [vmem:[#allocation2 + $0x54] sm:$0xf]
    %v1448 = vld [vmem:[#allocation2 + $0x58] sm:$0xf]
    %v1449 = vld [vmem:[#allocation2 + $0x60] sm:$0xf]
    %v1450 = vld [vmem:[#allocation2 + $0x64] sm:$0xf]
    %v1451 = vld [vmem:[#allocation2 + $0x6c] sm:$0xf]
    %v1452 = vld [vmem:[#allocation2 + $0x70] sm:$0xf]
    %v1453 = vld [vmem:[#allocation2 + $0x78] sm:$0xf]
    %v1454 = vld [vmem:[#allocation2 + $0x7c] sm:$0xf]
    %v1455 = vld [vmem:[#allocation2 + $0x84] sm:$0xf]
    %v1456 = vld [vmem:[#allocation2 + $0x88] sm:$0xf]
    %v1457 = vld [vmem:[#allocation2 + $0x90] sm:$0xf]
    %v1458 = vld [vmem:[#allocation2 + $0x94] sm:$0xf]
    %v1459 = vld [vmem:[#allocation2 + $0x9c] sm:$0xf]
    %v1460 = vld [vmem:[#allocation2 + $0xa0] sm:$0xf]
    %v1461 = vld [vmem:[#allocation2 + $0xa8] sm:$0xf]
    %v1462 = vld [vmem:[#allocation2 + $0xac] sm:$0xf]
    %v1463 = vld [vmem:[#allocation2 + $0xb4] sm:$0xf]
    %v1464 = vld [vmem:[#allocation2 + $0xb8] sm:$0xf]
    %v1465 = vld [vmem:[#allocation2 + $0xc0] sm:$0xf]
    %v1466 = vld [vmem:[#allocation2 + $0xc4] sm:$0xf]
    %v1467 = vld [vmem:[#allocation2 + $0xcc] sm:$0xf]
    %v1468 = vld [vmem:[#allocation2 + $0xd0] sm:$0xf]
    %v1469 = vld [vmem:[#allocation2 + $0xd8] sm:$0xf]
    %v1470 = vld [vmem:[#allocation2 + $0xdc] sm:$0xf]
    %v1471 = vld [vmem:[#allocation2 + $0xe4] sm:$0xf]
    %v1472 = vld [vmem:[#allocation2 + $0xe8] sm:$0xf]
    %v1473 = vld [vmem:[#allocation2 + $0xf0] sm:$0xf]
    %v1474 = vld [vmem:[#allocation2 + $0xf4] sm:$0xf]
    %v1475 = vld [vmem:[#allocation2 + $0xfc] sm:$0xf]
    %v1476 = vld [vmem:[#allocation2 + $0x100] sm:$0xf]
    %v1477 = vld [vmem:[#allocation2 + $0x108] sm:$0xf]
    %v1478 = vld [vmem:[#allocation2 + $0x10c] sm:$0xf]
    %v1479 = vld [vmem:[#allocation2 + $0x114] sm:$0xf]
    %v1480 = vld [vmem:[#allocation2 + $0x118] sm:$0xf]
    %v1481 = vld [vmem:[#allocation2 + $0x120] sm:$0xf]
    %v1482 = vld [vmem:[#allocation2 + $0x124] sm:$0xf]
    %v1483 = vld [vmem:[#allocation2 + $0x12c] sm:$0xf]
    %v1484 = vld [vmem:[#allocation2 + $0x130] sm:$0xf]
    %v1485 = vld [vmem:[#allocation2 + $0x138] sm:$0xf]
    %v1486 = vld [vmem:[#allocation2 + $0x13c] sm:$0xf]
    %v1487 = vld [vmem:[#allocation2 + $0x144] sm:$0xf]
    %v1488 = vld [vmem:[#allocation2 + $0x148] sm:$0xf]
    %v1489 = vld [vmem:[#allocation2 + $0x150] sm:$0xf]
    %v1490 = vld [vmem:[#allocation2 + $0x154] sm:$0xf]
    %v1491 = vld [vmem:[#allocation2 + $0x15c] sm:$0xf]
    %v1492 = vld [vmem:[#allocation2 + $0x160] sm:$0xf]
    %v1493 = vld [vmem:[#allocation2 + $0x168] sm:$0xf]
    %v1494 = vld [vmem:[#allocation2 + $0x16c] sm:$0xf]
    %v1495 = vld [vmem:[#allocation2 + $0x174] sm:$0xf]
    %v1496 = vld [vmem:[#allocation2 + $0x178] sm:$0xf]
    %v1497 = vld [vmem:[#allocation2 + $0x180] sm:$0xf]
    %v1498 = vld [vmem:[#allocation2 + $0x184] sm:$0xf]
    %v1499 = vld [vmem:[#allocation2 + $0x18c] sm:$0xf]
    %v1500 = vld [vmem:[#allocation2 + $0x190] sm:$0xf]
    %v1501 = vld [vmem:[#allocation2 + $0x198] sm:$0xf]
    %v1502 = vld [vmem:[#allocation2 + $0x19c] sm:$0xf]
    %v1503 = vld [vmem:[#allocation2 + $0x1a4] sm:$0xf]
    %v1504 = vld [vmem:[#allocation2 + $0x1a8] sm:$0xf]
    %v1505 = vld [vmem:[#allocation2 + $0x8] sm:$0x1]
    %v1506 = vld [vmem:[#allocation2 + $0x14] sm:$0x1]
    %v1507 = vld [vmem:[#allocation2 + $0x20] sm:$0x1]
    %v1508 = vld [vmem:[#allocation2 + $0x2c] sm:$0x1]
    %v1509 = vld [vmem:[#allocation2 + $0x38] sm:$0x1]
    %v1510 = vld [vmem:[#allocation2 + $0x44] sm:$0x1]
    %v1511 = vld [vmem:[#allocation2 + $0x50] sm:$0x1]
    %v1512 = vld [vmem:[#allocation2 + $0x5c] sm:$0x1]
    %v1513 = vld [vmem:[#allocation2 + $0x68] sm:$0x1]
    %v1514 = vld [vmem:[#allocation2 + $0x74] sm:$0x1]
    %v1515 = vld [vmem:[#allocation2 + $0x80] sm:$0x1]
    %v1516 = vld [vmem:[#allocation2 + $0x8c] sm:$0x1]
    %v1517 = vld [vmem:[#allocation2 + $0x98] sm:$0x1]
    %v1518 = vld [vmem:[#allocation2 + $0xa4] sm:$0x1]
    %v1519 = vld [vmem:[#allocation2 + $0xb0] sm:$0x1]
    %v1520 = vld [vmem:[#allocation2 + $0xbc] sm:$0x1]
    %v1521 = vld [vmem:[#allocation2 + $0xc8] sm:$0x1]
    %v1522 = vld [vmem:[#allocation2 + $0xd4] sm:$0x1]
    %v1523 = vld [vmem:[#allocation2 + $0xe0] sm:$0x1]
    %v1524 = vld [vmem:[#allocation2 + $0xec] sm:$0x1]
    %v1525 = vld [vmem:[#allocation2 + $0xf8] sm:$0x1]
    %v1526 = vld [vmem:[#allocation2 + $0x104] sm:$0x1]
    %v1527 = vld [vmem:[#allocation2 + $0x110] sm:$0x1]
    %v1528 = vld [vmem:[#allocation2 + $0x11c] sm:$0x1]
    %v1529 = vld [vmem:[#allocation2 + $0x128] sm:$0x1]
    %v1530 = vld [vmem:[#allocation2 + $0x134] sm:$0x1]
    %v1531 = vld [vmem:[#allocation2 + $0x140] sm:$0x1]
    %v1532 = vld [vmem:[#allocation2 + $0x14c] sm:$0x1]
    %v1533 = vld [vmem:[#allocation2 + $0x158] sm:$0x1]
    %v1534 = vld [vmem:[#allocation2 + $0x164] sm:$0x1]
    %v1535 = vld [vmem:[#allocation2 + $0x170] sm:$0x1]
    %v1536 = vld [vmem:[#allocation2 + $0x17c] sm:$0x1]
    %v1537 = vld [vmem:[#allocation2 + $0x188] sm:$0x1]
    %v1538 = vld [vmem:[#allocation2 + $0x194] sm:$0x1]
    %v1539 = vld [vmem:[#allocation2 + $0x1a0] sm:$0x1]
    %v1540 = vld [vmem:[#allocation2 + $0x1ac] sm:$0x1]
    %v1541 = vld [vmem:[#allocation2] sm:$0xe]
    %v1542 = vld [vmem:[#allocation2 + $0xc] sm:$0xe]
    %v1543 = vld [vmem:[#allocation2 + $0x18] sm:$0xe]
    %v1544 = vld [vmem:[#allocation2 + $0x24] sm:$0xe]
    %v1545 = vld [vmem:[#allocation2 + $0x30] sm:$0xe]
    %v1546 = vld [vmem:[#allocation2 + $0x3c] sm:$0xe]
    %v1547 = vld [vmem:[#allocation2 + $0x48] sm:$0xe]
    %v1548 = vld [vmem:[#allocation2 + $0x54] sm:$0xe]
    %v1549 = vld [vmem:[#allocation2 + $0x60] sm:$0xe]
    %v1550 = vld [vmem:[#allocation2 + $0x6c] sm:$0xe]
    %v1551 = vld [vmem:[#allocation2 + $0x78] sm:$0xe]
    %v1552 = vld [vmem:[#allocation2 + $0x84] sm:$0xe]
    %v1553 = vld [vmem:[#allocation2 + $0x90] sm:$0xe]
    %v1554 = vld [vmem:[#allocation2 + $0x9c] sm:$0xe]
    %v1555 = vld [vmem:[#allocation2 + $0xa8] sm:$0xe]
    %v1556 = vld [vmem:[#allocation2 + $0xb4] sm:$0xe]
    %v1557 = vld [vmem:[#allocation2 + $0xc0] sm:$0xe]
    %v1558 = vld [vmem:[#allocation2 + $0xcc] sm:$0xe]
    %v1559 = vld [vmem:[#allocation2 + $0xd8] sm:$0xe]
    %v1560 = vld [vmem:[#allocation2 + $0xe4] sm:$0xe]
    %v1561 = vld [vmem:[#allocation2 + $0xf0] sm:$0xe]
    %v1562 = vld [vmem:[#allocation2 + $0xfc] sm:$0xe]
    %v1563 = vld [vmem:[#allocation2 + $0x108] sm:$0xe]
    %v1564 = vld [vmem:[#allocation2 + $0x114] sm:$0xe]
    %v1565 = vld [vmem:[#allocation2 + $0x120] sm:$0xe]
    %v1566 = vld [vmem:[#allocation2 + $0x12c] sm:$0xe]
    %v1567 = vld [vmem:[#allocation2 + $0x138] sm:$0xe]
    %v1568 = vld [vmem:[#allocation2 + $0x144] sm:$0xe]
    %v1569 = vld [vmem:[#allocation2 + $0x150] sm:$0xe]
    %v1570 = vld [vmem:[#allocation2 + $0x15c] sm:$0xe]
    %v1571 = vld [vmem:[#allocation2 + $0x168] sm:$0xe]
    %v1572 = vld [vmem:[#allocation2 + $0x174] sm:$0xe]
    %v1573 = vld [vmem:[#allocation2 + $0x180] sm:$0xe]
    %v1574 = vld [vmem:[#allocation2 + $0x18c] sm:$0xe]
    %v1575 = vld [vmem:[#allocation2 + $0x198] sm:$0xe]
    %v1576 = vld [vmem:[#allocation2 + $0x1a4] sm:$0xe]
    %v1641 = vunpack.c.l.b16 %v1433
    %v1642 = vunpack.c.l.b16 %v1434
    %v1643 = vunpack.c.l.b16 %v1435
    %v1644 = vunpack.c.l.b16 %v1436
    %v1645 = vunpack.c.l.b16 %v1437
    %v1646 = vunpack.c.l.b16 %v1438
    %v1647 = vunpack.c.l.b16 %v1439
    %v1648 = vunpack.c.l.b16 %v1440
    %v1649 = vunpack.c.l.b16 %v1441
    %v1650 = vunpack.c.l.b16 %v1442
    %v1651 = vunpack.c.l.b16 %v1443
    %v1652 = vunpack.c.l.b16 %v1444
    %v1653 = vunpack.c.l.b16 %v1445
    %v1654 = vunpack.c.l.b16 %v1446
    %v1655 = vunpack.c.l.b16 %v1447
    %v1656 = vunpack.c.l.b16 %v1448
    %v1657 = vunpack.c.l.b16 %v1449
    %v1658 = vunpack.c.l.b16 %v1450
    %v1659 = vunpack.c.l.b16 %v1451
    %v1660 = vunpack.c.l.b16 %v1452
    %v1661 = vunpack.c.l.b16 %v1453
    %v1662 = vunpack.c.l.b16 %v1454
    %v1663 = vunpack.c.l.b16 %v1455
    %v1664 = vunpack.c.l.b16 %v1456
    %v1665 = vunpack.c.l.b16 %v1457
    %v1666 = vunpack.c.l.b16 %v1458
    %v1667 = vunpack.c.l.b16 %v1459
    %v1668 = vunpack.c.l.b16 %v1460
    %v1669 = vunpack.c.l.b16 %v1461
    %v1670 = vunpack.c.l.b16 %v1462
    %v1671 = vunpack.c.l.b16 %v1463
    %v1672 = vunpack.c.l.b16 %v1464
    %v1673 = vunpack.c.l.b16 %v1469
    %v1674 = vunpack.c.l.b16 %v1470
    %v1675 = vunpack.c.l.b16 %v1471
    %v1676 = vunpack.c.l.b16 %v1472
    %v1677 = vunpack.c.l.b16 %v1473
    %v1678 = vunpack.c.l.b16 %v1474
    %v1679 = vunpack.c.l.b16 %v1475
    %v1680 = vunpack.c.l.b16 %v1476
    %v1681 = vunpack.c.l.b16 %v1477
    %v1682 = vunpack.c.l.b16 %v1478
    %v1683 = vunpack.c.l.b16 %v1479
    %v1684 = vunpack.c.l.b16 %v1480
    %v1685 = vunpack.c.l.b16 %v1481
    %v1686 = vunpack.c.l.b16 %v1482
    %v1687 = vunpack.c.l.b16 %v1483
    %v1688 = vunpack.c.l.b16 %v1484
    %v1689 = vunpack.c.l.b16 %v1485
    %v1690 = vunpack.c.l.b16 %v1486
    %v1691 = vunpack.c.l.b16 %v1487
    %v1692 = vunpack.c.l.b16 %v1488
    %v1693 = vunpack.c.l.b16 %v1489
    %v1694 = vunpack.c.l.b16 %v1490
    %v1695 = vunpack.c.l.b16 %v1491
    %v1696 = vunpack.c.l.b16 %v1492
    %v1697 = vunpack.c.l.b16 %v1493
    %v1698 = vunpack.c.l.b16 %v1494
    %v1699 = vunpack.c.l.b16 %v1495
    %v1700 = vunpack.c.l.b16 %v1496
    %v1701 = vunpack.c.l.b16 %v1497
    %v1702 = vunpack.c.l.b16 %v1498
    %v1703 = vunpack.c.l.b16 %v1499
    %v1704 = vunpack.c.l.b16 %v1500
    %v1705 = vpack.c.b16 %v1642, %v1641
    %v1706 = vpack.c.b16 %v1644, %v1643
    %v1707 = vpack.c.b16 %v1646, %v1645
    %v1708 = vpack.c.b16 %v1648, %v1647
    %v1709 = vpack.c.b16 %v1650, %v1649
    %v1710 = vpack.c.b16 %v1652, %v1651
    %v1711 = vpack.c.b16 %v1654, %v1653
    %v1712 = vpack.c.b16 %v1656, %v1655
    %v1713 = vpack.c.b16 %v1658, %v1657
    %v1714 = vpack.c.b16 %v1660, %v1659
    %v1715 = vpack.c.b16 %v1662, %v1661
    %v1716 = vpack.c.b16 %v1664, %v1663
    %v1717 = vpack.c.b16 %v1666, %v1665
    %v1718 = vpack.c.b16 %v1668, %v1667
    %v1719 = vpack.c.b16 %v1670, %v1669
    %v1720 = vpack.c.b16 %v1672, %v1671
    %v1721 = vpack.c.b16 %v1674, %v1673
    %v1722 = vpack.c.b16 %v1676, %v1675
    %v1723 = vpack.c.b16 %v1678, %v1677
    %v1724 = vpack.c.b16 %v1680, %v1679
    %v1725 = vpack.c.b16 %v1682, %v1681
    %v1726 = vpack.c.b16 %v1684, %v1683
    %v1727 = vpack.c.b16 %v1686, %v1685
    %v1728 = vpack.c.b16 %v1688, %v1687
    %v1729 = vpack.c.b16 %v1690, %v1689
    %v1730 = vpack.c.b16 %v1692, %v1691
    %v1731 = vpack.c.b16 %v1694, %v1693
    %v1732 = vpack.c.b16 %v1696, %v1695
    %v1733 = vpack.c.b16 %v1698, %v1697
    %v1734 = vpack.c.b16 %v1700, %v1699
    %v1735 = vpack.c.b16 %v1702, %v1701
    %v1736 = vpack.c.b16 %v1704, %v1703
    %v1801 = vunpack.c.l.b16 %v1505
    %v1802 = vunpack.c.l.b16 %v1506
    %v1803 = vunpack.c.l.b16 %v1507
    %v1804 = vunpack.c.l.b16 %v1508
    %v1805 = vunpack.c.l.b16 %v1509
    %v1806 = vunpack.c.l.b16 %v1510
    %v1807 = vunpack.c.l.b16 %v1511
    %v1808 = vunpack.c.l.b16 %v1512
    %v1809 = vunpack.c.l.b16 %v1513
    %v1810 = vunpack.c.l.b16 %v1514
    %v1811 = vunpack.c.l.b16 %v1515
    %v1812 = vunpack.c.l.b16 %v1516
    %v1813 = vunpack.c.l.b16 %v1517
    %v1814 = vunpack.c.l.b16 %v1518
    %v1815 = vunpack.c.l.b16 %v1519
    %v1816 = vunpack.c.l.b16 %v1520
    %v1817 = vunpack.c.l.b16 %v1523
    %v1818 = vunpack.c.l.b16 %v1524
    %v1819 = vunpack.c.l.b16 %v1525
    %v1820 = vunpack.c.l.b16 %v1526
    %v1821 = vunpack.c.l.b16 %v1527
    %v1822 = vunpack.c.l.b16 %v1528
    %v1823 = vunpack.c.l.b16 %v1529
    %v1824 = vunpack.c.l.b16 %v1530
    %v1825 = vunpack.c.l.b16 %v1531
    %v1826 = vunpack.c.l.b16 %v1532
    %v1827 = vunpack.c.l.b16 %v1533
    %v1828 = vunpack.c.l.b16 %v1534
    %v1829 = vunpack.c.l.b16 %v1535
    %v1830 = vunpack.c.l.b16 %v1536
    %v1831 = vunpack.c.l.b16 %v1537
    %v1832 = vunpack.c.l.b16 %v1538
    %v1833 = vpack.c.b16 %v1801, %v1801
    %v1834 = vpack.c.b16 %v1802, %v1802
    %v1835 = vpack.c.b16 %v1803, %v1803
    %v1836 = vpack.c.b16 %v1804, %v1804
    %v1837 = vpack.c.b16 %v1805, %v1805
    %v1838 = vpack.c.b16 %v1806, %v1806
    %v1839 = vpack.c.b16 %v1807, %v1807
    %v1840 = vpack.c.b16 %v1808, %v1808
    %v1841 = vpack.c.b16 %v1809, %v1809
    %v1842 = vpack.c.b16 %v1810, %v1810
    %v1843 = vpack.c.b16 %v1811, %v1811
    %v1844 = vpack.c.b16 %v1812, %v1812
    %v1845 = vpack.c.b16 %v1813, %v1813
    %v1846 = vpack.c.b16 %v1814, %v1814
    %v1847 = vpack.c.b16 %v1815, %v1815
    %v1848 = vpack.c.b16 %v1816, %v1816
    %v1849 = vpack.c.b16 %v1817, %v1817
    %v1850 = vpack.c.b16 %v1818, %v1818
    %v1851 = vpack.c.b16 %v1819, %v1819
    %v1852 = vpack.c.b16 %v1820, %v1820
    %v1853 = vpack.c.b16 %v1821, %v1821
    %v1854 = vpack.c.b16 %v1822, %v1822
    %v1855 = vpack.c.b16 %v1823, %v1823
    %v1856 = vpack.c.b16 %v1824, %v1824
    %v1857 = vpack.c.b16 %v1825, %v1825
    %v1858 = vpack.c.b16 %v1826, %v1826
    %v1859 = vpack.c.b16 %v1827, %v1827
    %v1860 = vpack.c.b16 %v1828, %v1828
    %v1861 = vpack.c.b16 %v1829, %v1829
    %v1862 = vpack.c.b16 %v1830, %v1830
    %v1863 = vpack.c.b16 %v1831, %v1831
    %v1864 = vpack.c.b16 %v1832, %v1832
    %vm1865 = vsmask.f32 7424
    %v1867 = vshrl.u32 %v1705, 16
    %v1869 = vshll.u32 %v1705, 16
    %v1871 = vrot.slane %v1869, 1
    %v1872 = vor.u32 %v1867, %v1871
    %v1874 = vshll.u32 %v1833, 16
    %v1876 = vrot.slane %v1874, 1
    %v1877 = vsel %vm1865, %v1872, %v1876
    %v1879 = vshrl.u32 %v1706, 16
    %v1881 = vshll.u32 %v1706, 16
    %v1883 = vrot.slane %v1881, 1
    %v1884 = vor.u32 %v1879, %v1883
    %v1886 = vshll.u32 %v1834, 16
    %v1888 = vrot.slane %v1886, 1
    %v1889 = vsel %vm1865, %v1884, %v1888
    %v1891 = vshrl.u32 %v1707, 16
    %v1893 = vshll.u32 %v1707, 16
    %v1895 = vrot.slane %v1893, 1
    %v1896 = vor.u32 %v1891, %v1895
    %v1898 = vshll.u32 %v1835, 16
    %v1900 = vrot.slane %v1898, 1
    %v1901 = vsel %vm1865, %v1896, %v1900
    %v1903 = vshrl.u32 %v1708, 16
    %v1905 = vshll.u32 %v1708, 16
    %v1907 = vrot.slane %v1905, 1
    %v1908 = vor.u32 %v1903, %v1907
    %v1910 = vshll.u32 %v1836, 16
    %v1912 = vrot.slane %v1910, 1
    %v1913 = vsel %vm1865, %v1908, %v1912
    %v1915 = vshrl.u32 %v1709, 16
    %v1917 = vshll.u32 %v1709, 16
    %v1919 = vrot.slane %v1917, 1
    %v1920 = vor.u32 %v1915, %v1919
    %v1922 = vshll.u32 %v1837, 16
    %v1924 = vrot.slane %v1922, 1
    %v1925 = vsel %vm1865, %v1920, %v1924
    %v1927 = vshrl.u32 %v1710, 16
    %v1929 = vshll.u32 %v1710, 16
    %v1931 = vrot.slane %v1929, 1
    %v1932 = vor.u32 %v1927, %v1931
    %v1934 = vshll.u32 %v1838, 16
    %v1936 = vrot.slane %v1934, 1
    %v1937 = vsel %vm1865, %v1932, %v1936
    %v1939 = vshrl.u32 %v1711, 16
    %v1941 = vshll.u32 %v1711, 16
    %v1943 = vrot.slane %v1941, 1
    %v1944 = vor.u32 %v1939, %v1943
    %v1946 = vshll.u32 %v1839, 16
    %v1948 = vrot.slane %v1946, 1
    %v1949 = vsel %vm1865, %v1944, %v1948
    %v1951 = vshrl.u32 %v1712, 16
    %v1953 = vshll.u32 %v1712, 16
    %v1955 = vrot.slane %v1953, 1
    %v1956 = vor.u32 %v1951, %v1955
    %v1958 = vshll.u32 %v1840, 16
    %v1960 = vrot.slane %v1958, 1
    %v1961 = vsel %vm1865, %v1956, %v1960
    %v1963 = vshrl.u32 %v1713, 16
    %v1965 = vshll.u32 %v1713, 16
    %v1967 = vrot.slane %v1965, 1
    %v1968 = vor.u32 %v1963, %v1967
    %v1970 = vshll.u32 %v1841, 16
    %v1972 = vrot.slane %v1970, 1
    %v1973 = vsel %vm1865, %v1968, %v1972
    %v1975 = vshrl.u32 %v1714, 16
    %v1977 = vshll.u32 %v1714, 16
    %v1979 = vrot.slane %v1977, 1
    %v1980 = vor.u32 %v1975, %v1979
    %v1982 = vshll.u32 %v1842, 16
    %v1984 = vrot.slane %v1982, 1
    %v1985 = vsel %vm1865, %v1980, %v1984
    %v1987 = vshrl.u32 %v1715, 16
    %v1989 = vshll.u32 %v1715, 16
    %v1991 = vrot.slane %v1989, 1
    %v1992 = vor.u32 %v1987, %v1991
    %v1994 = vshll.u32 %v1843, 16
    %v1996 = vrot.slane %v1994, 1
    %v1997 = vsel %vm1865, %v1992, %v1996
    %v1999 = vshrl.u32 %v1716, 16
    %v2001 = vshll.u32 %v1716, 16
    %v2003 = vrot.slane %v2001, 1
    %v2004 = vor.u32 %v1999, %v2003
    %v2006 = vshll.u32 %v1844, 16
    %v2008 = vrot.slane %v2006, 1
    %v2009 = vsel %vm1865, %v2004, %v2008
    %v2011 = vshrl.u32 %v1717, 16
    %v2013 = vshll.u32 %v1717, 16
    %v2015 = vrot.slane %v2013, 1
    %v2016 = vor.u32 %v2011, %v2015
    %v2018 = vshll.u32 %v1845, 16
    %v2020 = vrot.slane %v2018, 1
    %v2021 = vsel %vm1865, %v2016, %v2020
    %v2023 = vshrl.u32 %v1718, 16
    %v2025 = vshll.u32 %v1718, 16
    %v2027 = vrot.slane %v2025, 1
    %v2028 = vor.u32 %v2023, %v2027
    %v2030 = vshll.u32 %v1846, 16
    %v2032 = vrot.slane %v2030, 1
    %v2033 = vsel %vm1865, %v2028, %v2032
    %v2035 = vshrl.u32 %v1719, 16
    %v2037 = vshll.u32 %v1719, 16
    %v2039 = vrot.slane %v2037, 1
    %v2040 = vor.u32 %v2035, %v2039
    %v2042 = vshll.u32 %v1847, 16
    %v2044 = vrot.slane %v2042, 1
    %v2045 = vsel %vm1865, %v2040, %v2044
    %v2047 = vshrl.u32 %v1720, 16
    %v2049 = vshll.u32 %v1720, 16
    %v2051 = vrot.slane %v2049, 1
    %v2052 = vor.u32 %v2047, %v2051
    %v2054 = vshll.u32 %v1848, 16
    %v2056 = vrot.slane %v2054, 1
    %v2057 = vsel %vm1865, %v2052, %v2056
    %v2059 = vshrl.u32 %v1721, 16
    %v2061 = vshll.u32 %v1721, 16
    %v2063 = vrot.slane %v2061, 1
    %v2064 = vor.u32 %v2059, %v2063
    %v2066 = vshll.u32 %v1849, 16
    %v2068 = vrot.slane %v2066, 1
    %v2069 = vsel %vm1865, %v2064, %v2068
    %v2071 = vshrl.u32 %v1722, 16
    %v2073 = vshll.u32 %v1722, 16
    %v2075 = vrot.slane %v2073, 1
    %v2076 = vor.u32 %v2071, %v2075
    %v2078 = vshll.u32 %v1850, 16
    %v2080 = vrot.slane %v2078, 1
    %v2081 = vsel %vm1865, %v2076, %v2080
    %v2083 = vshrl.u32 %v1723, 16
    %v2085 = vshll.u32 %v1723, 16
    %v2087 = vrot.slane %v2085, 1
    %v2088 = vor.u32 %v2083, %v2087
    %v2090 = vshll.u32 %v1851, 16
    %v2092 = vrot.slane %v2090, 1
    %v2093 = vsel %vm1865, %v2088, %v2092
    %v2095 = vshrl.u32 %v1724, 16
    %v2097 = vshll.u32 %v1724, 16
    %v2099 = vrot.slane %v2097, 1
    %v2100 = vor.u32 %v2095, %v2099
    %v2102 = vshll.u32 %v1852, 16
    %v2104 = vrot.slane %v2102, 1
    %v2105 = vsel %vm1865, %v2100, %v2104
    %v2107 = vshrl.u32 %v1725, 16
    %v2109 = vshll.u32 %v1725, 16
    %v2111 = vrot.slane %v2109, 1
    %v2112 = vor.u32 %v2107, %v2111
    %v2114 = vshll.u32 %v1853, 16
    %v2116 = vrot.slane %v2114, 1
    %v2117 = vsel %vm1865, %v2112, %v2116
    %v2119 = vshrl.u32 %v1726, 16
    %v2121 = vshll.u32 %v1726, 16
    %v2123 = vrot.slane %v2121, 1
    %v2124 = vor.u32 %v2119, %v2123
    %v2126 = vshll.u32 %v1854, 16
    %v2128 = vrot.slane %v2126, 1
    %v2129 = vsel %vm1865, %v2124, %v2128
    %v2131 = vshrl.u32 %v1727, 16
    %v2133 = vshll.u32 %v1727, 16
    %v2135 = vrot.slane %v2133, 1
    %v2136 = vor.u32 %v2131, %v2135
    %v2138 = vshll.u32 %v1855, 16
    %v2140 = vrot.slane %v2138, 1
    %v2141 = vsel %vm1865, %v2136, %v2140
    %v2143 = vshrl.u32 %v1728, 16
    %v2145 = vshll.u32 %v1728, 16
    %v2147 = vrot.slane %v2145, 1
    %v2148 = vor.u32 %v2143, %v2147
    %v2150 = vshll.u32 %v1856, 16
    %v2152 = vrot.slane %v2150, 1
    %v2153 = vsel %vm1865, %v2148, %v2152
    %v2155 = vshrl.u32 %v1729, 16
    %v2157 = vshll.u32 %v1729, 16
    %v2159 = vrot.slane %v2157, 1
    %v2160 = vor.u32 %v2155, %v2159
    %v2162 = vshll.u32 %v1857, 16
    %v2164 = vrot.slane %v2162, 1
    %v2165 = vsel %vm1865, %v2160, %v2164
    %v2167 = vshrl.u32 %v1730, 16
    %v2169 = vshll.u32 %v1730, 16
    %v2171 = vrot.slane %v2169, 1
    %v2172 = vor.u32 %v2167, %v2171
    %v2174 = vshll.u32 %v1858, 16
    %v2176 = vrot.slane %v2174, 1
    %v2177 = vsel %vm1865, %v2172, %v2176
    %v2179 = vshrl.u32 %v1731, 16
    %v2181 = vshll.u32 %v1731, 16
    %v2183 = vrot.slane %v2181, 1
    %v2184 = vor.u32 %v2179, %v2183
    %v2186 = vshll.u32 %v1859, 16
    %v2188 = vrot.slane %v2186, 1
    %v2189 = vsel %vm1865, %v2184, %v2188
    %v2191 = vshrl.u32 %v1732, 16
    %v2193 = vshll.u32 %v1732, 16
    %v2195 = vrot.slane %v2193, 1
    %v2196 = vor.u32 %v2191, %v2195
    %v2198 = vshll.u32 %v1860, 16
    %v2200 = vrot.slane %v2198, 1
    %v2201 = vsel %vm1865, %v2196, %v2200
    %v2203 = vshrl.u32 %v1733, 16
    %v2205 = vshll.u32 %v1733, 16
    %v2207 = vrot.slane %v2205, 1
    %v2208 = vor.u32 %v2203, %v2207
    %v2210 = vshll.u32 %v1861, 16
    %v2212 = vrot.slane %v2210, 1
    %v2213 = vsel %vm1865, %v2208, %v2212
    %v2215 = vshrl.u32 %v1734, 16
    %v2217 = vshll.u32 %v1734, 16
    %v2219 = vrot.slane %v2217, 1
    %v2220 = vor.u32 %v2215, %v2219
    %v2222 = vshll.u32 %v1862, 16
    %v2224 = vrot.slane %v2222, 1
    %v2225 = vsel %vm1865, %v2220, %v2224
    %v2227 = vshrl.u32 %v1735, 16
    %v2229 = vshll.u32 %v1735, 16
    %v2231 = vrot.slane %v2229, 1
    %v2232 = vor.u32 %v2227, %v2231
    %v2234 = vshll.u32 %v1863, 16
    %v2236 = vrot.slane %v2234, 1
    %v2237 = vsel %vm1865, %v2232, %v2236
    %v2239 = vshrl.u32 %v1736, 16
    %v2241 = vshll.u32 %v1736, 16
    %v2243 = vrot.slane %v2241, 1
    %v2244 = vor.u32 %v2239, %v2243
    %v2246 = vshll.u32 %v1864, 16
    %v2248 = vrot.slane %v2246, 1
    %v2249 = vsel %vm1865, %v2244, %v2248
    %v2314 = vunpack.c.l.b16 %v1541
    %v2315 = vunpack.c.l.b16 %v1542
    %v2316 = vunpack.c.l.b16 %v1543
    %v2317 = vunpack.c.l.b16 %v1544
    %v2318 = vunpack.c.l.b16 %v1545
    %v2319 = vunpack.c.l.b16 %v1546
    %v2320 = vunpack.c.l.b16 %v1547
    %v2321 = vunpack.c.l.b16 %v1548
    %v2322 = vunpack.c.l.b16 %v1549
    %v2323 = vunpack.c.l.b16 %v1550
    %v2324 = vunpack.c.l.b16 %v1551
    %v2325 = vunpack.c.l.b16 %v1552
    %v2326 = vunpack.c.l.b16 %v1553
    %v2327 = vunpack.c.l.b16 %v1554
    %v2328 = vunpack.c.l.b16 %v1555
    %v2329 = vunpack.c.l.b16 %v1556
    %v2330 = vunpack.c.l.b16 %v1559
    %v2331 = vunpack.c.l.b16 %v1560
    %v2332 = vunpack.c.l.b16 %v1561
    %v2333 = vunpack.c.l.b16 %v1562
    %v2334 = vunpack.c.l.b16 %v1563
    %v2335 = vunpack.c.l.b16 %v1564
    %v2336 = vunpack.c.l.b16 %v1565
    %v2337 = vunpack.c.l.b16 %v1566
    %v2338 = vunpack.c.l.b16 %v1567
    %v2339 = vunpack.c.l.b16 %v1568
    %v2340 = vunpack.c.l.b16 %v1569
    %v2341 = vunpack.c.l.b16 %v1570
    %v2342 = vunpack.c.l.b16 %v1571
    %v2343 = vunpack.c.l.b16 %v1572
    %v2344 = vunpack.c.l.b16 %v1573
    %v2345 = vunpack.c.l.b16 %v1574
    %v2346 = vpack.c.b16 %v1642, %v2314
    %v2347 = vpack.c.b16 %v1644, %v2315
    %v2348 = vpack.c.b16 %v1646, %v2316
    %v2349 = vpack.c.b16 %v1648, %v2317
    %v2350 = vpack.c.b16 %v1650, %v2318
    %v2351 = vpack.c.b16 %v1652, %v2319
    %v2352 = vpack.c.b16 %v1654, %v2320
    %v2353 = vpack.c.b16 %v1656, %v2321
    %v2354 = vpack.c.b16 %v1658, %v2322
    %v2355 = vpack.c.b16 %v1660, %v2323
    %v2356 = vpack.c.b16 %v1662, %v2324
    %v2357 = vpack.c.b16 %v1664, %v2325
    %v2358 = vpack.c.b16 %v1666, %v2326
    %v2359 = vpack.c.b16 %v1668, %v2327
    %v2360 = vpack.c.b16 %v1670, %v2328
    %v2361 = vpack.c.b16 %v1672, %v2329
    %v2362 = vpack.c.b16 %v1674, %v2330
    %v2363 = vpack.c.b16 %v1676, %v2331
    %v2364 = vpack.c.b16 %v1678, %v2332
    %v2365 = vpack.c.b16 %v1680, %v2333
    %v2366 = vpack.c.b16 %v1682, %v2334
    %v2367 = vpack.c.b16 %v1684, %v2335
    %v2368 = vpack.c.b16 %v1686, %v2336
    %v2369 = vpack.c.b16 %v1688, %v2337
    %v2370 = vpack.c.b16 %v1690, %v2338
    %v2371 = vpack.c.b16 %v1692, %v2339
    %v2372 = vpack.c.b16 %v1694, %v2340
    %v2373 = vpack.c.b16 %v1696, %v2341
    %v2374 = vpack.c.b16 %v1698, %v2342
    %v2375 = vpack.c.b16 %v1700, %v2343
    %v2376 = vpack.c.b16 %v1702, %v2344
    %v2377 = vpack.c.b16 %v1704, %v2345
    %vm2378 = vcmask 1046528
    %v2379 = vrot.slane %v2346, 1
    %v2380 = vrot.slane %v1833, 1
    %v2381 = vsel %vm2378, %v2379, %v2380
    %v2382 = vrot.slane %v2347, 1
    %v2383 = vrot.slane %v1834, 1
    %v2384 = vsel %vm2378, %v2382, %v2383
    %v2385 = vrot.slane %v2348, 1
    %v2386 = vrot.slane %v1835, 1
    %v2387 = vsel %vm2378, %v2385, %v2386
    %v2388 = vrot.slane %v2349, 1
    %v2389 = vrot.slane %v1836, 1
    %v2390 = vsel %vm2378, %v2388, %v2389
    %v2391 = vrot.slane %v2350, 1
    %v2392 = vrot.slane %v1837, 1
    %v2393 = vsel %vm2378, %v2391, %v2392
    %v2394 = vrot.slane %v2351, 1
    %v2395 = vrot.slane %v1838, 1
    %v2396 = vsel %vm2378, %v2394, %v2395
    %v2397 = vrot.slane %v2352, 1
    %v2398 = vrot.slane %v1839, 1
    %v2399 = vsel %vm2378, %v2397, %v2398
    %v2400 = vrot.slane %v2353, 1
    %v2401 = vrot.slane %v1840, 1
    %v2402 = vsel %vm2378, %v2400, %v2401
    %v2403 = vrot.slane %v2354, 1
    %v2404 = vrot.slane %v1841, 1
    %v2405 = vsel %vm2378, %v2403, %v2404
    %v2406 = vrot.slane %v2355, 1
    %v2407 = vrot.slane %v1842, 1
    %v2408 = vsel %vm2378, %v2406, %v2407
    %v2409 = vrot.slane %v2356, 1
    %v2410 = vrot.slane %v1843, 1
    %v2411 = vsel %vm2378, %v2409, %v2410
    %v2412 = vrot.slane %v2357, 1
    %v2413 = vrot.slane %v1844, 1
    %v2414 = vsel %vm2378, %v2412, %v2413
    %v2415 = vrot.slane %v2358, 1
    %v2416 = vrot.slane %v1845, 1
    %v2417 = vsel %vm2378, %v2415, %v2416
    %v2418 = vrot.slane %v2359, 1
    %v2419 = vrot.slane %v1846, 1
    %v2420 = vsel %vm2378, %v2418, %v2419
    %v2421 = vrot.slane %v2360, 1
    %v2422 = vrot.slane %v1847, 1
    %v2423 = vsel %vm2378, %v2421, %v2422
    %v2424 = vrot.slane %v2361, 1
    %v2425 = vrot.slane %v1848, 1
    %v2426 = vsel %vm2378, %v2424, %v2425
    %v2427 = vrot.slane %v2362, 1
    %v2428 = vrot.slane %v1849, 1
    %v2429 = vsel %vm2378, %v2427, %v2428
    %v2430 = vrot.slane %v2363, 1
    %v2431 = vrot.slane %v1850, 1
    %v2432 = vsel %vm2378, %v2430, %v2431
    %v2433 = vrot.slane %v2364, 1
    %v2434 = vrot.slane %v1851, 1
    %v2435 = vsel %vm2378, %v2433, %v2434
    %v2436 = vrot.slane %v2365, 1
    %v2437 = vrot.slane %v1852, 1
    %v2438 = vsel %vm2378, %v2436, %v2437
    %v2439 = vrot.slane %v2366, 1
    %v2440 = vrot.slane %v1853, 1
    %v2441 = vsel %vm2378, %v2439, %v2440
    %v2442 = vrot.slane %v2367, 1
    %v2443 = vrot.slane %v1854, 1
    %v2444 = vsel %vm2378, %v2442, %v2443
    %v2445 = vrot.slane %v2368, 1
    %v2446 = vrot.slane %v1855, 1
    %v2447 = vsel %vm2378, %v2445, %v2446
    %v2448 = vrot.slane %v2369, 1
    %v2449 = vrot.slane %v1856, 1
    %v2450 = vsel %vm2378, %v2448, %v2449
    %v2451 = vrot.slane %v2370, 1
    %v2452 = vrot.slane %v1857, 1
    %v2453 = vsel %vm2378, %v2451, %v2452
    %v2454 = vrot.slane %v2371, 1
    %v2455 = vrot.slane %v1858, 1
    %v2456 = vsel %vm2378, %v2454, %v2455
    %v2457 = vrot.slane %v2372, 1
    %v2458 = vrot.slane %v1859, 1
    %v2459 = vsel %vm2378, %v2457, %v2458
    %v2460 = vrot.slane %v2373, 1
    %v2461 = vrot.slane %v1860, 1
    %v2462 = vsel %vm2378, %v2460, %v2461
    %v2463 = vrot.slane %v2374, 1
    %v2464 = vrot.slane %v1861, 1
    %v2465 = vsel %vm2378, %v2463, %v2464
    %v2466 = vrot.slane %v2375, 1
    %v2467 = vrot.slane %v1862, 1
    %v2468 = vsel %vm2378, %v2466, %v2467
    %v2469 = vrot.slane %v2376, 1
    %v2470 = vrot.slane %v1863, 1
    %v2471 = vsel %vm2378, %v2469, %v2470
    %v2472 = vrot.slane %v2377, 1
    %v2473 = vrot.slane %v1864, 1
    %v2474 = vsel %vm2378, %v2472, %v2473
    %v2511 = vunpack.c.l.b16 %v1465
    %v2512 = vunpack.c.l.b16 %v1466
    %v2513 = vunpack.c.l.b16 %v1501
    %v2514 = vunpack.c.l.b16 %v1502
    %v2515 = vpack.c.b16 %v2512, %v2511
    %v2516 = vpack.c.b16 %v2514, %v2513
    %v2521 = vunpack.c.l.b16 %v1521
    %v2522 = vunpack.c.l.b16 %v1539
    %v2523 = vpack.c.b16 %v2521, %v2521
    %v2524 = vpack.c.b16 %v2522, %v2522
    %v2526 = vshrl.u32 %v2515, 16
    %v2528 = vshll.u32 %v2515, 16
    %v2530 = vrot.slane %v2528, 1
    %v2531 = vor.u32 %v2526, %v2530
    %v2533 = vshll.u32 %v2523, 16
    %v2535 = vrot.slane %v2533, 1
    %v2536 = vsel %vm1865, %v2531, %v2535
    %v2538 = vshrl.u32 %v2516, 16
    %v2540 = vshll.u32 %v2516, 16
    %v2542 = vrot.slane %v2540, 1
    %v2543 = vor.u32 %v2538, %v2542
    %v2545 = vshll.u32 %v2524, 16
    %v2547 = vrot.slane %v2545, 1
    %v2548 = vsel %vm1865, %v2543, %v2547
    %v2553 = vunpack.c.l.b16 %v1557
    %v2554 = vunpack.c.l.b16 %v1575
    %v2555 = vpack.c.b16 %v2512, %v2553
    %v2556 = vpack.c.b16 %v2514, %v2554
    %v2557 = vrot.slane %v2555, 1
    %v2558 = vrot.slane %v2523, 1
    %v2559 = vsel %vm2378, %v2557, %v2558
    %v2560 = vrot.slane %v2556, 1
    %v2561 = vrot.slane %v2524, 1
    %v2562 = vsel %vm2378, %v2560, %v2561
    %v2569 = vunpack.c.l.b16 %v1467
    %v2570 = vunpack.c.l.b16 %v1468
    %v2571 = vunpack.c.l.b16 %v1503
    %v2572 = vunpack.c.l.b16 %v1504
    %v2573 = vpack.c.b16 %v2570, %v2569
    %v2574 = vpack.c.b16 %v2572, %v2571
    %v2579 = vunpack.c.l.b16 %v1522
    %v2580 = vunpack.c.l.b16 %v1540
    %v2581 = vpack.c.b16 %v2579, %v2579
    %v2582 = vpack.c.b16 %v2580, %v2580
    %v2584 = vshrl.u32 %v2573, 16
    %v2586 = vshll.u32 %v2573, 16
    %v2588 = vrot.slane %v2586, 1
    %v2589 = vor.u32 %v2584, %v2588
    %v2591 = vshll.u32 %v2581, 16
    %v2593 = vrot.slane %v2591, 1
    %v2594 = vsel %vm1865, %v2589, %v2593
    %v2596 = vshrl.u32 %v2574, 16
    %v2598 = vshll.u32 %v2574, 16
    %v2600 = vrot.slane %v2598, 1
    %v2601 = vor.u32 %v2596, %v2600
    %v2603 = vshll.u32 %v2582, 16
    %v2605 = vrot.slane %v2603, 1
    %v2606 = vsel %vm1865, %v2601, %v2605
    %v2611 = vunpack.c.l.b16 %v1558
    %v2612 = vunpack.c.l.b16 %v1576
    %v2613 = vpack.c.b16 %v2570, %v2611
    %v2614 = vpack.c.b16 %v2572, %v2612
    %v2615 = vrot.slane %v2613, 1
    %v2616 = vrot.slane %v2581, 1
    %v2617 = vsel %vm2378, %v2615, %v2616
    %v2618 = vrot.slane %v2614, 1
    %v2619 = vrot.slane %v2582, 1
    %v2620 = vsel %vm2378, %v2618, %v2619
    %v2623 = vld [vmem:[#allocation4] sm:$0xf]
    %v2624 = vld [vmem:[#allocation4 + $0x4] sm:$0xf]
    %v2625 = vld [vmem:[#allocation4 + $0x8] sm:$0xf]
    %v2626 = vld [vmem:[#allocation4 + $0xc] sm:$0xf]
    %v2627 = vld [vmem:[#allocation4 + $0x10] sm:$0xf]
    %v2628 = vld [vmem:[#allocation4 + $0x14] sm:$0xf]
    %v2629 = vld [vmem:[#allocation4 + $0x18] sm:$0xf]
    %v2630 = vld [vmem:[#allocation4 + $0x1c] sm:$0xf]
    %v2631 = vld [vmem:[#allocation4 + $0x20] sm:$0xf]
    %v2632 = vld [vmem:[#allocation4 + $0x24] sm:$0xf]
    %v2633 = vld [vmem:[#allocation4 + $0x28] sm:$0xf]
    %v2634 = vld [vmem:[#allocation4 + $0x2c] sm:$0xf]
    %v2635 = vld [vmem:[#allocation4 + $0x30] sm:$0xf]
    %v2636 = vld [vmem:[#allocation4 + $0x34] sm:$0xf]
    %v2637 = vld [vmem:[#allocation4 + $0x38] sm:$0xf]
    %v2638 = vld [vmem:[#allocation4 + $0x3c] sm:$0xf]
    %v2639 = vld [vmem:[#allocation4 + $0x40] sm:$0xf]
    %v2640 = vld [vmem:[#allocation4 + $0x44] sm:$0xf]
    %v2641 = vld [vmem:[#allocation4 + $0x48] sm:$0xf]
    %v2642 = vld [vmem:[#allocation4 + $0x4c] sm:$0xf]
    %v2643 = vld [vmem:[#allocation4 + $0x50] sm:$0xf]
    %v2644 = vld [vmem:[#allocation4 + $0x54] sm:$0xf]
    %v2645 = vld [vmem:[#allocation4 + $0x58] sm:$0xf]
    %v2646 = vld [vmem:[#allocation4 + $0x5c] sm:$0xf]
    %v2647 = vld [vmem:[#allocation4 + $0x60] sm:$0xf]
    %v2648 = vld [vmem:[#allocation4 + $0x64] sm:$0xf]
    %v2649 = vld [vmem:[#allocation4 + $0x68] sm:$0xf]
    %v2650 = vld [vmem:[#allocation4 + $0x6c] sm:$0xf]
    %v2651 = vld [vmem:[#allocation4 + $0x70] sm:$0xf]
    %v2652 = vld [vmem:[#allocation4 + $0x74] sm:$0xf]
    %v2653 = vld [vmem:[#allocation4 + $0x78] sm:$0xf]
    %v2654 = vld [vmem:[#allocation4 + $0x7c] sm:$0xf]
    %v2655 = vld [vmem:[#allocation4 + $0x80] sm:$0xf]
    %v2656 = vld [vmem:[#allocation4 + $0x84] sm:$0xf]
    %v2657 = vld [vmem:[#allocation4 + $0x88] sm:$0xf]
    %v2658 = vld [vmem:[#allocation4 + $0x8c] sm:$0xf]
    %v2659 = vld [vmem:[#allocation4 + $0x90] sm:$0xf]
    %v2660 = vld [vmem:[#allocation4 + $0x94] sm:$0xf]
    %v2661 = vld [vmem:[#allocation4 + $0x98] sm:$0xf]
    %v2662 = vld [vmem:[#allocation4 + $0x9c] sm:$0xf]
    %v2663 = vld [vmem:[#allocation4 + $0xa0] sm:$0xf]
    %v2664 = vld [vmem:[#allocation4 + $0xa4] sm:$0xf]
    %v2665 = vld [vmem:[#allocation4 + $0xa8] sm:$0xf]
    %v2666 = vld [vmem:[#allocation4 + $0xac] sm:$0xf]
    %v2667 = vld [vmem:[#allocation4 + $0xb0] sm:$0xf]
    %v2668 = vld [vmem:[#allocation4 + $0xb4] sm:$0xf]
    %v2669 = vld [vmem:[#allocation4 + $0xb8] sm:$0xf]
    %v2670 = vld [vmem:[#allocation4 + $0xbc] sm:$0xf]
    %v2671 = vld [vmem:[#allocation4 + $0xc0] sm:$0xf]
    %v2672 = vld [vmem:[#allocation4 + $0xc4] sm:$0xf]
    %v2673 = vld [vmem:[#allocation4 + $0xc8] sm:$0xf]
    %v2674 = vld [vmem:[#allocation4 + $0xcc] sm:$0xf]
    %v2675 = vld [vmem:[#allocation4 + $0xd0] sm:$0xf]
    %v2676 = vld [vmem:[#allocation4 + $0xd4] sm:$0xf]
    %v2677 = vld [vmem:[#allocation4 + $0xd8] sm:$0xf]
    %v2678 = vld [vmem:[#allocation4 + $0xdc] sm:$0xf]
    %v2679 = vld [vmem:[#allocation4 + $0xe0] sm:$0xf]
    %v2680 = vld [vmem:[#allocation4 + $0xe4] sm:$0xf]
    %v2681 = vld [vmem:[#allocation4 + $0xe8] sm:$0xf]
    %v2682 = vld [vmem:[#allocation4 + $0xec] sm:$0xf]
    %v2683 = vld [vmem:[#allocation4 + $0xf0] sm:$0xf]
    %v2684 = vld [vmem:[#allocation4 + $0xf4] sm:$0xf]
    %v2685 = vld [vmem:[#allocation4 + $0xf8] sm:$0xf]
    %v2686 = vld [vmem:[#allocation4 + $0xfc] sm:$0xf]
    %v2687 = vld [vmem:[#allocation4 + $0x100] sm:$0xf]
    %v2688 = vld [vmem:[#allocation4 + $0x104] sm:$0xf]
    %v2689 = vld [vmem:[#allocation4 + $0x108] sm:$0xf]
    %v2690 = vld [vmem:[#allocation4 + $0x10c] sm:$0xf]
    %v2691 = vld [vmem:[#allocation4 + $0x110] sm:$0xf]
    %v2692 = vld [vmem:[#allocation4 + $0x114] sm:$0xf]
    %v2693 = vld [vmem:[#allocation4 + $0x118] sm:$0xf]
    %v2694 = vld [vmem:[#allocation4 + $0x11c] sm:$0xf]
    %v2695 = vld [vmem:[#allocation4 + $0x120] sm:$0xf]
    %v2696 = vld [vmem:[#allocation4 + $0x124] sm:$0xf]
    %v2697 = vld [vmem:[#allocation4 + $0x128] sm:$0xf]
    %v2698 = vld [vmem:[#allocation4 + $0x12c] sm:$0xf]
    %v2699 = vld [vmem:[#allocation4 + $0x130] sm:$0xf]
    %v2700 = vld [vmem:[#allocation4 + $0x134] sm:$0xf]
    %v2701 = vld [vmem:[#allocation4 + $0x138] sm:$0xf]
    %v2702 = vld [vmem:[#allocation4 + $0x13c] sm:$0xf]
    %v2703 = vld [vmem:[#allocation4 + $0x140] sm:$0xf]
    %v2704 = vld [vmem:[#allocation4 + $0x144] sm:$0xf]
    %v2705 = vld [vmem:[#allocation4 + $0x148] sm:$0xf]
    %v2706 = vld [vmem:[#allocation4 + $0x14c] sm:$0xf]
    %v2707 = vld [vmem:[#allocation4 + $0x150] sm:$0xf]
    %v2708 = vld [vmem:[#allocation4 + $0x154] sm:$0xf]
    %v2709 = vld [vmem:[#allocation4 + $0x158] sm:$0xf]
    %v2710 = vld [vmem:[#allocation4 + $0x15c] sm:$0xf]
    %v2711 = vld [vmem:[#allocation4 + $0x160] sm:$0xf]
    %v2712 = vld [vmem:[#allocation4 + $0x164] sm:$0xf]
    %v2713 = vld [vmem:[#allocation4 + $0x168] sm:$0xf]
    %v2714 = vld [vmem:[#allocation4 + $0x16c] sm:$0xf]
    %v2715 = vld [vmem:[#allocation4 + $0x170] sm:$0xf]
    %v2716 = vld [vmem:[#allocation4 + $0x174] sm:$0xf]
    %v2717 = vld [vmem:[#allocation4 + $0x178] sm:$0xf]
    %v2718 = vld [vmem:[#allocation4 + $0x17c] sm:$0xf]
    %v2719 = vld [vmem:[#allocation4 + $0x180] sm:$0xf]
    %v2720 = vld [vmem:[#allocation4 + $0x184] sm:$0xf]
    %v2721 = vld [vmem:[#allocation4 + $0x188] sm:$0xf]
    %v2722 = vld [vmem:[#allocation4 + $0x18c] sm:$0xf]
    %v2723 = vld [vmem:[#allocation4 + $0x190] sm:$0xf]
    %v2724 = vld [vmem:[#allocation4 + $0x194] sm:$0xf]
    %v2725 = vld [vmem:[#allocation4 + $0x198] sm:$0xf]
    %v2726 = vld [vmem:[#allocation4 + $0x19c] sm:$0xf]
    %v2727 = vld [vmem:[#allocation4 + $0x1a0] sm:$0xf]
    %v2728 = vld [vmem:[#allocation4 + $0x1a4] sm:$0xf]
    %v2729 = vld [vmem:[#allocation4 + $0x1a8] sm:$0xf]
    %v2730 = vld [vmem:[#allocation4 + $0x1ac] sm:$0xf]
    %v2731 = vld [vmem:[#allocation4 + $0x1b0] sm:$0xf]
    %v2732 = vld [vmem:[#allocation4 + $0x1b4] sm:$0xf]
    %v2733 = vld [vmem:[#allocation4 + $0x1b8] sm:$0xf]
    %v2734 = vld [vmem:[#allocation4 + $0x1bc] sm:$0xf]
    %v2735 = vld [vmem:[#allocation4 + $0x1c0] sm:$0xf]
    %v2736 = vld [vmem:[#allocation4 + $0x1c4] sm:$0xf]
    %v2737 = vld [vmem:[#allocation4 + $0x1c8] sm:$0xf]
    %v2738 = vld [vmem:[#allocation4 + $0x1cc] sm:$0xf]
    %v2739 = vld [vmem:[#allocation4 + $0x1d0] sm:$0xf]
    %v2740 = vld [vmem:[#allocation4 + $0x1d4] sm:$0xf]
    %v2741 = vld [vmem:[#allocation4 + $0x1d8] sm:$0xf]
    %v2742 = vld [vmem:[#allocation4 + $0x1dc] sm:$0xf]
    %v2743 = vld [vmem:[#allocation4 + $0x1e0] sm:$0xf]
    %v2744 = vld [vmem:[#allocation4 + $0x1e4] sm:$0xf]
    %v2745 = vld [vmem:[#allocation4 + $0x1e8] sm:$0xf]
    %v2746 = vld [vmem:[#allocation4 + $0x1ec] sm:$0xf]
    %v2747 = vld [vmem:[#allocation4 + $0x1f0] sm:$0xf]
    %v2748 = vld [vmem:[#allocation4 + $0x1f4] sm:$0xf]
    %v2749 = vld [vmem:[#allocation4 + $0x1f8] sm:$0xf]
    %v2750 = vld [vmem:[#allocation4 + $0x1fc] sm:$0xf]
    %v2751 = vld [vmem:[#allocation4 + $0x200] sm:$0xf]
    %v2752 = vld [vmem:[#allocation4 + $0x204] sm:$0xf]
    %v2753 = vld [vmem:[#allocation4 + $0x208] sm:$0xf]
    %v2754 = vld [vmem:[#allocation4 + $0x20c] sm:$0xf]
    %v2755 = vld [vmem:[#allocation4 + $0x210] sm:$0xf]
    %v2756 = vld [vmem:[#allocation4 + $0x214] sm:$0xf]
    %v2757 = vld [vmem:[#allocation4 + $0x218] sm:$0xf]
    %v2758 = vld [vmem:[#allocation4 + $0x21c] sm:$0xf]
    %v2759 = vld [vmem:[#allocation4 + $0x220] sm:$0xf]
    %v2760 = vld [vmem:[#allocation4 + $0x224] sm:$0xf]
    %v2761 = vld [vmem:[#allocation4 + $0x228] sm:$0xf]
    %v2762 = vld [vmem:[#allocation4 + $0x22c] sm:$0xf]
    %v2763 = vld [vmem:[#allocation4 + $0x230] sm:$0xf]
    %v2764 = vld [vmem:[#allocation4 + $0x234] sm:$0xf]
    %v2765 = vld [vmem:[#allocation4 + $0x238] sm:$0xf]
    %v2766 = vld [vmem:[#allocation4 + $0x23c] sm:$0xf]
    %v2767 = vld [vmem:[%s2] sm:$0x1]
    %v2769 = vperm.slane %v2767, 0
    %v2915 = vunpack.c.l.b16 %v2623
    %v2916 = vunpack.c.l.b16 %v2624
    %v2917 = vunpack.c.l.b16 %v2625
    %v2918 = vunpack.c.l.b16 %v2626
    %v2919 = vunpack.c.l.b16 %v2627
    %v2920 = vunpack.c.l.b16 %v2628
    %v2921 = vunpack.c.l.b16 %v2629
    %v2922 = vunpack.c.l.b16 %v2630
    %v2923 = vunpack.c.l.b16 %v2631
    %v2924 = vunpack.c.l.b16 %v2632
    %v2925 = vunpack.c.l.b16 %v2633
    %v2926 = vunpack.c.l.b16 %v2634
    %v2927 = vunpack.c.l.b16 %v2635
    %v2928 = vunpack.c.l.b16 %v2636
    %v2929 = vunpack.c.l.b16 %v2637
    %v2930 = vunpack.c.l.b16 %v2638
    %v2931 = vunpack.c.l.b16 %v2639
    %v2932 = vunpack.c.l.b16 %v2640
    %v2933 = vunpack.c.l.b16 %v2641
    %v2934 = vunpack.c.l.b16 %v2642
    %v2935 = vunpack.c.l.b16 %v2643
    %v2936 = vunpack.c.l.b16 %v2644
    %v2937 = vunpack.c.l.b16 %v2645
    %v2938 = vunpack.c.l.b16 %v2646
    %v2939 = vunpack.c.l.b16 %v2647
    %v2940 = vunpack.c.l.b16 %v2648
    %v2941 = vunpack.c.l.b16 %v2649
    %v2942 = vunpack.c.l.b16 %v2650
    %v2943 = vunpack.c.l.b16 %v2651
    %v2944 = vunpack.c.l.b16 %v2652
    %v2945 = vunpack.c.l.b16 %v2653
    %v2946 = vunpack.c.l.b16 %v2654
    %v2947 = vunpack.c.l.b16 %v2655
    %v2948 = vunpack.c.l.b16 %v2656
    %v2949 = vunpack.c.l.b16 %v2657
    %v2950 = vunpack.c.l.b16 %v2658
    %v2951 = vunpack.c.l.b16 %v2659
    %v2952 = vunpack.c.l.b16 %v2660
    %v2953 = vunpack.c.l.b16 %v2661
    %v2954 = vunpack.c.l.b16 %v2662
    %v2955 = vunpack.c.l.b16 %v2663
    %v2956 = vunpack.c.l.b16 %v2664
    %v2957 = vunpack.c.l.b16 %v2665
    %v2958 = vunpack.c.l.b16 %v2666
    %v2959 = vunpack.c.l.b16 %v2667
    %v2960 = vunpack.c.l.b16 %v2668
    %v2961 = vunpack.c.l.b16 %v2669
    %v2962 = vunpack.c.l.b16 %v2670
    %v2963 = vunpack.c.l.b16 %v2671
    %v2964 = vunpack.c.l.b16 %v2672
    %v2965 = vunpack.c.l.b16 %v2673
    %v2966 = vunpack.c.l.b16 %v2674
    %v2967 = vunpack.c.l.b16 %v2675
    %v2968 = vunpack.c.l.b16 %v2676
    %v2969 = vunpack.c.l.b16 %v2677
    %v2970 = vunpack.c.l.b16 %v2678
    %v2971 = vunpack.c.l.b16 %v2679
    %v2972 = vunpack.c.l.b16 %v2680
    %v2973 = vunpack.c.l.b16 %v2681
    %v2974 = vunpack.c.l.b16 %v2682
    %v2975 = vunpack.c.l.b16 %v2683
    %v2976 = vunpack.c.l.b16 %v2684
    %v2977 = vunpack.c.l.b16 %v2685
    %v2978 = vunpack.c.l.b16 %v2686
    %v2979 = vunpack.c.l.b16 %v2687
    %v2980 = vunpack.c.l.b16 %v2688
    %v2981 = vunpack.c.l.b16 %v2689
    %v2982 = vunpack.c.l.b16 %v2690
    %v2983 = vunpack.c.l.b16 %v2691
    %v2984 = vunpack.c.l.b16 %v2692
    %v2985 = vunpack.c.l.b16 %v2693
    %v2986 = vunpack.c.l.b16 %v2694
    %v2987 = vunpack.c.l.b16 %v2695
    %v2988 = vunpack.c.l.b16 %v2696
    %v2989 = vunpack.c.l.b16 %v2697
    %v2990 = vunpack.c.l.b16 %v2698
    %v2991 = vunpack.c.l.b16 %v2699
    %v2992 = vunpack.c.l.b16 %v2700
    %v2993 = vunpack.c.l.b16 %v2701
    %v2994 = vunpack.c.l.b16 %v2702
    %v2995 = vunpack.c.l.b16 %v2703
    %v2996 = vunpack.c.l.b16 %v2704
    %v2997 = vunpack.c.l.b16 %v2705
    %v2998 = vunpack.c.l.b16 %v2706
    %v2999 = vunpack.c.l.b16 %v2707
    %v3000 = vunpack.c.l.b16 %v2708
    %v3001 = vunpack.c.l.b16 %v2709
    %v3002 = vunpack.c.l.b16 %v2710
    %v3003 = vunpack.c.l.b16 %v2711
    %v3004 = vunpack.c.l.b16 %v2712
    %v3005 = vunpack.c.l.b16 %v2713
    %v3006 = vunpack.c.l.b16 %v2714
    %v3007 = vunpack.c.l.b16 %v2715
    %v3008 = vunpack.c.l.b16 %v2716
    %v3009 = vunpack.c.l.b16 %v2717
    %v3010 = vunpack.c.l.b16 %v2718
    %v3011 = vunpack.c.l.b16 %v2719
    %v3012 = vunpack.c.l.b16 %v2720
    %v3013 = vunpack.c.l.b16 %v2721
    %v3014 = vunpack.c.l.b16 %v2722
    %v3015 = vunpack.c.l.b16 %v2723
    %v3016 = vunpack.c.l.b16 %v2724
    %v3017 = vunpack.c.l.b16 %v2725
    %v3018 = vunpack.c.l.b16 %v2726
    %v3019 = vunpack.c.l.b16 %v2727
    %v3020 = vunpack.c.l.b16 %v2728
    %v3021 = vunpack.c.l.b16 %v2729
    %v3022 = vunpack.c.l.b16 %v2730
    %v3023 = vunpack.c.l.b16 %v2731
    %v3024 = vunpack.c.l.b16 %v2732
    %v3025 = vunpack.c.l.b16 %v2733
    %v3026 = vunpack.c.l.b16 %v2734
    %v3027 = vunpack.c.l.b16 %v2735
    %v3028 = vunpack.c.l.b16 %v2736
    %v3029 = vunpack.c.l.b16 %v2737
    %v3030 = vunpack.c.l.b16 %v2738
    %v3031 = vunpack.c.l.b16 %v2739
    %v3032 = vunpack.c.l.b16 %v2740
    %v3033 = vunpack.c.l.b16 %v2741
    %v3034 = vunpack.c.l.b16 %v2742
    %v3035 = vunpack.c.l.b16 %v2743
    %v3036 = vunpack.c.l.b16 %v2744
    %v3037 = vunpack.c.l.b16 %v2745
    %v3038 = vunpack.c.l.b16 %v2746
    %v3039 = vunpack.c.l.b16 %v2747
    %v3040 = vunpack.c.l.b16 %v2748
    %v3041 = vunpack.c.l.b16 %v2749
    %v3042 = vunpack.c.l.b16 %v2750
    %v3043 = vunpack.c.l.b16 %v2751
    %v3044 = vunpack.c.l.b16 %v2752
    %v3045 = vunpack.c.l.b16 %v2753
    %v3046 = vunpack.c.l.b16 %v2754
    %v3047 = vunpack.c.l.b16 %v2755
    %v3048 = vunpack.c.l.b16 %v2756
    %v3049 = vunpack.c.l.b16 %v2757
    %v3050 = vunpack.c.l.b16 %v2758
    %v3051 = vunpack.c.l.b16 %v2759
    %v3052 = vunpack.c.l.b16 %v2760
    %v3053 = vunpack.c.l.b16 %v2761
    %v3054 = vunpack.c.l.b16 %v2762
    %v3055 = vunpack.c.l.b16 %v2763
    %v3056 = vunpack.c.l.b16 %v2764
    %v3057 = vunpack.c.l.b16 %v2765
    %v3058 = vunpack.c.l.b16 %v2766
    %v3059 = vpack.c.b16 %v2916, %v2915
    %v3060 = vpack.c.b16 %v2918, %v2917
    %v3061 = vpack.c.b16 %v2920, %v2919
    %v3062 = vpack.c.b16 %v2922, %v2921
    %v3063 = vpack.c.b16 %v2924, %v2923
    %v3064 = vpack.c.b16 %v2926, %v2925
    %v3065 = vpack.c.b16 %v2928, %v2927
    %v3066 = vpack.c.b16 %v2930, %v2929
    %v3067 = vpack.c.b16 %v2932, %v2931
    %v3068 = vpack.c.b16 %v2934, %v2933
    %v3069 = vpack.c.b16 %v2936, %v2935
    %v3070 = vpack.c.b16 %v2938, %v2937
    %v3071 = vpack.c.b16 %v2940, %v2939
    %v3072 = vpack.c.b16 %v2942, %v2941
    %v3073 = vpack.c.b16 %v2944, %v2943
    %v3074 = vpack.c.b16 %v2946, %v2945
    %v3075 = vpack.c.b16 %v2948, %v2947
    %v3076 = vpack.c.b16 %v2950, %v2949
    %v3077 = vpack.c.b16 %v2952, %v2951
    %v3078 = vpack.c.b16 %v2954, %v2953
    %v3079 = vpack.c.b16 %v2956, %v2955
    %v3080 = vpack.c.b16 %v2958, %v2957
    %v3081 = vpack.c.b16 %v2960, %v2959
    %v3082 = vpack.c.b16 %v2962, %v2961
    %v3083 = vpack.c.b16 %v2964, %v2963
    %v3084 = vpack.c.b16 %v2966, %v2965
    %v3085 = vpack.c.b16 %v2968, %v2967
    %v3086 = vpack.c.b16 %v2970, %v2969
    %v3087 = vpack.c.b16 %v2972, %v2971
    %v3088 = vpack.c.b16 %v2974, %v2973
    %v3089 = vpack.c.b16 %v2976, %v2975
    %v3090 = vpack.c.b16 %v2978, %v2977
    %v3091 = vpack.c.b16 %v2980, %v2979
    %v3092 = vpack.c.b16 %v2982, %v2981
    %v3093 = vpack.c.b16 %v2984, %v2983
    %v3094 = vpack.c.b16 %v2986, %v2985
    %v3095 = vpack.c.b16 %v2988, %v2987
    %v3096 = vpack.c.b16 %v2990, %v2989
    %v3097 = vpack.c.b16 %v2992, %v2991
    %v3098 = vpack.c.b16 %v2994, %v2993
    %v3099 = vpack.c.b16 %v2996, %v2995
    %v3100 = vpack.c.b16 %v2998, %v2997
    %v3101 = vpack.c.b16 %v3000, %v2999
    %v3102 = vpack.c.b16 %v3002, %v3001
    %v3103 = vpack.c.b16 %v3004, %v3003
    %v3104 = vpack.c.b16 %v3006, %v3005
    %v3105 = vpack.c.b16 %v3008, %v3007
    %v3106 = vpack.c.b16 %v3010, %v3009
    %v3107 = vpack.c.b16 %v3012, %v3011
    %v3108 = vpack.c.b16 %v3014, %v3013
    %v3109 = vpack.c.b16 %v3016, %v3015
    %v3110 = vpack.c.b16 %v3018, %v3017
    %v3111 = vpack.c.b16 %v3020, %v3019
    %v3112 = vpack.c.b16 %v3022, %v3021
    %v3113 = vpack.c.b16 %v3024, %v3023
    %v3114 = vpack.c.b16 %v3026, %v3025
    %v3115 = vpack.c.b16 %v3028, %v3027
    %v3116 = vpack.c.b16 %v3030, %v3029
    %v3117 = vpack.c.b16 %v3032, %v3031
    %v3118 = vpack.c.b16 %v3034, %v3033
    %v3119 = vpack.c.b16 %v3036, %v3035
    %v3120 = vpack.c.b16 %v3038, %v3037
    %v3121 = vpack.c.b16 %v3040, %v3039
    %v3122 = vpack.c.b16 %v3042, %v3041
    %v3123 = vpack.c.b16 %v3044, %v3043
    %v3124 = vpack.c.b16 %v3046, %v3045
    %v3125 = vpack.c.b16 %v3048, %v3047
    %v3126 = vpack.c.b16 %v3050, %v3049
    %v3127 = vpack.c.b16 %v3052, %v3051
    %v3128 = vpack.c.b16 %v3054, %v3053
    %v3129 = vpack.c.b16 %v3056, %v3055
    %v3130 = vpack.c.b16 %v3058, %v3057
    %3203 = vmatpush.bf16.msra.mxu0 %v3066
    %3204 = vmatpush.bf16.msra.mxu0 %v3065
    %3205 = vmatpush.bf16.msra.mxu0 %v3064
    %3206 = vmatpush.bf16.msra.mxu0 %v3063
    %3207 = vmatpush.bf16.msra.mxu0 %v3062
    %3208 = vmatpush.bf16.msra.mxu0 %v3061
    %3209 = vmatpush.bf16.msra.mxu0 %v3060
    %3210 = vmatpush.bf16.msra.mxu0 %v3059
    %3211 = vmatmul.bf16.gmra.mxu0 %v1705
    %v3212 = vpop.f32.mrf.mxu0
    %v3213 = vadd.f32 %v2769, %v3212
    %v3214 = vpop.f32.mrf.mxu0
    %v3215 = vadd.f32 %v2769, %v3214
    %3216 = vmatmul.bf16.gmra.mxu0 %v1706
    %v3217 = vpop.f32.mrf.mxu0
    %v3218 = vadd.f32 %v2769, %v3217
    %v3219 = vpop.f32.mrf.mxu0
    %v3220 = vadd.f32 %v2769, %v3219
    %3221 = vmatmul.bf16.gmra.mxu0 %v1707
    %v3222 = vpop.f32.mrf.mxu0
    %v3223 = vadd.f32 %v2769, %v3222
    %v3224 = vpop.f32.mrf.mxu0
    %v3225 = vadd.f32 %v2769, %v3224
    %3226 = vmatmul.bf16.gmra.mxu0 %v1708
    %v3227 = vpop.f32.mrf.mxu0
    %v3228 = vadd.f32 %v2769, %v3227
    %v3229 = vpop.f32.mrf.mxu0
    %v3230 = vadd.f32 %v2769, %v3229
    %3231 = vmatmul.bf16.gmra.mxu0 %v1709
    %v3232 = vpop.f32.mrf.mxu0
    %v3233 = vadd.f32 %v2769, %v3232
    %v3234 = vpop.f32.mrf.mxu0
    %v3235 = vadd.f32 %v2769, %v3234
    %3236 = vmatmul.bf16.gmra.mxu0 %v1710
    %v3237 = vpop.f32.mrf.mxu0
    %v3238 = vadd.f32 %v2769, %v3237
    %v3239 = vpop.f32.mrf.mxu0
    %v3240 = vadd.f32 %v2769, %v3239
    %3241 = vmatmul.bf16.gmra.mxu0 %v1711
    %v3242 = vpop.f32.mrf.mxu0
    %v3243 = vadd.f32 %v2769, %v3242
    %v3244 = vpop.f32.mrf.mxu0
    %v3245 = vadd.f32 %v2769, %v3244
    %3246 = vmatmul.bf16.gmra.mxu0 %v1712
    %v3247 = vpop.f32.mrf.mxu0
    %v3248 = vadd.f32 %v2769, %v3247
    %v3249 = vpop.f32.mrf.mxu0
    %v3250 = vadd.f32 %v2769, %v3249
    %3251 = vmatmul.bf16.gmra.mxu0 %v1713
    %v3252 = vpop.f32.mrf.mxu0
    %v3253 = vadd.f32 %v2769, %v3252
    %v3254 = vpop.f32.mrf.mxu0
    %v3255 = vadd.f32 %v2769, %v3254
    %3256 = vmatmul.bf16.gmra.mxu0 %v1714
    %v3257 = vpop.f32.mrf.mxu0
    %v3258 = vadd.f32 %v2769, %v3257
    %v3259 = vpop.f32.mrf.mxu0
    %v3260 = vadd.f32 %v2769, %v3259
    %3261 = vmatmul.bf16.gmra.mxu0 %v1715
    %v3262 = vpop.f32.mrf.mxu0
    %v3263 = vadd.f32 %v2769, %v3262
    %v3264 = vpop.f32.mrf.mxu0
    %v3265 = vadd.f32 %v2769, %v3264
    %3266 = vmatmul.bf16.gmra.mxu0 %v1716
    %v3267 = vpop.f32.mrf.mxu0
    %v3268 = vadd.f32 %v2769, %v3267
    %v3269 = vpop.f32.mrf.mxu0
    %v3270 = vadd.f32 %v2769, %v3269
    %3271 = vmatmul.bf16.gmra.mxu0 %v1717
    %v3272 = vpop.f32.mrf.mxu0
    %v3273 = vadd.f32 %v2769, %v3272
    %v3274 = vpop.f32.mrf.mxu0
    %v3275 = vadd.f32 %v2769, %v3274
    %3276 = vmatmul.bf16.gmra.mxu0 %v1718
    %v3277 = vpop.f32.mrf.mxu0
    %v3278 = vadd.f32 %v2769, %v3277
    %v3279 = vpop.f32.mrf.mxu0
    %v3280 = vadd.f32 %v2769, %v3279
    %3281 = vmatmul.bf16.gmra.mxu0 %v1719
    %v3282 = vpop.f32.mrf.mxu0
    %v3283 = vadd.f32 %v2769, %v3282
    %v3284 = vpop.f32.mrf.mxu0
    %v3285 = vadd.f32 %v2769, %v3284
    %3286 = vmatmul.bf16.gmra.mxu0 %v1720
    %v3287 = vpop.f32.mrf.mxu0
    %v3288 = vadd.f32 %v2769, %v3287
    %v3289 = vpop.f32.mrf.mxu0
    %v3290 = vadd.f32 %v2769, %v3289
    %3291 = vmatmul.bf16.gmra.mxu0 %v1721
    %v3292 = vpop.f32.mrf.mxu0
    %v3293 = vadd.f32 %v2769, %v3292
    %v3294 = vpop.f32.mrf.mxu0
    %v3295 = vadd.f32 %v2769, %v3294
    %3296 = vmatmul.bf16.gmra.mxu0 %v1722
    %v3297 = vpop.f32.mrf.mxu0
    %v3298 = vadd.f32 %v2769, %v3297
    %v3299 = vpop.f32.mrf.mxu0
    %v3300 = vadd.f32 %v2769, %v3299
    %3301 = vmatmul.bf16.gmra.mxu0 %v1723
    %v3302 = vpop.f32.mrf.mxu0
    %v3303 = vadd.f32 %v2769, %v3302
    %v3304 = vpop.f32.mrf.mxu0
    %v3305 = vadd.f32 %v2769, %v3304
    %3306 = vmatmul.bf16.gmra.mxu0 %v1724
    %v3307 = vpop.f32.mrf.mxu0
    %v3308 = vadd.f32 %v2769, %v3307
    %v3309 = vpop.f32.mrf.mxu0
    %v3310 = vadd.f32 %v2769, %v3309
    %3311 = vmatmul.bf16.gmra.mxu0 %v1725
    %v3312 = vpop.f32.mrf.mxu0
    %v3313 = vadd.f32 %v2769, %v3312
    %v3314 = vpop.f32.mrf.mxu0
    %v3315 = vadd.f32 %v2769, %v3314
    %3316 = vmatmul.bf16.gmra.mxu0 %v1726
    %v3317 = vpop.f32.mrf.mxu0
    %v3318 = vadd.f32 %v2769, %v3317
    %v3319 = vpop.f32.mrf.mxu0
    %v3320 = vadd.f32 %v2769, %v3319
    %3321 = vmatmul.bf16.gmra.mxu0 %v1727
    %v3322 = vpop.f32.mrf.mxu0
    %v3323 = vadd.f32 %v2769, %v3322
    %v3324 = vpop.f32.mrf.mxu0
    %v3325 = vadd.f32 %v2769, %v3324
    %3326 = vmatmul.bf16.gmra.mxu0 %v1728
    %v3327 = vpop.f32.mrf.mxu0
    %v3328 = vadd.f32 %v2769, %v3327
    %v3329 = vpop.f32.mrf.mxu0
    %v3330 = vadd.f32 %v2769, %v3329
    %3331 = vmatmul.bf16.gmra.mxu0 %v1729
    %v3332 = vpop.f32.mrf.mxu0
    %v3333 = vadd.f32 %v2769, %v3332
    %v3334 = vpop.f32.mrf.mxu0
    %v3335 = vadd.f32 %v2769, %v3334
    %3336 = vmatmul.bf16.gmra.mxu0 %v1730
    %v3337 = vpop.f32.mrf.mxu0
    %v3338 = vadd.f32 %v2769, %v3337
    %v3339 = vpop.f32.mrf.mxu0
    %v3340 = vadd.f32 %v2769, %v3339
    %3341 = vmatmul.bf16.gmra.mxu0 %v1731
    %v3342 = vpop.f32.mrf.mxu0
    %v3343 = vadd.f32 %v2769, %v3342
    %v3344 = vpop.f32.mrf.mxu0
    %v3345 = vadd.f32 %v2769, %v3344
    %3346 = vmatmul.bf16.gmra.mxu0 %v1732
    %v3347 = vpop.f32.mrf.mxu0
    %v3348 = vadd.f32 %v2769, %v3347
    %v3349 = vpop.f32.mrf.mxu0
    %v3350 = vadd.f32 %v2769, %v3349
    %3351 = vmatmul.bf16.gmra.mxu0 %v1733
    %v3352 = vpop.f32.mrf.mxu0
    %v3353 = vadd.f32 %v2769, %v3352
    %v3354 = vpop.f32.mrf.mxu0
    %v3355 = vadd.f32 %v2769, %v3354
    %3356 = vmatmul.bf16.gmra.mxu0 %v1734
    %v3357 = vpop.f32.mrf.mxu0
    %v3358 = vadd.f32 %v2769, %v3357
    %v3359 = vpop.f32.mrf.mxu0
    %v3360 = vadd.f32 %v2769, %v3359
    %3361 = vmatmul.bf16.gmra.mxu0 %v1735
    %v3362 = vpop.f32.mrf.mxu0
    %v3363 = vadd.f32 %v2769, %v3362
    %v3364 = vpop.f32.mrf.mxu0
    %v3365 = vadd.f32 %v2769, %v3364
    %3366 = vmatmul.bf16.gmra.mxu0 %v1736
    %v3367 = vpop.f32.mrf.mxu0
    %v3368 = vadd.f32 %v2769, %v3367
    %v3369 = vpop.f32.mrf.mxu0
    %v3370 = vadd.f32 %v2769, %v3369
    %3371 = vdwg.mxu0
    %3372 = vmatpush.bf16.msra.mxu0 %v3074
    %3373 = vmatpush.bf16.msra.mxu0 %v3073
    %3374 = vmatpush.bf16.msra.mxu0 %v3072
    %3375 = vmatpush.bf16.msra.mxu0 %v3071
    %3376 = vmatpush.bf16.msra.mxu0 %v3070
    %3377 = vmatpush.bf16.msra.mxu0 %v3069
    %3378 = vmatpush.bf16.msra.mxu0 %v3068
    %3379 = vmatpush.bf16.msra.mxu0 %v3067
    %3380 = vmatmul.bf16.gmra.mxu0 %v1877
    %v3381 = vpop.f32.mrf.mxu0
    %v3382 = vadd.f32 %v3213, %v3381
    %v3383 = vpop.f32.mrf.mxu0
    %v3384 = vadd.f32 %v3215, %v3383
    %3385 = vmatmul.bf16.gmra.mxu0 %v1889
    %v3386 = vpop.f32.mrf.mxu0
    %v3387 = vadd.f32 %v3218, %v3386
    %v3388 = vpop.f32.mrf.mxu0
    %v3389 = vadd.f32 %v3220, %v3388
    %3390 = vmatmul.bf16.gmra.mxu0 %v1901
    %v3391 = vpop.f32.mrf.mxu0
    %v3392 = vadd.f32 %v3223, %v3391
    %v3393 = vpop.f32.mrf.mxu0
    %v3394 = vadd.f32 %v3225, %v3393
    %3395 = vmatmul.bf16.gmra.mxu0 %v1913
    %v3396 = vpop.f32.mrf.mxu0
    %v3397 = vadd.f32 %v3228, %v3396
    %v3398 = vpop.f32.mrf.mxu0
    %v3399 = vadd.f32 %v3230, %v3398
    %3400 = vmatmul.bf16.gmra.mxu0 %v1925
    %v3401 = vpop.f32.mrf.mxu0
    %v3402 = vadd.f32 %v3233, %v3401
    %v3403 = vpop.f32.mrf.mxu0
    %v3404 = vadd.f32 %v3235, %v3403
    %3405 = vmatmul.bf16.gmra.mxu0 %v1937
    %v3406 = vpop.f32.mrf.mxu0
    %v3407 = vadd.f32 %v3238, %v3406
    %v3408 = vpop.f32.mrf.mxu0
    %v3409 = vadd.f32 %v3240, %v3408
    %3410 = vmatmul.bf16.gmra.mxu0 %v1949
    %v3411 = vpop.f32.mrf.mxu0
    %v3412 = vadd.f32 %v3243, %v3411
    %v3413 = vpop.f32.mrf.mxu0
    %v3414 = vadd.f32 %v3245, %v3413
    %3415 = vmatmul.bf16.gmra.mxu0 %v1961
    %v3416 = vpop.f32.mrf.mxu0
    %v3417 = vadd.f32 %v3248, %v3416
    %v3418 = vpop.f32.mrf.mxu0
    %v3419 = vadd.f32 %v3250, %v3418
    %3420 = vmatmul.bf16.gmra.mxu0 %v1973
    %v3421 = vpop.f32.mrf.mxu0
    %v3422 = vadd.f32 %v3253, %v3421
    %v3423 = vpop.f32.mrf.mxu0
    %v3424 = vadd.f32 %v3255, %v3423
    %3425 = vmatmul.bf16.gmra.mxu0 %v1985
    %v3426 = vpop.f32.mrf.mxu0
    %v3427 = vadd.f32 %v3258, %v3426
    %v3428 = vpop.f32.mrf.mxu0
    %v3429 = vadd.f32 %v3260, %v3428
    %3430 = vmatmul.bf16.gmra.mxu0 %v1997
    %v3431 = vpop.f32.mrf.mxu0
    %v3432 = vadd.f32 %v3263, %v3431
    %v3433 = vpop.f32.mrf.mxu0
    %v3434 = vadd.f32 %v3265, %v3433
    %3435 = vmatmul.bf16.gmra.mxu0 %v2009
    %v3436 = vpop.f32.mrf.mxu0
    %v3437 = vadd.f32 %v3268, %v3436
    %v3438 = vpop.f32.mrf.mxu0
    %v3439 = vadd.f32 %v3270, %v3438
    %3440 = vmatmul.bf16.gmra.mxu0 %v2021
    %v3441 = vpop.f32.mrf.mxu0
    %v3442 = vadd.f32 %v3273, %v3441
    %v3443 = vpop.f32.mrf.mxu0
    %v3444 = vadd.f32 %v3275, %v3443
    %3445 = vmatmul.bf16.gmra.mxu0 %v2033
    %v3446 = vpop.f32.mrf.mxu0
    %v3447 = vadd.f32 %v3278, %v3446
    %v3448 = vpop.f32.mrf.mxu0
    %v3449 = vadd.f32 %v3280, %v3448
    %3450 = vmatmul.bf16.gmra.mxu0 %v2045
    %v3451 = vpop.f32.mrf.mxu0
    %v3452 = vadd.f32 %v3283, %v3451
    %v3453 = vpop.f32.mrf.mxu0
    %v3454 = vadd.f32 %v3285, %v3453
    %3455 = vmatmul.bf16.gmra.mxu0 %v2057
    %v3456 = vpop.f32.mrf.mxu0
    %v3457 = vadd.f32 %v3288, %v3456
    %v3458 = vpop.f32.mrf.mxu0
    %v3459 = vadd.f32 %v3290, %v3458
    %3460 = vmatmul.bf16.gmra.mxu0 %v2069
    %v3461 = vpop.f32.mrf.mxu0
    %v3462 = vadd.f32 %v3293, %v3461
    %v3463 = vpop.f32.mrf.mxu0
    %v3464 = vadd.f32 %v3295, %v3463
    %3465 = vmatmul.bf16.gmra.mxu0 %v2081
    %v3466 = vpop.f32.mrf.mxu0
    %v3467 = vadd.f32 %v3298, %v3466
    %v3468 = vpop.f32.mrf.mxu0
    %v3469 = vadd.f32 %v3300, %v3468
    %3470 = vmatmul.bf16.gmra.mxu0 %v2093
    %v3471 = vpop.f32.mrf.mxu0
    %v3472 = vadd.f32 %v3303, %v3471
    %v3473 = vpop.f32.mrf.mxu0
    %v3474 = vadd.f32 %v3305, %v3473
    %3475 = vmatmul.bf16.gmra.mxu0 %v2105
    %v3476 = vpop.f32.mrf.mxu0
    %v3477 = vadd.f32 %v3308, %v3476
    %v3478 = vpop.f32.mrf.mxu0
    %v3479 = vadd.f32 %v3310, %v3478
    %3480 = vmatmul.bf16.gmra.mxu0 %v2117
    %v3481 = vpop.f32.mrf.mxu0
    %v3482 = vadd.f32 %v3313, %v3481
    %v3483 = vpop.f32.mrf.mxu0
    %v3484 = vadd.f32 %v3315, %v3483
    %3485 = vmatmul.bf16.gmra.mxu0 %v2129
    %v3486 = vpop.f32.mrf.mxu0
    %v3487 = vadd.f32 %v3318, %v3486
    %v3488 = vpop.f32.mrf.mxu0
    %v3489 = vadd.f32 %v3320, %v3488
    %3490 = vmatmul.bf16.gmra.mxu0 %v2141
    %v3491 = vpop.f32.mrf.mxu0
    %v3492 = vadd.f32 %v3323, %v3491
    %v3493 = vpop.f32.mrf.mxu0
    %v3494 = vadd.f32 %v3325, %v3493
    %3495 = vmatmul.bf16.gmra.mxu0 %v2153
    %v3496 = vpop.f32.mrf.mxu0
    %v3497 = vadd.f32 %v3328, %v3496
    %v3498 = vpop.f32.mrf.mxu0
    %v3499 = vadd.f32 %v3330, %v3498
    %3500 = vmatmul.bf16.gmra.mxu0 %v2165
    %v3501 = vpop.f32.mrf.mxu0
    %v3502 = vadd.f32 %v3333, %v3501
    %v3503 = vpop.f32.mrf.mxu0
    %v3504 = vadd.f32 %v3335, %v3503
    %3505 = vmatmul.bf16.gmra.mxu0 %v2177
    %v3506 = vpop.f32.mrf.mxu0
    %v3507 = vadd.f32 %v3338, %v3506
    %v3508 = vpop.f32.mrf.mxu0
    %v3509 = vadd.f32 %v3340, %v3508
    %3510 = vmatmul.bf16.gmra.mxu0 %v2189
    %v3511 = vpop.f32.mrf.mxu0
    %v3512 = vadd.f32 %v3343, %v3511
    %v3513 = vpop.f32.mrf.mxu0
    %v3514 = vadd.f32 %v3345, %v3513
    %3515 = vmatmul.bf16.gmra.mxu0 %v2201
    %v3516 = vpop.f32.mrf.mxu0
    %v3517 = vadd.f32 %v3348, %v3516
    %v3518 = vpop.f32.mrf.mxu0
    %v3519 = vadd.f32 %v3350, %v3518
    %3520 = vmatmul.bf16.gmra.mxu0 %v2213
    %v3521 = vpop.f32.mrf.mxu0
    %v3522 = vadd.f32 %v3353, %v3521
    %v3523 = vpop.f32.mrf.mxu0
    %v3524 = vadd.f32 %v3355, %v3523
    %3525 = vmatmul.bf16.gmra.mxu0 %v2225
    %v3526 = vpop.f32.mrf.mxu0
    %v3527 = vadd.f32 %v3358, %v3526
    %v3528 = vpop.f32.mrf.mxu0
    %v3529 = vadd.f32 %v3360, %v3528
    %3530 = vmatmul.bf16.gmra.mxu0 %v2237
    %v3531 = vpop.f32.mrf.mxu0
    %v3532 = vadd.f32 %v3363, %v3531
    %v3533 = vpop.f32.mrf.mxu0
    %v3534 = vadd.f32 %v3365, %v3533
    %3535 = vmatmul.bf16.gmra.mxu0 %v2249
    %v3536 = vpop.f32.mrf.mxu0
    %v3537 = vadd.f32 %v3368, %v3536
    %v3538 = vpop.f32.mrf.mxu0
    %v3539 = vadd.f32 %v3370, %v3538
    %3540 = vdwg.mxu0
    %3541 = vmatpush.bf16.msra.mxu0 %v3082
    %3542 = vmatpush.bf16.msra.mxu0 %v3081
    %3543 = vmatpush.bf16.msra.mxu0 %v3080
    %3544 = vmatpush.bf16.msra.mxu0 %v3079
    %3545 = vmatpush.bf16.msra.mxu0 %v3078
    %3546 = vmatpush.bf16.msra.mxu0 %v3077
    %3547 = vmatpush.bf16.msra.mxu0 %v3076
    %3548 = vmatpush.bf16.msra.mxu0 %v3075
    %3549 = vmatmul.bf16.gmra.mxu0 %v2381
    %v3550 = vpop.f32.mrf.mxu0
    %v3551 = vadd.f32 %v3382, %v3550
    %v3552 = vpop.f32.mrf.mxu0
    %v3553 = vadd.f32 %v3384, %v3552
    %3554 = vmatmul.bf16.gmra.mxu0 %v2384
    %v3555 = vpop.f32.mrf.mxu0
    %v3556 = vadd.f32 %v3387, %v3555
    %v3557 = vpop.f32.mrf.mxu0
    %v3558 = vadd.f32 %v3389, %v3557
    %3559 = vmatmul.bf16.gmra.mxu0 %v2387
    %v3560 = vpop.f32.mrf.mxu0
    %v3561 = vadd.f32 %v3392, %v3560
    %v3562 = vpop.f32.mrf.mxu0
    %v3563 = vadd.f32 %v3394, %v3562
    %3564 = vmatmul.bf16.gmra.mxu0 %v2390
    %v3565 = vpop.f32.mrf.mxu0
    %v3566 = vadd.f32 %v3397, %v3565
    %v3567 = vpop.f32.mrf.mxu0
    %v3568 = vadd.f32 %v3399, %v3567
    %3569 = vmatmul.bf16.gmra.mxu0 %v2393
    %v3570 = vpop.f32.mrf.mxu0
    %v3571 = vadd.f32 %v3402, %v3570
    %v3572 = vpop.f32.mrf.mxu0
    %v3573 = vadd.f32 %v3404, %v3572
    %3574 = vmatmul.bf16.gmra.mxu0 %v2396
    %v3575 = vpop.f32.mrf.mxu0
    %v3576 = vadd.f32 %v3407, %v3575
    %v3577 = vpop.f32.mrf.mxu0
    %v3578 = vadd.f32 %v3409, %v3577
    %3579 = vmatmul.bf16.gmra.mxu0 %v2399
    %v3580 = vpop.f32.mrf.mxu0
    %v3581 = vadd.f32 %v3412, %v3580
    %v3582 = vpop.f32.mrf.mxu0
    %v3583 = vadd.f32 %v3414, %v3582
    %3584 = vmatmul.bf16.gmra.mxu0 %v2402
    %v3585 = vpop.f32.mrf.mxu0
    %v3586 = vadd.f32 %v3417, %v3585
    %v3587 = vpop.f32.mrf.mxu0
    %v3588 = vadd.f32 %v3419, %v3587
    %3589 = vmatmul.bf16.gmra.mxu0 %v2405
    %v3590 = vpop.f32.mrf.mxu0
    %v3591 = vadd.f32 %v3422, %v3590
    %v3592 = vpop.f32.mrf.mxu0
    %v3593 = vadd.f32 %v3424, %v3592
    %3594 = vmatmul.bf16.gmra.mxu0 %v2408
    %v3595 = vpop.f32.mrf.mxu0
    %v3596 = vadd.f32 %v3427, %v3595
    %v3597 = vpop.f32.mrf.mxu0
    %v3598 = vadd.f32 %v3429, %v3597
    %3599 = vmatmul.bf16.gmra.mxu0 %v2411
    %v3600 = vpop.f32.mrf.mxu0
    %v3601 = vadd.f32 %v3432, %v3600
    %v3602 = vpop.f32.mrf.mxu0
    %v3603 = vadd.f32 %v3434, %v3602
    %3604 = vmatmul.bf16.gmra.mxu0 %v2414
    %v3605 = vpop.f32.mrf.mxu0
    %v3606 = vadd.f32 %v3437, %v3605
    %v3607 = vpop.f32.mrf.mxu0
    %v3608 = vadd.f32 %v3439, %v3607
    %3609 = vmatmul.bf16.gmra.mxu0 %v2417
    %v3610 = vpop.f32.mrf.mxu0
    %v3611 = vadd.f32 %v3442, %v3610
    %v3612 = vpop.f32.mrf.mxu0
    %v3613 = vadd.f32 %v3444, %v3612
    %3614 = vmatmul.bf16.gmra.mxu0 %v2420
    %v3615 = vpop.f32.mrf.mxu0
    %v3616 = vadd.f32 %v3447, %v3615
    %v3617 = vpop.f32.mrf.mxu0
    %v3618 = vadd.f32 %v3449, %v3617
    %3619 = vmatmul.bf16.gmra.mxu0 %v2423
    %v3620 = vpop.f32.mrf.mxu0
    %v3621 = vadd.f32 %v3452, %v3620
    %v3622 = vpop.f32.mrf.mxu0
    %v3623 = vadd.f32 %v3454, %v3622
    %3624 = vmatmul.bf16.gmra.mxu0 %v2426
    %v3625 = vpop.f32.mrf.mxu0
    %v3626 = vadd.f32 %v3457, %v3625
    %v3627 = vpop.f32.mrf.mxu0
    %v3628 = vadd.f32 %v3459, %v3627
    %3629 = vmatmul.bf16.gmra.mxu0 %v2429
    %v3630 = vpop.f32.mrf.mxu0
    %v3631 = vadd.f32 %v3462, %v3630
    %v3632 = vpop.f32.mrf.mxu0
    %v3633 = vadd.f32 %v3464, %v3632
    %3634 = vmatmul.bf16.gmra.mxu0 %v2432
    %v3635 = vpop.f32.mrf.mxu0
    %v3636 = vadd.f32 %v3467, %v3635
    %v3637 = vpop.f32.mrf.mxu0
    %v3638 = vadd.f32 %v3469, %v3637
    %3639 = vmatmul.bf16.gmra.mxu0 %v2435
    %v3640 = vpop.f32.mrf.mxu0
    %v3641 = vadd.f32 %v3472, %v3640
    %v3642 = vpop.f32.mrf.mxu0
    %v3643 = vadd.f32 %v3474, %v3642
    %3644 = vmatmul.bf16.gmra.mxu0 %v2438
    %v3645 = vpop.f32.mrf.mxu0
    %v3646 = vadd.f32 %v3477, %v3645
    %v3647 = vpop.f32.mrf.mxu0
    %v3648 = vadd.f32 %v3479, %v3647
    %3649 = vmatmul.bf16.gmra.mxu0 %v2441
    %v3650 = vpop.f32.mrf.mxu0
    %v3651 = vadd.f32 %v3482, %v3650
    %v3652 = vpop.f32.mrf.mxu0
    %v3653 = vadd.f32 %v3484, %v3652
    %3654 = vmatmul.bf16.gmra.mxu0 %v2444
    %v3655 = vpop.f32.mrf.mxu0
    %v3656 = vadd.f32 %v3487, %v3655
    %v3657 = vpop.f32.mrf.mxu0
    %v3658 = vadd.f32 %v3489, %v3657
    %3659 = vmatmul.bf16.gmra.mxu0 %v2447
    %v3660 = vpop.f32.mrf.mxu0
    %v3661 = vadd.f32 %v3492, %v3660
    %v3662 = vpop.f32.mrf.mxu0
    %v3663 = vadd.f32 %v3494, %v3662
    %3664 = vmatmul.bf16.gmra.mxu0 %v2450
    %v3665 = vpop.f32.mrf.mxu0
    %v3666 = vadd.f32 %v3497, %v3665
    %v3667 = vpop.f32.mrf.mxu0
    %v3668 = vadd.f32 %v3499, %v3667
    %3669 = vmatmul.bf16.gmra.mxu0 %v2453
    %v3670 = vpop.f32.mrf.mxu0
    %v3671 = vadd.f32 %v3502, %v3670
    %v3672 = vpop.f32.mrf.mxu0
    %v3673 = vadd.f32 %v3504, %v3672
    %3674 = vmatmul.bf16.gmra.mxu0 %v2456
    %v3675 = vpop.f32.mrf.mxu0
    %v3676 = vadd.f32 %v3507, %v3675
    %v3677 = vpop.f32.mrf.mxu0
    %v3678 = vadd.f32 %v3509, %v3677
    %3679 = vmatmul.bf16.gmra.mxu0 %v2459
    %v3680 = vpop.f32.mrf.mxu0
    %v3681 = vadd.f32 %v3512, %v3680
    %v3682 = vpop.f32.mrf.mxu0
    %v3683 = vadd.f32 %v3514, %v3682
    %3684 = vmatmul.bf16.gmra.mxu0 %v2462
    %v3685 = vpop.f32.mrf.mxu0
    %v3686 = vadd.f32 %v3517, %v3685
    %v3687 = vpop.f32.mrf.mxu0
    %v3688 = vadd.f32 %v3519, %v3687
    %3689 = vmatmul.bf16.gmra.mxu0 %v2465
    %v3690 = vpop.f32.mrf.mxu0
    %v3691 = vadd.f32 %v3522, %v3690
    %v3692 = vpop.f32.mrf.mxu0
    %v3693 = vadd.f32 %v3524, %v3692
    %3694 = vmatmul.bf16.gmra.mxu0 %v2468
    %v3695 = vpop.f32.mrf.mxu0
    %v3696 = vadd.f32 %v3527, %v3695
    %v3697 = vpop.f32.mrf.mxu0
    %v3698 = vadd.f32 %v3529, %v3697
    %3699 = vmatmul.bf16.gmra.mxu0 %v2471
    %v3700 = vpop.f32.mrf.mxu0
    %v3701 = vadd.f32 %v3532, %v3700
    %v3702 = vpop.f32.mrf.mxu0
    %v3703 = vadd.f32 %v3534, %v3702
    %3704 = vmatmul.bf16.gmra.mxu0 %v2474
    %v3705 = vpop.f32.mrf.mxu0
    %v3706 = vadd.f32 %v3537, %v3705
    %v3707 = vpop.f32.mrf.mxu0
    %v3708 = vadd.f32 %v3539, %v3707
    %3709 = vdwg.mxu0
    %3710 = vmatpush.bf16.msra.mxu0 %v3090
    %3711 = vmatpush.bf16.msra.mxu0 %v3089
    %3712 = vmatpush.bf16.msra.mxu0 %v3088
    %3713 = vmatpush.bf16.msra.mxu0 %v3087
    %3714 = vmatpush.bf16.msra.mxu0 %v3086
    %3715 = vmatpush.bf16.msra.mxu0 %v3085
    %3716 = vmatpush.bf16.msra.mxu0 %v3084
    %3717 = vmatpush.bf16.msra.mxu0 %v3083
    %3718 = vmatmul.bf16.gmra.mxu0 %v1706
    %v3719 = vpop.f32.mrf.mxu0
    %v3720 = vadd.f32 %v3551, %v3719
    %v3721 = vpop.f32.mrf.mxu0
    %v3722 = vadd.f32 %v3553, %v3721
    %3723 = vmatmul.bf16.gmra.mxu0 %v1707
    %v3724 = vpop.f32.mrf.mxu0
    %v3725 = vadd.f32 %v3556, %v3724
    %v3726 = vpop.f32.mrf.mxu0
    %v3727 = vadd.f32 %v3558, %v3726
    %3728 = vmatmul.bf16.gmra.mxu0 %v1708
    %v3729 = vpop.f32.mrf.mxu0
    %v3730 = vadd.f32 %v3561, %v3729
    %v3731 = vpop.f32.mrf.mxu0
    %v3732 = vadd.f32 %v3563, %v3731
    %3733 = vmatmul.bf16.gmra.mxu0 %v1709
    %v3734 = vpop.f32.mrf.mxu0
    %v3735 = vadd.f32 %v3566, %v3734
    %v3736 = vpop.f32.mrf.mxu0
    %v3737 = vadd.f32 %v3568, %v3736
    %3738 = vmatmul.bf16.gmra.mxu0 %v1710
    %v3739 = vpop.f32.mrf.mxu0
    %v3740 = vadd.f32 %v3571, %v3739
    %v3741 = vpop.f32.mrf.mxu0
    %v3742 = vadd.f32 %v3573, %v3741
    %3743 = vmatmul.bf16.gmra.mxu0 %v1711
    %v3744 = vpop.f32.mrf.mxu0
    %v3745 = vadd.f32 %v3576, %v3744
    %v3746 = vpop.f32.mrf.mxu0
    %v3747 = vadd.f32 %v3578, %v3746
    %3748 = vmatmul.bf16.gmra.mxu0 %v1712
    %v3749 = vpop.f32.mrf.mxu0
    %v3750 = vadd.f32 %v3581, %v3749
    %v3751 = vpop.f32.mrf.mxu0
    %v3752 = vadd.f32 %v3583, %v3751
    %3753 = vmatmul.bf16.gmra.mxu0 %v1713
    %v3754 = vpop.f32.mrf.mxu0
    %v3755 = vadd.f32 %v3586, %v3754
    %v3756 = vpop.f32.mrf.mxu0
    %v3757 = vadd.f32 %v3588, %v3756
    %3758 = vmatmul.bf16.gmra.mxu0 %v1714
    %v3759 = vpop.f32.mrf.mxu0
    %v3760 = vadd.f32 %v3591, %v3759
    %v3761 = vpop.f32.mrf.mxu0
    %v3762 = vadd.f32 %v3593, %v3761
    %3763 = vmatmul.bf16.gmra.mxu0 %v1715
    %v3764 = vpop.f32.mrf.mxu0
    %v3765 = vadd.f32 %v3596, %v3764
    %v3766 = vpop.f32.mrf.mxu0
    %v3767 = vadd.f32 %v3598, %v3766
    %3768 = vmatmul.bf16.gmra.mxu0 %v1716
    %v3769 = vpop.f32.mrf.mxu0
    %v3770 = vadd.f32 %v3601, %v3769
    %v3771 = vpop.f32.mrf.mxu0
    %v3772 = vadd.f32 %v3603, %v3771
    %3773 = vmatmul.bf16.gmra.mxu0 %v1717
    %v3774 = vpop.f32.mrf.mxu0
    %v3775 = vadd.f32 %v3606, %v3774
    %v3776 = vpop.f32.mrf.mxu0
    %v3777 = vadd.f32 %v3608, %v3776
    %3778 = vmatmul.bf16.gmra.mxu0 %v1718
    %v3779 = vpop.f32.mrf.mxu0
    %v3780 = vadd.f32 %v3611, %v3779
    %v3781 = vpop.f32.mrf.mxu0
    %v3782 = vadd.f32 %v3613, %v3781
    %3783 = vmatmul.bf16.gmra.mxu0 %v1719
    %v3784 = vpop.f32.mrf.mxu0
    %v3785 = vadd.f32 %v3616, %v3784
    %v3786 = vpop.f32.mrf.mxu0
    %v3787 = vadd.f32 %v3618, %v3786
    %3788 = vmatmul.bf16.gmra.mxu0 %v1720
    %v3789 = vpop.f32.mrf.mxu0
    %v3790 = vadd.f32 %v3621, %v3789
    %v3791 = vpop.f32.mrf.mxu0
    %v3792 = vadd.f32 %v3623, %v3791
    %3793 = vmatmul.bf16.gmra.mxu0 %v2515
    %v3794 = vpop.f32.mrf.mxu0
    %v3795 = vadd.f32 %v3626, %v3794
    %v3796 = vpop.f32.mrf.mxu0
    %v3797 = vadd.f32 %v3628, %v3796
    %3798 = vmatmul.bf16.gmra.mxu0 %v1722
    %v3799 = vpop.f32.mrf.mxu0
    %v3800 = vadd.f32 %v3631, %v3799
    %v3801 = vpop.f32.mrf.mxu0
    %v3802 = vadd.f32 %v3633, %v3801
    %3803 = vmatmul.bf16.gmra.mxu0 %v1723
    %v3804 = vpop.f32.mrf.mxu0
    %v3805 = vadd.f32 %v3636, %v3804
    %v3806 = vpop.f32.mrf.mxu0
    %v3807 = vadd.f32 %v3638, %v3806
    %3808 = vmatmul.bf16.gmra.mxu0 %v1724
    %v3809 = vpop.f32.mrf.mxu0
    %v3810 = vadd.f32 %v3641, %v3809
    %v3811 = vpop.f32.mrf.mxu0
    %v3812 = vadd.f32 %v3643, %v3811
    %3813 = vmatmul.bf16.gmra.mxu0 %v1725
    %v3814 = vpop.f32.mrf.mxu0
    %v3815 = vadd.f32 %v3646, %v3814
    %v3816 = vpop.f32.mrf.mxu0
    %v3817 = vadd.f32 %v3648, %v3816
    %3818 = vmatmul.bf16.gmra.mxu0 %v1726
    %v3819 = vpop.f32.mrf.mxu0
    %v3820 = vadd.f32 %v3651, %v3819
    %v3821 = vpop.f32.mrf.mxu0
    %v3822 = vadd.f32 %v3653, %v3821
    %3823 = vmatmul.bf16.gmra.mxu0 %v1727
    %v3824 = vpop.f32.mrf.mxu0
    %v3825 = vadd.f32 %v3656, %v3824
    %v3826 = vpop.f32.mrf.mxu0
    %v3827 = vadd.f32 %v3658, %v3826
    %3828 = vmatmul.bf16.gmra.mxu0 %v1728
    %v3829 = vpop.f32.mrf.mxu0
    %v3830 = vadd.f32 %v3661, %v3829
    %v3831 = vpop.f32.mrf.mxu0
    %v3832 = vadd.f32 %v3663, %v3831
    %3833 = vmatmul.bf16.gmra.mxu0 %v1729
    %v3834 = vpop.f32.mrf.mxu0
    %v3835 = vadd.f32 %v3666, %v3834
    %v3836 = vpop.f32.mrf.mxu0
    %v3837 = vadd.f32 %v3668, %v3836
    %3838 = vmatmul.bf16.gmra.mxu0 %v1730
    %v3839 = vpop.f32.mrf.mxu0
    %v3840 = vadd.f32 %v3671, %v3839
    %v3841 = vpop.f32.mrf.mxu0
    %v3842 = vadd.f32 %v3673, %v3841
    %3843 = vmatmul.bf16.gmra.mxu0 %v1731
    %v3844 = vpop.f32.mrf.mxu0
    %v3845 = vadd.f32 %v3676, %v3844
    %v3846 = vpop.f32.mrf.mxu0
    %v3847 = vadd.f32 %v3678, %v3846
    %3848 = vmatmul.bf16.gmra.mxu0 %v1732
    %v3849 = vpop.f32.mrf.mxu0
    %v3850 = vadd.f32 %v3681, %v3849
    %v3851 = vpop.f32.mrf.mxu0
    %v3852 = vadd.f32 %v3683, %v3851
    %3853 = vmatmul.bf16.gmra.mxu0 %v1733
    %v3854 = vpop.f32.mrf.mxu0
    %v3855 = vadd.f32 %v3686, %v3854
    %v3856 = vpop.f32.mrf.mxu0
    %v3857 = vadd.f32 %v3688, %v3856
    %3858 = vmatmul.bf16.gmra.mxu0 %v1734
    %v3859 = vpop.f32.mrf.mxu0
    %v3860 = vadd.f32 %v3691, %v3859
    %v3861 = vpop.f32.mrf.mxu0
    %v3862 = vadd.f32 %v3693, %v3861
    %3863 = vmatmul.bf16.gmra.mxu0 %v1735
    %v3864 = vpop.f32.mrf.mxu0
    %v3865 = vadd.f32 %v3696, %v3864
    %v3866 = vpop.f32.mrf.mxu0
    %v3867 = vadd.f32 %v3698, %v3866
    %3868 = vmatmul.bf16.gmra.mxu0 %v1736
    %v3869 = vpop.f32.mrf.mxu0
    %v3870 = vadd.f32 %v3701, %v3869
    %v3871 = vpop.f32.mrf.mxu0
    %v3872 = vadd.f32 %v3703, %v3871
    %3873 = vmatmul.bf16.gmra.mxu0 %v2516
    %v3874 = vpop.f32.mrf.mxu0
    %v3875 = vadd.f32 %v3706, %v3874
    %v3876 = vpop.f32.mrf.mxu0
    %v3877 = vadd.f32 %v3708, %v3876
    %3878 = vdwg.mxu0
    %3879 = vmatpush.bf16.msra.mxu0 %v3098
    %3880 = vmatpush.bf16.msra.mxu0 %v3097
    %3881 = vmatpush.bf16.msra.mxu0 %v3096
    %3882 = vmatpush.bf16.msra.mxu0 %v3095
    %3883 = vmatpush.bf16.msra.mxu0 %v3094
    %3884 = vmatpush.bf16.msra.mxu0 %v3093
    %3885 = vmatpush.bf16.msra.mxu0 %v3092
    %3886 = vmatpush.bf16.msra.mxu0 %v3091
    %3887 = vmatmul.bf16.gmra.mxu0 %v1889
    %v3888 = vpop.f32.mrf.mxu0
    %v3889 = vadd.f32 %v3720, %v3888
    %v3890 = vpop.f32.mrf.mxu0
    %v3891 = vadd.f32 %v3722, %v3890
    %3892 = vmatmul.bf16.gmra.mxu0 %v1901
    %v3893 = vpop.f32.mrf.mxu0
    %v3894 = vadd.f32 %v3725, %v3893
    %v3895 = vpop.f32.mrf.mxu0
    %v3896 = vadd.f32 %v3727, %v3895
    %3897 = vmatmul.bf16.gmra.mxu0 %v1913
    %v3898 = vpop.f32.mrf.mxu0
    %v3899 = vadd.f32 %v3730, %v3898
    %v3900 = vpop.f32.mrf.mxu0
    %v3901 = vadd.f32 %v3732, %v3900
    %3902 = vmatmul.bf16.gmra.mxu0 %v1925
    %v3903 = vpop.f32.mrf.mxu0
    %v3904 = vadd.f32 %v3735, %v3903
    %v3905 = vpop.f32.mrf.mxu0
    %v3906 = vadd.f32 %v3737, %v3905
    %3907 = vmatmul.bf16.gmra.mxu0 %v1937
    %v3908 = vpop.f32.mrf.mxu0
    %v3909 = vadd.f32 %v3740, %v3908
    %v3910 = vpop.f32.mrf.mxu0
    %v3911 = vadd.f32 %v3742, %v3910
    %3912 = vmatmul.bf16.gmra.mxu0 %v1949
    %v3913 = vpop.f32.mrf.mxu0
    %v3914 = vadd.f32 %v3745, %v3913
    %v3915 = vpop.f32.mrf.mxu0
    %v3916 = vadd.f32 %v3747, %v3915
    %3917 = vmatmul.bf16.gmra.mxu0 %v1961
    %v3918 = vpop.f32.mrf.mxu0
    %v3919 = vadd.f32 %v3750, %v3918
    %v3920 = vpop.f32.mrf.mxu0
    %v3921 = vadd.f32 %v3752, %v3920
    %3922 = vmatmul.bf16.gmra.mxu0 %v1973
    %v3923 = vpop.f32.mrf.mxu0
    %v3924 = vadd.f32 %v3755, %v3923
    %v3925 = vpop.f32.mrf.mxu0
    %v3926 = vadd.f32 %v3757, %v3925
    %3927 = vmatmul.bf16.gmra.mxu0 %v1985
    %v3928 = vpop.f32.mrf.mxu0
    %v3929 = vadd.f32 %v3760, %v3928
    %v3930 = vpop.f32.mrf.mxu0
    %v3931 = vadd.f32 %v3762, %v3930
    %3932 = vmatmul.bf16.gmra.mxu0 %v1997
    %v3933 = vpop.f32.mrf.mxu0
    %v3934 = vadd.f32 %v3765, %v3933
    %v3935 = vpop.f32.mrf.mxu0
    %v3936 = vadd.f32 %v3767, %v3935
    %3937 = vmatmul.bf16.gmra.mxu0 %v2009
    %v3938 = vpop.f32.mrf.mxu0
    %v3939 = vadd.f32 %v3770, %v3938
    %v3940 = vpop.f32.mrf.mxu0
    %v3941 = vadd.f32 %v3772, %v3940
    %3942 = vmatmul.bf16.gmra.mxu0 %v2021
    %v3943 = vpop.f32.mrf.mxu0
    %v3944 = vadd.f32 %v3775, %v3943
    %v3945 = vpop.f32.mrf.mxu0
    %v3946 = vadd.f32 %v3777, %v3945
    %3947 = vmatmul.bf16.gmra.mxu0 %v2033
    %v3948 = vpop.f32.mrf.mxu0
    %v3949 = vadd.f32 %v3780, %v3948
    %v3950 = vpop.f32.mrf.mxu0
    %v3951 = vadd.f32 %v3782, %v3950
    %3952 = vmatmul.bf16.gmra.mxu0 %v2045
    %v3953 = vpop.f32.mrf.mxu0
    %v3954 = vadd.f32 %v3785, %v3953
    %v3955 = vpop.f32.mrf.mxu0
    %v3956 = vadd.f32 %v3787, %v3955
    %3957 = vmatmul.bf16.gmra.mxu0 %v2057
    %v3958 = vpop.f32.mrf.mxu0
    %v3959 = vadd.f32 %v3790, %v3958
    %v3960 = vpop.f32.mrf.mxu0
    %v3961 = vadd.f32 %v3792, %v3960
    %3962 = vmatmul.bf16.gmra.mxu0 %v2536
    %v3963 = vpop.f32.mrf.mxu0
    %v3964 = vadd.f32 %v3795, %v3963
    %v3965 = vpop.f32.mrf.mxu0
    %v3966 = vadd.f32 %v3797, %v3965
    %3967 = vmatmul.bf16.gmra.mxu0 %v2081
    %v3968 = vpop.f32.mrf.mxu0
    %v3969 = vadd.f32 %v3800, %v3968
    %v3970 = vpop.f32.mrf.mxu0
    %v3971 = vadd.f32 %v3802, %v3970
    %3972 = vmatmul.bf16.gmra.mxu0 %v2093
    %v3973 = vpop.f32.mrf.mxu0
    %v3974 = vadd.f32 %v3805, %v3973
    %v3975 = vpop.f32.mrf.mxu0
    %v3976 = vadd.f32 %v3807, %v3975
    %3977 = vmatmul.bf16.gmra.mxu0 %v2105
    %v3978 = vpop.f32.mrf.mxu0
    %v3979 = vadd.f32 %v3810, %v3978
    %v3980 = vpop.f32.mrf.mxu0
    %v3981 = vadd.f32 %v3812, %v3980
    %3982 = vmatmul.bf16.gmra.mxu0 %v2117
    %v3983 = vpop.f32.mrf.mxu0
    %v3984 = vadd.f32 %v3815, %v3983
    %v3985 = vpop.f32.mrf.mxu0
    %v3986 = vadd.f32 %v3817, %v3985
    %3987 = vmatmul.bf16.gmra.mxu0 %v2129
    %v3988 = vpop.f32.mrf.mxu0
    %v3989 = vadd.f32 %v3820, %v3988
    %v3990 = vpop.f32.mrf.mxu0
    %v3991 = vadd.f32 %v3822, %v3990
    %3992 = vmatmul.bf16.gmra.mxu0 %v2141
    %v3993 = vpop.f32.mrf.mxu0
    %v3994 = vadd.f32 %v3825, %v3993
    %v3995 = vpop.f32.mrf.mxu0
    %v3996 = vadd.f32 %v3827, %v3995
    %3997 = vmatmul.bf16.gmra.mxu0 %v2153
    %v3998 = vpop.f32.mrf.mxu0
    %v3999 = vadd.f32 %v3830, %v3998
    %v4000 = vpop.f32.mrf.mxu0
    %v4001 = vadd.f32 %v3832, %v4000
    %4002 = vmatmul.bf16.gmra.mxu0 %v2165
    %v4003 = vpop.f32.mrf.mxu0
    %v4004 = vadd.f32 %v3835, %v4003
    %v4005 = vpop.f32.mrf.mxu0
    %v4006 = vadd.f32 %v3837, %v4005
    %4007 = vmatmul.bf16.gmra.mxu0 %v2177
    %v4008 = vpop.f32.mrf.mxu0
    %v4009 = vadd.f32 %v3840, %v4008
    %v4010 = vpop.f32.mrf.mxu0
    %v4011 = vadd.f32 %v3842, %v4010
    %4012 = vmatmul.bf16.gmra.mxu0 %v2189
    %v4013 = vpop.f32.mrf.mxu0
    %v4014 = vadd.f32 %v3845, %v4013
    %v4015 = vpop.f32.mrf.mxu0
    %v4016 = vadd.f32 %v3847, %v4015
    %4017 = vmatmul.bf16.gmra.mxu0 %v2201
    %v4018 = vpop.f32.mrf.mxu0
    %v4019 = vadd.f32 %v3850, %v4018
    %v4020 = vpop.f32.mrf.mxu0
    %v4021 = vadd.f32 %v3852, %v4020
    %4022 = vmatmul.bf16.gmra.mxu0 %v2213
    %v4023 = vpop.f32.mrf.mxu0
    %v4024 = vadd.f32 %v3855, %v4023
    %v4025 = vpop.f32.mrf.mxu0
    %v4026 = vadd.f32 %v3857, %v4025
    %4027 = vmatmul.bf16.gmra.mxu0 %v2225
    %v4028 = vpop.f32.mrf.mxu0
    %v4029 = vadd.f32 %v3860, %v4028
    %v4030 = vpop.f32.mrf.mxu0
    %v4031 = vadd.f32 %v3862, %v4030
    %4032 = vmatmul.bf16.gmra.mxu0 %v2237
    %v4033 = vpop.f32.mrf.mxu0
    %v4034 = vadd.f32 %v3865, %v4033
    %v4035 = vpop.f32.mrf.mxu0
    %v4036 = vadd.f32 %v3867, %v4035
    %4037 = vmatmul.bf16.gmra.mxu0 %v2249
    %v4038 = vpop.f32.mrf.mxu0
    %v4039 = vadd.f32 %v3870, %v4038
    %v4040 = vpop.f32.mrf.mxu0
    %v4041 = vadd.f32 %v3872, %v4040
    %4042 = vmatmul.bf16.gmra.mxu0 %v2548
    %v4043 = vpop.f32.mrf.mxu0
    %v4044 = vadd.f32 %v3875, %v4043
    %v4045 = vpop.f32.mrf.mxu0
    %v4046 = vadd.f32 %v3877, %v4045
    %4047 = vdwg.mxu0
    %4048 = vmatpush.bf16.msra.mxu0 %v3106
    %4049 = vmatpush.bf16.msra.mxu0 %v3105
    %4050 = vmatpush.bf16.msra.mxu0 %v3104
    %4051 = vmatpush.bf16.msra.mxu0 %v3103
    %4052 = vmatpush.bf16.msra.mxu0 %v3102
    %4053 = vmatpush.bf16.msra.mxu0 %v3101
    %4054 = vmatpush.bf16.msra.mxu0 %v3100
    %4055 = vmatpush.bf16.msra.mxu0 %v3099
    %4056 = vmatmul.bf16.gmra.mxu0 %v2384
    %v4057 = vpop.f32.mrf.mxu0
    %v4058 = vadd.f32 %v3889, %v4057
    %v4059 = vpop.f32.mrf.mxu0
    %v4060 = vadd.f32 %v3891, %v4059
    %4061 = vmatmul.bf16.gmra.mxu0 %v2387
    %v4062 = vpop.f32.mrf.mxu0
    %v4063 = vadd.f32 %v3894, %v4062
    %v4064 = vpop.f32.mrf.mxu0
    %v4065 = vadd.f32 %v3896, %v4064
    %4066 = vmatmul.bf16.gmra.mxu0 %v2390
    %v4067 = vpop.f32.mrf.mxu0
    %v4068 = vadd.f32 %v3899, %v4067
    %v4069 = vpop.f32.mrf.mxu0
    %v4070 = vadd.f32 %v3901, %v4069
    %4071 = vmatmul.bf16.gmra.mxu0 %v2393
    %v4072 = vpop.f32.mrf.mxu0
    %v4073 = vadd.f32 %v3904, %v4072
    %v4074 = vpop.f32.mrf.mxu0
    %v4075 = vadd.f32 %v3906, %v4074
    %4076 = vmatmul.bf16.gmra.mxu0 %v2396
    %v4077 = vpop.f32.mrf.mxu0
    %v4078 = vadd.f32 %v3909, %v4077
    %v4079 = vpop.f32.mrf.mxu0
    %v4080 = vadd.f32 %v3911, %v4079
    %4081 = vmatmul.bf16.gmra.mxu0 %v2399
    %v4082 = vpop.f32.mrf.mxu0
    %v4083 = vadd.f32 %v3914, %v4082
    %v4084 = vpop.f32.mrf.mxu0
    %v4085 = vadd.f32 %v3916, %v4084
    %4086 = vmatmul.bf16.gmra.mxu0 %v2402
    %v4087 = vpop.f32.mrf.mxu0
    %v4088 = vadd.f32 %v3919, %v4087
    %v4089 = vpop.f32.mrf.mxu0
    %v4090 = vadd.f32 %v3921, %v4089
    %4091 = vmatmul.bf16.gmra.mxu0 %v2405
    %v4092 = vpop.f32.mrf.mxu0
    %v4093 = vadd.f32 %v3924, %v4092
    %v4094 = vpop.f32.mrf.mxu0
    %v4095 = vadd.f32 %v3926, %v4094
    %4096 = vmatmul.bf16.gmra.mxu0 %v2408
    %v4097 = vpop.f32.mrf.mxu0
    %v4098 = vadd.f32 %v3929, %v4097
    %v4099 = vpop.f32.mrf.mxu0
    %v4100 = vadd.f32 %v3931, %v4099
    %4101 = vmatmul.bf16.gmra.mxu0 %v2411
    %v4102 = vpop.f32.mrf.mxu0
    %v4103 = vadd.f32 %v3934, %v4102
    %v4104 = vpop.f32.mrf.mxu0
    %v4105 = vadd.f32 %v3936, %v4104
    %4106 = vmatmul.bf16.gmra.mxu0 %v2414
    %v4107 = vpop.f32.mrf.mxu0
    %v4108 = vadd.f32 %v3939, %v4107
    %v4109 = vpop.f32.mrf.mxu0
    %v4110 = vadd.f32 %v3941, %v4109
    %4111 = vmatmul.bf16.gmra.mxu0 %v2417
    %v4112 = vpop.f32.mrf.mxu0
    %v4113 = vadd.f32 %v3944, %v4112
    %v4114 = vpop.f32.mrf.mxu0
    %v4115 = vadd.f32 %v3946, %v4114
    %4116 = vmatmul.bf16.gmra.mxu0 %v2420
    %v4117 = vpop.f32.mrf.mxu0
    %v4118 = vadd.f32 %v3949, %v4117
    %v4119 = vpop.f32.mrf.mxu0
    %v4120 = vadd.f32 %v3951, %v4119
    %4121 = vmatmul.bf16.gmra.mxu0 %v2423
    %v4122 = vpop.f32.mrf.mxu0
    %v4123 = vadd.f32 %v3954, %v4122
    %v4124 = vpop.f32.mrf.mxu0
    %v4125 = vadd.f32 %v3956, %v4124
    %4126 = vmatmul.bf16.gmra.mxu0 %v2426
    %v4127 = vpop.f32.mrf.mxu0
    %v4128 = vadd.f32 %v3959, %v4127
    %v4129 = vpop.f32.mrf.mxu0
    %v4130 = vadd.f32 %v3961, %v4129
    %4131 = vmatmul.bf16.gmra.mxu0 %v2559
    %v4132 = vpop.f32.mrf.mxu0
    %v4133 = vadd.f32 %v3964, %v4132
    %v4134 = vpop.f32.mrf.mxu0
    %v4135 = vadd.f32 %v3966, %v4134
    %4136 = vmatmul.bf16.gmra.mxu0 %v2432
    %v4137 = vpop.f32.mrf.mxu0
    %v4138 = vadd.f32 %v3969, %v4137
    %v4139 = vpop.f32.mrf.mxu0
    %v4140 = vadd.f32 %v3971, %v4139
    %4141 = vmatmul.bf16.gmra.mxu0 %v2435
    %v4142 = vpop.f32.mrf.mxu0
    %v4143 = vadd.f32 %v3974, %v4142
    %v4144 = vpop.f32.mrf.mxu0
    %v4145 = vadd.f32 %v3976, %v4144
    %4146 = vmatmul.bf16.gmra.mxu0 %v2438
    %v4147 = vpop.f32.mrf.mxu0
    %v4148 = vadd.f32 %v3979, %v4147
    %v4149 = vpop.f32.mrf.mxu0
    %v4150 = vadd.f32 %v3981, %v4149
    %4151 = vmatmul.bf16.gmra.mxu0 %v2441
    %v4152 = vpop.f32.mrf.mxu0
    %v4153 = vadd.f32 %v3984, %v4152
    %v4154 = vpop.f32.mrf.mxu0
    %v4155 = vadd.f32 %v3986, %v4154
    %4156 = vmatmul.bf16.gmra.mxu0 %v2444
    %v4157 = vpop.f32.mrf.mxu0
    %v4158 = vadd.f32 %v3989, %v4157
    %v4159 = vpop.f32.mrf.mxu0
    %v4160 = vadd.f32 %v3991, %v4159
    %4161 = vmatmul.bf16.gmra.mxu0 %v2447
    %v4162 = vpop.f32.mrf.mxu0
    %v4163 = vadd.f32 %v3994, %v4162
    %v4164 = vpop.f32.mrf.mxu0
    %v4165 = vadd.f32 %v3996, %v4164
    %4166 = vmatmul.bf16.gmra.mxu0 %v2450
    %v4167 = vpop.f32.mrf.mxu0
    %v4168 = vadd.f32 %v3999, %v4167
    %v4169 = vpop.f32.mrf.mxu0
    %v4170 = vadd.f32 %v4001, %v4169
    %4171 = vmatmul.bf16.gmra.mxu0 %v2453
    %v4172 = vpop.f32.mrf.mxu0
    %v4173 = vadd.f32 %v4004, %v4172
    %v4174 = vpop.f32.mrf.mxu0
    %v4175 = vadd.f32 %v4006, %v4174
    %4176 = vmatmul.bf16.gmra.mxu0 %v2456
    %v4177 = vpop.f32.mrf.mxu0
    %v4178 = vadd.f32 %v4009, %v4177
    %v4179 = vpop.f32.mrf.mxu0
    %v4180 = vadd.f32 %v4011, %v4179
    %4181 = vmatmul.bf16.gmra.mxu0 %v2459
    %v4182 = vpop.f32.mrf.mxu0
    %v4183 = vadd.f32 %v4014, %v4182
    %v4184 = vpop.f32.mrf.mxu0
    %v4185 = vadd.f32 %v4016, %v4184
    %4186 = vmatmul.bf16.gmra.mxu0 %v2462
    %v4187 = vpop.f32.mrf.mxu0
    %v4188 = vadd.f32 %v4019, %v4187
    %v4189 = vpop.f32.mrf.mxu0
    %v4190 = vadd.f32 %v4021, %v4189
    %4191 = vmatmul.bf16.gmra.mxu0 %v2465
    %v4192 = vpop.f32.mrf.mxu0
    %v4193 = vadd.f32 %v4024, %v4192
    %v4194 = vpop.f32.mrf.mxu0
    %v4195 = vadd.f32 %v4026, %v4194
    %4196 = vmatmul.bf16.gmra.mxu0 %v2468
    %v4197 = vpop.f32.mrf.mxu0
    %v4198 = vadd.f32 %v4029, %v4197
    %v4199 = vpop.f32.mrf.mxu0
    %v4200 = vadd.f32 %v4031, %v4199
    %4201 = vmatmul.bf16.gmra.mxu0 %v2471
    %v4202 = vpop.f32.mrf.mxu0
    %v4203 = vadd.f32 %v4034, %v4202
    %v4204 = vpop.f32.mrf.mxu0
    %v4205 = vadd.f32 %v4036, %v4204
    %4206 = vmatmul.bf16.gmra.mxu0 %v2474
    %v4207 = vpop.f32.mrf.mxu0
    %v4208 = vadd.f32 %v4039, %v4207
    %v4209 = vpop.f32.mrf.mxu0
    %v4210 = vadd.f32 %v4041, %v4209
    %4211 = vmatmul.bf16.gmra.mxu0 %v2562
    %v4212 = vpop.f32.mrf.mxu0
    %v4213 = vadd.f32 %v4044, %v4212
    %v4214 = vpop.f32.mrf.mxu0
    %v4215 = vadd.f32 %v4046, %v4214
    %4216 = vdwg.mxu0
    %4217 = vmatpush.bf16.msra.mxu0 %v3114
    %4218 = vmatpush.bf16.msra.mxu0 %v3113
    %4219 = vmatpush.bf16.msra.mxu0 %v3112
    %4220 = vmatpush.bf16.msra.mxu0 %v3111
    %4221 = vmatpush.bf16.msra.mxu0 %v3110
    %4222 = vmatpush.bf16.msra.mxu0 %v3109
    %4223 = vmatpush.bf16.msra.mxu0 %v3108
    %4224 = vmatpush.bf16.msra.mxu0 %v3107
    %4225 = vmatmul.bf16.gmra.mxu0 %v1707
    %v4226 = vpop.f32.mrf.mxu0
    %v4227 = vadd.f32 %v4058, %v4226
    %v4228 = vpop.f32.mrf.mxu0
    %v4229 = vadd.f32 %v4060, %v4228
    %4230 = vmatmul.bf16.gmra.mxu0 %v1708
    %v4231 = vpop.f32.mrf.mxu0
    %v4232 = vadd.f32 %v4063, %v4231
    %v4233 = vpop.f32.mrf.mxu0
    %v4234 = vadd.f32 %v4065, %v4233
    %4235 = vmatmul.bf16.gmra.mxu0 %v1709
    %v4236 = vpop.f32.mrf.mxu0
    %v4237 = vadd.f32 %v4068, %v4236
    %v4238 = vpop.f32.mrf.mxu0
    %v4239 = vadd.f32 %v4070, %v4238
    %4240 = vmatmul.bf16.gmra.mxu0 %v1710
    %v4241 = vpop.f32.mrf.mxu0
    %v4242 = vadd.f32 %v4073, %v4241
    %v4243 = vpop.f32.mrf.mxu0
    %v4244 = vadd.f32 %v4075, %v4243
    %4245 = vmatmul.bf16.gmra.mxu0 %v1711
    %v4246 = vpop.f32.mrf.mxu0
    %v4247 = vadd.f32 %v4078, %v4246
    %v4248 = vpop.f32.mrf.mxu0
    %v4249 = vadd.f32 %v4080, %v4248
    %4250 = vmatmul.bf16.gmra.mxu0 %v1712
    %v4251 = vpop.f32.mrf.mxu0
    %v4252 = vadd.f32 %v4083, %v4251
    %v4253 = vpop.f32.mrf.mxu0
    %v4254 = vadd.f32 %v4085, %v4253
    %4255 = vmatmul.bf16.gmra.mxu0 %v1713
    %v4256 = vpop.f32.mrf.mxu0
    %v4257 = vadd.f32 %v4088, %v4256
    %v4258 = vpop.f32.mrf.mxu0
    %v4259 = vadd.f32 %v4090, %v4258
    %4260 = vmatmul.bf16.gmra.mxu0 %v1714
    %v4261 = vpop.f32.mrf.mxu0
    %v4262 = vadd.f32 %v4093, %v4261
    %v4263 = vpop.f32.mrf.mxu0
    %v4264 = vadd.f32 %v4095, %v4263
    %4265 = vmatmul.bf16.gmra.mxu0 %v1715
    %v4266 = vpop.f32.mrf.mxu0
    %v4267 = vadd.f32 %v4098, %v4266
    %v4268 = vpop.f32.mrf.mxu0
    %v4269 = vadd.f32 %v4100, %v4268
    %4270 = vmatmul.bf16.gmra.mxu0 %v1716
    %v4271 = vpop.f32.mrf.mxu0
    %v4272 = vadd.f32 %v4103, %v4271
    %v4273 = vpop.f32.mrf.mxu0
    %v4274 = vadd.f32 %v4105, %v4273
    %4275 = vmatmul.bf16.gmra.mxu0 %v1717
    %v4276 = vpop.f32.mrf.mxu0
    %v4277 = vadd.f32 %v4108, %v4276
    %v4278 = vpop.f32.mrf.mxu0
    %v4279 = vadd.f32 %v4110, %v4278
    %4280 = vmatmul.bf16.gmra.mxu0 %v1718
    %v4281 = vpop.f32.mrf.mxu0
    %v4282 = vadd.f32 %v4113, %v4281
    %v4283 = vpop.f32.mrf.mxu0
    %v4284 = vadd.f32 %v4115, %v4283
    %4285 = vmatmul.bf16.gmra.mxu0 %v1719
    %v4286 = vpop.f32.mrf.mxu0
    %v4287 = vadd.f32 %v4118, %v4286
    %v4288 = vpop.f32.mrf.mxu0
    %v4289 = vadd.f32 %v4120, %v4288
    %4290 = vmatmul.bf16.gmra.mxu0 %v1720
    %v4291 = vpop.f32.mrf.mxu0
    %v4292 = vadd.f32 %v4123, %v4291
    %v4293 = vpop.f32.mrf.mxu0
    %v4294 = vadd.f32 %v4125, %v4293
    %4295 = vmatmul.bf16.gmra.mxu0 %v2515
    %v4296 = vpop.f32.mrf.mxu0
    %v4297 = vadd.f32 %v4128, %v4296
    %v4298 = vpop.f32.mrf.mxu0
    %v4299 = vadd.f32 %v4130, %v4298
    %4300 = vmatmul.bf16.gmra.mxu0 %v2573
    %v4301 = vpop.f32.mrf.mxu0
    %v4302 = vadd.f32 %v4133, %v4301
    %v4303 = vpop.f32.mrf.mxu0
    %v4304 = vadd.f32 %v4135, %v4303
    %4305 = vmatmul.bf16.gmra.mxu0 %v1723
    %v4306 = vpop.f32.mrf.mxu0
    %v4307 = vadd.f32 %v4138, %v4306
    %v4308 = vpop.f32.mrf.mxu0
    %v4309 = vadd.f32 %v4140, %v4308
    %4310 = vmatmul.bf16.gmra.mxu0 %v1724
    %v4311 = vpop.f32.mrf.mxu0
    %v4312 = vadd.f32 %v4143, %v4311
    %v4313 = vpop.f32.mrf.mxu0
    %v4314 = vadd.f32 %v4145, %v4313
    %4315 = vmatmul.bf16.gmra.mxu0 %v1725
    %v4316 = vpop.f32.mrf.mxu0
    %v4317 = vadd.f32 %v4148, %v4316
    %v4318 = vpop.f32.mrf.mxu0
    %v4319 = vadd.f32 %v4150, %v4318
    %4320 = vmatmul.bf16.gmra.mxu0 %v1726
    %v4321 = vpop.f32.mrf.mxu0
    %v4322 = vadd.f32 %v4153, %v4321
    %v4323 = vpop.f32.mrf.mxu0
    %v4324 = vadd.f32 %v4155, %v4323
    %4325 = vmatmul.bf16.gmra.mxu0 %v1727
    %v4326 = vpop.f32.mrf.mxu0
    %v4327 = vadd.f32 %v4158, %v4326
    %v4328 = vpop.f32.mrf.mxu0
    %v4329 = vadd.f32 %v4160, %v4328
    %4330 = vmatmul.bf16.gmra.mxu0 %v1728
    %v4331 = vpop.f32.mrf.mxu0
    %v4332 = vadd.f32 %v4163, %v4331
    %v4333 = vpop.f32.mrf.mxu0
    %v4334 = vadd.f32 %v4165, %v4333
    %4335 = vmatmul.bf16.gmra.mxu0 %v1729
    %v4336 = vpop.f32.mrf.mxu0
    %v4337 = vadd.f32 %v4168, %v4336
    %v4338 = vpop.f32.mrf.mxu0
    %v4339 = vadd.f32 %v4170, %v4338
    %4340 = vmatmul.bf16.gmra.mxu0 %v1730
    %v4341 = vpop.f32.mrf.mxu0
    %v4342 = vadd.f32 %v4173, %v4341
    %v4343 = vpop.f32.mrf.mxu0
    %v4344 = vadd.f32 %v4175, %v4343
    %4345 = vmatmul.bf16.gmra.mxu0 %v1731
    %v4346 = vpop.f32.mrf.mxu0
    %v4347 = vadd.f32 %v4178, %v4346
    %v4348 = vpop.f32.mrf.mxu0
    %v4349 = vadd.f32 %v4180, %v4348
    %4350 = vmatmul.bf16.gmra.mxu0 %v1732
    %v4351 = vpop.f32.mrf.mxu0
    %v4352 = vadd.f32 %v4183, %v4351
    %v4353 = vpop.f32.mrf.mxu0
    %v4354 = vadd.f32 %v4185, %v4353
    %4355 = vmatmul.bf16.gmra.mxu0 %v1733
    %v4356 = vpop.f32.mrf.mxu0
    %v4357 = vadd.f32 %v4188, %v4356
    %v4358 = vpop.f32.mrf.mxu0
    %v4359 = vadd.f32 %v4190, %v4358
    %4360 = vmatmul.bf16.gmra.mxu0 %v1734
    %v4361 = vpop.f32.mrf.mxu0
    %v4362 = vadd.f32 %v4193, %v4361
    %v4363 = vpop.f32.mrf.mxu0
    %v4364 = vadd.f32 %v4195, %v4363
    %4365 = vmatmul.bf16.gmra.mxu0 %v1735
    %v4366 = vpop.f32.mrf.mxu0
    %v4367 = vadd.f32 %v4198, %v4366
    %v4368 = vpop.f32.mrf.mxu0
    %v4369 = vadd.f32 %v4200, %v4368
    %4370 = vmatmul.bf16.gmra.mxu0 %v1736
    %v4371 = vpop.f32.mrf.mxu0
    %v4372 = vadd.f32 %v4203, %v4371
    %v4373 = vpop.f32.mrf.mxu0
    %v4374 = vadd.f32 %v4205, %v4373
    %4375 = vmatmul.bf16.gmra.mxu0 %v2516
    %v4376 = vpop.f32.mrf.mxu0
    %v4377 = vadd.f32 %v4208, %v4376
    %v4378 = vpop.f32.mrf.mxu0
    %v4379 = vadd.f32 %v4210, %v4378
    %4380 = vmatmul.bf16.gmra.mxu0 %v2574
    %v4381 = vpop.f32.mrf.mxu0
    %v4382 = vadd.f32 %v4213, %v4381
    %v4383 = vpop.f32.mrf.mxu0
    %v4384 = vadd.f32 %v4215, %v4383
    %4385 = vdwg.mxu0
    %4386 = vmatpush.bf16.msra.mxu0 %v3122
    %4387 = vmatpush.bf16.msra.mxu0 %v3121
    %4388 = vmatpush.bf16.msra.mxu0 %v3120
    %4389 = vmatpush.bf16.msra.mxu0 %v3119
    %4390 = vmatpush.bf16.msra.mxu0 %v3118
    %4391 = vmatpush.bf16.msra.mxu0 %v3117
    %4392 = vmatpush.bf16.msra.mxu0 %v3116
    %4393 = vmatpush.bf16.msra.mxu0 %v3115
    %4394 = vmatmul.bf16.gmra.mxu0 %v1901
    %v4395 = vpop.f32.mrf.mxu0
    %v4396 = vadd.f32 %v4227, %v4395
    %v4397 = vpop.f32.mrf.mxu0
    %v4398 = vadd.f32 %v4229, %v4397
    %4399 = vmatmul.bf16.gmra.mxu0 %v1913
    %v4400 = vpop.f32.mrf.mxu0
    %v4401 = vadd.f32 %v4232, %v4400
    %v4402 = vpop.f32.mrf.mxu0
    %v4403 = vadd.f32 %v4234, %v4402
    %4404 = vmatmul.bf16.gmra.mxu0 %v1925
    %v4405 = vpop.f32.mrf.mxu0
    %v4406 = vadd.f32 %v4237, %v4405
    %v4407 = vpop.f32.mrf.mxu0
    %v4408 = vadd.f32 %v4239, %v4407
    %4409 = vmatmul.bf16.gmra.mxu0 %v1937
    %v4410 = vpop.f32.mrf.mxu0
    %v4411 = vadd.f32 %v4242, %v4410
    %v4412 = vpop.f32.mrf.mxu0
    %v4413 = vadd.f32 %v4244, %v4412
    %4414 = vmatmul.bf16.gmra.mxu0 %v1949
    %v4415 = vpop.f32.mrf.mxu0
    %v4416 = vadd.f32 %v4247, %v4415
    %v4417 = vpop.f32.mrf.mxu0
    %v4418 = vadd.f32 %v4249, %v4417
    %4419 = vmatmul.bf16.gmra.mxu0 %v1961
    %v4420 = vpop.f32.mrf.mxu0
    %v4421 = vadd.f32 %v4252, %v4420
    %v4422 = vpop.f32.mrf.mxu0
    %v4423 = vadd.f32 %v4254, %v4422
    %4424 = vmatmul.bf16.gmra.mxu0 %v1973
    %v4425 = vpop.f32.mrf.mxu0
    %v4426 = vadd.f32 %v4257, %v4425
    %v4427 = vpop.f32.mrf.mxu0
    %v4428 = vadd.f32 %v4259, %v4427
    %4429 = vmatmul.bf16.gmra.mxu0 %v1985
    %v4430 = vpop.f32.mrf.mxu0
    %v4431 = vadd.f32 %v4262, %v4430
    %v4432 = vpop.f32.mrf.mxu0
    %v4433 = vadd.f32 %v4264, %v4432
    %4434 = vmatmul.bf16.gmra.mxu0 %v1997
    %v4435 = vpop.f32.mrf.mxu0
    %v4436 = vadd.f32 %v4267, %v4435
    %v4437 = vpop.f32.mrf.mxu0
    %v4438 = vadd.f32 %v4269, %v4437
    %4439 = vmatmul.bf16.gmra.mxu0 %v2009
    %v4440 = vpop.f32.mrf.mxu0
    %v4441 = vadd.f32 %v4272, %v4440
    %v4442 = vpop.f32.mrf.mxu0
    %v4443 = vadd.f32 %v4274, %v4442
    %4444 = vmatmul.bf16.gmra.mxu0 %v2021
    %v4445 = vpop.f32.mrf.mxu0
    %v4446 = vadd.f32 %v4277, %v4445
    %v4447 = vpop.f32.mrf.mxu0
    %v4448 = vadd.f32 %v4279, %v4447
    %4449 = vmatmul.bf16.gmra.mxu0 %v2033
    %v4450 = vpop.f32.mrf.mxu0
    %v4451 = vadd.f32 %v4282, %v4450
    %v4452 = vpop.f32.mrf.mxu0
    %v4453 = vadd.f32 %v4284, %v4452
    %4454 = vmatmul.bf16.gmra.mxu0 %v2045
    %v4455 = vpop.f32.mrf.mxu0
    %v4456 = vadd.f32 %v4287, %v4455
    %v4457 = vpop.f32.mrf.mxu0
    %v4458 = vadd.f32 %v4289, %v4457
    %4459 = vmatmul.bf16.gmra.mxu0 %v2057
    %v4460 = vpop.f32.mrf.mxu0
    %v4461 = vadd.f32 %v4292, %v4460
    %v4462 = vpop.f32.mrf.mxu0
    %v4463 = vadd.f32 %v4294, %v4462
    %4464 = vmatmul.bf16.gmra.mxu0 %v2536
    %v4465 = vpop.f32.mrf.mxu0
    %v4466 = vadd.f32 %v4297, %v4465
    %v4467 = vpop.f32.mrf.mxu0
    %v4468 = vadd.f32 %v4299, %v4467
    %4469 = vmatmul.bf16.gmra.mxu0 %v2594
    %v4470 = vpop.f32.mrf.mxu0
    %v4471 = vadd.f32 %v4302, %v4470
    %v4472 = vpop.f32.mrf.mxu0
    %v4473 = vadd.f32 %v4304, %v4472
    %4474 = vmatmul.bf16.gmra.mxu0 %v2093
    %v4475 = vpop.f32.mrf.mxu0
    %v4476 = vadd.f32 %v4307, %v4475
    %v4477 = vpop.f32.mrf.mxu0
    %v4478 = vadd.f32 %v4309, %v4477
    %4479 = vmatmul.bf16.gmra.mxu0 %v2105
    %v4480 = vpop.f32.mrf.mxu0
    %v4481 = vadd.f32 %v4312, %v4480
    %v4482 = vpop.f32.mrf.mxu0
    %v4483 = vadd.f32 %v4314, %v4482
    %4484 = vmatmul.bf16.gmra.mxu0 %v2117
    %v4485 = vpop.f32.mrf.mxu0
    %v4486 = vadd.f32 %v4317, %v4485
    %v4487 = vpop.f32.mrf.mxu0
    %v4488 = vadd.f32 %v4319, %v4487
    %4489 = vmatmul.bf16.gmra.mxu0 %v2129
    %v4490 = vpop.f32.mrf.mxu0
    %v4491 = vadd.f32 %v4322, %v4490
    %v4492 = vpop.f32.mrf.mxu0
    %v4493 = vadd.f32 %v4324, %v4492
    %4494 = vmatmul.bf16.gmra.mxu0 %v2141
    %v4495 = vpop.f32.mrf.mxu0
    %v4496 = vadd.f32 %v4327, %v4495
    %v4497 = vpop.f32.mrf.mxu0
    %v4498 = vadd.f32 %v4329, %v4497
    %4499 = vmatmul.bf16.gmra.mxu0 %v2153
    %v4500 = vpop.f32.mrf.mxu0
    %v4501 = vadd.f32 %v4332, %v4500
    %v4502 = vpop.f32.mrf.mxu0
    %v4503 = vadd.f32 %v4334, %v4502
    %4504 = vmatmul.bf16.gmra.mxu0 %v2165
    %v4505 = vpop.f32.mrf.mxu0
    %v4506 = vadd.f32 %v4337, %v4505
    %v4507 = vpop.f32.mrf.mxu0
    %v4508 = vadd.f32 %v4339, %v4507
    %4509 = vmatmul.bf16.gmra.mxu0 %v2177
    %v4510 = vpop.f32.mrf.mxu0
    %v4511 = vadd.f32 %v4342, %v4510
    %v4512 = vpop.f32.mrf.mxu0
    %v4513 = vadd.f32 %v4344, %v4512
    %4514 = vmatmul.bf16.gmra.mxu0 %v2189
    %v4515 = vpop.f32.mrf.mxu0
    %v4516 = vadd.f32 %v4347, %v4515
    %v4517 = vpop.f32.mrf.mxu0
    %v4518 = vadd.f32 %v4349, %v4517
    %4519 = vmatmul.bf16.gmra.mxu0 %v2201
    %v4520 = vpop.f32.mrf.mxu0
    %v4521 = vadd.f32 %v4352, %v4520
    %v4522 = vpop.f32.mrf.mxu0
    %v4523 = vadd.f32 %v4354, %v4522
    %4524 = vmatmul.bf16.gmra.mxu0 %v2213
    %v4525 = vpop.f32.mrf.mxu0
    %v4526 = vadd.f32 %v4357, %v4525
    %v4527 = vpop.f32.mrf.mxu0
    %v4528 = vadd.f32 %v4359, %v4527
    %4529 = vmatmul.bf16.gmra.mxu0 %v2225
    %v4530 = vpop.f32.mrf.mxu0
    %v4531 = vadd.f32 %v4362, %v4530
    %v4532 = vpop.f32.mrf.mxu0
    %v4533 = vadd.f32 %v4364, %v4532
    %4534 = vmatmul.bf16.gmra.mxu0 %v2237
    %v4535 = vpop.f32.mrf.mxu0
    %v4536 = vadd.f32 %v4367, %v4535
    %v4537 = vpop.f32.mrf.mxu0
    %v4538 = vadd.f32 %v4369, %v4537
    %4539 = vmatmul.bf16.gmra.mxu0 %v2249
    %v4540 = vpop.f32.mrf.mxu0
    %v4541 = vadd.f32 %v4372, %v4540
    %v4542 = vpop.f32.mrf.mxu0
    %v4543 = vadd.f32 %v4374, %v4542
    %4544 = vmatmul.bf16.gmra.mxu0 %v2548
    %v4545 = vpop.f32.mrf.mxu0
    %v4546 = vadd.f32 %v4377, %v4545
    %v4547 = vpop.f32.mrf.mxu0
    %v4548 = vadd.f32 %v4379, %v4547
    %4549 = vmatmul.bf16.gmra.mxu0 %v2606
    %v4550 = vpop.f32.mrf.mxu0
    %v4551 = vadd.f32 %v4382, %v4550
    %v4552 = vpop.f32.mrf.mxu0
    %v4553 = vadd.f32 %v4384, %v4552
    %4554 = vdwg.mxu0
    %4555 = vmatpush.bf16.msra.mxu0 %v3130
    %4556 = vmatpush.bf16.msra.mxu0 %v3129
    %4557 = vmatpush.bf16.msra.mxu0 %v3128
    %4558 = vmatpush.bf16.msra.mxu0 %v3127
    %4559 = vmatpush.bf16.msra.mxu0 %v3126
    %4560 = vmatpush.bf16.msra.mxu0 %v3125
    %4561 = vmatpush.bf16.msra.mxu0 %v3124
    %4562 = vmatpush.bf16.msra.mxu0 %v3123
    %4563 = vmatmul.bf16.gmra.mxu0 %v2387
    %v4564 = vpop.f32.mrf.mxu0
    %v4565 = vadd.f32 %v4396, %v4564
    %v4566 = vpop.f32.mrf.mxu0
    %v4567 = vadd.f32 %v4398, %v4566
    %4568 = vmatmul.bf16.gmra.mxu0 %v2390
    %v4569 = vpop.f32.mrf.mxu0
    %v4570 = vadd.f32 %v4401, %v4569
    %v4571 = vpop.f32.mrf.mxu0
    %v4572 = vadd.f32 %v4403, %v4571
    %4573 = vmatmul.bf16.gmra.mxu0 %v2393
    %v4574 = vpop.f32.mrf.mxu0
    %v4575 = vadd.f32 %v4406, %v4574
    %v4576 = vpop.f32.mrf.mxu0
    %v4577 = vadd.f32 %v4408, %v4576
    %4578 = vmatmul.bf16.gmra.mxu0 %v2396
    %v4579 = vpop.f32.mrf.mxu0
    %v4580 = vadd.f32 %v4411, %v4579
    %v4581 = vpop.f32.mrf.mxu0
    %v4582 = vadd.f32 %v4413, %v4581
    %4583 = vmatmul.bf16.gmra.mxu0 %v2399
    %v4584 = vpop.f32.mrf.mxu0
    %v4585 = vadd.f32 %v4416, %v4584
    %v4586 = vpop.f32.mrf.mxu0
    %v4587 = vadd.f32 %v4418, %v4586
    %4588 = vmatmul.bf16.gmra.mxu0 %v2402
    %v4589 = vpop.f32.mrf.mxu0
    %v4590 = vadd.f32 %v4421, %v4589
    %v4591 = vpop.f32.mrf.mxu0
    %v4592 = vadd.f32 %v4423, %v4591
    %4593 = vmatmul.bf16.gmra.mxu0 %v2405
    %v4594 = vpop.f32.mrf.mxu0
    %v4595 = vadd.f32 %v4426, %v4594
    %v4596 = vpop.f32.mrf.mxu0
    %v4597 = vadd.f32 %v4428, %v4596
    %4598 = vmatmul.bf16.gmra.mxu0 %v2408
    %v4599 = vpop.f32.mrf.mxu0
    %v4600 = vadd.f32 %v4431, %v4599
    %v4601 = vpop.f32.mrf.mxu0
    %v4602 = vadd.f32 %v4433, %v4601
    %4603 = vmatmul.bf16.gmra.mxu0 %v2411
    %v4604 = vpop.f32.mrf.mxu0
    %v4605 = vadd.f32 %v4436, %v4604
    %v4606 = vpop.f32.mrf.mxu0
    %v4607 = vadd.f32 %v4438, %v4606
    %4608 = vmatmul.bf16.gmra.mxu0 %v2414
    %v4609 = vpop.f32.mrf.mxu0
    %v4610 = vadd.f32 %v4441, %v4609
    %v4611 = vpop.f32.mrf.mxu0
    %v4612 = vadd.f32 %v4443, %v4611
    %4613 = vmatmul.bf16.gmra.mxu0 %v2417
    %v4614 = vpop.f32.mrf.mxu0
    %v4615 = vadd.f32 %v4446, %v4614
    %v4616 = vpop.f32.mrf.mxu0
    %v4617 = vadd.f32 %v4448, %v4616
    %4618 = vmatmul.bf16.gmra.mxu0 %v2420
    %v4619 = vpop.f32.mrf.mxu0
    %v4620 = vadd.f32 %v4451, %v4619
    %v4621 = vpop.f32.mrf.mxu0
    %v4622 = vadd.f32 %v4453, %v4621
    %4623 = vmatmul.bf16.gmra.mxu0 %v2423
    %v4624 = vpop.f32.mrf.mxu0
    %v4625 = vadd.f32 %v4456, %v4624
    %v4626 = vpop.f32.mrf.mxu0
    %v4627 = vadd.f32 %v4458, %v4626
    %4628 = vmatmul.bf16.gmra.mxu0 %v2426
    %v4629 = vpop.f32.mrf.mxu0
    %v4630 = vadd.f32 %v4461, %v4629
    %v4631 = vpop.f32.mrf.mxu0
    %v4632 = vadd.f32 %v4463, %v4631
    %4633 = vmatmul.bf16.gmra.mxu0 %v2559
    %v4634 = vpop.f32.mrf.mxu0
    %v4635 = vadd.f32 %v4466, %v4634
    %v4636 = vpop.f32.mrf.mxu0
    %v4637 = vadd.f32 %v4468, %v4636
    %4638 = vmatmul.bf16.gmra.mxu0 %v2617
    %v4639 = vpop.f32.mrf.mxu0
    %v4640 = vadd.f32 %v4471, %v4639
    %v4641 = vpop.f32.mrf.mxu0
    %v4642 = vadd.f32 %v4473, %v4641
    %4643 = vmatmul.bf16.gmra.mxu0 %v2435
    %v4644 = vpop.f32.mrf.mxu0
    %v4645 = vadd.f32 %v4476, %v4644
    %v4646 = vpop.f32.mrf.mxu0
    %v4647 = vadd.f32 %v4478, %v4646
    %4648 = vmatmul.bf16.gmra.mxu0 %v2438
    %v4649 = vpop.f32.mrf.mxu0
    %v4650 = vadd.f32 %v4481, %v4649
    %v4651 = vpop.f32.mrf.mxu0
    %v4652 = vadd.f32 %v4483, %v4651
    %4653 = vmatmul.bf16.gmra.mxu0 %v2441
    %v4654 = vpop.f32.mrf.mxu0
    %v4655 = vadd.f32 %v4486, %v4654
    %v4656 = vpop.f32.mrf.mxu0
    %v4657 = vadd.f32 %v4488, %v4656
    %4658 = vmatmul.bf16.gmra.mxu0 %v2444
    %v4659 = vpop.f32.mrf.mxu0
    %v4660 = vadd.f32 %v4491, %v4659
    %v4661 = vpop.f32.mrf.mxu0
    %v4662 = vadd.f32 %v4493, %v4661
    %4663 = vmatmul.bf16.gmra.mxu0 %v2447
    %v4664 = vpop.f32.mrf.mxu0
    %v4665 = vadd.f32 %v4496, %v4664
    %v4666 = vpop.f32.mrf.mxu0
    %v4667 = vadd.f32 %v4498, %v4666
    %4668 = vmatmul.bf16.gmra.mxu0 %v2450
    %v4669 = vpop.f32.mrf.mxu0
    %v4670 = vadd.f32 %v4501, %v4669
    %v4671 = vpop.f32.mrf.mxu0
    %v4672 = vadd.f32 %v4503, %v4671
    %4673 = vmatmul.bf16.gmra.mxu0 %v2453
    %v4674 = vpop.f32.mrf.mxu0
    %v4675 = vadd.f32 %v4506, %v4674
    %v4676 = vpop.f32.mrf.mxu0
    %v4677 = vadd.f32 %v4508, %v4676
    %4678 = vmatmul.bf16.gmra.mxu0 %v2456
    %v4679 = vpop.f32.mrf.mxu0
    %v4680 = vadd.f32 %v4511, %v4679
    %v4681 = vpop.f32.mrf.mxu0
    %v4682 = vadd.f32 %v4513, %v4681
    %4683 = vmatmul.bf16.gmra.mxu0 %v2459
    %v4684 = vpop.f32.mrf.mxu0
    %v4685 = vadd.f32 %v4516, %v4684
    %v4686 = vpop.f32.mrf.mxu0
    %v4687 = vadd.f32 %v4518, %v4686
    %4688 = vmatmul.bf16.gmra.mxu0 %v2462
    %v4689 = vpop.f32.mrf.mxu0
    %v4690 = vadd.f32 %v4521, %v4689
    %v4691 = vpop.f32.mrf.mxu0
    %v4692 = vadd.f32 %v4523, %v4691
    %4693 = vmatmul.bf16.gmra.mxu0 %v2465
    %v4694 = vpop.f32.mrf.mxu0
    %v4695 = vadd.f32 %v4526, %v4694
    %v4696 = vpop.f32.mrf.mxu0
    %v4697 = vadd.f32 %v4528, %v4696
    %4698 = vmatmul.bf16.gmra.mxu0 %v2468
    %v4699 = vpop.f32.mrf.mxu0
    %v4700 = vadd.f32 %v4531, %v4699
    %v4701 = vpop.f32.mrf.mxu0
    %v4702 = vadd.f32 %v4533, %v4701
    %4703 = vmatmul.bf16.gmra.mxu0 %v2471
    %v4704 = vpop.f32.mrf.mxu0
    %v4705 = vadd.f32 %v4536, %v4704
    %v4706 = vpop.f32.mrf.mxu0
    %v4707 = vadd.f32 %v4538, %v4706
    %4708 = vmatmul.bf16.gmra.mxu0 %v2474
    %v4709 = vpop.f32.mrf.mxu0
    %v4710 = vadd.f32 %v4541, %v4709
    %v4711 = vpop.f32.mrf.mxu0
    %v4712 = vadd.f32 %v4543, %v4711
    %4713 = vmatmul.bf16.gmra.mxu0 %v2562
    %v4714 = vpop.f32.mrf.mxu0
    %v4715 = vadd.f32 %v4546, %v4714
    %v4716 = vpop.f32.mrf.mxu0
    %v4717 = vadd.f32 %v4548, %v4716
    %4718 = vmatmul.bf16.gmra.mxu0 %v2620
    %v4719 = vpop.f32.mrf.mxu0
    %v4720 = vadd.f32 %v4551, %v4719
    %v4721 = vpop.f32.mrf.mxu0
    %v4722 = vadd.f32 %v4553, %v4721
    %4723 = vdwg.mxu0
    %v4724 = vmax.f32 %v4565, 0.0
    %v4725 = vmax.f32 %v4567, 0.0
    %v4726 = vmax.f32 %v4570, 0.0
    %v4727 = vmax.f32 %v4572, 0.0
    %v4728 = vmax.f32 %v4575, 0.0
    %v4729 = vmax.f32 %v4577, 0.0
    %v4730 = vmax.f32 %v4580, 0.0
    %v4731 = vmax.f32 %v4582, 0.0
    %v4732 = vmax.f32 %v4585, 0.0
    %v4733 = vmax.f32 %v4587, 0.0
    %v4734 = vmax.f32 %v4590, 0.0
    %v4735 = vmax.f32 %v4592, 0.0
    %v4736 = vmax.f32 %v4595, 0.0
    %v4737 = vmax.f32 %v4597, 0.0
    %v4738 = vmax.f32 %v4600, 0.0
    %v4739 = vmax.f32 %v4602, 0.0
    %v4740 = vmax.f32 %v4605, 0.0
    %v4741 = vmax.f32 %v4607, 0.0
    %v4742 = vmax.f32 %v4610, 0.0
    %v4743 = vmax.f32 %v4612, 0.0
    %v4744 = vmax.f32 %v4615, 0.0
    %v4745 = vmax.f32 %v4617, 0.0
    %v4746 = vmax.f32 %v4620, 0.0
    %v4747 = vmax.f32 %v4622, 0.0
    %v4748 = vmax.f32 %v4625, 0.0
    %v4749 = vmax.f32 %v4627, 0.0
    %v4750 = vmax.f32 %v4630, 0.0
    %v4751 = vmax.f32 %v4632, 0.0
    %v4752 = vmax.f32 %v4635, 0.0
    %v4753 = vmax.f32 %v4637, 0.0
    %v4754 = vmax.f32 %v4640, 0.0
    %v4755 = vmax.f32 %v4642, 0.0
    %v4756 = vmax.f32 %v4645, 0.0
    %v4757 = vmax.f32 %v4647, 0.0
    %v4758 = vmax.f32 %v4650, 0.0
    %v4759 = vmax.f32 %v4652, 0.0
    %v4760 = vmax.f32 %v4655, 0.0
    %v4761 = vmax.f32 %v4657, 0.0
    %v4762 = vmax.f32 %v4660, 0.0
    %v4763 = vmax.f32 %v4662, 0.0
    %v4764 = vmax.f32 %v4665, 0.0
    %v4765 = vmax.f32 %v4667, 0.0
    %v4766 = vmax.f32 %v4670, 0.0
    %v4767 = vmax.f32 %v4672, 0.0
    %v4768 = vmax.f32 %v4675, 0.0
    %v4769 = vmax.f32 %v4677, 0.0
    %v4770 = vmax.f32 %v4680, 0.0
    %v4771 = vmax.f32 %v4682, 0.0
    %v4772 = vmax.f32 %v4685, 0.0
    %v4773 = vmax.f32 %v4687, 0.0
    %v4774 = vmax.f32 %v4690, 0.0
    %v4775 = vmax.f32 %v4692, 0.0
    %v4776 = vmax.f32 %v4695, 0.0
    %v4777 = vmax.f32 %v4697, 0.0
    %v4778 = vmax.f32 %v4700, 0.0
    %v4779 = vmax.f32 %v4702, 0.0
    %v4780 = vmax.f32 %v4705, 0.0
    %v4781 = vmax.f32 %v4707, 0.0
    %v4782 = vmax.f32 %v4710, 0.0
    %v4783 = vmax.f32 %v4712, 0.0
    %v4784 = vmax.f32 %v4715, 0.0
    %v4785 = vmax.f32 %v4717, 0.0
    %v4786 = vmax.f32 %v4720, 0.0
    %v4787 = vmax.f32 %v4722, 0.0
    %v4788 = vpack.c.bf16 %v4724, %v4724
    %v4789 = vpack.c.bf16 %v4725, %v4725
    %v4790 = vpack.c.bf16 %v4726, %v4726
    %v4791 = vpack.c.bf16 %v4727, %v4727
    %v4792 = vpack.c.bf16 %v4728, %v4728
    %v4793 = vpack.c.bf16 %v4729, %v4729
    %v4794 = vpack.c.bf16 %v4730, %v4730
    %v4795 = vpack.c.bf16 %v4731, %v4731
    %v4796 = vpack.c.bf16 %v4732, %v4732
    %v4797 = vpack.c.bf16 %v4733, %v4733
    %v4798 = vpack.c.bf16 %v4734, %v4734
    %v4799 = vpack.c.bf16 %v4735, %v4735
    %v4800 = vpack.c.bf16 %v4736, %v4736
    %v4801 = vpack.c.bf16 %v4737, %v4737
    %v4802 = vpack.c.bf16 %v4738, %v4738
    %v4803 = vpack.c.bf16 %v4739, %v4739
    %v4804 = vpack.c.bf16 %v4740, %v4740
    %v4805 = vpack.c.bf16 %v4741, %v4741
    %v4806 = vpack.c.bf16 %v4742, %v4742
    %v4807 = vpack.c.bf16 %v4743, %v4743
    %v4808 = vpack.c.bf16 %v4744, %v4744
    %v4809 = vpack.c.bf16 %v4745, %v4745
    %v4810 = vpack.c.bf16 %v4746, %v4746
    %v4811 = vpack.c.bf16 %v4747, %v4747
    %v4812 = vpack.c.bf16 %v4748, %v4748
    %v4813 = vpack.c.bf16 %v4749, %v4749
    %v4814 = vpack.c.bf16 %v4750, %v4750
    %v4815 = vpack.c.bf16 %v4751, %v4751
    %v4816 = vpack.c.bf16 %v4752, %v4752
    %v4817 = vpack.c.bf16 %v4753, %v4753
    %v4818 = vpack.c.bf16 %v4754, %v4754
    %v4819 = vpack.c.bf16 %v4755, %v4755
    %v4820 = vpack.c.bf16 %v4756, %v4756
    %v4821 = vpack.c.bf16 %v4757, %v4757
    %v4822 = vpack.c.bf16 %v4758, %v4758
    %v4823 = vpack.c.bf16 %v4759, %v4759
    %v4824 = vpack.c.bf16 %v4760, %v4760
    %v4825 = vpack.c.bf16 %v4761, %v4761
    %v4826 = vpack.c.bf16 %v4762, %v4762
    %v4827 = vpack.c.bf16 %v4763, %v4763
    %v4828 = vpack.c.bf16 %v4764, %v4764
    %v4829 = vpack.c.bf16 %v4765, %v4765
    %v4830 = vpack.c.bf16 %v4766, %v4766
    %v4831 = vpack.c.bf16 %v4767, %v4767
    %v4832 = vpack.c.bf16 %v4768, %v4768
    %v4833 = vpack.c.bf16 %v4769, %v4769
    %v4834 = vpack.c.bf16 %v4770, %v4770
    %v4835 = vpack.c.bf16 %v4771, %v4771
    %v4836 = vpack.c.bf16 %v4772, %v4772
    %v4837 = vpack.c.bf16 %v4773, %v4773
    %v4838 = vpack.c.bf16 %v4774, %v4774
    %v4839 = vpack.c.bf16 %v4775, %v4775
    %v4840 = vpack.c.bf16 %v4776, %v4776
    %v4841 = vpack.c.bf16 %v4777, %v4777
    %v4842 = vpack.c.bf16 %v4778, %v4778
    %v4843 = vpack.c.bf16 %v4779, %v4779
    %v4844 = vpack.c.bf16 %v4780, %v4780
    %v4845 = vpack.c.bf16 %v4781, %v4781
    %v4846 = vpack.c.bf16 %v4782, %v4782
    %v4847 = vpack.c.bf16 %v4783, %v4783
    %v4848 = vpack.c.bf16 %v4784, %v4784
    %v4849 = vpack.c.bf16 %v4785, %v4785
    %v4850 = vpack.c.bf16 %v4786, %v4786
    %v4851 = vpack.c.bf16 %v4787, %v4787
    %v4853 = vshrl.u32 %v4788, 16
    %v4855 = vrot.slane %v4853, 7
    %v4856 = vshll.u32 %v4788, 16
    %v4858 = vor.u32 %v4855, %v4856
    %v4859 = vrot.slane %v4855, 4
    %v4861 = vshrl.u32 %v4789, 16
    %v4863 = vrot.slane %v4861, 7
    %v4864 = vshll.u32 %v4789, 16
    %v4866 = vor.u32 %v4863, %v4864
    %v4867 = vsel %vm565, %v4859, %v4866
    %v4868 = vrot.slane %v4863, 4
    %v4870 = vshrl.u32 %v4790, 16
    %v4872 = vrot.slane %v4870, 7
    %v4873 = vshll.u32 %v4790, 16
    %v4875 = vor.u32 %v4872, %v4873
    %v4876 = vrot.slane %v4872, 4
    %v4878 = vshrl.u32 %v4791, 16
    %v4880 = vrot.slane %v4878, 7
    %v4881 = vshll.u32 %v4791, 16
    %v4883 = vor.u32 %v4880, %v4881
    %v4884 = vsel %vm565, %v4876, %v4883
    %v4885 = vrot.slane %v4880, 4
    %v4887 = vshrl.u32 %v4792, 16
    %v4889 = vrot.slane %v4887, 7
    %v4890 = vshll.u32 %v4792, 16
    %v4892 = vor.u32 %v4889, %v4890
    %v4893 = vrot.slane %v4889, 4
    %v4895 = vshrl.u32 %v4793, 16
    %v4897 = vrot.slane %v4895, 7
    %v4898 = vshll.u32 %v4793, 16
    %v4900 = vor.u32 %v4897, %v4898
    %v4901 = vsel %vm565, %v4893, %v4900
    %v4902 = vrot.slane %v4897, 4
    %v4904 = vshrl.u32 %v4794, 16
    %v4906 = vrot.slane %v4904, 7
    %v4907 = vshll.u32 %v4794, 16
    %v4909 = vor.u32 %v4906, %v4907
    %v4910 = vrot.slane %v4906, 4
    %v4912 = vshrl.u32 %v4795, 16
    %v4914 = vrot.slane %v4912, 7
    %v4915 = vshll.u32 %v4795, 16
    %v4917 = vor.u32 %v4914, %v4915
    %v4918 = vsel %vm565, %v4910, %v4917
    %v4919 = vrot.slane %v4914, 4
    %v4921 = vshrl.u32 %v4796, 16
    %v4923 = vrot.slane %v4921, 7
    %v4924 = vshll.u32 %v4796, 16
    %v4926 = vor.u32 %v4923, %v4924
    %v4927 = vrot.slane %v4923, 4
    %v4929 = vshrl.u32 %v4797, 16
    %v4931 = vrot.slane %v4929, 7
    %v4932 = vshll.u32 %v4797, 16
    %v4934 = vor.u32 %v4931, %v4932
    %v4935 = vsel %vm565, %v4927, %v4934
    %v4936 = vrot.slane %v4931, 4
    %v4938 = vshrl.u32 %v4798, 16
    %v4940 = vrot.slane %v4938, 7
    %v4941 = vshll.u32 %v4798, 16
    %v4943 = vor.u32 %v4940, %v4941
    %v4944 = vrot.slane %v4940, 4
    %v4946 = vshrl.u32 %v4799, 16
    %v4948 = vrot.slane %v4946, 7
    %v4949 = vshll.u32 %v4799, 16
    %v4951 = vor.u32 %v4948, %v4949
    %v4952 = vsel %vm565, %v4944, %v4951
    %v4953 = vrot.slane %v4948, 4
    %v4955 = vshrl.u32 %v4800, 16
    %v4957 = vrot.slane %v4955, 7
    %v4958 = vshll.u32 %v4800, 16
    %v4960 = vor.u32 %v4957, %v4958
    %v4961 = vrot.slane %v4957, 4
    %v4963 = vshrl.u32 %v4801, 16
    %v4965 = vrot.slane %v4963, 7
    %v4966 = vshll.u32 %v4801, 16
    %v4968 = vor.u32 %v4965, %v4966
    %v4969 = vsel %vm565, %v4961, %v4968
    %v4970 = vrot.slane %v4965, 4
    %v4972 = vshrl.u32 %v4802, 16
    %v4974 = vrot.slane %v4972, 7
    %v4975 = vshll.u32 %v4802, 16
    %v4977 = vor.u32 %v4974, %v4975
    %v4978 = vrot.slane %v4974, 4
    %v4980 = vshrl.u32 %v4803, 16
    %v4982 = vrot.slane %v4980, 7
    %v4983 = vshll.u32 %v4803, 16
    %v4985 = vor.u32 %v4982, %v4983
    %v4986 = vsel %vm565, %v4978, %v4985
    %v4987 = vrot.slane %v4982, 4
    %v4989 = vshrl.u32 %v4804, 16
    %v4991 = vrot.slane %v4989, 7
    %v4992 = vshll.u32 %v4804, 16
    %v4994 = vor.u32 %v4991, %v4992
    %v4995 = vrot.slane %v4991, 4
    %v4997 = vshrl.u32 %v4805, 16
    %v4999 = vrot.slane %v4997, 7
    %v5000 = vshll.u32 %v4805, 16
    %v5002 = vor.u32 %v4999, %v5000
    %v5003 = vsel %vm565, %v4995, %v5002
    %v5004 = vrot.slane %v4999, 4
    %v5006 = vshrl.u32 %v4806, 16
    %v5008 = vrot.slane %v5006, 7
    %v5009 = vshll.u32 %v4806, 16
    %v5011 = vor.u32 %v5008, %v5009
    %v5012 = vrot.slane %v5008, 4
    %v5014 = vshrl.u32 %v4807, 16
    %v5016 = vrot.slane %v5014, 7
    %v5017 = vshll.u32 %v4807, 16
    %v5019 = vor.u32 %v5016, %v5017
    %v5020 = vsel %vm565, %v5012, %v5019
    %v5021 = vrot.slane %v5016, 4
    %v5023 = vshrl.u32 %v4808, 16
    %v5025 = vrot.slane %v5023, 7
    %v5026 = vshll.u32 %v4808, 16
    %v5028 = vor.u32 %v5025, %v5026
    %v5029 = vrot.slane %v5025, 4
    %v5031 = vshrl.u32 %v4809, 16
    %v5033 = vrot.slane %v5031, 7
    %v5034 = vshll.u32 %v4809, 16
    %v5036 = vor.u32 %v5033, %v5034
    %v5037 = vsel %vm565, %v5029, %v5036
    %v5038 = vrot.slane %v5033, 4
    %v5040 = vshrl.u32 %v4810, 16
    %v5042 = vrot.slane %v5040, 7
    %v5043 = vshll.u32 %v4810, 16
    %v5045 = vor.u32 %v5042, %v5043
    %v5046 = vrot.slane %v5042, 4
    %v5048 = vshrl.u32 %v4811, 16
    %v5050 = vrot.slane %v5048, 7
    %v5051 = vshll.u32 %v4811, 16
    %v5053 = vor.u32 %v5050, %v5051
    %v5054 = vsel %vm565, %v5046, %v5053
    %v5055 = vrot.slane %v5050, 4
    %v5057 = vshrl.u32 %v4812, 16
    %v5059 = vrot.slane %v5057, 7
    %v5060 = vshll.u32 %v4812, 16
    %v5062 = vor.u32 %v5059, %v5060
    %v5063 = vrot.slane %v5059, 4
    %v5065 = vshrl.u32 %v4813, 16
    %v5067 = vrot.slane %v5065, 7
    %v5068 = vshll.u32 %v4813, 16
    %v5070 = vor.u32 %v5067, %v5068
    %v5071 = vsel %vm565, %v5063, %v5070
    %v5072 = vrot.slane %v5067, 4
    %v5074 = vshrl.u32 %v4814, 16
    %v5076 = vrot.slane %v5074, 7
    %v5077 = vshll.u32 %v4814, 16
    %v5079 = vor.u32 %v5076, %v5077
    %v5080 = vrot.slane %v5076, 4
    %v5082 = vshrl.u32 %v4815, 16
    %v5084 = vrot.slane %v5082, 7
    %v5085 = vshll.u32 %v4815, 16
    %v5087 = vor.u32 %v5084, %v5085
    %v5088 = vsel %vm565, %v5080, %v5087
    %v5089 = vrot.slane %v5084, 4
    %v5091 = vshrl.u32 %v4816, 16
    %v5093 = vrot.slane %v5091, 7
    %v5094 = vshll.u32 %v4816, 16
    %v5096 = vor.u32 %v5093, %v5094
    %v5097 = vrot.slane %v5093, 4
    %v5099 = vshrl.u32 %v4817, 16
    %v5101 = vrot.slane %v5099, 7
    %v5102 = vshll.u32 %v4817, 16
    %v5104 = vor.u32 %v5101, %v5102
    %v5105 = vsel %vm565, %v5097, %v5104
    %v5106 = vrot.slane %v5101, 4
    %v5108 = vshrl.u32 %v4818, 16
    %v5110 = vrot.slane %v5108, 7
    %v5111 = vshll.u32 %v4818, 16
    %v5113 = vor.u32 %v5110, %v5111
    %v5114 = vrot.slane %v5110, 4
    %v5116 = vshrl.u32 %v4819, 16
    %v5118 = vrot.slane %v5116, 7
    %v5119 = vshll.u32 %v4819, 16
    %v5121 = vor.u32 %v5118, %v5119
    %v5122 = vsel %vm565, %v5114, %v5121
    %v5123 = vrot.slane %v5118, 4
    %v5125 = vshrl.u32 %v4820, 16
    %v5127 = vrot.slane %v5125, 7
    %v5128 = vshll.u32 %v4820, 16
    %v5130 = vor.u32 %v5127, %v5128
    %v5131 = vrot.slane %v5127, 4
    %v5133 = vshrl.u32 %v4821, 16
    %v5135 = vrot.slane %v5133, 7
    %v5136 = vshll.u32 %v4821, 16
    %v5138 = vor.u32 %v5135, %v5136
    %v5139 = vsel %vm565, %v5131, %v5138
    %v5140 = vrot.slane %v5135, 4
    %v5142 = vshrl.u32 %v4822, 16
    %v5144 = vrot.slane %v5142, 7
    %v5145 = vshll.u32 %v4822, 16
    %v5147 = vor.u32 %v5144, %v5145
    %v5148 = vrot.slane %v5144, 4
    %v5150 = vshrl.u32 %v4823, 16
    %v5152 = vrot.slane %v5150, 7
    %v5153 = vshll.u32 %v4823, 16
    %v5155 = vor.u32 %v5152, %v5153
    %v5156 = vsel %vm565, %v5148, %v5155
    %v5157 = vrot.slane %v5152, 4
    %v5159 = vshrl.u32 %v4824, 16
    %v5161 = vrot.slane %v5159, 7
    %v5162 = vshll.u32 %v4824, 16
    %v5164 = vor.u32 %v5161, %v5162
    %v5165 = vrot.slane %v5161, 4
    %v5167 = vshrl.u32 %v4825, 16
    %v5169 = vrot.slane %v5167, 7
    %v5170 = vshll.u32 %v4825, 16
    %v5172 = vor.u32 %v5169, %v5170
    %v5173 = vsel %vm565, %v5165, %v5172
    %v5174 = vrot.slane %v5169, 4
    %v5176 = vshrl.u32 %v4826, 16
    %v5178 = vrot.slane %v5176, 7
    %v5179 = vshll.u32 %v4826, 16
    %v5181 = vor.u32 %v5178, %v5179
    %v5182 = vrot.slane %v5178, 4
    %v5184 = vshrl.u32 %v4827, 16
    %v5186 = vrot.slane %v5184, 7
    %v5187 = vshll.u32 %v4827, 16
    %v5189 = vor.u32 %v5186, %v5187
    %v5190 = vsel %vm565, %v5182, %v5189
    %v5191 = vrot.slane %v5186, 4
    %v5193 = vshrl.u32 %v4828, 16
    %v5195 = vrot.slane %v5193, 7
    %v5196 = vshll.u32 %v4828, 16
    %v5198 = vor.u32 %v5195, %v5196
    %v5199 = vrot.slane %v5195, 4
    %v5201 = vshrl.u32 %v4829, 16
    %v5203 = vrot.slane %v5201, 7
    %v5204 = vshll.u32 %v4829, 16
    %v5206 = vor.u32 %v5203, %v5204
    %v5207 = vsel %vm565, %v5199, %v5206
    %v5208 = vrot.slane %v5203, 4
    %v5210 = vshrl.u32 %v4830, 16
    %v5212 = vrot.slane %v5210, 7
    %v5213 = vshll.u32 %v4830, 16
    %v5215 = vor.u32 %v5212, %v5213
    %v5216 = vrot.slane %v5212, 4
    %v5218 = vshrl.u32 %v4831, 16
    %v5220 = vrot.slane %v5218, 7
    %v5221 = vshll.u32 %v4831, 16
    %v5223 = vor.u32 %v5220, %v5221
    %v5224 = vsel %vm565, %v5216, %v5223
    %v5225 = vrot.slane %v5220, 4
    %v5227 = vshrl.u32 %v4832, 16
    %v5229 = vrot.slane %v5227, 7
    %v5230 = vshll.u32 %v4832, 16
    %v5232 = vor.u32 %v5229, %v5230
    %v5233 = vrot.slane %v5229, 4
    %v5235 = vshrl.u32 %v4833, 16
    %v5237 = vrot.slane %v5235, 7
    %v5238 = vshll.u32 %v4833, 16
    %v5240 = vor.u32 %v5237, %v5238
    %v5241 = vsel %vm565, %v5233, %v5240
    %v5242 = vrot.slane %v5237, 4
    %v5244 = vshrl.u32 %v4834, 16
    %v5246 = vrot.slane %v5244, 7
    %v5247 = vshll.u32 %v4834, 16
    %v5249 = vor.u32 %v5246, %v5247
    %v5250 = vrot.slane %v5246, 4
    %v5252 = vshrl.u32 %v4835, 16
    %v5254 = vrot.slane %v5252, 7
    %v5255 = vshll.u32 %v4835, 16
    %v5257 = vor.u32 %v5254, %v5255
    %v5258 = vsel %vm565, %v5250, %v5257
    %v5259 = vrot.slane %v5254, 4
    %v5261 = vshrl.u32 %v4836, 16
    %v5263 = vrot.slane %v5261, 7
    %v5264 = vshll.u32 %v4836, 16
    %v5266 = vor.u32 %v5263, %v5264
    %v5267 = vrot.slane %v5263, 4
    %v5269 = vshrl.u32 %v4837, 16
    %v5271 = vrot.slane %v5269, 7
    %v5272 = vshll.u32 %v4837, 16
    %v5274 = vor.u32 %v5271, %v5272
    %v5275 = vsel %vm565, %v5267, %v5274
    %v5276 = vrot.slane %v5271, 4
    %v5278 = vshrl.u32 %v4838, 16
    %v5280 = vrot.slane %v5278, 7
    %v5281 = vshll.u32 %v4838, 16
    %v5283 = vor.u32 %v5280, %v5281
    %v5284 = vrot.slane %v5280, 4
    %v5286 = vshrl.u32 %v4839, 16
    %v5288 = vrot.slane %v5286, 7
    %v5289 = vshll.u32 %v4839, 16
    %v5291 = vor.u32 %v5288, %v5289
    %v5292 = vsel %vm565, %v5284, %v5291
    %v5293 = vrot.slane %v5288, 4
    %v5295 = vshrl.u32 %v4840, 16
    %v5297 = vrot.slane %v5295, 7
    %v5298 = vshll.u32 %v4840, 16
    %v5300 = vor.u32 %v5297, %v5298
    %v5301 = vrot.slane %v5297, 4
    %v5303 = vshrl.u32 %v4841, 16
    %v5305 = vrot.slane %v5303, 7
    %v5306 = vshll.u32 %v4841, 16
    %v5308 = vor.u32 %v5305, %v5306
    %v5309 = vsel %vm565, %v5301, %v5308
    %v5310 = vrot.slane %v5305, 4
    %v5312 = vshrl.u32 %v4842, 16
    %v5314 = vrot.slane %v5312, 7
    %v5315 = vshll.u32 %v4842, 16
    %v5317 = vor.u32 %v5314, %v5315
    %v5318 = vrot.slane %v5314, 4
    %v5320 = vshrl.u32 %v4843, 16
    %v5322 = vrot.slane %v5320, 7
    %v5323 = vshll.u32 %v4843, 16
    %v5325 = vor.u32 %v5322, %v5323
    %v5326 = vsel %vm565, %v5318, %v5325
    %v5327 = vrot.slane %v5322, 4
    %v5329 = vshrl.u32 %v4844, 16
    %v5331 = vrot.slane %v5329, 7
    %v5332 = vshll.u32 %v4844, 16
    %v5334 = vor.u32 %v5331, %v5332
    %v5335 = vrot.slane %v5331, 4
    %v5337 = vshrl.u32 %v4845, 16
    %v5339 = vrot.slane %v5337, 7
    %v5340 = vshll.u32 %v4845, 16
    %v5342 = vor.u32 %v5339, %v5340
    %v5343 = vsel %vm565, %v5335, %v5342
    %v5344 = vrot.slane %v5339, 4
    %v5346 = vshrl.u32 %v4846, 16
    %v5348 = vrot.slane %v5346, 7
    %v5349 = vshll.u32 %v4846, 16
    %v5351 = vor.u32 %v5348, %v5349
    %v5352 = vrot.slane %v5348, 4
    %v5354 = vshrl.u32 %v4847, 16
    %v5356 = vrot.slane %v5354, 7
    %v5357 = vshll.u32 %v4847, 16
    %v5359 = vor.u32 %v5356, %v5357
    %v5360 = vsel %vm565, %v5352, %v5359
    %v5361 = vrot.slane %v5356, 4
    %v5363 = vshrl.u32 %v4848, 16
    %v5365 = vrot.slane %v5363, 7
    %v5366 = vshll.u32 %v4848, 16
    %v5368 = vor.u32 %v5365, %v5366
    %v5369 = vrot.slane %v5365, 4
    %v5371 = vshrl.u32 %v4849, 16
    %v5373 = vrot.slane %v5371, 7
    %v5374 = vshll.u32 %v4849, 16
    %v5376 = vor.u32 %v5373, %v5374
    %v5377 = vsel %vm565, %v5369, %v5376
    %v5378 = vrot.slane %v5373, 4
    %v5380 = vshrl.u32 %v4850, 16
    %v5382 = vrot.slane %v5380, 7
    %v5383 = vshll.u32 %v4850, 16
    %v5385 = vor.u32 %v5382, %v5383
    %v5386 = vrot.slane %v5382, 4
    %v5388 = vshrl.u32 %v4851, 16
    %v5390 = vrot.slane %v5388, 7
    %v5391 = vshll.u32 %v4851, 16
    %v5393 = vor.u32 %v5390, %v5391
    %v5394 = vsel %vm565, %v5386, %v5393
    %v5395 = vrot.slane %v5390, 4
    %s5492 = scalar_lea.vmem [#allocation3], 12
    %v5493 = vld [vmem:[%s5492] sm:$0xf]
    %v5494 = vsel %vm1208, %v4858, %v5493
    %5495 = vst [vmem:[%s5492] sm:$0xf] %v5494
    %5496 = vst [vmem:[%s5492 + $0x4] sm:$0xf] %v4867
    %v5497 = vld [vmem:[%s5492 + $0x8] sm:$0x1]
    %v5498 = vsel %vm52, %v4868, %v5497
    %5499 = vst [vmem:[%s5492 + $0x8] sm:$0x1] %v5498
    %v5500 = vld [vmem:[%s5492 + $0xc] sm:$0xf]
    %v5501 = vsel %vm1208, %v4875, %v5500
    %5502 = vst [vmem:[%s5492 + $0xc] sm:$0xf] %v5501
    %5503 = vst [vmem:[%s5492 + $0x10] sm:$0xf] %v4884
    %v5504 = vld [vmem:[%s5492 + $0x14] sm:$0x1]
    %v5505 = vsel %vm52, %v4885, %v5504
    %5506 = vst [vmem:[%s5492 + $0x14] sm:$0x1] %v5505
    %v5507 = vld [vmem:[%s5492 + $0x18] sm:$0xf]
    %v5508 = vsel %vm1208, %v4892, %v5507
    %5509 = vst [vmem:[%s5492 + $0x18] sm:$0xf] %v5508
    %5510 = vst [vmem:[%s5492 + $0x1c] sm:$0xf] %v4901
    %v5511 = vld [vmem:[%s5492 + $0x20] sm:$0x1]
    %v5512 = vsel %vm52, %v4902, %v5511
    %5513 = vst [vmem:[%s5492 + $0x20] sm:$0x1] %v5512
    %v5514 = vld [vmem:[%s5492 + $0x24] sm:$0xf]
    %v5515 = vsel %vm1208, %v4909, %v5514
    %5516 = vst [vmem:[%s5492 + $0x24] sm:$0xf] %v5515
    %5517 = vst [vmem:[%s5492 + $0x28] sm:$0xf] %v4918
    %v5518 = vld [vmem:[%s5492 + $0x2c] sm:$0x1]
    %v5519 = vsel %vm52, %v4919, %v5518
    %5520 = vst [vmem:[%s5492 + $0x2c] sm:$0x1] %v5519
    %v5521 = vld [vmem:[%s5492 + $0x30] sm:$0xf]
    %v5522 = vsel %vm1208, %v4926, %v5521
    %5523 = vst [vmem:[%s5492 + $0x30] sm:$0xf] %v5522
    %5524 = vst [vmem:[%s5492 + $0x34] sm:$0xf] %v4935
    %v5525 = vld [vmem:[%s5492 + $0x38] sm:$0x1]
    %v5526 = vsel %vm52, %v4936, %v5525
    %5527 = vst [vmem:[%s5492 + $0x38] sm:$0x1] %v5526
    %v5528 = vld [vmem:[%s5492 + $0x3c] sm:$0xf]
    %v5529 = vsel %vm1208, %v4943, %v5528
    %5530 = vst [vmem:[%s5492 + $0x3c] sm:$0xf] %v5529
    %5531 = vst [vmem:[%s5492 + $0x40] sm:$0xf] %v4952
    %v5532 = vld [vmem:[%s5492 + $0x44] sm:$0x1]
    %v5533 = vsel %vm52, %v4953, %v5532
    %5534 = vst [vmem:[%s5492 + $0x44] sm:$0x1] %v5533
    %v5535 = vld [vmem:[%s5492 + $0x48] sm:$0xf]
    %v5536 = vsel %vm1208, %v4960, %v5535
    %5537 = vst [vmem:[%s5492 + $0x48] sm:$0xf] %v5536
    %5538 = vst [vmem:[%s5492 + $0x4c] sm:$0xf] %v4969
    %v5539 = vld [vmem:[%s5492 + $0x50] sm:$0x1]
    %v5540 = vsel %vm52, %v4970, %v5539
    %5541 = vst [vmem:[%s5492 + $0x50] sm:$0x1] %v5540
    %v5542 = vld [vmem:[%s5492 + $0x54] sm:$0xf]
    %v5543 = vsel %vm1208, %v4977, %v5542
    %5544 = vst [vmem:[%s5492 + $0x54] sm:$0xf] %v5543
    %5545 = vst [vmem:[%s5492 + $0x58] sm:$0xf] %v4986
    %v5546 = vld [vmem:[%s5492 + $0x5c] sm:$0x1]
    %v5547 = vsel %vm52, %v4987, %v5546
    %5548 = vst [vmem:[%s5492 + $0x5c] sm:$0x1] %v5547
    %v5549 = vld [vmem:[%s5492 + $0x60] sm:$0xf]
    %v5550 = vsel %vm1208, %v4994, %v5549
    %5551 = vst [vmem:[%s5492 + $0x60] sm:$0xf] %v5550
    %5552 = vst [vmem:[%s5492 + $0x64] sm:$0xf] %v5003
    %v5553 = vld [vmem:[%s5492 + $0x68] sm:$0x1]
    %v5554 = vsel %vm52, %v5004, %v5553
    %5555 = vst [vmem:[%s5492 + $0x68] sm:$0x1] %v5554
    %v5556 = vld [vmem:[%s5492 + $0x6c] sm:$0xf]
    %v5557 = vsel %vm1208, %v5011, %v5556
    %5558 = vst [vmem:[%s5492 + $0x6c] sm:$0xf] %v5557
    %5559 = vst [vmem:[%s5492 + $0x70] sm:$0xf] %v5020
    %v5560 = vld [vmem:[%s5492 + $0x74] sm:$0x1]
    %v5561 = vsel %vm52, %v5021, %v5560
    %5562 = vst [vmem:[%s5492 + $0x74] sm:$0x1] %v5561
    %v5563 = vld [vmem:[%s5492 + $0x78] sm:$0xf]
    %v5564 = vsel %vm1208, %v5028, %v5563
    %5565 = vst [vmem:[%s5492 + $0x78] sm:$0xf] %v5564
    %5566 = vst [vmem:[%s5492 + $0x7c] sm:$0xf] %v5037
    %v5567 = vld [vmem:[%s5492 + $0x80] sm:$0x1]
    %v5568 = vsel %vm52, %v5038, %v5567
    %5569 = vst [vmem:[%s5492 + $0x80] sm:$0x1] %v5568
    %v5570 = vld [vmem:[%s5492 + $0x84] sm:$0xf]
    %v5571 = vsel %vm1208, %v5045, %v5570
    %5572 = vst [vmem:[%s5492 + $0x84] sm:$0xf] %v5571
    %5573 = vst [vmem:[%s5492 + $0x88] sm:$0xf] %v5054
    %v5574 = vld [vmem:[%s5492 + $0x8c] sm:$0x1]
    %v5575 = vsel %vm52, %v5055, %v5574
    %5576 = vst [vmem:[%s5492 + $0x8c] sm:$0x1] %v5575
    %v5577 = vld [vmem:[%s5492 + $0x90] sm:$0xf]
    %v5578 = vsel %vm1208, %v5062, %v5577
    %5579 = vst [vmem:[%s5492 + $0x90] sm:$0xf] %v5578
    %5580 = vst [vmem:[%s5492 + $0x94] sm:$0xf] %v5071
    %v5581 = vld [vmem:[%s5492 + $0x98] sm:$0x1]
    %v5582 = vsel %vm52, %v5072, %v5581
    %5583 = vst [vmem:[%s5492 + $0x98] sm:$0x1] %v5582
    %v5584 = vld [vmem:[%s5492 + $0x9c] sm:$0xf]
    %v5585 = vsel %vm1208, %v5079, %v5584
    %5586 = vst [vmem:[%s5492 + $0x9c] sm:$0xf] %v5585
    %5587 = vst [vmem:[%s5492 + $0xa0] sm:$0xf] %v5088
    %v5588 = vld [vmem:[%s5492 + $0xa4] sm:$0x1]
    %v5589 = vsel %vm52, %v5089, %v5588
    %5590 = vst [vmem:[%s5492 + $0xa4] sm:$0x1] %v5589
    %v5591 = vld [vmem:[%s5492 + $0xa8] sm:$0xf]
    %v5592 = vsel %vm1208, %v5096, %v5591
    %5593 = vst [vmem:[%s5492 + $0xa8] sm:$0xf] %v5592
    %5594 = vst [vmem:[%s5492 + $0xac] sm:$0xf] %v5105
    %v5595 = vld [vmem:[%s5492 + $0xb0] sm:$0x1]
    %v5596 = vsel %vm52, %v5106, %v5595
    %5597 = vst [vmem:[%s5492 + $0xb0] sm:$0x1] %v5596
    %v5598 = vld [vmem:[%s5492 + $0xb4] sm:$0xf]
    %v5599 = vsel %vm1208, %v5113, %v5598
    %5600 = vst [vmem:[%s5492 + $0xb4] sm:$0xf] %v5599
    %5601 = vst [vmem:[%s5492 + $0xb8] sm:$0xf] %v5122
    %v5602 = vld [vmem:[%s5492 + $0xbc] sm:$0x1]
    %v5603 = vsel %vm52, %v5123, %v5602
    %5604 = vst [vmem:[%s5492 + $0xbc] sm:$0x1] %v5603
    %v5605 = vld [vmem:[%s5492 + $0xd8] sm:$0xf]
    %v5606 = vsel %vm1208, %v5130, %v5605
    %5607 = vst [vmem:[%s5492 + $0xd8] sm:$0xf] %v5606
    %5608 = vst [vmem:[%s5492 + $0xdc] sm:$0xf] %v5139
    %v5609 = vld [vmem:[%s5492 + $0xe0] sm:$0x1]
    %v5610 = vsel %vm52, %v5140, %v5609
    %5611 = vst [vmem:[%s5492 + $0xe0] sm:$0x1] %v5610
    %v5612 = vld [vmem:[%s5492 + $0xe4] sm:$0xf]
    %v5613 = vsel %vm1208, %v5147, %v5612
    %5614 = vst [vmem:[%s5492 + $0xe4] sm:$0xf] %v5613
    %5615 = vst [vmem:[%s5492 + $0xe8] sm:$0xf] %v5156
    %v5616 = vld [vmem:[%s5492 + $0xec] sm:$0x1]
    %v5617 = vsel %vm52, %v5157, %v5616
    %5618 = vst [vmem:[%s5492 + $0xec] sm:$0x1] %v5617
    %v5619 = vld [vmem:[%s5492 + $0xf0] sm:$0xf]
    %v5620 = vsel %vm1208, %v5164, %v5619
    %5621 = vst [vmem:[%s5492 + $0xf0] sm:$0xf] %v5620
    %5622 = vst [vmem:[%s5492 + $0xf4] sm:$0xf] %v5173
    %v5623 = vld [vmem:[%s5492 + $0xf8] sm:$0x1]
    %v5624 = vsel %vm52, %v5174, %v5623
    %5625 = vst [vmem:[%s5492 + $0xf8] sm:$0x1] %v5624
    %v5626 = vld [vmem:[%s5492 + $0xfc] sm:$0xf]
    %v5627 = vsel %vm1208, %v5181, %v5626
    %5628 = vst [vmem:[%s5492 + $0xfc] sm:$0xf] %v5627
    %5629 = vst [vmem:[%s5492 + $0x100] sm:$0xf] %v5190
    %v5630 = vld [vmem:[%s5492 + $0x104] sm:$0x1]
    %v5631 = vsel %vm52, %v5191, %v5630
    %5632 = vst [vmem:[%s5492 + $0x104] sm:$0x1] %v5631
    %v5633 = vld [vmem:[%s5492 + $0x108] sm:$0xf]
    %v5634 = vsel %vm1208, %v5198, %v5633
    %5635 = vst [vmem:[%s5492 + $0x108] sm:$0xf] %v5634
    %5636 = vst [vmem:[%s5492 + $0x10c] sm:$0xf] %v5207
    %v5637 = vld [vmem:[%s5492 + $0x110] sm:$0x1]
    %v5638 = vsel %vm52, %v5208, %v5637
    %5639 = vst [vmem:[%s5492 + $0x110] sm:$0x1] %v5638
    %v5640 = vld [vmem:[%s5492 + $0x114] sm:$0xf]
    %v5641 = vsel %vm1208, %v5215, %v5640
    %5642 = vst [vmem:[%s5492 + $0x114] sm:$0xf] %v5641
    %5643 = vst [vmem:[%s5492 + $0x118] sm:$0xf] %v5224
    %v5644 = vld [vmem:[%s5492 + $0x11c] sm:$0x1]
    %v5645 = vsel %vm52, %v5225, %v5644
    %5646 = vst [vmem:[%s5492 + $0x11c] sm:$0x1] %v5645
    %v5647 = vld [vmem:[%s5492 + $0x120] sm:$0xf]
    %v5648 = vsel %vm1208, %v5232, %v5647
    %5649 = vst [vmem:[%s5492 + $0x120] sm:$0xf] %v5648
    %5650 = vst [vmem:[%s5492 + $0x124] sm:$0xf] %v5241
    %v5651 = vld [vmem:[%s5492 + $0x128] sm:$0x1]
    %v5652 = vsel %vm52, %v5242, %v5651
    %5653 = vst [vmem:[%s5492 + $0x128] sm:$0x1] %v5652
    %v5654 = vld [vmem:[%s5492 + $0x12c] sm:$0xf]
    %v5655 = vsel %vm1208, %v5249, %v5654
    %5656 = vst [vmem:[%s5492 + $0x12c] sm:$0xf] %v5655
    %5657 = vst [vmem:[%s5492 + $0x130] sm:$0xf] %v5258
    %v5658 = vld [vmem:[%s5492 + $0x134] sm:$0x1]
    %v5659 = vsel %vm52, %v5259, %v5658
    %5660 = vst [vmem:[%s5492 + $0x134] sm:$0x1] %v5659
    %v5661 = vld [vmem:[%s5492 + $0x138] sm:$0xf]
    %v5662 = vsel %vm1208, %v5266, %v5661
    %5663 = vst [vmem:[%s5492 + $0x138] sm:$0xf] %v5662
    %5664 = vst [vmem:[%s5492 + $0x13c] sm:$0xf] %v5275
    %v5665 = vld [vmem:[%s5492 + $0x140] sm:$0x1]
    %v5666 = vsel %vm52, %v5276, %v5665
    %5667 = vst [vmem:[%s5492 + $0x140] sm:$0x1] %v5666
    %v5668 = vld [vmem:[%s5492 + $0x144] sm:$0xf]
    %v5669 = vsel %vm1208, %v5283, %v5668
    %5670 = vst [vmem:[%s5492 + $0x144] sm:$0xf] %v5669
    %5671 = vst [vmem:[%s5492 + $0x148] sm:$0xf] %v5292
    %v5672 = vld [vmem:[%s5492 + $0x14c] sm:$0x1]
    %v5673 = vsel %vm52, %v5293, %v5672
    %5674 = vst [vmem:[%s5492 + $0x14c] sm:$0x1] %v5673
    %v5675 = vld [vmem:[%s5492 + $0x150] sm:$0xf]
    %v5676 = vsel %vm1208, %v5300, %v5675
    %5677 = vst [vmem:[%s5492 + $0x150] sm:$0xf] %v5676
    %5678 = vst [vmem:[%s5492 + $0x154] sm:$0xf] %v5309
    %v5679 = vld [vmem:[%s5492 + $0x158] sm:$0x1]
    %v5680 = vsel %vm52, %v5310, %v5679
    %5681 = vst [vmem:[%s5492 + $0x158] sm:$0x1] %v5680
    %v5682 = vld [vmem:[%s5492 + $0x15c] sm:$0xf]
    %v5683 = vsel %vm1208, %v5317, %v5682
    %5684 = vst [vmem:[%s5492 + $0x15c] sm:$0xf] %v5683
    %5685 = vst [vmem:[%s5492 + $0x160] sm:$0xf] %v5326
    %v5686 = vld [vmem:[%s5492 + $0x164] sm:$0x1]
    %v5687 = vsel %vm52, %v5327, %v5686
    %5688 = vst [vmem:[%s5492 + $0x164] sm:$0x1] %v5687
    %v5689 = vld [vmem:[%s5492 + $0x168] sm:$0xf]
    %v5690 = vsel %vm1208, %v5334, %v5689
    %5691 = vst [vmem:[%s5492 + $0x168] sm:$0xf] %v5690
    %5692 = vst [vmem:[%s5492 + $0x16c] sm:$0xf] %v5343
    %v5693 = vld [vmem:[%s5492 + $0x170] sm:$0x1]
    %v5694 = vsel %vm52, %v5344, %v5693
    %5695 = vst [vmem:[%s5492 + $0x170] sm:$0x1] %v5694
    %v5696 = vld [vmem:[%s5492 + $0x174] sm:$0xf]
    %v5697 = vsel %vm1208, %v5351, %v5696
    %5698 = vst [vmem:[%s5492 + $0x174] sm:$0xf] %v5697
    %5699 = vst [vmem:[%s5492 + $0x178] sm:$0xf] %v5360
    %v5700 = vld [vmem:[%s5492 + $0x17c] sm:$0x1]
    %v5701 = vsel %vm52, %v5361, %v5700
    %5702 = vst [vmem:[%s5492 + $0x17c] sm:$0x1] %v5701
    %v5703 = vld [vmem:[%s5492 + $0x180] sm:$0xf]
    %v5704 = vsel %vm1208, %v5368, %v5703
    %5705 = vst [vmem:[%s5492 + $0x180] sm:$0xf] %v5704
    %5706 = vst [vmem:[%s5492 + $0x184] sm:$0xf] %v5377
    %v5707 = vld [vmem:[%s5492 + $0x188] sm:$0x1]
    %v5708 = vsel %vm52, %v5378, %v5707
    %5709 = vst [vmem:[%s5492 + $0x188] sm:$0x1] %v5708
    %v5710 = vld [vmem:[%s5492 + $0x18c] sm:$0xf]
    %v5711 = vsel %vm1208, %v5385, %v5710
    %5712 = vst [vmem:[%s5492 + $0x18c] sm:$0xf] %v5711
    %5713 = vst [vmem:[%s5492 + $0x190] sm:$0xf] %v5394
    %v5714 = vld [vmem:[%s5492 + $0x194] sm:$0x1]
    %v5715 = vsel %vm52, %v5395, %v5714
    %5716 = vst [vmem:[%s5492 + $0x194] sm:$0x1] %v5715
    %v5717 = vld [vmem:[#allocation3] sm:$0xf]
    %v5718 = vld [vmem:[#allocation3 + $0x4] sm:$0xf]
    %v5719 = vld [vmem:[#allocation3 + $0xc] sm:$0xf]
    %v5720 = vld [vmem:[#allocation3 + $0x10] sm:$0xf]
    %v5721 = vld [vmem:[#allocation3 + $0x18] sm:$0xf]
    %v5722 = vld [vmem:[#allocation3 + $0x1c] sm:$0xf]
    %v5723 = vld [vmem:[#allocation3 + $0x24] sm:$0xf]
    %v5724 = vld [vmem:[#allocation3 + $0x28] sm:$0xf]
    %v5725 = vld [vmem:[#allocation3 + $0x30] sm:$0xf]
    %v5726 = vld [vmem:[#allocation3 + $0x34] sm:$0xf]
    %v5727 = vld [vmem:[#allocation3 + $0x3c] sm:$0xf]
    %v5728 = vld [vmem:[#allocation3 + $0x40] sm:$0xf]
    %v5729 = vld [vmem:[#allocation3 + $0x48] sm:$0xf]
    %v5730 = vld [vmem:[#allocation3 + $0x4c] sm:$0xf]
    %v5731 = vld [vmem:[#allocation3 + $0x54] sm:$0xf]
    %v5732 = vld [vmem:[#allocation3 + $0x58] sm:$0xf]
    %v5733 = vld [vmem:[#allocation3 + $0x60] sm:$0xf]
    %v5734 = vld [vmem:[#allocation3 + $0x64] sm:$0xf]
    %v5735 = vld [vmem:[#allocation3 + $0x6c] sm:$0xf]
    %v5736 = vld [vmem:[#allocation3 + $0x70] sm:$0xf]
    %v5737 = vld [vmem:[#allocation3 + $0x78] sm:$0xf]
    %v5738 = vld [vmem:[#allocation3 + $0x7c] sm:$0xf]
    %v5739 = vld [vmem:[#allocation3 + $0x84] sm:$0xf]
    %v5740 = vld [vmem:[#allocation3 + $0x88] sm:$0xf]
    %v5741 = vld [vmem:[#allocation3 + $0x90] sm:$0xf]
    %v5742 = vld [vmem:[#allocation3 + $0x94] sm:$0xf]
    %v5743 = vld [vmem:[#allocation3 + $0x9c] sm:$0xf]
    %v5744 = vld [vmem:[#allocation3 + $0xa0] sm:$0xf]
    %v5745 = vld [vmem:[#allocation3 + $0xa8] sm:$0xf]
    %v5746 = vld [vmem:[#allocation3 + $0xac] sm:$0xf]
    %v5747 = vld [vmem:[#allocation3 + $0xb4] sm:$0xf]
    %v5748 = vld [vmem:[#allocation3 + $0xb8] sm:$0xf]
    %v5749 = vld [vmem:[#allocation3 + $0xc0] sm:$0xf]
    %v5750 = vld [vmem:[#allocation3 + $0xc4] sm:$0xf]
    %v5751 = vld [vmem:[#allocation3 + $0xcc] sm:$0xf]
    %v5752 = vld [vmem:[#allocation3 + $0xd0] sm:$0xf]
    %v5753 = vld [vmem:[#allocation3 + $0xd8] sm:$0xf]
    %v5754 = vld [vmem:[#allocation3 + $0xdc] sm:$0xf]
    %v5755 = vld [vmem:[#allocation3 + $0xe4] sm:$0xf]
    %v5756 = vld [vmem:[#allocation3 + $0xe8] sm:$0xf]
    %v5757 = vld [vmem:[#allocation3 + $0xf0] sm:$0xf]
    %v5758 = vld [vmem:[#allocation3 + $0xf4] sm:$0xf]
    %v5759 = vld [vmem:[#allocation3 + $0xfc] sm:$0xf]
    %v5760 = vld [vmem:[#allocation3 + $0x100] sm:$0xf]
    %v5761 = vld [vmem:[#allocation3 + $0x108] sm:$0xf]
    %v5762 = vld [vmem:[#allocation3 + $0x10c] sm:$0xf]
    %v5763 = vld [vmem:[#allocation3 + $0x114] sm:$0xf]
    %v5764 = vld [vmem:[#allocation3 + $0x118] sm:$0xf]
    %v5765 = vld [vmem:[#allocation3 + $0x120] sm:$0xf]
    %v5766 = vld [vmem:[#allocation3 + $0x124] sm:$0xf]
    %v5767 = vld [vmem:[#allocation3 + $0x12c] sm:$0xf]
    %v5768 = vld [vmem:[#allocation3 + $0x130] sm:$0xf]
    %v5769 = vld [vmem:[#allocation3 + $0x138] sm:$0xf]
    %v5770 = vld [vmem:[#allocation3 + $0x13c] sm:$0xf]
    %v5771 = vld [vmem:[#allocation3 + $0x144] sm:$0xf]
    %v5772 = vld [vmem:[#allocation3 + $0x148] sm:$0xf]
    %v5773 = vld [vmem:[#allocation3 + $0x150] sm:$0xf]
    %v5774 = vld [vmem:[#allocation3 + $0x154] sm:$0xf]
    %v5775 = vld [vmem:[#allocation3 + $0x15c] sm:$0xf]
    %v5776 = vld [vmem:[#allocation3 + $0x160] sm:$0xf]
    %v5777 = vld [vmem:[#allocation3 + $0x168] sm:$0xf]
    %v5778 = vld [vmem:[#allocation3 + $0x16c] sm:$0xf]
    %v5779 = vld [vmem:[#allocation3 + $0x174] sm:$0xf]
    %v5780 = vld [vmem:[#allocation3 + $0x178] sm:$0xf]
    %v5781 = vld [vmem:[#allocation3 + $0x180] sm:$0xf]
    %v5782 = vld [vmem:[#allocation3 + $0x184] sm:$0xf]
    %v5783 = vld [vmem:[#allocation3 + $0x18c] sm:$0xf]
    %v5784 = vld [vmem:[#allocation3 + $0x190] sm:$0xf]
    %v5785 = vld [vmem:[#allocation3 + $0x198] sm:$0xf]
    %v5786 = vld [vmem:[#allocation3 + $0x19c] sm:$0xf]
    %v5787 = vld [vmem:[#allocation3 + $0x1a4] sm:$0xf]
    %v5788 = vld [vmem:[#allocation3 + $0x1a8] sm:$0xf]
    %v5789 = vld [vmem:[#allocation3 + $0x8] sm:$0x1]
    %v5790 = vld [vmem:[#allocation3 + $0x14] sm:$0x1]
    %v5791 = vld [vmem:[#allocation3 + $0x20] sm:$0x1]
    %v5792 = vld [vmem:[#allocation3 + $0x2c] sm:$0x1]
    %v5793 = vld [vmem:[#allocation3 + $0x38] sm:$0x1]
    %v5794 = vld [vmem:[#allocation3 + $0x44] sm:$0x1]
    %v5795 = vld [vmem:[#allocation3 + $0x50] sm:$0x1]
    %v5796 = vld [vmem:[#allocation3 + $0x5c] sm:$0x1]
    %v5797 = vld [vmem:[#allocation3 + $0x68] sm:$0x1]
    %v5798 = vld [vmem:[#allocation3 + $0x74] sm:$0x1]
    %v5799 = vld [vmem:[#allocation3 + $0x80] sm:$0x1]
    %v5800 = vld [vmem:[#allocation3 + $0x8c] sm:$0x1]
    %v5801 = vld [vmem:[#allocation3 + $0x98] sm:$0x1]
    %v5802 = vld [vmem:[#allocation3 + $0xa4] sm:$0x1]
    %v5803 = vld [vmem:[#allocation3 + $0xb0] sm:$0x1]
    %v5804 = vld [vmem:[#allocation3 + $0xbc] sm:$0x1]
    %v5805 = vld [vmem:[#allocation3 + $0xc8] sm:$0x1]
    %v5806 = vld [vmem:[#allocation3 + $0xd4] sm:$0x1]
    %v5807 = vld [vmem:[#allocation3 + $0xe0] sm:$0x1]
    %v5808 = vld [vmem:[#allocation3 + $0xec] sm:$0x1]
    %v5809 = vld [vmem:[#allocation3 + $0xf8] sm:$0x1]
    %v5810 = vld [vmem:[#allocation3 + $0x104] sm:$0x1]
    %v5811 = vld [vmem:[#allocation3 + $0x110] sm:$0x1]
    %v5812 = vld [vmem:[#allocation3 + $0x11c] sm:$0x1]
    %v5813 = vld [vmem:[#allocation3 + $0x128] sm:$0x1]
    %v5814 = vld [vmem:[#allocation3 + $0x134] sm:$0x1]
    %v5815 = vld [vmem:[#allocation3 + $0x140] sm:$0x1]
    %v5816 = vld [vmem:[#allocation3 + $0x14c] sm:$0x1]
    %v5817 = vld [vmem:[#allocation3 + $0x158] sm:$0x1]
    %v5818 = vld [vmem:[#allocation3 + $0x164] sm:$0x1]
    %v5819 = vld [vmem:[#allocation3 + $0x170] sm:$0x1]
    %v5820 = vld [vmem:[#allocation3 + $0x17c] sm:$0x1]
    %v5821 = vld [vmem:[#allocation3 + $0x188] sm:$0x1]
    %v5822 = vld [vmem:[#allocation3 + $0x194] sm:$0x1]
    %v5823 = vld [vmem:[#allocation3 + $0x1a0] sm:$0x1]
    %v5824 = vld [vmem:[#allocation3 + $0x1ac] sm:$0x1]
    %v5825 = vld [vmem:[#allocation3] sm:$0xe]
    %v5826 = vld [vmem:[#allocation3 + $0xc] sm:$0xe]
    %v5827 = vld [vmem:[#allocation3 + $0x18] sm:$0xe]
    %v5828 = vld [vmem:[#allocation3 + $0x24] sm:$0xe]
    %v5829 = vld [vmem:[#allocation3 + $0x30] sm:$0xe]
    %v5830 = vld [vmem:[#allocation3 + $0x3c] sm:$0xe]
    %v5831 = vld [vmem:[#allocation3 + $0x48] sm:$0xe]
    %v5832 = vld [vmem:[#allocation3 + $0x54] sm:$0xe]
    %v5833 = vld [vmem:[#allocation3 + $0x60] sm:$0xe]
    %v5834 = vld [vmem:[#allocation3 + $0x6c] sm:$0xe]
    %v5835 = vld [vmem:[#allocation3 + $0x78] sm:$0xe]
    %v5836 = vld [vmem:[#allocation3 + $0x84] sm:$0xe]
    %v5837 = vld [vmem:[#allocation3 + $0x90] sm:$0xe]
    %v5838 = vld [vmem:[#allocation3 + $0x9c] sm:$0xe]
    %v5839 = vld [vmem:[#allocation3 + $0xa8] sm:$0xe]
    %v5840 = vld [vmem:[#allocation3 + $0xb4] sm:$0xe]
    %v5841 = vld [vmem:[#allocation3 + $0xc0] sm:$0xe]
    %v5842 = vld [vmem:[#allocation3 + $0xcc] sm:$0xe]
    %v5843 = vld [vmem:[#allocation3 + $0xd8] sm:$0xe]
    %v5844 = vld [vmem:[#allocation3 + $0xe4] sm:$0xe]
    %v5845 = vld [vmem:[#allocation3 + $0xf0] sm:$0xe]
    %v5846 = vld [vmem:[#allocation3 + $0xfc] sm:$0xe]
    %v5847 = vld [vmem:[#allocation3 + $0x108] sm:$0xe]
    %v5848 = vld [vmem:[#allocation3 + $0x114] sm:$0xe]
    %v5849 = vld [vmem:[#allocation3 + $0x120] sm:$0xe]
    %v5850 = vld [vmem:[#allocation3 + $0x12c] sm:$0xe]
    %v5851 = vld [vmem:[#allocation3 + $0x138] sm:$0xe]
    %v5852 = vld [vmem:[#allocation3 + $0x144] sm:$0xe]
    %v5853 = vld [vmem:[#allocation3 + $0x150] sm:$0xe]
    %v5854 = vld [vmem:[#allocation3 + $0x15c] sm:$0xe]
    %v5855 = vld [vmem:[#allocation3 + $0x168] sm:$0xe]
    %v5856 = vld [vmem:[#allocation3 + $0x174] sm:$0xe]
    %v5857 = vld [vmem:[#allocation3 + $0x180] sm:$0xe]
    %v5858 = vld [vmem:[#allocation3 + $0x18c] sm:$0xe]
    %v5859 = vld [vmem:[#allocation3 + $0x198] sm:$0xe]
    %v5860 = vld [vmem:[#allocation3 + $0x1a4] sm:$0xe]
    %v5925 = vunpack.c.l.b16 %v5717
    %v5926 = vunpack.c.l.b16 %v5718
    %v5927 = vunpack.c.l.b16 %v5719
    %v5928 = vunpack.c.l.b16 %v5720
    %v5929 = vunpack.c.l.b16 %v5721
    %v5930 = vunpack.c.l.b16 %v5722
    %v5931 = vunpack.c.l.b16 %v5723
    %v5932 = vunpack.c.l.b16 %v5724
    %v5933 = vunpack.c.l.b16 %v5725
    %v5934 = vunpack.c.l.b16 %v5726
    %v5935 = vunpack.c.l.b16 %v5727
    %v5936 = vunpack.c.l.b16 %v5728
    %v5937 = vunpack.c.l.b16 %v5729
    %v5938 = vunpack.c.l.b16 %v5730
    %v5939 = vunpack.c.l.b16 %v5731
    %v5940 = vunpack.c.l.b16 %v5732
    %v5941 = vunpack.c.l.b16 %v5733
    %v5942 = vunpack.c.l.b16 %v5734
    %v5943 = vunpack.c.l.b16 %v5735
    %v5944 = vunpack.c.l.b16 %v5736
    %v5945 = vunpack.c.l.b16 %v5737
    %v5946 = vunpack.c.l.b16 %v5738
    %v5947 = vunpack.c.l.b16 %v5739
    %v5948 = vunpack.c.l.b16 %v5740
    %v5949 = vunpack.c.l.b16 %v5741
    %v5950 = vunpack.c.l.b16 %v5742
    %v5951 = vunpack.c.l.b16 %v5743
    %v5952 = vunpack.c.l.b16 %v5744
    %v5953 = vunpack.c.l.b16 %v5745
    %v5954 = vunpack.c.l.b16 %v5746
    %v5955 = vunpack.c.l.b16 %v5747
    %v5956 = vunpack.c.l.b16 %v5748
    %v5957 = vunpack.c.l.b16 %v5753
    %v5958 = vunpack.c.l.b16 %v5754
    %v5959 = vunpack.c.l.b16 %v5755
    %v5960 = vunpack.c.l.b16 %v5756
    %v5961 = vunpack.c.l.b16 %v5757
    %v5962 = vunpack.c.l.b16 %v5758
    %v5963 = vunpack.c.l.b16 %v5759
    %v5964 = vunpack.c.l.b16 %v5760
    %v5965 = vunpack.c.l.b16 %v5761
    %v5966 = vunpack.c.l.b16 %v5762
    %v5967 = vunpack.c.l.b16 %v5763
    %v5968 = vunpack.c.l.b16 %v5764
    %v5969 = vunpack.c.l.b16 %v5765
    %v5970 = vunpack.c.l.b16 %v5766
    %v5971 = vunpack.c.l.b16 %v5767
    %v5972 = vunpack.c.l.b16 %v5768
    %v5973 = vunpack.c.l.b16 %v5769
    %v5974 = vunpack.c.l.b16 %v5770
    %v5975 = vunpack.c.l.b16 %v5771
    %v5976 = vunpack.c.l.b16 %v5772
    %v5977 = vunpack.c.l.b16 %v5773
    %v5978 = vunpack.c.l.b16 %v5774
    %v5979 = vunpack.c.l.b16 %v5775
    %v5980 = vunpack.c.l.b16 %v5776
    %v5981 = vunpack.c.l.b16 %v5777
    %v5982 = vunpack.c.l.b16 %v5778
    %v5983 = vunpack.c.l.b16 %v5779
    %v5984 = vunpack.c.l.b16 %v5780
    %v5985 = vunpack.c.l.b16 %v5781
    %v5986 = vunpack.c.l.b16 %v5782
    %v5987 = vunpack.c.l.b16 %v5783
    %v5988 = vunpack.c.l.b16 %v5784
    %v5989 = vpack.c.b16 %v5926, %v5925
    %v5990 = vpack.c.b16 %v5928, %v5927
    %v5991 = vpack.c.b16 %v5930, %v5929
    %v5992 = vpack.c.b16 %v5932, %v5931
    %v5993 = vpack.c.b16 %v5934, %v5933
    %v5994 = vpack.c.b16 %v5936, %v5935
    %v5995 = vpack.c.b16 %v5938, %v5937
    %v5996 = vpack.c.b16 %v5940, %v5939
    %v5997 = vpack.c.b16 %v5942, %v5941
    %v5998 = vpack.c.b16 %v5944, %v5943
    %v5999 = vpack.c.b16 %v5946, %v5945
    %v6000 = vpack.c.b16 %v5948, %v5947
    %v6001 = vpack.c.b16 %v5950, %v5949
    %v6002 = vpack.c.b16 %v5952, %v5951
    %v6003 = vpack.c.b16 %v5954, %v5953
    %v6004 = vpack.c.b16 %v5956, %v5955
    %v6005 = vpack.c.b16 %v5958, %v5957
    %v6006 = vpack.c.b16 %v5960, %v5959
    %v6007 = vpack.c.b16 %v5962, %v5961
    %v6008 = vpack.c.b16 %v5964, %v5963
    %v6009 = vpack.c.b16 %v5966, %v5965
    %v6010 = vpack.c.b16 %v5968, %v5967
    %v6011 = vpack.c.b16 %v5970, %v5969
    %v6012 = vpack.c.b16 %v5972, %v5971
    %v6013 = vpack.c.b16 %v5974, %v5973
    %v6014 = vpack.c.b16 %v5976, %v5975
    %v6015 = vpack.c.b16 %v5978, %v5977
    %v6016 = vpack.c.b16 %v5980, %v5979
    %v6017 = vpack.c.b16 %v5982, %v5981
    %v6018 = vpack.c.b16 %v5984, %v5983
    %v6019 = vpack.c.b16 %v5986, %v5985
    %v6020 = vpack.c.b16 %v5988, %v5987
    %v6085 = vunpack.c.l.b16 %v5789
    %v6086 = vunpack.c.l.b16 %v5790
    %v6087 = vunpack.c.l.b16 %v5791
    %v6088 = vunpack.c.l.b16 %v5792
    %v6089 = vunpack.c.l.b16 %v5793
    %v6090 = vunpack.c.l.b16 %v5794
    %v6091 = vunpack.c.l.b16 %v5795
    %v6092 = vunpack.c.l.b16 %v5796
    %v6093 = vunpack.c.l.b16 %v5797
    %v6094 = vunpack.c.l.b16 %v5798
    %v6095 = vunpack.c.l.b16 %v5799
    %v6096 = vunpack.c.l.b16 %v5800
    %v6097 = vunpack.c.l.b16 %v5801
    %v6098 = vunpack.c.l.b16 %v5802
    %v6099 = vunpack.c.l.b16 %v5803
    %v6100 = vunpack.c.l.b16 %v5804
    %v6101 = vunpack.c.l.b16 %v5807
    %v6102 = vunpack.c.l.b16 %v5808
    %v6103 = vunpack.c.l.b16 %v5809
    %v6104 = vunpack.c.l.b16 %v5810
    %v6105 = vunpack.c.l.b16 %v5811
    %v6106 = vunpack.c.l.b16 %v5812
    %v6107 = vunpack.c.l.b16 %v5813
    %v6108 = vunpack.c.l.b16 %v5814
    %v6109 = vunpack.c.l.b16 %v5815
    %v6110 = vunpack.c.l.b16 %v5816
    %v6111 = vunpack.c.l.b16 %v5817
    %v6112 = vunpack.c.l.b16 %v5818
    %v6113 = vunpack.c.l.b16 %v5819
    %v6114 = vunpack.c.l.b16 %v5820
    %v6115 = vunpack.c.l.b16 %v5821
    %v6116 = vunpack.c.l.b16 %v5822
    %v6117 = vpack.c.b16 %v6085, %v6085
    %v6118 = vpack.c.b16 %v6086, %v6086
    %v6119 = vpack.c.b16 %v6087, %v6087
    %v6120 = vpack.c.b16 %v6088, %v6088
    %v6121 = vpack.c.b16 %v6089, %v6089
    %v6122 = vpack.c.b16 %v6090, %v6090
    %v6123 = vpack.c.b16 %v6091, %v6091
    %v6124 = vpack.c.b16 %v6092, %v6092
    %v6125 = vpack.c.b16 %v6093, %v6093
    %v6126 = vpack.c.b16 %v6094, %v6094
    %v6127 = vpack.c.b16 %v6095, %v6095
    %v6128 = vpack.c.b16 %v6096, %v6096
    %v6129 = vpack.c.b16 %v6097, %v6097
    %v6130 = vpack.c.b16 %v6098, %v6098
    %v6131 = vpack.c.b16 %v6099, %v6099
    %v6132 = vpack.c.b16 %v6100, %v6100
    %v6133 = vpack.c.b16 %v6101, %v6101
    %v6134 = vpack.c.b16 %v6102, %v6102
    %v6135 = vpack.c.b16 %v6103, %v6103
    %v6136 = vpack.c.b16 %v6104, %v6104
    %v6137 = vpack.c.b16 %v6105, %v6105
    %v6138 = vpack.c.b16 %v6106, %v6106
    %v6139 = vpack.c.b16 %v6107, %v6107
    %v6140 = vpack.c.b16 %v6108, %v6108
    %v6141 = vpack.c.b16 %v6109, %v6109
    %v6142 = vpack.c.b16 %v6110, %v6110
    %v6143 = vpack.c.b16 %v6111, %v6111
    %v6144 = vpack.c.b16 %v6112, %v6112
    %v6145 = vpack.c.b16 %v6113, %v6113
    %v6146 = vpack.c.b16 %v6114, %v6114
    %v6147 = vpack.c.b16 %v6115, %v6115
    %v6148 = vpack.c.b16 %v6116, %v6116
    %v6150 = vshrl.u32 %v5989, 16
    %v6152 = vshll.u32 %v5989, 16
    %v6154 = vrot.slane %v6152, 1
    %v6155 = vor.u32 %v6150, %v6154
    %v6157 = vshll.u32 %v6117, 16
    %v6159 = vrot.slane %v6157, 1
    %v6160 = vsel %vm1865, %v6155, %v6159
    %v6162 = vshrl.u32 %v5990, 16
    %v6164 = vshll.u32 %v5990, 16
    %v6166 = vrot.slane %v6164, 1
    %v6167 = vor.u32 %v6162, %v6166
    %v6169 = vshll.u32 %v6118, 16
    %v6171 = vrot.slane %v6169, 1
    %v6172 = vsel %vm1865, %v6167, %v6171
    %v6174 = vshrl.u32 %v5991, 16
    %v6176 = vshll.u32 %v5991, 16
    %v6178 = vrot.slane %v6176, 1
    %v6179 = vor.u32 %v6174, %v6178
    %v6181 = vshll.u32 %v6119, 16
    %v6183 = vrot.slane %v6181, 1
    %v6184 = vsel %vm1865, %v6179, %v6183
    %v6186 = vshrl.u32 %v5992, 16
    %v6188 = vshll.u32 %v5992, 16
    %v6190 = vrot.slane %v6188, 1
    %v6191 = vor.u32 %v6186, %v6190
    %v6193 = vshll.u32 %v6120, 16
    %v6195 = vrot.slane %v6193, 1
    %v6196 = vsel %vm1865, %v6191, %v6195
    %v6198 = vshrl.u32 %v5993, 16
    %v6200 = vshll.u32 %v5993, 16
    %v6202 = vrot.slane %v6200, 1
    %v6203 = vor.u32 %v6198, %v6202
    %v6205 = vshll.u32 %v6121, 16
    %v6207 = vrot.slane %v6205, 1
    %v6208 = vsel %vm1865, %v6203, %v6207
    %v6210 = vshrl.u32 %v5994, 16
    %v6212 = vshll.u32 %v5994, 16
    %v6214 = vrot.slane %v6212, 1
    %v6215 = vor.u32 %v6210, %v6214
    %v6217 = vshll.u32 %v6122, 16
    %v6219 = vrot.slane %v6217, 1
    %v6220 = vsel %vm1865, %v6215, %v6219
    %v6222 = vshrl.u32 %v5995, 16
    %v6224 = vshll.u32 %v5995, 16
    %v6226 = vrot.slane %v6224, 1
    %v6227 = vor.u32 %v6222, %v6226
    %v6229 = vshll.u32 %v6123, 16
    %v6231 = vrot.slane %v6229, 1
    %v6232 = vsel %vm1865, %v6227, %v6231
    %v6234 = vshrl.u32 %v5996, 16
    %v6236 = vshll.u32 %v5996, 16
    %v6238 = vrot.slane %v6236, 1
    %v6239 = vor.u32 %v6234, %v6238
    %v6241 = vshll.u32 %v6124, 16
    %v6243 = vrot.slane %v6241, 1
    %v6244 = vsel %vm1865, %v6239, %v6243
    %v6246 = vshrl.u32 %v5997, 16
    %v6248 = vshll.u32 %v5997, 16
    %v6250 = vrot.slane %v6248, 1
    %v6251 = vor.u32 %v6246, %v6250
    %v6253 = vshll.u32 %v6125, 16
    %v6255 = vrot.slane %v6253, 1
    %v6256 = vsel %vm1865, %v6251, %v6255
    %v6258 = vshrl.u32 %v5998, 16
    %v6260 = vshll.u32 %v5998, 16
    %v6262 = vrot.slane %v6260, 1
    %v6263 = vor.u32 %v6258, %v6262
    %v6265 = vshll.u32 %v6126, 16
    %v6267 = vrot.slane %v6265, 1
    %v6268 = vsel %vm1865, %v6263, %v6267
    %v6270 = vshrl.u32 %v5999, 16
    %v6272 = vshll.u32 %v5999, 16
    %v6274 = vrot.slane %v6272, 1
    %v6275 = vor.u32 %v6270, %v6274
    %v6277 = vshll.u32 %v6127, 16
    %v6279 = vrot.slane %v6277, 1
    %v6280 = vsel %vm1865, %v6275, %v6279
    %v6282 = vshrl.u32 %v6000, 16
    %v6284 = vshll.u32 %v6000, 16
    %v6286 = vrot.slane %v6284, 1
    %v6287 = vor.u32 %v6282, %v6286
    %v6289 = vshll.u32 %v6128, 16
    %v6291 = vrot.slane %v6289, 1
    %v6292 = vsel %vm1865, %v6287, %v6291
    %v6294 = vshrl.u32 %v6001, 16
    %v6296 = vshll.u32 %v6001, 16
    %v6298 = vrot.slane %v6296, 1
    %v6299 = vor.u32 %v6294, %v6298
    %v6301 = vshll.u32 %v6129, 16
    %v6303 = vrot.slane %v6301, 1
    %v6304 = vsel %vm1865, %v6299, %v6303
    %v6306 = vshrl.u32 %v6002, 16
    %v6308 = vshll.u32 %v6002, 16
    %v6310 = vrot.slane %v6308, 1
    %v6311 = vor.u32 %v6306, %v6310
    %v6313 = vshll.u32 %v6130, 16
    %v6315 = vrot.slane %v6313, 1
    %v6316 = vsel %vm1865, %v6311, %v6315
    %v6318 = vshrl.u32 %v6003, 16
    %v6320 = vshll.u32 %v6003, 16
    %v6322 = vrot.slane %v6320, 1
    %v6323 = vor.u32 %v6318, %v6322
    %v6325 = vshll.u32 %v6131, 16
    %v6327 = vrot.slane %v6325, 1
    %v6328 = vsel %vm1865, %v6323, %v6327
    %v6330 = vshrl.u32 %v6004, 16
    %v6332 = vshll.u32 %v6004, 16
    %v6334 = vrot.slane %v6332, 1
    %v6335 = vor.u32 %v6330, %v6334
    %v6337 = vshll.u32 %v6132, 16
    %v6339 = vrot.slane %v6337, 1
    %v6340 = vsel %vm1865, %v6335, %v6339
    %v6342 = vshrl.u32 %v6005, 16
    %v6344 = vshll.u32 %v6005, 16
    %v6346 = vrot.slane %v6344, 1
    %v6347 = vor.u32 %v6342, %v6346
    %v6349 = vshll.u32 %v6133, 16
    %v6351 = vrot.slane %v6349, 1
    %v6352 = vsel %vm1865, %v6347, %v6351
    %v6354 = vshrl.u32 %v6006, 16
    %v6356 = vshll.u32 %v6006, 16
    %v6358 = vrot.slane %v6356, 1
    %v6359 = vor.u32 %v6354, %v6358
    %v6361 = vshll.u32 %v6134, 16
    %v6363 = vrot.slane %v6361, 1
    %v6364 = vsel %vm1865, %v6359, %v6363
    %v6366 = vshrl.u32 %v6007, 16
    %v6368 = vshll.u32 %v6007, 16
    %v6370 = vrot.slane %v6368, 1
    %v6371 = vor.u32 %v6366, %v6370
    %v6373 = vshll.u32 %v6135, 16
    %v6375 = vrot.slane %v6373, 1
    %v6376 = vsel %vm1865, %v6371, %v6375
    %v6378 = vshrl.u32 %v6008, 16
    %v6380 = vshll.u32 %v6008, 16
    %v6382 = vrot.slane %v6380, 1
    %v6383 = vor.u32 %v6378, %v6382
    %v6385 = vshll.u32 %v6136, 16
    %v6387 = vrot.slane %v6385, 1
    %v6388 = vsel %vm1865, %v6383, %v6387
    %v6390 = vshrl.u32 %v6009, 16
    %v6392 = vshll.u32 %v6009, 16
    %v6394 = vrot.slane %v6392, 1
    %v6395 = vor.u32 %v6390, %v6394
    %v6397 = vshll.u32 %v6137, 16
    %v6399 = vrot.slane %v6397, 1
    %v6400 = vsel %vm1865, %v6395, %v6399
    %v6402 = vshrl.u32 %v6010, 16
    %v6404 = vshll.u32 %v6010, 16
    %v6406 = vrot.slane %v6404, 1
    %v6407 = vor.u32 %v6402, %v6406
    %v6409 = vshll.u32 %v6138, 16
    %v6411 = vrot.slane %v6409, 1
    %v6412 = vsel %vm1865, %v6407, %v6411
    %v6414 = vshrl.u32 %v6011, 16
    %v6416 = vshll.u32 %v6011, 16
    %v6418 = vrot.slane %v6416, 1
    %v6419 = vor.u32 %v6414, %v6418
    %v6421 = vshll.u32 %v6139, 16
    %v6423 = vrot.slane %v6421, 1
    %v6424 = vsel %vm1865, %v6419, %v6423
    %v6426 = vshrl.u32 %v6012, 16
    %v6428 = vshll.u32 %v6012, 16
    %v6430 = vrot.slane %v6428, 1
    %v6431 = vor.u32 %v6426, %v6430
    %v6433 = vshll.u32 %v6140, 16
    %v6435 = vrot.slane %v6433, 1
    %v6436 = vsel %vm1865, %v6431, %v6435
    %v6438 = vshrl.u32 %v6013, 16
    %v6440 = vshll.u32 %v6013, 16
    %v6442 = vrot.slane %v6440, 1
    %v6443 = vor.u32 %v6438, %v6442
    %v6445 = vshll.u32 %v6141, 16
    %v6447 = vrot.slane %v6445, 1
    %v6448 = vsel %vm1865, %v6443, %v6447
    %v6450 = vshrl.u32 %v6014, 16
    %v6452 = vshll.u32 %v6014, 16
    %v6454 = vrot.slane %v6452, 1
    %v6455 = vor.u32 %v6450, %v6454
    %v6457 = vshll.u32 %v6142, 16
    %v6459 = vrot.slane %v6457, 1
    %v6460 = vsel %vm1865, %v6455, %v6459
    %v6462 = vshrl.u32 %v6015, 16
    %v6464 = vshll.u32 %v6015, 16
    %v6466 = vrot.slane %v6464, 1
    %v6467 = vor.u32 %v6462, %v6466
    %v6469 = vshll.u32 %v6143, 16
    %v6471 = vrot.slane %v6469, 1
    %v6472 = vsel %vm1865, %v6467, %v6471
    %v6474 = vshrl.u32 %v6016, 16
    %v6476 = vshll.u32 %v6016, 16
    %v6478 = vrot.slane %v6476, 1
    %v6479 = vor.u32 %v6474, %v6478
    %v6481 = vshll.u32 %v6144, 16
    %v6483 = vrot.slane %v6481, 1
    %v6484 = vsel %vm1865, %v6479, %v6483
    %v6486 = vshrl.u32 %v6017, 16
    %v6488 = vshll.u32 %v6017, 16
    %v6490 = vrot.slane %v6488, 1
    %v6491 = vor.u32 %v6486, %v6490
    %v6493 = vshll.u32 %v6145, 16
    %v6495 = vrot.slane %v6493, 1
    %v6496 = vsel %vm1865, %v6491, %v6495
    %v6498 = vshrl.u32 %v6018, 16
    %v6500 = vshll.u32 %v6018, 16
    %v6502 = vrot.slane %v6500, 1
    %v6503 = vor.u32 %v6498, %v6502
    %v6505 = vshll.u32 %v6146, 16
    %v6507 = vrot.slane %v6505, 1
    %v6508 = vsel %vm1865, %v6503, %v6507
    %v6510 = vshrl.u32 %v6019, 16
    %v6512 = vshll.u32 %v6019, 16
    %v6514 = vrot.slane %v6512, 1
    %v6515 = vor.u32 %v6510, %v6514
    %v6517 = vshll.u32 %v6147, 16
    %v6519 = vrot.slane %v6517, 1
    %v6520 = vsel %vm1865, %v6515, %v6519
    %v6522 = vshrl.u32 %v6020, 16
    %v6524 = vshll.u32 %v6020, 16
    %v6526 = vrot.slane %v6524, 1
    %v6527 = vor.u32 %v6522, %v6526
    %v6529 = vshll.u32 %v6148, 16
    %v6531 = vrot.slane %v6529, 1
    %v6532 = vsel %vm1865, %v6527, %v6531
    %v6597 = vunpack.c.l.b16 %v5825
    %v6598 = vunpack.c.l.b16 %v5826
    %v6599 = vunpack.c.l.b16 %v5827
    %v6600 = vunpack.c.l.b16 %v5828
    %v6601 = vunpack.c.l.b16 %v5829
    %v6602 = vunpack.c.l.b16 %v5830
    %v6603 = vunpack.c.l.b16 %v5831
    %v6604 = vunpack.c.l.b16 %v5832
    %v6605 = vunpack.c.l.b16 %v5833
    %v6606 = vunpack.c.l.b16 %v5834
    %v6607 = vunpack.c.l.b16 %v5835
    %v6608 = vunpack.c.l.b16 %v5836
    %v6609 = vunpack.c.l.b16 %v5837
    %v6610 = vunpack.c.l.b16 %v5838
    %v6611 = vunpack.c.l.b16 %v5839
    %v6612 = vunpack.c.l.b16 %v5840
    %v6613 = vunpack.c.l.b16 %v5843
    %v6614 = vunpack.c.l.b16 %v5844
    %v6615 = vunpack.c.l.b16 %v5845
    %v6616 = vunpack.c.l.b16 %v5846
    %v6617 = vunpack.c.l.b16 %v5847
    %v6618 = vunpack.c.l.b16 %v5848
    %v6619 = vunpack.c.l.b16 %v5849
    %v6620 = vunpack.c.l.b16 %v5850
    %v6621 = vunpack.c.l.b16 %v5851
    %v6622 = vunpack.c.l.b16 %v5852
    %v6623 = vunpack.c.l.b16 %v5853
    %v6624 = vunpack.c.l.b16 %v5854
    %v6625 = vunpack.c.l.b16 %v5855
    %v6626 = vunpack.c.l.b16 %v5856
    %v6627 = vunpack.c.l.b16 %v5857
    %v6628 = vunpack.c.l.b16 %v5858
    %v6629 = vpack.c.b16 %v5926, %v6597
    %v6630 = vpack.c.b16 %v5928, %v6598
    %v6631 = vpack.c.b16 %v5930, %v6599
    %v6632 = vpack.c.b16 %v5932, %v6600
    %v6633 = vpack.c.b16 %v5934, %v6601
    %v6634 = vpack.c.b16 %v5936, %v6602
    %v6635 = vpack.c.b16 %v5938, %v6603
    %v6636 = vpack.c.b16 %v5940, %v6604
    %v6637 = vpack.c.b16 %v5942, %v6605
    %v6638 = vpack.c.b16 %v5944, %v6606
    %v6639 = vpack.c.b16 %v5946, %v6607
    %v6640 = vpack.c.b16 %v5948, %v6608
    %v6641 = vpack.c.b16 %v5950, %v6609
    %v6642 = vpack.c.b16 %v5952, %v6610
    %v6643 = vpack.c.b16 %v5954, %v6611
    %v6644 = vpack.c.b16 %v5956, %v6612
    %v6645 = vpack.c.b16 %v5958, %v6613
    %v6646 = vpack.c.b16 %v5960, %v6614
    %v6647 = vpack.c.b16 %v5962, %v6615
    %v6648 = vpack.c.b16 %v5964, %v6616
    %v6649 = vpack.c.b16 %v5966, %v6617
    %v6650 = vpack.c.b16 %v5968, %v6618
    %v6651 = vpack.c.b16 %v5970, %v6619
    %v6652 = vpack.c.b16 %v5972, %v6620
    %v6653 = vpack.c.b16 %v5974, %v6621
    %v6654 = vpack.c.b16 %v5976, %v6622
    %v6655 = vpack.c.b16 %v5978, %v6623
    %v6656 = vpack.c.b16 %v5980, %v6624
    %v6657 = vpack.c.b16 %v5982, %v6625
    %v6658 = vpack.c.b16 %v5984, %v6626
    %v6659 = vpack.c.b16 %v5986, %v6627
    %v6660 = vpack.c.b16 %v5988, %v6628
    %v6661 = vrot.slane %v6629, 1
    %v6662 = vrot.slane %v6117, 1
    %v6663 = vsel %vm2378, %v6661, %v6662
    %v6664 = vrot.slane %v6630, 1
    %v6665 = vrot.slane %v6118, 1
    %v6666 = vsel %vm2378, %v6664, %v6665
    %v6667 = vrot.slane %v6631, 1
    %v6668 = vrot.slane %v6119, 1
    %v6669 = vsel %vm2378, %v6667, %v6668
    %v6670 = vrot.slane %v6632, 1
    %v6671 = vrot.slane %v6120, 1
    %v6672 = vsel %vm2378, %v6670, %v6671
    %v6673 = vrot.slane %v6633, 1
    %v6674 = vrot.slane %v6121, 1
    %v6675 = vsel %vm2378, %v6673, %v6674
    %v6676 = vrot.slane %v6634, 1
    %v6677 = vrot.slane %v6122, 1
    %v6678 = vsel %vm2378, %v6676, %v6677
    %v6679 = vrot.slane %v6635, 1
    %v6680 = vrot.slane %v6123, 1
    %v6681 = vsel %vm2378, %v6679, %v6680
    %v6682 = vrot.slane %v6636, 1
    %v6683 = vrot.slane %v6124, 1
    %v6684 = vsel %vm2378, %v6682, %v6683
    %v6685 = vrot.slane %v6637, 1
    %v6686 = vrot.slane %v6125, 1
    %v6687 = vsel %vm2378, %v6685, %v6686
    %v6688 = vrot.slane %v6638, 1
    %v6689 = vrot.slane %v6126, 1
    %v6690 = vsel %vm2378, %v6688, %v6689
    %v6691 = vrot.slane %v6639, 1
    %v6692 = vrot.slane %v6127, 1
    %v6693 = vsel %vm2378, %v6691, %v6692
    %v6694 = vrot.slane %v6640, 1
    %v6695 = vrot.slane %v6128, 1
    %v6696 = vsel %vm2378, %v6694, %v6695
    %v6697 = vrot.slane %v6641, 1
    %v6698 = vrot.slane %v6129, 1
    %v6699 = vsel %vm2378, %v6697, %v6698
    %v6700 = vrot.slane %v6642, 1
    %v6701 = vrot.slane %v6130, 1
    %v6702 = vsel %vm2378, %v6700, %v6701
    %v6703 = vrot.slane %v6643, 1
    %v6704 = vrot.slane %v6131, 1
    %v6705 = vsel %vm2378, %v6703, %v6704
    %v6706 = vrot.slane %v6644, 1
    %v6707 = vrot.slane %v6132, 1
    %v6708 = vsel %vm2378, %v6706, %v6707
    %v6709 = vrot.slane %v6645, 1
    %v6710 = vrot.slane %v6133, 1
    %v6711 = vsel %vm2378, %v6709, %v6710
    %v6712 = vrot.slane %v6646, 1
    %v6713 = vrot.slane %v6134, 1
    %v6714 = vsel %vm2378, %v6712, %v6713
    %v6715 = vrot.slane %v6647, 1
    %v6716 = vrot.slane %v6135, 1
    %v6717 = vsel %vm2378, %v6715, %v6716
    %v6718 = vrot.slane %v6648, 1
    %v6719 = vrot.slane %v6136, 1
    %v6720 = vsel %vm2378, %v6718, %v6719
    %v6721 = vrot.slane %v6649, 1
    %v6722 = vrot.slane %v6137, 1
    %v6723 = vsel %vm2378, %v6721, %v6722
    %v6724 = vrot.slane %v6650, 1
    %v6725 = vrot.slane %v6138, 1
    %v6726 = vsel %vm2378, %v6724, %v6725
    %v6727 = vrot.slane %v6651, 1
    %v6728 = vrot.slane %v6139, 1
    %v6729 = vsel %vm2378, %v6727, %v6728
    %v6730 = vrot.slane %v6652, 1
    %v6731 = vrot.slane %v6140, 1
    %v6732 = vsel %vm2378, %v6730, %v6731
    %v6733 = vrot.slane %v6653, 1
    %v6734 = vrot.slane %v6141, 1
    %v6735 = vsel %vm2378, %v6733, %v6734
    %v6736 = vrot.slane %v6654, 1
    %v6737 = vrot.slane %v6142, 1
    %v6738 = vsel %vm2378, %v6736, %v6737
    %v6739 = vrot.slane %v6655, 1
    %v6740 = vrot.slane %v6143, 1
    %v6741 = vsel %vm2378, %v6739, %v6740
    %v6742 = vrot.slane %v6656, 1
    %v6743 = vrot.slane %v6144, 1
    %v6744 = vsel %vm2378, %v6742, %v6743
    %v6745 = vrot.slane %v6657, 1
    %v6746 = vrot.slane %v6145, 1
    %v6747 = vsel %vm2378, %v6745, %v6746
    %v6748 = vrot.slane %v6658, 1
    %v6749 = vrot.slane %v6146, 1
    %v6750 = vsel %vm2378, %v6748, %v6749
    %v6751 = vrot.slane %v6659, 1
    %v6752 = vrot.slane %v6147, 1
    %v6753 = vsel %vm2378, %v6751, %v6752
    %v6754 = vrot.slane %v6660, 1
    %v6755 = vrot.slane %v6148, 1
    %v6756 = vsel %vm2378, %v6754, %v6755
    %v6793 = vunpack.c.l.b16 %v5749
    %v6794 = vunpack.c.l.b16 %v5750
    %v6795 = vunpack.c.l.b16 %v5785
    %v6796 = vunpack.c.l.b16 %v5786
    %v6797 = vpack.c.b16 %v6794, %v6793
    %v6798 = vpack.c.b16 %v6796, %v6795
    %v6803 = vunpack.c.l.b16 %v5805
    %v6804 = vunpack.c.l.b16 %v5823
    %v6805 = vpack.c.b16 %v6803, %v6803
    %v6806 = vpack.c.b16 %v6804, %v6804
    %v6808 = vshrl.u32 %v6797, 16
    %v6810 = vshll.u32 %v6797, 16
    %v6812 = vrot.slane %v6810, 1
    %v6813 = vor.u32 %v6808, %v6812
    %v6815 = vshll.u32 %v6805, 16
    %v6817 = vrot.slane %v6815, 1
    %v6818 = vsel %vm1865, %v6813, %v6817
    %v6820 = vshrl.u32 %v6798, 16
    %v6822 = vshll.u32 %v6798, 16
    %v6824 = vrot.slane %v6822, 1
    %v6825 = vor.u32 %v6820, %v6824
    %v6827 = vshll.u32 %v6806, 16
    %v6829 = vrot.slane %v6827, 1
    %v6830 = vsel %vm1865, %v6825, %v6829
    %v6835 = vunpack.c.l.b16 %v5841
    %v6836 = vunpack.c.l.b16 %v5859
    %v6837 = vpack.c.b16 %v6794, %v6835
    %v6838 = vpack.c.b16 %v6796, %v6836
    %v6839 = vrot.slane %v6837, 1
    %v6840 = vrot.slane %v6805, 1
    %v6841 = vsel %vm2378, %v6839, %v6840
    %v6842 = vrot.slane %v6838, 1
    %v6843 = vrot.slane %v6806, 1
    %v6844 = vsel %vm2378, %v6842, %v6843
    %v6851 = vunpack.c.l.b16 %v5751
    %v6852 = vunpack.c.l.b16 %v5752
    %v6853 = vunpack.c.l.b16 %v5787
    %v6854 = vunpack.c.l.b16 %v5788
    %v6855 = vpack.c.b16 %v6852, %v6851
    %v6856 = vpack.c.b16 %v6854, %v6853
    %v6861 = vunpack.c.l.b16 %v5806
    %v6862 = vunpack.c.l.b16 %v5824
    %v6863 = vpack.c.b16 %v6861, %v6861
    %v6864 = vpack.c.b16 %v6862, %v6862
    %v6866 = vshrl.u32 %v6855, 16
    %v6868 = vshll.u32 %v6855, 16
    %v6870 = vrot.slane %v6868, 1
    %v6871 = vor.u32 %v6866, %v6870
    %v6873 = vshll.u32 %v6863, 16
    %v6875 = vrot.slane %v6873, 1
    %v6876 = vsel %vm1865, %v6871, %v6875
    %v6878 = vshrl.u32 %v6856, 16
    %v6880 = vshll.u32 %v6856, 16
    %v6882 = vrot.slane %v6880, 1
    %v6883 = vor.u32 %v6878, %v6882
    %v6885 = vshll.u32 %v6864, 16
    %v6887 = vrot.slane %v6885, 1
    %v6888 = vsel %vm1865, %v6883, %v6887
    %v6893 = vunpack.c.l.b16 %v5842
    %v6894 = vunpack.c.l.b16 %v5860
    %v6895 = vpack.c.b16 %v6852, %v6893
    %v6896 = vpack.c.b16 %v6854, %v6894
    %v6897 = vrot.slane %v6895, 1
    %v6898 = vrot.slane %v6863, 1
    %v6899 = vsel %vm2378, %v6897, %v6898
    %v6900 = vrot.slane %v6896, 1
    %v6901 = vrot.slane %v6864, 1
    %v6902 = vsel %vm2378, %v6900, %v6901
    %v6905 = vld [vmem:[%s3] sm:$0xff]
    %v6906 = vld [vmem:[%s3 + $0x8] sm:$0xff]
    %v6907 = vld [vmem:[%s3 + $0x10] sm:$0xff]
    %v6908 = vld [vmem:[%s3 + $0x18] sm:$0xff]
    %v6909 = vld [vmem:[%s3 + $0x20] sm:$0xf]
    %v6910 = vld [vmem:[%s3 + $0x24] sm:$0xff]
    %v6911 = vld [vmem:[%s3 + $0x2c] sm:$0xff]
    %v6912 = vld [vmem:[%s3 + $0x34] sm:$0xff]
    %v6913 = vld [vmem:[%s3 + $0x3c] sm:$0xff]
    %v6914 = vld [vmem:[%s3 + $0x44] sm:$0xf]
    %v6915 = vld [vmem:[%s3 + $0x48] sm:$0xff]
    %v6916 = vld [vmem:[%s3 + $0x50] sm:$0xff]
    %v6917 = vld [vmem:[%s3 + $0x58] sm:$0xff]
    %v6918 = vld [vmem:[%s3 + $0x60] sm:$0xff]
    %v6919 = vld [vmem:[%s3 + $0x68] sm:$0xf]
    %v6920 = vld [vmem:[%s3 + $0x6c] sm:$0xff]
    %v6921 = vld [vmem:[%s3 + $0x74] sm:$0xff]
    %v6922 = vld [vmem:[%s3 + $0x7c] sm:$0xff]
    %v6923 = vld [vmem:[%s3 + $0x84] sm:$0xff]
    %v6924 = vld [vmem:[%s3 + $0x8c] sm:$0xf]
    %v6925 = vld [vmem:[%s3 + $0x90] sm:$0xff]
    %v6926 = vld [vmem:[%s3 + $0x98] sm:$0xff]
    %v6927 = vld [vmem:[%s3 + $0xa0] sm:$0xff]
    %v6928 = vld [vmem:[%s3 + $0xa8] sm:$0xff]
    %v6929 = vld [vmem:[%s3 + $0xb0] sm:$0xf]
    %v6930 = vld [vmem:[%s3 + $0xb4] sm:$0xff]
    %v6931 = vld [vmem:[%s3 + $0xbc] sm:$0xff]
    %v6932 = vld [vmem:[%s3 + $0xc4] sm:$0xff]
    %v6933 = vld [vmem:[%s3 + $0xcc] sm:$0xff]
    %v6934 = vld [vmem:[%s3 + $0xd4] sm:$0xf]
    %v6935 = vld [vmem:[%s3 + $0xd8] sm:$0xff]
    %v6936 = vld [vmem:[%s3 + $0xe0] sm:$0xff]
    %v6937 = vld [vmem:[%s3 + $0xe8] sm:$0xff]
    %v6938 = vld [vmem:[%s3 + $0xf0] sm:$0xff]
    %v6939 = vld [vmem:[%s3 + $0xf8] sm:$0xf]
    %v6940 = vld [vmem:[%s3 + $0xfc] sm:$0xff]
    %v6941 = vld [vmem:[%s3 + $0x104] sm:$0xff]
    %v6942 = vld [vmem:[%s3 + $0x10c] sm:$0xff]
    %v6943 = vld [vmem:[%s3 + $0x114] sm:$0xff]
    %v6944 = vld [vmem:[%s3 + $0x11c] sm:$0xf]
    %v6945 = vld [vmem:[%s3 + $0x120] sm:$0xff]
    %v6946 = vld [vmem:[%s3 + $0x128] sm:$0xff]
    %v6947 = vld [vmem:[%s3 + $0x130] sm:$0xff]
    %v6948 = vld [vmem:[%s3 + $0x138] sm:$0xff]
    %v6949 = vld [vmem:[%s3 + $0x140] sm:$0xf]
    %v6950 = vld [vmem:[%s3 + $0x144] sm:$0xff]
    %v6951 = vld [vmem:[%s3 + $0x14c] sm:$0xff]
    %v6952 = vld [vmem:[%s3 + $0x154] sm:$0xff]
    %v6953 = vld [vmem:[%s3 + $0x15c] sm:$0xff]
    %v6954 = vld [vmem:[%s3 + $0x164] sm:$0xf]
    %v6955 = vld [vmem:[%s3 + $0x168] sm:$0xff]
    %v6956 = vld [vmem:[%s3 + $0x170] sm:$0xff]
    %v6957 = vld [vmem:[%s3 + $0x178] sm:$0xff]
    %v6958 = vld [vmem:[%s3 + $0x180] sm:$0xff]
    %v6959 = vld [vmem:[%s3 + $0x188] sm:$0xf]
    %v6960 = vld [vmem:[%s3 + $0x18c] sm:$0xff]
    %v6961 = vld [vmem:[%s3 + $0x194] sm:$0xff]
    %v6962 = vld [vmem:[%s3 + $0x19c] sm:$0xff]
    %v6963 = vld [vmem:[%s3 + $0x1a4] sm:$0xff]
    %v6964 = vld [vmem:[%s3 + $0x1ac] sm:$0xf]
    %v6965 = vld [vmem:[%s3 + $0x1b0] sm:$0xff]
    %v6966 = vld [vmem:[%s3 + $0x1b8] sm:$0xff]
    %v6967 = vld [vmem:[%s3 + $0x1c0] sm:$0xff]
    %v6968 = vld [vmem:[%s3 + $0x1c8] sm:$0xff]
    %v6969 = vld [vmem:[%s3 + $0x1d0] sm:$0xf]
    %v6970 = vld [vmem:[%s3 + $0x1d4] sm:$0xff]
    %v6971 = vld [vmem:[%s3 + $0x1dc] sm:$0xff]
    %v6972 = vld [vmem:[%s3 + $0x1e4] sm:$0xff]
    %v6973 = vld [vmem:[%s3 + $0x1ec] sm:$0xff]
    %v6974 = vld [vmem:[%s3 + $0x1f4] sm:$0xf]
    %v6975 = vld [vmem:[%s3 + $0x1f8] sm:$0xff]
    %v6976 = vld [vmem:[%s3 + $0x200] sm:$0xff]
    %v6977 = vld [vmem:[%s3 + $0x208] sm:$0xff]
    %v6978 = vld [vmem:[%s3 + $0x210] sm:$0xff]
    %v6979 = vld [vmem:[%s3 + $0x218] sm:$0xf]
    %v6980 = vld [vmem:[%s3 + $0x21c] sm:$0xff]
    %v6981 = vld [vmem:[%s3 + $0x224] sm:$0xff]
    %v6982 = vld [vmem:[%s3 + $0x22c] sm:$0xff]
    %v6983 = vld [vmem:[%s3 + $0x234] sm:$0xff]
    %v6984 = vld [vmem:[%s3 + $0x23c] sm:$0xf]
    %v6985 = vld [vmem:[%s4] sm:$0xff]
    %v6986 = vld [vmem:[%s4 + $0x8] sm:$0xff]
    %v6987 = vld [vmem:[%s4 + $0x10] sm:$0xff]
    %v6988 = vld [vmem:[%s4 + $0x18] sm:$0xff]
    %v6989 = vld [vmem:[%s4 + $0x20] sm:$0xff]
    %v6990 = vld [vmem:[%s4 + $0x28] sm:$0xff]
    %v6991 = vld [vmem:[%s4 + $0x30] sm:$0xff]
    %v6992 = vld [vmem:[%s4 + $0x38] sm:$0xff]
    %v6993 = vld [vmem:[%s4 + $0x40] sm:$0xff]
    %v6994 = vld [vmem:[%s4 + $0x48] sm:$0xff]
    %v6995 = vld [vmem:[%s4 + $0x50] sm:$0xff]
    %v6996 = vld [vmem:[%s4 + $0x58] sm:$0xff]
    %v6997 = vld [vmem:[%s4 + $0x60] sm:$0xff]
    %v6998 = vld [vmem:[%s4 + $0x68] sm:$0xff]
    %v6999 = vld [vmem:[%s4 + $0x70] sm:$0xff]
    %v7000 = vld [vmem:[%s4 + $0x78] sm:$0xff]
    %7002 = vset.pattern.permute.xlu0 0
    %7003 = vperm.xlu0 %7002, %v6985
    %v7004 = vpop.permute.xlu0 %7003
    %7007 = vset.pattern.permute.xlu0 0
    %7008 = vperm.xlu0 %7007, %v6986
    %v7009 = vpop.permute.xlu0 %7008
    %7012 = vset.pattern.permute.xlu0 0
    %7013 = vperm.xlu0 %7012, %v6987
    %v7014 = vpop.permute.xlu0 %7013
    %7017 = vset.pattern.permute.xlu0 0
    %7018 = vperm.xlu0 %7017, %v6988
    %v7019 = vpop.permute.xlu0 %7018
    %7022 = vset.pattern.permute.xlu0 0
    %7023 = vperm.xlu0 %7022, %v6989
    %v7024 = vpop.permute.xlu0 %7023
    %7027 = vset.pattern.permute.xlu0 0
    %7028 = vperm.xlu0 %7027, %v6990
    %v7029 = vpop.permute.xlu0 %7028
    %7032 = vset.pattern.permute.xlu0 0
    %7033 = vperm.xlu0 %7032, %v6991
    %v7034 = vpop.permute.xlu0 %7033
    %7037 = vset.pattern.permute.xlu0 0
    %7038 = vperm.xlu0 %7037, %v6992
    %v7039 = vpop.permute.xlu0 %7038
    %7042 = vset.pattern.permute.xlu0 0
    %7043 = vperm.xlu0 %7042, %v6993
    %v7044 = vpop.permute.xlu0 %7043
    %7047 = vset.pattern.permute.xlu0 0
    %7048 = vperm.xlu0 %7047, %v6994
    %v7049 = vpop.permute.xlu0 %7048
    %7052 = vset.pattern.permute.xlu0 0
    %7053 = vperm.xlu0 %7052, %v6995
    %v7054 = vpop.permute.xlu0 %7053
    %7057 = vset.pattern.permute.xlu0 0
    %7058 = vperm.xlu0 %7057, %v6996
    %v7059 = vpop.permute.xlu0 %7058
    %7062 = vset.pattern.permute.xlu0 0
    %7063 = vperm.xlu0 %7062, %v6997
    %v7064 = vpop.permute.xlu0 %7063
    %7067 = vset.pattern.permute.xlu0 0
    %7068 = vperm.xlu0 %7067, %v6998
    %v7069 = vpop.permute.xlu0 %7068
    %7072 = vset.pattern.permute.xlu0 0
    %7073 = vperm.xlu0 %7072, %v6999
    %v7074 = vpop.permute.xlu0 %7073
    %7077 = vset.pattern.permute.xlu0 0
    %7078 = vperm.xlu0 %7077, %v7000
    %v7079 = vpop.permute.xlu0 %7078
    %v7161 = vunpack.c.l.b16 %v6905
    %v7162 = vunpack.c.h.b16 %v6905
    %v7163 = vunpack.c.l.b16 %v6906
    %v7164 = vunpack.c.h.b16 %v6906
    %v7165 = vunpack.c.l.b16 %v6907
    %v7166 = vunpack.c.h.b16 %v6907
    %v7167 = vunpack.c.l.b16 %v6908
    %v7168 = vunpack.c.h.b16 %v6908
    %v7169 = vunpack.c.l.b16 %v6909
    %v7170 = vunpack.c.l.b16 %v6910
    %v7171 = vunpack.c.h.b16 %v6910
    %v7172 = vunpack.c.l.b16 %v6911
    %v7173 = vunpack.c.h.b16 %v6911
    %v7174 = vunpack.c.l.b16 %v6912
    %v7175 = vunpack.c.h.b16 %v6912
    %v7176 = vunpack.c.l.b16 %v6913
    %v7177 = vunpack.c.h.b16 %v6913
    %v7178 = vunpack.c.l.b16 %v6914
    %v7179 = vunpack.c.l.b16 %v6915
    %v7180 = vunpack.c.h.b16 %v6915
    %v7181 = vunpack.c.l.b16 %v6916
    %v7182 = vunpack.c.h.b16 %v6916
    %v7183 = vunpack.c.l.b16 %v6917
    %v7184 = vunpack.c.h.b16 %v6917
    %v7185 = vunpack.c.l.b16 %v6918
    %v7186 = vunpack.c.h.b16 %v6918
    %v7187 = vunpack.c.l.b16 %v6919
    %v7188 = vunpack.c.l.b16 %v6920
    %v7189 = vunpack.c.h.b16 %v6920
    %v7190 = vunpack.c.l.b16 %v6921
    %v7191 = vunpack.c.h.b16 %v6921
    %v7192 = vunpack.c.l.b16 %v6922
    %v7193 = vunpack.c.h.b16 %v6922
    %v7194 = vunpack.c.l.b16 %v6923
    %v7195 = vunpack.c.h.b16 %v6923
    %v7196 = vunpack.c.l.b16 %v6924
    %v7197 = vunpack.c.l.b16 %v6925
    %v7198 = vunpack.c.h.b16 %v6925
    %v7199 = vunpack.c.l.b16 %v6926
    %v7200 = vunpack.c.h.b16 %v6926
    %v7201 = vunpack.c.l.b16 %v6927
    %v7202 = vunpack.c.h.b16 %v6927
    %v7203 = vunpack.c.l.b16 %v6928
    %v7204 = vunpack.c.h.b16 %v6928
    %v7205 = vunpack.c.l.b16 %v6929
    %v7206 = vunpack.c.l.b16 %v6930
    %v7207 = vunpack.c.h.b16 %v6930
    %v7208 = vunpack.c.l.b16 %v6931
    %v7209 = vunpack.c.h.b16 %v6931
    %v7210 = vunpack.c.l.b16 %v6932
    %v7211 = vunpack.c.h.b16 %v6932
    %v7212 = vunpack.c.l.b16 %v6933
    %v7213 = vunpack.c.h.b16 %v6933
    %v7214 = vunpack.c.l.b16 %v6934
    %v7215 = vunpack.c.l.b16 %v6935
    %v7216 = vunpack.c.h.b16 %v6935
    %v7217 = vunpack.c.l.b16 %v6936
    %v7218 = vunpack.c.h.b16 %v6936
    %v7219 = vunpack.c.l.b16 %v6937
    %v7220 = vunpack.c.h.b16 %v6937
    %v7221 = vunpack.c.l.b16 %v6938
    %v7222 = vunpack.c.h.b16 %v6938
    %v7223 = vunpack.c.l.b16 %v6939
    %v7224 = vunpack.c.l.b16 %v6940
    %v7225 = vunpack.c.h.b16 %v6940
    %v7226 = vunpack.c.l.b16 %v6941
    %v7227 = vunpack.c.h.b16 %v6941
    %v7228 = vunpack.c.l.b16 %v6942
    %v7229 = vunpack.c.h.b16 %v6942
    %v7230 = vunpack.c.l.b16 %v6943
    %v7231 = vunpack.c.h.b16 %v6943
    %v7232 = vunpack.c.l.b16 %v6944
    %v7233 = vunpack.c.l.b16 %v6945
    %v7234 = vunpack.c.h.b16 %v6945
    %v7235 = vunpack.c.l.b16 %v6946
    %v7236 = vunpack.c.h.b16 %v6946
    %v7237 = vunpack.c.l.b16 %v6947
    %v7238 = vunpack.c.h.b16 %v6947
    %v7239 = vunpack.c.l.b16 %v6948
    %v7240 = vunpack.c.h.b16 %v6948
    %v7241 = vunpack.c.l.b16 %v6949
    %v7242 = vunpack.c.l.b16 %v6950
    %v7243 = vunpack.c.h.b16 %v6950
    %v7244 = vunpack.c.l.b16 %v6951
    %v7245 = vunpack.c.h.b16 %v6951
    %v7246 = vunpack.c.l.b16 %v6952
    %v7247 = vunpack.c.h.b16 %v6952
    %v7248 = vunpack.c.l.b16 %v6953
    %v7249 = vunpack.c.h.b16 %v6953
    %v7250 = vunpack.c.l.b16 %v6954
    %v7251 = vunpack.c.l.b16 %v6955
    %v7252 = vunpack.c.h.b16 %v6955
    %v7253 = vunpack.c.l.b16 %v6956
    %v7254 = vunpack.c.h.b16 %v6956
    %v7255 = vunpack.c.l.b16 %v6957
    %v7256 = vunpack.c.h.b16 %v6957
    %v7257 = vunpack.c.l.b16 %v6958
    %v7258 = vunpack.c.h.b16 %v6958
    %v7259 = vunpack.c.l.b16 %v6959
    %v7260 = vunpack.c.l.b16 %v6960
    %v7261 = vunpack.c.h.b16 %v6960
    %v7262 = vunpack.c.l.b16 %v6961
    %v7263 = vunpack.c.h.b16 %v6961
    %v7264 = vunpack.c.l.b16 %v6962
    %v7265 = vunpack.c.h.b16 %v6962
    %v7266 = vunpack.c.l.b16 %v6963
    %v7267 = vunpack.c.h.b16 %v6963
    %v7268 = vunpack.c.l.b16 %v6964
    %v7269 = vunpack.c.l.b16 %v6965
    %v7270 = vunpack.c.h.b16 %v6965
    %v7271 = vunpack.c.l.b16 %v6966
    %v7272 = vunpack.c.h.b16 %v6966
    %v7273 = vunpack.c.l.b16 %v6967
    %v7274 = vunpack.c.h.b16 %v6967
    %v7275 = vunpack.c.l.b16 %v6968
    %v7276 = vunpack.c.h.b16 %v6968
    %v7277 = vunpack.c.l.b16 %v6969
    %v7278 = vunpack.c.l.b16 %v6970
    %v7279 = vunpack.c.h.b16 %v6970
    %v7280 = vunpack.c.l.b16 %v6971
    %v7281 = vunpack.c.h.b16 %v6971
    %v7282 = vunpack.c.l.b16 %v6972
    %v7283 = vunpack.c.h.b16 %v6972
    %v7284 = vunpack.c.l.b16 %v6973
    %v7285 = vunpack.c.h.b16 %v6973
    %v7286 = vunpack.c.l.b16 %v6974
    %v7287 = vunpack.c.l.b16 %v6975
    %v7288 = vunpack.c.h.b16 %v6975
    %v7289 = vunpack.c.l.b16 %v6976
    %v7290 = vunpack.c.h.b16 %v6976
    %v7291 = vunpack.c.l.b16 %v6977
    %v7292 = vunpack.c.h.b16 %v6977
    %v7293 = vunpack.c.l.b16 %v6978
    %v7294 = vunpack.c.h.b16 %v6978
    %v7295 = vunpack.c.l.b16 %v6979
    %v7296 = vunpack.c.l.b16 %v6980
    %v7297 = vunpack.c.h.b16 %v6980
    %v7298 = vunpack.c.l.b16 %v6981
    %v7299 = vunpack.c.h.b16 %v6981
    %v7300 = vunpack.c.l.b16 %v6982
    %v7301 = vunpack.c.h.b16 %v6982
    %v7302 = vunpack.c.l.b16 %v6983
    %v7303 = vunpack.c.h.b16 %v6983
    %v7304 = vunpack.c.l.b16 %v6984
    %v7305 = vpack.c.b16 %v7170, %v7161
    %v7306 = vpack.c.b16 %v7171, %v7162
    %v7307 = vpack.c.b16 %v7172, %v7163
    %v7308 = vpack.c.b16 %v7173, %v7164
    %v7309 = vpack.c.b16 %v7174, %v7165
    %v7310 = vpack.c.b16 %v7175, %v7166
    %v7311 = vpack.c.b16 %v7176, %v7167
    %v7312 = vpack.c.b16 %v7177, %v7168
    %v7313 = vpack.c.b16 %v7178, %v7169
    %v7314 = vpack.c.b16 %v7188, %v7179
    %v7315 = vpack.c.b16 %v7189, %v7180
    %v7316 = vpack.c.b16 %v7190, %v7181
    %v7317 = vpack.c.b16 %v7191, %v7182
    %v7318 = vpack.c.b16 %v7192, %v7183
    %v7319 = vpack.c.b16 %v7193, %v7184
    %v7320 = vpack.c.b16 %v7194, %v7185
    %v7321 = vpack.c.b16 %v7195, %v7186
    %v7322 = vpack.c.b16 %v7196, %v7187
    %v7323 = vpack.c.b16 %v7206, %v7197
    %v7324 = vpack.c.b16 %v7207, %v7198
    %v7325 = vpack.c.b16 %v7208, %v7199
    %v7326 = vpack.c.b16 %v7209, %v7200
    %v7327 = vpack.c.b16 %v7210, %v7201
    %v7328 = vpack.c.b16 %v7211, %v7202
    %v7329 = vpack.c.b16 %v7212, %v7203
    %v7330 = vpack.c.b16 %v7213, %v7204
    %v7331 = vpack.c.b16 %v7214, %v7205
    %v7332 = vpack.c.b16 %v7224, %v7215
    %v7333 = vpack.c.b16 %v7225, %v7216
    %v7334 = vpack.c.b16 %v7226, %v7217
    %v7335 = vpack.c.b16 %v7227, %v7218
    %v7336 = vpack.c.b16 %v7228, %v7219
    %v7337 = vpack.c.b16 %v7229, %v7220
    %v7338 = vpack.c.b16 %v7230, %v7221
    %v7339 = vpack.c.b16 %v7231, %v7222
    %v7340 = vpack.c.b16 %v7232, %v7223
    %v7341 = vpack.c.b16 %v7242, %v7233
    %v7342 = vpack.c.b16 %v7243, %v7234
    %v7343 = vpack.c.b16 %v7244, %v7235
    %v7344 = vpack.c.b16 %v7245, %v7236
    %v7345 = vpack.c.b16 %v7246, %v7237
    %v7346 = vpack.c.b16 %v7247, %v7238
    %v7347 = vpack.c.b16 %v7248, %v7239
    %v7348 = vpack.c.b16 %v7249, %v7240
    %v7349 = vpack.c.b16 %v7250, %v7241
    %v7350 = vpack.c.b16 %v7260, %v7251
    %v7351 = vpack.c.b16 %v7261, %v7252
    %v7352 = vpack.c.b16 %v7262, %v7253
    %v7353 = vpack.c.b16 %v7263, %v7254
    %v7354 = vpack.c.b16 %v7264, %v7255
    %v7355 = vpack.c.b16 %v7265, %v7256
    %v7356 = vpack.c.b16 %v7266, %v7257
    %v7357 = vpack.c.b16 %v7267, %v7258
    %v7358 = vpack.c.b16 %v7268, %v7259
    %v7359 = vpack.c.b16 %v7278, %v7269
    %v7360 = vpack.c.b16 %v7279, %v7270
    %v7361 = vpack.c.b16 %v7280, %v7271
    %v7362 = vpack.c.b16 %v7281, %v7272
    %v7363 = vpack.c.b16 %v7282, %v7273
    %v7364 = vpack.c.b16 %v7283, %v7274
    %v7365 = vpack.c.b16 %v7284, %v7275
    %v7366 = vpack.c.b16 %v7285, %v7276
    %v7367 = vpack.c.b16 %v7286, %v7277
    %v7368 = vpack.c.b16 %v7296, %v7287
    %v7369 = vpack.c.b16 %v7297, %v7288
    %v7370 = vpack.c.b16 %v7298, %v7289
    %v7371 = vpack.c.b16 %v7299, %v7290
    %v7372 = vpack.c.b16 %v7300, %v7291
    %v7373 = vpack.c.b16 %v7301, %v7292
    %v7374 = vpack.c.b16 %v7302, %v7293
    %v7375 = vpack.c.b16 %v7303, %v7294
    %v7376 = vpack.c.b16 %v7304, %v7295
    %7449 = vmatpush.bf16.xpose.msra.mxu0 %v5996
    %7450 = vmatpush.bf16.xpose.msra.mxu0 %v5995
    %7451 = vmatpush.bf16.xpose.msra.mxu0 %v5994
    %7452 = vmatpush.bf16.xpose.msra.mxu0 %v5993
    %7453 = vmatpush.bf16.xpose.msra.mxu0 %v5992
    %7454 = vmatpush.bf16.xpose.msra.mxu0 %v5991
    %7455 = vmatpush.bf16.xpose.msra.mxu0 %v5990
    %7456 = vmatpush.bf16.xpose.msra.mxu0 %v5989
    %7457 = vmatmul.bf16.gmra.mxu0 %v7305
    %v7458 = vpop.f32.mrf.mxu0
    %v7459 = vadd.f32 %v7004, %v7458
    %v7460 = vpop.f32.mrf.mxu0
    %v7461 = vadd.f32 %v7009, %v7460
    %7462 = vmatmul.bf16.gmra.mxu0 %v7314
    %v7463 = vpop.f32.mrf.mxu0
    %v7464 = vadd.f32 %v7014, %v7463
    %v7465 = vpop.f32.mrf.mxu0
    %v7466 = vadd.f32 %v7019, %v7465
    %7467 = vmatmul.bf16.gmra.mxu0 %v7323
    %v7468 = vpop.f32.mrf.mxu0
    %v7469 = vadd.f32 %v7024, %v7468
    %v7470 = vpop.f32.mrf.mxu0
    %v7471 = vadd.f32 %v7029, %v7470
    %7472 = vmatmul.bf16.gmra.mxu0 %v7332
    %v7473 = vpop.f32.mrf.mxu0
    %v7474 = vadd.f32 %v7034, %v7473
    %v7475 = vpop.f32.mrf.mxu0
    %v7476 = vadd.f32 %v7039, %v7475
    %7477 = vmatmul.bf16.gmra.mxu0 %v7341
    %v7478 = vpop.f32.mrf.mxu0
    %v7479 = vadd.f32 %v7044, %v7478
    %v7480 = vpop.f32.mrf.mxu0
    %v7481 = vadd.f32 %v7049, %v7480
    %7482 = vmatmul.bf16.gmra.mxu0 %v7350
    %v7483 = vpop.f32.mrf.mxu0
    %v7484 = vadd.f32 %v7054, %v7483
    %v7485 = vpop.f32.mrf.mxu0
    %v7486 = vadd.f32 %v7059, %v7485
    %7487 = vmatmul.bf16.gmra.mxu0 %v7359
    %v7488 = vpop.f32.mrf.mxu0
    %v7489 = vadd.f32 %v7064, %v7488
    %v7490 = vpop.f32.mrf.mxu0
    %v7491 = vadd.f32 %v7069, %v7490
    %7492 = vmatmul.bf16.gmra.mxu0 %v7368
    %v7493 = vpop.f32.mrf.mxu0
    %v7494 = vadd.f32 %v7074, %v7493
    %v7495 = vpop.f32.mrf.mxu0
    %v7496 = vadd.f32 %v7079, %v7495
    %7497 = vdwg.mxu0
    %7498 = vmatpush.bf16.xpose.msra.mxu0 %v6244
    %7499 = vmatpush.bf16.xpose.msra.mxu0 %v6232
    %7500 = vmatpush.bf16.xpose.msra.mxu0 %v6220
    %7501 = vmatpush.bf16.xpose.msra.mxu0 %v6208
    %7502 = vmatpush.bf16.xpose.msra.mxu0 %v6196
    %7503 = vmatpush.bf16.xpose.msra.mxu0 %v6184
    %7504 = vmatpush.bf16.xpose.msra.mxu0 %v6172
    %7505 = vmatpush.bf16.xpose.msra.mxu0 %v6160
    %7506 = vmatmul.bf16.gmra.mxu0 %v7306
    %v7507 = vpop.f32.mrf.mxu0
    %v7508 = vadd.f32 %v7459, %v7507
    %v7509 = vpop.f32.mrf.mxu0
    %v7510 = vadd.f32 %v7461, %v7509
    %7511 = vmatmul.bf16.gmra.mxu0 %v7315
    %v7512 = vpop.f32.mrf.mxu0
    %v7513 = vadd.f32 %v7464, %v7512
    %v7514 = vpop.f32.mrf.mxu0
    %v7515 = vadd.f32 %v7466, %v7514
    %7516 = vmatmul.bf16.gmra.mxu0 %v7324
    %v7517 = vpop.f32.mrf.mxu0
    %v7518 = vadd.f32 %v7469, %v7517
    %v7519 = vpop.f32.mrf.mxu0
    %v7520 = vadd.f32 %v7471, %v7519
    %7521 = vmatmul.bf16.gmra.mxu0 %v7333
    %v7522 = vpop.f32.mrf.mxu0
    %v7523 = vadd.f32 %v7474, %v7522
    %v7524 = vpop.f32.mrf.mxu0
    %v7525 = vadd.f32 %v7476, %v7524
    %7526 = vmatmul.bf16.gmra.mxu0 %v7342
    %v7527 = vpop.f32.mrf.mxu0
    %v7528 = vadd.f32 %v7479, %v7527
    %v7529 = vpop.f32.mrf.mxu0
    %v7530 = vadd.f32 %v7481, %v7529
    %7531 = vmatmul.bf16.gmra.mxu0 %v7351
    %v7532 = vpop.f32.mrf.mxu0
    %v7533 = vadd.f32 %v7484, %v7532
    %v7534 = vpop.f32.mrf.mxu0
    %v7535 = vadd.f32 %v7486, %v7534
    %7536 = vmatmul.bf16.gmra.mxu0 %v7360
    %v7537 = vpop.f32.mrf.mxu0
    %v7538 = vadd.f32 %v7489, %v7537
    %v7539 = vpop.f32.mrf.mxu0
    %v7540 = vadd.f32 %v7491, %v7539
    %7541 = vmatmul.bf16.gmra.mxu0 %v7369
    %v7542 = vpop.f32.mrf.mxu0
    %v7543 = vadd.f32 %v7494, %v7542
    %v7544 = vpop.f32.mrf.mxu0
    %v7545 = vadd.f32 %v7496, %v7544
    %7546 = vdwg.mxu0
    %7547 = vmatpush.bf16.xpose.msra.mxu0 %v6684
    %7548 = vmatpush.bf16.xpose.msra.mxu0 %v6681
    %7549 = vmatpush.bf16.xpose.msra.mxu0 %v6678
    %7550 = vmatpush.bf16.xpose.msra.mxu0 %v6675
    %7551 = vmatpush.bf16.xpose.msra.mxu0 %v6672
    %7552 = vmatpush.bf16.xpose.msra.mxu0 %v6669
    %7553 = vmatpush.bf16.xpose.msra.mxu0 %v6666
    %7554 = vmatpush.bf16.xpose.msra.mxu0 %v6663
    %7555 = vmatmul.bf16.gmra.mxu0 %v7307
    %v7556 = vpop.f32.mrf.mxu0
    %v7557 = vadd.f32 %v7508, %v7556
    %v7558 = vpop.f32.mrf.mxu0
    %v7559 = vadd.f32 %v7510, %v7558
    %7560 = vmatmul.bf16.gmra.mxu0 %v7316
    %v7561 = vpop.f32.mrf.mxu0
    %v7562 = vadd.f32 %v7513, %v7561
    %v7563 = vpop.f32.mrf.mxu0
    %v7564 = vadd.f32 %v7515, %v7563
    %7565 = vmatmul.bf16.gmra.mxu0 %v7325
    %v7566 = vpop.f32.mrf.mxu0
    %v7567 = vadd.f32 %v7518, %v7566
    %v7568 = vpop.f32.mrf.mxu0
    %v7569 = vadd.f32 %v7520, %v7568
    %7570 = vmatmul.bf16.gmra.mxu0 %v7334
    %v7571 = vpop.f32.mrf.mxu0
    %v7572 = vadd.f32 %v7523, %v7571
    %v7573 = vpop.f32.mrf.mxu0
    %v7574 = vadd.f32 %v7525, %v7573
    %7575 = vmatmul.bf16.gmra.mxu0 %v7343
    %v7576 = vpop.f32.mrf.mxu0
    %v7577 = vadd.f32 %v7528, %v7576
    %v7578 = vpop.f32.mrf.mxu0
    %v7579 = vadd.f32 %v7530, %v7578
    %7580 = vmatmul.bf16.gmra.mxu0 %v7352
    %v7581 = vpop.f32.mrf.mxu0
    %v7582 = vadd.f32 %v7533, %v7581
    %v7583 = vpop.f32.mrf.mxu0
    %v7584 = vadd.f32 %v7535, %v7583
    %7585 = vmatmul.bf16.gmra.mxu0 %v7361
    %v7586 = vpop.f32.mrf.mxu0
    %v7587 = vadd.f32 %v7538, %v7586
    %v7588 = vpop.f32.mrf.mxu0
    %v7589 = vadd.f32 %v7540, %v7588
    %7590 = vmatmul.bf16.gmra.mxu0 %v7370
    %v7591 = vpop.f32.mrf.mxu0
    %v7592 = vadd.f32 %v7543, %v7591
    %v7593 = vpop.f32.mrf.mxu0
    %v7594 = vadd.f32 %v7545, %v7593
    %7595 = vdwg.mxu0
    %7596 = vmatpush.bf16.xpose.msra.mxu0 %v5997
    %7597 = vmatpush.bf16.xpose.msra.mxu0 %v5996
    %7598 = vmatpush.bf16.xpose.msra.mxu0 %v5995
    %7599 = vmatpush.bf16.xpose.msra.mxu0 %v5994
    %7600 = vmatpush.bf16.xpose.msra.mxu0 %v5993
    %7601 = vmatpush.bf16.xpose.msra.mxu0 %v5992
    %7602 = vmatpush.bf16.xpose.msra.mxu0 %v5991
    %7603 = vmatpush.bf16.xpose.msra.mxu0 %v5990
    %7604 = vmatmul.bf16.gmra.mxu0 %v7308
    %v7605 = vpop.f32.mrf.mxu0
    %v7606 = vadd.f32 %v7557, %v7605
    %v7607 = vpop.f32.mrf.mxu0
    %v7608 = vadd.f32 %v7559, %v7607
    %7609 = vmatmul.bf16.gmra.mxu0 %v7317
    %v7610 = vpop.f32.mrf.mxu0
    %v7611 = vadd.f32 %v7562, %v7610
    %v7612 = vpop.f32.mrf.mxu0
    %v7613 = vadd.f32 %v7564, %v7612
    %7614 = vmatmul.bf16.gmra.mxu0 %v7326
    %v7615 = vpop.f32.mrf.mxu0
    %v7616 = vadd.f32 %v7567, %v7615
    %v7617 = vpop.f32.mrf.mxu0
    %v7618 = vadd.f32 %v7569, %v7617
    %7619 = vmatmul.bf16.gmra.mxu0 %v7335
    %v7620 = vpop.f32.mrf.mxu0
    %v7621 = vadd.f32 %v7572, %v7620
    %v7622 = vpop.f32.mrf.mxu0
    %v7623 = vadd.f32 %v7574, %v7622
    %7624 = vmatmul.bf16.gmra.mxu0 %v7344
    %v7625 = vpop.f32.mrf.mxu0
    %v7626 = vadd.f32 %v7577, %v7625
    %v7627 = vpop.f32.mrf.mxu0
    %v7628 = vadd.f32 %v7579, %v7627
    %7629 = vmatmul.bf16.gmra.mxu0 %v7353
    %v7630 = vpop.f32.mrf.mxu0
    %v7631 = vadd.f32 %v7582, %v7630
    %v7632 = vpop.f32.mrf.mxu0
    %v7633 = vadd.f32 %v7584, %v7632
    %7634 = vmatmul.bf16.gmra.mxu0 %v7362
    %v7635 = vpop.f32.mrf.mxu0
    %v7636 = vadd.f32 %v7587, %v7635
    %v7637 = vpop.f32.mrf.mxu0
    %v7638 = vadd.f32 %v7589, %v7637
    %7639 = vmatmul.bf16.gmra.mxu0 %v7371
    %v7640 = vpop.f32.mrf.mxu0
    %v7641 = vadd.f32 %v7592, %v7640
    %v7642 = vpop.f32.mrf.mxu0
    %v7643 = vadd.f32 %v7594, %v7642
    %7644 = vdwg.mxu0
    %7645 = vmatpush.bf16.xpose.msra.mxu0 %v6256
    %7646 = vmatpush.bf16.xpose.msra.mxu0 %v6244
    %7647 = vmatpush.bf16.xpose.msra.mxu0 %v6232
    %7648 = vmatpush.bf16.xpose.msra.mxu0 %v6220
    %7649 = vmatpush.bf16.xpose.msra.mxu0 %v6208
    %7650 = vmatpush.bf16.xpose.msra.mxu0 %v6196
    %7651 = vmatpush.bf16.xpose.msra.mxu0 %v6184
    %7652 = vmatpush.bf16.xpose.msra.mxu0 %v6172
    %7653 = vmatmul.bf16.gmra.mxu0 %v7309
    %v7654 = vpop.f32.mrf.mxu0
    %v7655 = vadd.f32 %v7606, %v7654
    %v7656 = vpop.f32.mrf.mxu0
    %v7657 = vadd.f32 %v7608, %v7656
    %7658 = vmatmul.bf16.gmra.mxu0 %v7318
    %v7659 = vpop.f32.mrf.mxu0
    %v7660 = vadd.f32 %v7611, %v7659
    %v7661 = vpop.f32.mrf.mxu0
    %v7662 = vadd.f32 %v7613, %v7661
    %7663 = vmatmul.bf16.gmra.mxu0 %v7327
    %v7664 = vpop.f32.mrf.mxu0
    %v7665 = vadd.f32 %v7616, %v7664
    %v7666 = vpop.f32.mrf.mxu0
    %v7667 = vadd.f32 %v7618, %v7666
    %7668 = vmatmul.bf16.gmra.mxu0 %v7336
    %v7669 = vpop.f32.mrf.mxu0
    %v7670 = vadd.f32 %v7621, %v7669
    %v7671 = vpop.f32.mrf.mxu0
    %v7672 = vadd.f32 %v7623, %v7671
    %7673 = vmatmul.bf16.gmra.mxu0 %v7345
    %v7674 = vpop.f32.mrf.mxu0
    %v7675 = vadd.f32 %v7626, %v7674
    %v7676 = vpop.f32.mrf.mxu0
    %v7677 = vadd.f32 %v7628, %v7676
    %7678 = vmatmul.bf16.gmra.mxu0 %v7354
    %v7679 = vpop.f32.mrf.mxu0
    %v7680 = vadd.f32 %v7631, %v7679
    %v7681 = vpop.f32.mrf.mxu0
    %v7682 = vadd.f32 %v7633, %v7681
    %7683 = vmatmul.bf16.gmra.mxu0 %v7363
    %v7684 = vpop.f32.mrf.mxu0
    %v7685 = vadd.f32 %v7636, %v7684
    %v7686 = vpop.f32.mrf.mxu0
    %v7687 = vadd.f32 %v7638, %v7686
    %7688 = vmatmul.bf16.gmra.mxu0 %v7372
    %v7689 = vpop.f32.mrf.mxu0
    %v7690 = vadd.f32 %v7641, %v7689
    %v7691 = vpop.f32.mrf.mxu0
    %v7692 = vadd.f32 %v7643, %v7691
    %7693 = vdwg.mxu0
    %7694 = vmatpush.bf16.xpose.msra.mxu0 %v6687
    %7695 = vmatpush.bf16.xpose.msra.mxu0 %v6684
    %7696 = vmatpush.bf16.xpose.msra.mxu0 %v6681
    %7697 = vmatpush.bf16.xpose.msra.mxu0 %v6678
    %7698 = vmatpush.bf16.xpose.msra.mxu0 %v6675
    %7699 = vmatpush.bf16.xpose.msra.mxu0 %v6672
    %7700 = vmatpush.bf16.xpose.msra.mxu0 %v6669
    %7701 = vmatpush.bf16.xpose.msra.mxu0 %v6666
    %7702 = vmatmul.bf16.gmra.mxu0 %v7310
    %v7703 = vpop.f32.mrf.mxu0
    %v7704 = vadd.f32 %v7655, %v7703
    %v7705 = vpop.f32.mrf.mxu0
    %v7706 = vadd.f32 %v7657, %v7705
    %7707 = vmatmul.bf16.gmra.mxu0 %v7319
    %v7708 = vpop.f32.mrf.mxu0
    %v7709 = vadd.f32 %v7660, %v7708
    %v7710 = vpop.f32.mrf.mxu0
    %v7711 = vadd.f32 %v7662, %v7710
    %7712 = vmatmul.bf16.gmra.mxu0 %v7328
    %v7713 = vpop.f32.mrf.mxu0
    %v7714 = vadd.f32 %v7665, %v7713
    %v7715 = vpop.f32.mrf.mxu0
    %v7716 = vadd.f32 %v7667, %v7715
    %7717 = vmatmul.bf16.gmra.mxu0 %v7337
    %v7718 = vpop.f32.mrf.mxu0
    %v7719 = vadd.f32 %v7670, %v7718
    %v7720 = vpop.f32.mrf.mxu0
    %v7721 = vadd.f32 %v7672, %v7720
    %7722 = vmatmul.bf16.gmra.mxu0 %v7346
    %v7723 = vpop.f32.mrf.mxu0
    %v7724 = vadd.f32 %v7675, %v7723
    %v7725 = vpop.f32.mrf.mxu0
    %v7726 = vadd.f32 %v7677, %v7725
    %7727 = vmatmul.bf16.gmra.mxu0 %v7355
    %v7728 = vpop.f32.mrf.mxu0
    %v7729 = vadd.f32 %v7680, %v7728
    %v7730 = vpop.f32.mrf.mxu0
    %v7731 = vadd.f32 %v7682, %v7730
    %7732 = vmatmul.bf16.gmra.mxu0 %v7364
    %v7733 = vpop.f32.mrf.mxu0
    %v7734 = vadd.f32 %v7685, %v7733
    %v7735 = vpop.f32.mrf.mxu0
    %v7736 = vadd.f32 %v7687, %v7735
    %7737 = vmatmul.bf16.gmra.mxu0 %v7373
    %v7738 = vpop.f32.mrf.mxu0
    %v7739 = vadd.f32 %v7690, %v7738
    %v7740 = vpop.f32.mrf.mxu0
    %v7741 = vadd.f32 %v7692, %v7740
    %7742 = vdwg.mxu0
    %7743 = vmatpush.bf16.xpose.msra.mxu0 %v5998
    %7744 = vmatpush.bf16.xpose.msra.mxu0 %v5997
    %7745 = vmatpush.bf16.xpose.msra.mxu0 %v5996
    %7746 = vmatpush.bf16.xpose.msra.mxu0 %v5995
    %7747 = vmatpush.bf16.xpose.msra.mxu0 %v5994
    %7748 = vmatpush.bf16.xpose.msra.mxu0 %v5993
    %7749 = vmatpush.bf16.xpose.msra.mxu0 %v5992
    %7750 = vmatpush.bf16.xpose.msra.mxu0 %v5991
    %7751 = vmatmul.bf16.gmra.mxu0 %v7311
    %v7752 = vpop.f32.mrf.mxu0
    %v7753 = vadd.f32 %v7704, %v7752
    %v7754 = vpop.f32.mrf.mxu0
    %v7755 = vadd.f32 %v7706, %v7754
    %7756 = vmatmul.bf16.gmra.mxu0 %v7320
    %v7757 = vpop.f32.mrf.mxu0
    %v7758 = vadd.f32 %v7709, %v7757
    %v7759 = vpop.f32.mrf.mxu0
    %v7760 = vadd.f32 %v7711, %v7759
    %7761 = vmatmul.bf16.gmra.mxu0 %v7329
    %v7762 = vpop.f32.mrf.mxu0
    %v7763 = vadd.f32 %v7714, %v7762
    %v7764 = vpop.f32.mrf.mxu0
    %v7765 = vadd.f32 %v7716, %v7764
    %7766 = vmatmul.bf16.gmra.mxu0 %v7338
    %v7767 = vpop.f32.mrf.mxu0
    %v7768 = vadd.f32 %v7719, %v7767
    %v7769 = vpop.f32.mrf.mxu0
    %v7770 = vadd.f32 %v7721, %v7769
    %7771 = vmatmul.bf16.gmra.mxu0 %v7347
    %v7772 = vpop.f32.mrf.mxu0
    %v7773 = vadd.f32 %v7724, %v7772
    %v7774 = vpop.f32.mrf.mxu0
    %v7775 = vadd.f32 %v7726, %v7774
    %7776 = vmatmul.bf16.gmra.mxu0 %v7356
    %v7777 = vpop.f32.mrf.mxu0
    %v7778 = vadd.f32 %v7729, %v7777
    %v7779 = vpop.f32.mrf.mxu0
    %v7780 = vadd.f32 %v7731, %v7779
    %7781 = vmatmul.bf16.gmra.mxu0 %v7365
    %v7782 = vpop.f32.mrf.mxu0
    %v7783 = vadd.f32 %v7734, %v7782
    %v7784 = vpop.f32.mrf.mxu0
    %v7785 = vadd.f32 %v7736, %v7784
    %7786 = vmatmul.bf16.gmra.mxu0 %v7374
    %v7787 = vpop.f32.mrf.mxu0
    %v7788 = vadd.f32 %v7739, %v7787
    %v7789 = vpop.f32.mrf.mxu0
    %v7790 = vadd.f32 %v7741, %v7789
    %7791 = vdwg.mxu0
    %7792 = vmatpush.bf16.xpose.msra.mxu0 %v6268
    %7793 = vmatpush.bf16.xpose.msra.mxu0 %v6256
    %7794 = vmatpush.bf16.xpose.msra.mxu0 %v6244
    %7795 = vmatpush.bf16.xpose.msra.mxu0 %v6232
    %7796 = vmatpush.bf16.xpose.msra.mxu0 %v6220
    %7797 = vmatpush.bf16.xpose.msra.mxu0 %v6208
    %7798 = vmatpush.bf16.xpose.msra.mxu0 %v6196
    %7799 = vmatpush.bf16.xpose.msra.mxu0 %v6184
    %7800 = vmatmul.bf16.gmra.mxu0 %v7312
    %v7801 = vpop.f32.mrf.mxu0
    %v7802 = vadd.f32 %v7753, %v7801
    %v7803 = vpop.f32.mrf.mxu0
    %v7804 = vadd.f32 %v7755, %v7803
    %7805 = vmatmul.bf16.gmra.mxu0 %v7321
    %v7806 = vpop.f32.mrf.mxu0
    %v7807 = vadd.f32 %v7758, %v7806
    %v7808 = vpop.f32.mrf.mxu0
    %v7809 = vadd.f32 %v7760, %v7808
    %7810 = vmatmul.bf16.gmra.mxu0 %v7330
    %v7811 = vpop.f32.mrf.mxu0
    %v7812 = vadd.f32 %v7763, %v7811
    %v7813 = vpop.f32.mrf.mxu0
    %v7814 = vadd.f32 %v7765, %v7813
    %7815 = vmatmul.bf16.gmra.mxu0 %v7339
    %v7816 = vpop.f32.mrf.mxu0
    %v7817 = vadd.f32 %v7768, %v7816
    %v7818 = vpop.f32.mrf.mxu0
    %v7819 = vadd.f32 %v7770, %v7818
    %7820 = vmatmul.bf16.gmra.mxu0 %v7348
    %v7821 = vpop.f32.mrf.mxu0
    %v7822 = vadd.f32 %v7773, %v7821
    %v7823 = vpop.f32.mrf.mxu0
    %v7824 = vadd.f32 %v7775, %v7823
    %7825 = vmatmul.bf16.gmra.mxu0 %v7357
    %v7826 = vpop.f32.mrf.mxu0
    %v7827 = vadd.f32 %v7778, %v7826
    %v7828 = vpop.f32.mrf.mxu0
    %v7829 = vadd.f32 %v7780, %v7828
    %7830 = vmatmul.bf16.gmra.mxu0 %v7366
    %v7831 = vpop.f32.mrf.mxu0
    %v7832 = vadd.f32 %v7783, %v7831
    %v7833 = vpop.f32.mrf.mxu0
    %v7834 = vadd.f32 %v7785, %v7833
    %7835 = vmatmul.bf16.gmra.mxu0 %v7375
    %v7836 = vpop.f32.mrf.mxu0
    %v7837 = vadd.f32 %v7788, %v7836
    %v7838 = vpop.f32.mrf.mxu0
    %v7839 = vadd.f32 %v7790, %v7838
    %7840 = vdwg.mxu0
    %7841 = vmatpush.bf16.xpose.msra.mxu0 %v6690
    %7842 = vmatpush.bf16.xpose.msra.mxu0 %v6687
    %7843 = vmatpush.bf16.xpose.msra.mxu0 %v6684
    %7844 = vmatpush.bf16.xpose.msra.mxu0 %v6681
    %7845 = vmatpush.bf16.xpose.msra.mxu0 %v6678
    %7846 = vmatpush.bf16.xpose.msra.mxu0 %v6675
    %7847 = vmatpush.bf16.xpose.msra.mxu0 %v6672
    %7848 = vmatpush.bf16.xpose.msra.mxu0 %v6669
    %7849 = vmatmul.bf16.gmra.mxu0 %v7313
    %v7850 = vpop.f32.mrf.mxu0
    %v7851 = vadd.f32 %v7802, %v7850
    %v7852 = vpop.f32.mrf.mxu0
    %v7853 = vadd.f32 %v7804, %v7852
    %7854 = vmatmul.bf16.gmra.mxu0 %v7322
    %v7855 = vpop.f32.mrf.mxu0
    %v7856 = vadd.f32 %v7807, %v7855
    %v7857 = vpop.f32.mrf.mxu0
    %v7858 = vadd.f32 %v7809, %v7857
    %7859 = vmatmul.bf16.gmra.mxu0 %v7331
    %v7860 = vpop.f32.mrf.mxu0
    %v7861 = vadd.f32 %v7812, %v7860
    %v7862 = vpop.f32.mrf.mxu0
    %v7863 = vadd.f32 %v7814, %v7862
    %7864 = vmatmul.bf16.gmra.mxu0 %v7340
    %v7865 = vpop.f32.mrf.mxu0
    %v7866 = vadd.f32 %v7817, %v7865
    %v7867 = vpop.f32.mrf.mxu0
    %v7868 = vadd.f32 %v7819, %v7867
    %7869 = vmatmul.bf16.gmra.mxu0 %v7349
    %v7870 = vpop.f32.mrf.mxu0
    %v7871 = vadd.f32 %v7822, %v7870
    %v7872 = vpop.f32.mrf.mxu0
    %v7873 = vadd.f32 %v7824, %v7872
    %7874 = vmatmul.bf16.gmra.mxu0 %v7358
    %v7875 = vpop.f32.mrf.mxu0
    %v7876 = vadd.f32 %v7827, %v7875
    %v7877 = vpop.f32.mrf.mxu0
    %v7878 = vadd.f32 %v7829, %v7877
    %7879 = vmatmul.bf16.gmra.mxu0 %v7367
    %v7880 = vpop.f32.mrf.mxu0
    %v7881 = vadd.f32 %v7832, %v7880
    %v7882 = vpop.f32.mrf.mxu0
    %v7883 = vadd.f32 %v7834, %v7882
    %7884 = vmatmul.bf16.gmra.mxu0 %v7376
    %v7885 = vpop.f32.mrf.mxu0
    %v7886 = vadd.f32 %v7837, %v7885
    %v7887 = vpop.f32.mrf.mxu0
    %v7888 = vadd.f32 %v7839, %v7887
    %7889 = vdwg.mxu0
    %7890 = vmatpush.bf16.xpose.msra.mxu0 %v6004
    %7891 = vmatpush.bf16.xpose.msra.mxu0 %v6003
    %7892 = vmatpush.bf16.xpose.msra.mxu0 %v6002
    %7893 = vmatpush.bf16.xpose.msra.mxu0 %v6001
    %7894 = vmatpush.bf16.xpose.msra.mxu0 %v6000
    %7895 = vmatpush.bf16.xpose.msra.mxu0 %v5999
    %7896 = vmatpush.bf16.xpose.msra.mxu0 %v5998
    %7897 = vmatpush.bf16.xpose.msra.mxu0 %v5997
    %7898 = vmatmul.bf16.gmra.mxu0 %v7305
    %v7899 = vpop.f32.mrf.mxu0
    %v7900 = vadd.f32 %v7004, %v7899
    %v7901 = vpop.f32.mrf.mxu0
    %v7902 = vadd.f32 %v7009, %v7901
    %7903 = vmatmul.bf16.gmra.mxu0 %v7314
    %v7904 = vpop.f32.mrf.mxu0
    %v7905 = vadd.f32 %v7014, %v7904
    %v7906 = vpop.f32.mrf.mxu0
    %v7907 = vadd.f32 %v7019, %v7906
    %7908 = vmatmul.bf16.gmra.mxu0 %v7323
    %v7909 = vpop.f32.mrf.mxu0
    %v7910 = vadd.f32 %v7024, %v7909
    %v7911 = vpop.f32.mrf.mxu0
    %v7912 = vadd.f32 %v7029, %v7911
    %7913 = vmatmul.bf16.gmra.mxu0 %v7332
    %v7914 = vpop.f32.mrf.mxu0
    %v7915 = vadd.f32 %v7034, %v7914
    %v7916 = vpop.f32.mrf.mxu0
    %v7917 = vadd.f32 %v7039, %v7916
    %7918 = vmatmul.bf16.gmra.mxu0 %v7341
    %v7919 = vpop.f32.mrf.mxu0
    %v7920 = vadd.f32 %v7044, %v7919
    %v7921 = vpop.f32.mrf.mxu0
    %v7922 = vadd.f32 %v7049, %v7921
    %7923 = vmatmul.bf16.gmra.mxu0 %v7350
    %v7924 = vpop.f32.mrf.mxu0
    %v7925 = vadd.f32 %v7054, %v7924
    %v7926 = vpop.f32.mrf.mxu0
    %v7927 = vadd.f32 %v7059, %v7926
    %7928 = vmatmul.bf16.gmra.mxu0 %v7359
    %v7929 = vpop.f32.mrf.mxu0
    %v7930 = vadd.f32 %v7064, %v7929
    %v7931 = vpop.f32.mrf.mxu0
    %v7932 = vadd.f32 %v7069, %v7931
    %7933 = vmatmul.bf16.gmra.mxu0 %v7368
    %v7934 = vpop.f32.mrf.mxu0
    %v7935 = vadd.f32 %v7074, %v7934
    %v7936 = vpop.f32.mrf.mxu0
    %v7937 = vadd.f32 %v7079, %v7936
    %7938 = vdwg.mxu0
    %7939 = vmatpush.bf16.xpose.msra.mxu0 %v6340
    %7940 = vmatpush.bf16.xpose.msra.mxu0 %v6328
    %7941 = vmatpush.bf16.xpose.msra.mxu0 %v6316
    %7942 = vmatpush.bf16.xpose.msra.mxu0 %v6304
    %7943 = vmatpush.bf16.xpose.msra.mxu0 %v6292
    %7944 = vmatpush.bf16.xpose.msra.mxu0 %v6280
    %7945 = vmatpush.bf16.xpose.msra.mxu0 %v6268
    %7946 = vmatpush.bf16.xpose.msra.mxu0 %v6256
    %7947 = vmatmul.bf16.gmra.mxu0 %v7306
    %v7948 = vpop.f32.mrf.mxu0
    %v7949 = vadd.f32 %v7900, %v7948
    %v7950 = vpop.f32.mrf.mxu0
    %v7951 = vadd.f32 %v7902, %v7950
    %7952 = vmatmul.bf16.gmra.mxu0 %v7315
    %v7953 = vpop.f32.mrf.mxu0
    %v7954 = vadd.f32 %v7905, %v7953
    %v7955 = vpop.f32.mrf.mxu0
    %v7956 = vadd.f32 %v7907, %v7955
    %7957 = vmatmul.bf16.gmra.mxu0 %v7324
    %v7958 = vpop.f32.mrf.mxu0
    %v7959 = vadd.f32 %v7910, %v7958
    %v7960 = vpop.f32.mrf.mxu0
    %v7961 = vadd.f32 %v7912, %v7960
    %7962 = vmatmul.bf16.gmra.mxu0 %v7333
    %v7963 = vpop.f32.mrf.mxu0
    %v7964 = vadd.f32 %v7915, %v7963
    %v7965 = vpop.f32.mrf.mxu0
    %v7966 = vadd.f32 %v7917, %v7965
    %7967 = vmatmul.bf16.gmra.mxu0 %v7342
    %v7968 = vpop.f32.mrf.mxu0
    %v7969 = vadd.f32 %v7920, %v7968
    %v7970 = vpop.f32.mrf.mxu0
    %v7971 = vadd.f32 %v7922, %v7970
    %7972 = vmatmul.bf16.gmra.mxu0 %v7351
    %v7973 = vpop.f32.mrf.mxu0
    %v7974 = vadd.f32 %v7925, %v7973
    %v7975 = vpop.f32.mrf.mxu0
    %v7976 = vadd.f32 %v7927, %v7975
    %7977 = vmatmul.bf16.gmra.mxu0 %v7360
    %v7978 = vpop.f32.mrf.mxu0
    %v7979 = vadd.f32 %v7930, %v7978
    %v7980 = vpop.f32.mrf.mxu0
    %v7981 = vadd.f32 %v7932, %v7980
    %7982 = vmatmul.bf16.gmra.mxu0 %v7369
    %v7983 = vpop.f32.mrf.mxu0
    %v7984 = vadd.f32 %v7935, %v7983
    %v7985 = vpop.f32.mrf.mxu0
    %v7986 = vadd.f32 %v7937, %v7985
    %7987 = vdwg.mxu0
    %7988 = vmatpush.bf16.xpose.msra.mxu0 %v6708
    %7989 = vmatpush.bf16.xpose.msra.mxu0 %v6705
    %7990 = vmatpush.bf16.xpose.msra.mxu0 %v6702
    %7991 = vmatpush.bf16.xpose.msra.mxu0 %v6699
    %7992 = vmatpush.bf16.xpose.msra.mxu0 %v6696
    %7993 = vmatpush.bf16.xpose.msra.mxu0 %v6693
    %7994 = vmatpush.bf16.xpose.msra.mxu0 %v6690
    %7995 = vmatpush.bf16.xpose.msra.mxu0 %v6687
    %7996 = vmatmul.bf16.gmra.mxu0 %v7307
    %v7997 = vpop.f32.mrf.mxu0
    %v7998 = vadd.f32 %v7949, %v7997
    %v7999 = vpop.f32.mrf.mxu0
    %v8000 = vadd.f32 %v7951, %v7999
    %8001 = vmatmul.bf16.gmra.mxu0 %v7316
    %v8002 = vpop.f32.mrf.mxu0
    %v8003 = vadd.f32 %v7954, %v8002
    %v8004 = vpop.f32.mrf.mxu0
    %v8005 = vadd.f32 %v7956, %v8004
    %8006 = vmatmul.bf16.gmra.mxu0 %v7325
    %v8007 = vpop.f32.mrf.mxu0
    %v8008 = vadd.f32 %v7959, %v8007
    %v8009 = vpop.f32.mrf.mxu0
    %v8010 = vadd.f32 %v7961, %v8009
    %8011 = vmatmul.bf16.gmra.mxu0 %v7334
    %v8012 = vpop.f32.mrf.mxu0
    %v8013 = vadd.f32 %v7964, %v8012
    %v8014 = vpop.f32.mrf.mxu0
    %v8015 = vadd.f32 %v7966, %v8014
    %8016 = vmatmul.bf16.gmra.mxu0 %v7343
    %v8017 = vpop.f32.mrf.mxu0
    %v8018 = vadd.f32 %v7969, %v8017
    %v8019 = vpop.f32.mrf.mxu0
    %v8020 = vadd.f32 %v7971, %v8019
    %8021 = vmatmul.bf16.gmra.mxu0 %v7352
    %v8022 = vpop.f32.mrf.mxu0
    %v8023 = vadd.f32 %v7974, %v8022
    %v8024 = vpop.f32.mrf.mxu0
    %v8025 = vadd.f32 %v7976, %v8024
    %8026 = vmatmul.bf16.gmra.mxu0 %v7361
    %v8027 = vpop.f32.mrf.mxu0
    %v8028 = vadd.f32 %v7979, %v8027
    %v8029 = vpop.f32.mrf.mxu0
    %v8030 = vadd.f32 %v7981, %v8029
    %8031 = vmatmul.bf16.gmra.mxu0 %v7370
    %v8032 = vpop.f32.mrf.mxu0
    %v8033 = vadd.f32 %v7984, %v8032
    %v8034 = vpop.f32.mrf.mxu0
    %v8035 = vadd.f32 %v7986, %v8034
    %8036 = vdwg.mxu0
    %8037 = vmatpush.bf16.xpose.msra.mxu0 %v6797
    %8038 = vmatpush.bf16.xpose.msra.mxu0 %v6004
    %8039 = vmatpush.bf16.xpose.msra.mxu0 %v6003
    %8040 = vmatpush.bf16.xpose.msra.mxu0 %v6002
    %8041 = vmatpush.bf16.xpose.msra.mxu0 %v6001
    %8042 = vmatpush.bf16.xpose.msra.mxu0 %v6000
    %8043 = vmatpush.bf16.xpose.msra.mxu0 %v5999
    %8044 = vmatpush.bf16.xpose.msra.mxu0 %v5998
    %8045 = vmatmul.bf16.gmra.mxu0 %v7308
    %v8046 = vpop.f32.mrf.mxu0
    %v8047 = vadd.f32 %v7998, %v8046
    %v8048 = vpop.f32.mrf.mxu0
    %v8049 = vadd.f32 %v8000, %v8048
    %8050 = vmatmul.bf16.gmra.mxu0 %v7317
    %v8051 = vpop.f32.mrf.mxu0
    %v8052 = vadd.f32 %v8003, %v8051
    %v8053 = vpop.f32.mrf.mxu0
    %v8054 = vadd.f32 %v8005, %v8053
    %8055 = vmatmul.bf16.gmra.mxu0 %v7326
    %v8056 = vpop.f32.mrf.mxu0
    %v8057 = vadd.f32 %v8008, %v8056
    %v8058 = vpop.f32.mrf.mxu0
    %v8059 = vadd.f32 %v8010, %v8058
    %8060 = vmatmul.bf16.gmra.mxu0 %v7335
    %v8061 = vpop.f32.mrf.mxu0
    %v8062 = vadd.f32 %v8013, %v8061
    %v8063 = vpop.f32.mrf.mxu0
    %v8064 = vadd.f32 %v8015, %v8063
    %8065 = vmatmul.bf16.gmra.mxu0 %v7344
    %v8066 = vpop.f32.mrf.mxu0
    %v8067 = vadd.f32 %v8018, %v8066
    %v8068 = vpop.f32.mrf.mxu0
    %v8069 = vadd.f32 %v8020, %v8068
    %8070 = vmatmul.bf16.gmra.mxu0 %v7353
    %v8071 = vpop.f32.mrf.mxu0
    %v8072 = vadd.f32 %v8023, %v8071
    %v8073 = vpop.f32.mrf.mxu0
    %v8074 = vadd.f32 %v8025, %v8073
    %8075 = vmatmul.bf16.gmra.mxu0 %v7362
    %v8076 = vpop.f32.mrf.mxu0
    %v8077 = vadd.f32 %v8028, %v8076
    %v8078 = vpop.f32.mrf.mxu0
    %v8079 = vadd.f32 %v8030, %v8078
    %8080 = vmatmul.bf16.gmra.mxu0 %v7371
    %v8081 = vpop.f32.mrf.mxu0
    %v8082 = vadd.f32 %v8033, %v8081
    %v8083 = vpop.f32.mrf.mxu0
    %v8084 = vadd.f32 %v8035, %v8083
    %8085 = vdwg.mxu0
    %8086 = vmatpush.bf16.xpose.msra.mxu0 %v6818
    %8087 = vmatpush.bf16.xpose.msra.mxu0 %v6340
    %8088 = vmatpush.bf16.xpose.msra.mxu0 %v6328
    %8089 = vmatpush.bf16.xpose.msra.mxu0 %v6316
    %8090 = vmatpush.bf16.xpose.msra.mxu0 %v6304
    %8091 = vmatpush.bf16.xpose.msra.mxu0 %v6292
    %8092 = vmatpush.bf16.xpose.msra.mxu0 %v6280
    %8093 = vmatpush.bf16.xpose.msra.mxu0 %v6268
    %8094 = vmatmul.bf16.gmra.mxu0 %v7309
    %v8095 = vpop.f32.mrf.mxu0
    %v8096 = vadd.f32 %v8047, %v8095
    %v8097 = vpop.f32.mrf.mxu0
    %v8098 = vadd.f32 %v8049, %v8097
    %8099 = vmatmul.bf16.gmra.mxu0 %v7318
    %v8100 = vpop.f32.mrf.mxu0
    %v8101 = vadd.f32 %v8052, %v8100
    %v8102 = vpop.f32.mrf.mxu0
    %v8103 = vadd.f32 %v8054, %v8102
    %8104 = vmatmul.bf16.gmra.mxu0 %v7327
    %v8105 = vpop.f32.mrf.mxu0
    %v8106 = vadd.f32 %v8057, %v8105
    %v8107 = vpop.f32.mrf.mxu0
    %v8108 = vadd.f32 %v8059, %v8107
    %8109 = vmatmul.bf16.gmra.mxu0 %v7336
    %v8110 = vpop.f32.mrf.mxu0
    %v8111 = vadd.f32 %v8062, %v8110
    %v8112 = vpop.f32.mrf.mxu0
    %v8113 = vadd.f32 %v8064, %v8112
    %8114 = vmatmul.bf16.gmra.mxu0 %v7345
    %v8115 = vpop.f32.mrf.mxu0
    %v8116 = vadd.f32 %v8067, %v8115
    %v8117 = vpop.f32.mrf.mxu0
    %v8118 = vadd.f32 %v8069, %v8117
    %8119 = vmatmul.bf16.gmra.mxu0 %v7354
    %v8120 = vpop.f32.mrf.mxu0
    %v8121 = vadd.f32 %v8072, %v8120
    %v8122 = vpop.f32.mrf.mxu0
    %v8123 = vadd.f32 %v8074, %v8122
    %8124 = vmatmul.bf16.gmra.mxu0 %v7363
    %v8125 = vpop.f32.mrf.mxu0
    %v8126 = vadd.f32 %v8077, %v8125
    %v8127 = vpop.f32.mrf.mxu0
    %v8128 = vadd.f32 %v8079, %v8127
    %8129 = vmatmul.bf16.gmra.mxu0 %v7372
    %v8130 = vpop.f32.mrf.mxu0
    %v8131 = vadd.f32 %v8082, %v8130
    %v8132 = vpop.f32.mrf.mxu0
    %v8133 = vadd.f32 %v8084, %v8132
    %8134 = vdwg.mxu0
    %8135 = vmatpush.bf16.xpose.msra.mxu0 %v6841
    %8136 = vmatpush.bf16.xpose.msra.mxu0 %v6708
    %8137 = vmatpush.bf16.xpose.msra.mxu0 %v6705
    %8138 = vmatpush.bf16.xpose.msra.mxu0 %v6702
    %8139 = vmatpush.bf16.xpose.msra.mxu0 %v6699
    %8140 = vmatpush.bf16.xpose.msra.mxu0 %v6696
    %8141 = vmatpush.bf16.xpose.msra.mxu0 %v6693
    %8142 = vmatpush.bf16.xpose.msra.mxu0 %v6690
    %8143 = vmatmul.bf16.gmra.mxu0 %v7310
    %v8144 = vpop.f32.mrf.mxu0
    %v8145 = vadd.f32 %v8096, %v8144
    %v8146 = vpop.f32.mrf.mxu0
    %v8147 = vadd.f32 %v8098, %v8146
    %8148 = vmatmul.bf16.gmra.mxu0 %v7319
    %v8149 = vpop.f32.mrf.mxu0
    %v8150 = vadd.f32 %v8101, %v8149
    %v8151 = vpop.f32.mrf.mxu0
    %v8152 = vadd.f32 %v8103, %v8151
    %8153 = vmatmul.bf16.gmra.mxu0 %v7328
    %v8154 = vpop.f32.mrf.mxu0
    %v8155 = vadd.f32 %v8106, %v8154
    %v8156 = vpop.f32.mrf.mxu0
    %v8157 = vadd.f32 %v8108, %v8156
    %8158 = vmatmul.bf16.gmra.mxu0 %v7337
    %v8159 = vpop.f32.mrf.mxu0
    %v8160 = vadd.f32 %v8111, %v8159
    %v8161 = vpop.f32.mrf.mxu0
    %v8162 = vadd.f32 %v8113, %v8161
    %8163 = vmatmul.bf16.gmra.mxu0 %v7346
    %v8164 = vpop.f32.mrf.mxu0
    %v8165 = vadd.f32 %v8116, %v8164
    %v8166 = vpop.f32.mrf.mxu0
    %v8167 = vadd.f32 %v8118, %v8166
    %8168 = vmatmul.bf16.gmra.mxu0 %v7355
    %v8169 = vpop.f32.mrf.mxu0
    %v8170 = vadd.f32 %v8121, %v8169
    %v8171 = vpop.f32.mrf.mxu0
    %v8172 = vadd.f32 %v8123, %v8171
    %8173 = vmatmul.bf16.gmra.mxu0 %v7364
    %v8174 = vpop.f32.mrf.mxu0
    %v8175 = vadd.f32 %v8126, %v8174
    %v8176 = vpop.f32.mrf.mxu0
    %v8177 = vadd.f32 %v8128, %v8176
    %8178 = vmatmul.bf16.gmra.mxu0 %v7373
    %v8179 = vpop.f32.mrf.mxu0
    %v8180 = vadd.f32 %v8131, %v8179
    %v8181 = vpop.f32.mrf.mxu0
    %v8182 = vadd.f32 %v8133, %v8181
    %8183 = vdwg.mxu0
    %8184 = vmatpush.bf16.xpose.msra.mxu0 %v6855
    %8185 = vmatpush.bf16.xpose.msra.mxu0 %v6797
    %8186 = vmatpush.bf16.xpose.msra.mxu0 %v6004
    %8187 = vmatpush.bf16.xpose.msra.mxu0 %v6003
    %8188 = vmatpush.bf16.xpose.msra.mxu0 %v6002
    %8189 = vmatpush.bf16.xpose.msra.mxu0 %v6001
    %8190 = vmatpush.bf16.xpose.msra.mxu0 %v6000
    %8191 = vmatpush.bf16.xpose.msra.mxu0 %v5999
    %8192 = vmatmul.bf16.gmra.mxu0 %v7311
    %v8193 = vpop.f32.mrf.mxu0
    %v8194 = vadd.f32 %v8145, %v8193
    %v8195 = vpop.f32.mrf.mxu0
    %v8196 = vadd.f32 %v8147, %v8195
    %8197 = vmatmul.bf16.gmra.mxu0 %v7320
    %v8198 = vpop.f32.mrf.mxu0
    %v8199 = vadd.f32 %v8150, %v8198
    %v8200 = vpop.f32.mrf.mxu0
    %v8201 = vadd.f32 %v8152, %v8200
    %8202 = vmatmul.bf16.gmra.mxu0 %v7329
    %v8203 = vpop.f32.mrf.mxu0
    %v8204 = vadd.f32 %v8155, %v8203
    %v8205 = vpop.f32.mrf.mxu0
    %v8206 = vadd.f32 %v8157, %v8205
    %8207 = vmatmul.bf16.gmra.mxu0 %v7338
    %v8208 = vpop.f32.mrf.mxu0
    %v8209 = vadd.f32 %v8160, %v8208
    %v8210 = vpop.f32.mrf.mxu0
    %v8211 = vadd.f32 %v8162, %v8210
    %8212 = vmatmul.bf16.gmra.mxu0 %v7347
    %v8213 = vpop.f32.mrf.mxu0
    %v8214 = vadd.f32 %v8165, %v8213
    %v8215 = vpop.f32.mrf.mxu0
    %v8216 = vadd.f32 %v8167, %v8215
    %8217 = vmatmul.bf16.gmra.mxu0 %v7356
    %v8218 = vpop.f32.mrf.mxu0
    %v8219 = vadd.f32 %v8170, %v8218
    %v8220 = vpop.f32.mrf.mxu0
    %v8221 = vadd.f32 %v8172, %v8220
    %8222 = vmatmul.bf16.gmra.mxu0 %v7365
    %v8223 = vpop.f32.mrf.mxu0
    %v8224 = vadd.f32 %v8175, %v8223
    %v8225 = vpop.f32.mrf.mxu0
    %v8226 = vadd.f32 %v8177, %v8225
    %8227 = vmatmul.bf16.gmra.mxu0 %v7374
    %v8228 = vpop.f32.mrf.mxu0
    %v8229 = vadd.f32 %v8180, %v8228
    %v8230 = vpop.f32.mrf.mxu0
    %v8231 = vadd.f32 %v8182, %v8230
    %8232 = vdwg.mxu0
    %8233 = vmatpush.bf16.xpose.msra.mxu0 %v6876
    %8234 = vmatpush.bf16.xpose.msra.mxu0 %v6818
    %8235 = vmatpush.bf16.xpose.msra.mxu0 %v6340
    %8236 = vmatpush.bf16.xpose.msra.mxu0 %v6328
    %8237 = vmatpush.bf16.xpose.msra.mxu0 %v6316
    %8238 = vmatpush.bf16.xpose.msra.mxu0 %v6304
    %8239 = vmatpush.bf16.xpose.msra.mxu0 %v6292
    %8240 = vmatpush.bf16.xpose.msra.mxu0 %v6280
    %8241 = vmatmul.bf16.gmra.mxu0 %v7312
    %v8242 = vpop.f32.mrf.mxu0
    %v8243 = vadd.f32 %v8194, %v8242
    %v8244 = vpop.f32.mrf.mxu0
    %v8245 = vadd.f32 %v8196, %v8244
    %8246 = vmatmul.bf16.gmra.mxu0 %v7321
    %v8247 = vpop.f32.mrf.mxu0
    %v8248 = vadd.f32 %v8199, %v8247
    %v8249 = vpop.f32.mrf.mxu0
    %v8250 = vadd.f32 %v8201, %v8249
    %8251 = vmatmul.bf16.gmra.mxu0 %v7330
    %v8252 = vpop.f32.mrf.mxu0
    %v8253 = vadd.f32 %v8204, %v8252
    %v8254 = vpop.f32.mrf.mxu0
    %v8255 = vadd.f32 %v8206, %v8254
    %8256 = vmatmul.bf16.gmra.mxu0 %v7339
    %v8257 = vpop.f32.mrf.mxu0
    %v8258 = vadd.f32 %v8209, %v8257
    %v8259 = vpop.f32.mrf.mxu0
    %v8260 = vadd.f32 %v8211, %v8259
    %8261 = vmatmul.bf16.gmra.mxu0 %v7348
    %v8262 = vpop.f32.mrf.mxu0
    %v8263 = vadd.f32 %v8214, %v8262
    %v8264 = vpop.f32.mrf.mxu0
    %v8265 = vadd.f32 %v8216, %v8264
    %8266 = vmatmul.bf16.gmra.mxu0 %v7357
    %v8267 = vpop.f32.mrf.mxu0
    %v8268 = vadd.f32 %v8219, %v8267
    %v8269 = vpop.f32.mrf.mxu0
    %v8270 = vadd.f32 %v8221, %v8269
    %8271 = vmatmul.bf16.gmra.mxu0 %v7366
    %v8272 = vpop.f32.mrf.mxu0
    %v8273 = vadd.f32 %v8224, %v8272
    %v8274 = vpop.f32.mrf.mxu0
    %v8275 = vadd.f32 %v8226, %v8274
    %8276 = vmatmul.bf16.gmra.mxu0 %v7375
    %v8277 = vpop.f32.mrf.mxu0
    %v8278 = vadd.f32 %v8229, %v8277
    %v8279 = vpop.f32.mrf.mxu0
    %v8280 = vadd.f32 %v8231, %v8279
    %8281 = vdwg.mxu0
    %8282 = vmatpush.bf16.xpose.msra.mxu0 %v6899
    %8283 = vmatpush.bf16.xpose.msra.mxu0 %v6841
    %8284 = vmatpush.bf16.xpose.msra.mxu0 %v6708
    %8285 = vmatpush.bf16.xpose.msra.mxu0 %v6705
    %8286 = vmatpush.bf16.xpose.msra.mxu0 %v6702
    %8287 = vmatpush.bf16.xpose.msra.mxu0 %v6699
    %8288 = vmatpush.bf16.xpose.msra.mxu0 %v6696
    %8289 = vmatpush.bf16.xpose.msra.mxu0 %v6693
    %8290 = vmatmul.bf16.gmra.mxu0 %v7313
    %v8291 = vpop.f32.mrf.mxu0
    %v8292 = vadd.f32 %v8243, %v8291
    %v8293 = vpop.f32.mrf.mxu0
    %v8294 = vadd.f32 %v8245, %v8293
    %8295 = vmatmul.bf16.gmra.mxu0 %v7322
    %v8296 = vpop.f32.mrf.mxu0
    %v8297 = vadd.f32 %v8248, %v8296
    %v8298 = vpop.f32.mrf.mxu0
    %v8299 = vadd.f32 %v8250, %v8298
    %8300 = vmatmul.bf16.gmra.mxu0 %v7331
    %v8301 = vpop.f32.mrf.mxu0
    %v8302 = vadd.f32 %v8253, %v8301
    %v8303 = vpop.f32.mrf.mxu0
    %v8304 = vadd.f32 %v8255, %v8303
    %8305 = vmatmul.bf16.gmra.mxu0 %v7340
    %v8306 = vpop.f32.mrf.mxu0
    %v8307 = vadd.f32 %v8258, %v8306
    %v8308 = vpop.f32.mrf.mxu0
    %v8309 = vadd.f32 %v8260, %v8308
    %8310 = vmatmul.bf16.gmra.mxu0 %v7349
    %v8311 = vpop.f32.mrf.mxu0
    %v8312 = vadd.f32 %v8263, %v8311
    %v8313 = vpop.f32.mrf.mxu0
    %v8314 = vadd.f32 %v8265, %v8313
    %8315 = vmatmul.bf16.gmra.mxu0 %v7358
    %v8316 = vpop.f32.mrf.mxu0
    %v8317 = vadd.f32 %v8268, %v8316
    %v8318 = vpop.f32.mrf.mxu0
    %v8319 = vadd.f32 %v8270, %v8318
    %8320 = vmatmul.bf16.gmra.mxu0 %v7367
    %v8321 = vpop.f32.mrf.mxu0
    %v8322 = vadd.f32 %v8273, %v8321
    %v8323 = vpop.f32.mrf.mxu0
    %v8324 = vadd.f32 %v8275, %v8323
    %8325 = vmatmul.bf16.gmra.mxu0 %v7376
    %v8326 = vpop.f32.mrf.mxu0
    %v8327 = vadd.f32 %v8278, %v8326
    %v8328 = vpop.f32.mrf.mxu0
    %v8329 = vadd.f32 %v8280, %v8328
    %8330 = vdwg.mxu0
    %8331 = vmatpush.bf16.xpose.msra.mxu0 %v6012
    %8332 = vmatpush.bf16.xpose.msra.mxu0 %v6011
    %8333 = vmatpush.bf16.xpose.msra.mxu0 %v6010
    %8334 = vmatpush.bf16.xpose.msra.mxu0 %v6009
    %8335 = vmatpush.bf16.xpose.msra.mxu0 %v6008
    %8336 = vmatpush.bf16.xpose.msra.mxu0 %v6007
    %8337 = vmatpush.bf16.xpose.msra.mxu0 %v6006
    %8338 = vmatpush.bf16.xpose.msra.mxu0 %v6005
    %8339 = vmatmul.bf16.gmra.mxu0 %v7305
    %v8340 = vpop.f32.mrf.mxu0
    %v8341 = vadd.f32 %v7004, %v8340
    %v8342 = vpop.f32.mrf.mxu0
    %v8343 = vadd.f32 %v7009, %v8342
    %8344 = vmatmul.bf16.gmra.mxu0 %v7314
    %v8345 = vpop.f32.mrf.mxu0
    %v8346 = vadd.f32 %v7014, %v8345
    %v8347 = vpop.f32.mrf.mxu0
    %v8348 = vadd.f32 %v7019, %v8347
    %8349 = vmatmul.bf16.gmra.mxu0 %v7323
    %v8350 = vpop.f32.mrf.mxu0
    %v8351 = vadd.f32 %v7024, %v8350
    %v8352 = vpop.f32.mrf.mxu0
    %v8353 = vadd.f32 %v7029, %v8352
    %8354 = vmatmul.bf16.gmra.mxu0 %v7332
    %v8355 = vpop.f32.mrf.mxu0
    %v8356 = vadd.f32 %v7034, %v8355
    %v8357 = vpop.f32.mrf.mxu0
    %v8358 = vadd.f32 %v7039, %v8357
    %8359 = vmatmul.bf16.gmra.mxu0 %v7341
    %v8360 = vpop.f32.mrf.mxu0
    %v8361 = vadd.f32 %v7044, %v8360
    %v8362 = vpop.f32.mrf.mxu0
    %v8363 = vadd.f32 %v7049, %v8362
    %8364 = vmatmul.bf16.gmra.mxu0 %v7350
    %v8365 = vpop.f32.mrf.mxu0
    %v8366 = vadd.f32 %v7054, %v8365
    %v8367 = vpop.f32.mrf.mxu0
    %v8368 = vadd.f32 %v7059, %v8367
    %8369 = vmatmul.bf16.gmra.mxu0 %v7359
    %v8370 = vpop.f32.mrf.mxu0
    %v8371 = vadd.f32 %v7064, %v8370
    %v8372 = vpop.f32.mrf.mxu0
    %v8373 = vadd.f32 %v7069, %v8372
    %8374 = vmatmul.bf16.gmra.mxu0 %v7368
    %v8375 = vpop.f32.mrf.mxu0
    %v8376 = vadd.f32 %v7074, %v8375
    %v8377 = vpop.f32.mrf.mxu0
    %v8378 = vadd.f32 %v7079, %v8377
    %8379 = vdwg.mxu0
    %8380 = vmatpush.bf16.xpose.msra.mxu0 %v6436
    %8381 = vmatpush.bf16.xpose.msra.mxu0 %v6424
    %8382 = vmatpush.bf16.xpose.msra.mxu0 %v6412
    %8383 = vmatpush.bf16.xpose.msra.mxu0 %v6400
    %8384 = vmatpush.bf16.xpose.msra.mxu0 %v6388
    %8385 = vmatpush.bf16.xpose.msra.mxu0 %v6376
    %8386 = vmatpush.bf16.xpose.msra.mxu0 %v6364
    %8387 = vmatpush.bf16.xpose.msra.mxu0 %v6352
    %8388 = vmatmul.bf16.gmra.mxu0 %v7306
    %v8389 = vpop.f32.mrf.mxu0
    %v8390 = vadd.f32 %v8341, %v8389
    %v8391 = vpop.f32.mrf.mxu0
    %v8392 = vadd.f32 %v8343, %v8391
    %8393 = vmatmul.bf16.gmra.mxu0 %v7315
    %v8394 = vpop.f32.mrf.mxu0
    %v8395 = vadd.f32 %v8346, %v8394
    %v8396 = vpop.f32.mrf.mxu0
    %v8397 = vadd.f32 %v8348, %v8396
    %8398 = vmatmul.bf16.gmra.mxu0 %v7324
    %v8399 = vpop.f32.mrf.mxu0
    %v8400 = vadd.f32 %v8351, %v8399
    %v8401 = vpop.f32.mrf.mxu0
    %v8402 = vadd.f32 %v8353, %v8401
    %8403 = vmatmul.bf16.gmra.mxu0 %v7333
    %v8404 = vpop.f32.mrf.mxu0
    %v8405 = vadd.f32 %v8356, %v8404
    %v8406 = vpop.f32.mrf.mxu0
    %v8407 = vadd.f32 %v8358, %v8406
    %8408 = vmatmul.bf16.gmra.mxu0 %v7342
    %v8409 = vpop.f32.mrf.mxu0
    %v8410 = vadd.f32 %v8361, %v8409
    %v8411 = vpop.f32.mrf.mxu0
    %v8412 = vadd.f32 %v8363, %v8411
    %8413 = vmatmul.bf16.gmra.mxu0 %v7351
    %v8414 = vpop.f32.mrf.mxu0
    %v8415 = vadd.f32 %v8366, %v8414
    %v8416 = vpop.f32.mrf.mxu0
    %v8417 = vadd.f32 %v8368, %v8416
    %8418 = vmatmul.bf16.gmra.mxu0 %v7360
    %v8419 = vpop.f32.mrf.mxu0
    %v8420 = vadd.f32 %v8371, %v8419
    %v8421 = vpop.f32.mrf.mxu0
    %v8422 = vadd.f32 %v8373, %v8421
    %8423 = vmatmul.bf16.gmra.mxu0 %v7369
    %v8424 = vpop.f32.mrf.mxu0
    %v8425 = vadd.f32 %v8376, %v8424
    %v8426 = vpop.f32.mrf.mxu0
    %v8427 = vadd.f32 %v8378, %v8426
    %8428 = vdwg.mxu0
    %8429 = vmatpush.bf16.xpose.msra.mxu0 %v6732
    %8430 = vmatpush.bf16.xpose.msra.mxu0 %v6729
    %8431 = vmatpush.bf16.xpose.msra.mxu0 %v6726
    %8432 = vmatpush.bf16.xpose.msra.mxu0 %v6723
    %8433 = vmatpush.bf16.xpose.msra.mxu0 %v6720
    %8434 = vmatpush.bf16.xpose.msra.mxu0 %v6717
    %8435 = vmatpush.bf16.xpose.msra.mxu0 %v6714
    %8436 = vmatpush.bf16.xpose.msra.mxu0 %v6711
    %8437 = vmatmul.bf16.gmra.mxu0 %v7307
    %v8438 = vpop.f32.mrf.mxu0
    %v8439 = vadd.f32 %v8390, %v8438
    %v8440 = vpop.f32.mrf.mxu0
    %v8441 = vadd.f32 %v8392, %v8440
    %8442 = vmatmul.bf16.gmra.mxu0 %v7316
    %v8443 = vpop.f32.mrf.mxu0
    %v8444 = vadd.f32 %v8395, %v8443
    %v8445 = vpop.f32.mrf.mxu0
    %v8446 = vadd.f32 %v8397, %v8445
    %8447 = vmatmul.bf16.gmra.mxu0 %v7325
    %v8448 = vpop.f32.mrf.mxu0
    %v8449 = vadd.f32 %v8400, %v8448
    %v8450 = vpop.f32.mrf.mxu0
    %v8451 = vadd.f32 %v8402, %v8450
    %8452 = vmatmul.bf16.gmra.mxu0 %v7334
    %v8453 = vpop.f32.mrf.mxu0
    %v8454 = vadd.f32 %v8405, %v8453
    %v8455 = vpop.f32.mrf.mxu0
    %v8456 = vadd.f32 %v8407, %v8455
    %8457 = vmatmul.bf16.gmra.mxu0 %v7343
    %v8458 = vpop.f32.mrf.mxu0
    %v8459 = vadd.f32 %v8410, %v8458
    %v8460 = vpop.f32.mrf.mxu0
    %v8461 = vadd.f32 %v8412, %v8460
    %8462 = vmatmul.bf16.gmra.mxu0 %v7352
    %v8463 = vpop.f32.mrf.mxu0
    %v8464 = vadd.f32 %v8415, %v8463
    %v8465 = vpop.f32.mrf.mxu0
    %v8466 = vadd.f32 %v8417, %v8465
    %8467 = vmatmul.bf16.gmra.mxu0 %v7361
    %v8468 = vpop.f32.mrf.mxu0
    %v8469 = vadd.f32 %v8420, %v8468
    %v8470 = vpop.f32.mrf.mxu0
    %v8471 = vadd.f32 %v8422, %v8470
    %8472 = vmatmul.bf16.gmra.mxu0 %v7370
    %v8473 = vpop.f32.mrf.mxu0
    %v8474 = vadd.f32 %v8425, %v8473
    %v8475 = vpop.f32.mrf.mxu0
    %v8476 = vadd.f32 %v8427, %v8475
    %8477 = vdwg.mxu0
    %8478 = vmatpush.bf16.xpose.msra.mxu0 %v6013
    %8479 = vmatpush.bf16.xpose.msra.mxu0 %v6012
    %8480 = vmatpush.bf16.xpose.msra.mxu0 %v6011
    %8481 = vmatpush.bf16.xpose.msra.mxu0 %v6010
    %8482 = vmatpush.bf16.xpose.msra.mxu0 %v6009
    %8483 = vmatpush.bf16.xpose.msra.mxu0 %v6008
    %8484 = vmatpush.bf16.xpose.msra.mxu0 %v6007
    %8485 = vmatpush.bf16.xpose.msra.mxu0 %v6006
    %8486 = vmatmul.bf16.gmra.mxu0 %v7308
    %v8487 = vpop.f32.mrf.mxu0
    %v8488 = vadd.f32 %v8439, %v8487
    %v8489 = vpop.f32.mrf.mxu0
    %v8490 = vadd.f32 %v8441, %v8489
    %8491 = vmatmul.bf16.gmra.mxu0 %v7317
    %v8492 = vpop.f32.mrf.mxu0
    %v8493 = vadd.f32 %v8444, %v8492
    %v8494 = vpop.f32.mrf.mxu0
    %v8495 = vadd.f32 %v8446, %v8494
    %8496 = vmatmul.bf16.gmra.mxu0 %v7326
    %v8497 = vpop.f32.mrf.mxu0
    %v8498 = vadd.f32 %v8449, %v8497
    %v8499 = vpop.f32.mrf.mxu0
    %v8500 = vadd.f32 %v8451, %v8499
    %8501 = vmatmul.bf16.gmra.mxu0 %v7335
    %v8502 = vpop.f32.mrf.mxu0
    %v8503 = vadd.f32 %v8454, %v8502
    %v8504 = vpop.f32.mrf.mxu0
    %v8505 = vadd.f32 %v8456, %v8504
    %8506 = vmatmul.bf16.gmra.mxu0 %v7344
    %v8507 = vpop.f32.mrf.mxu0
    %v8508 = vadd.f32 %v8459, %v8507
    %v8509 = vpop.f32.mrf.mxu0
    %v8510 = vadd.f32 %v8461, %v8509
    %8511 = vmatmul.bf16.gmra.mxu0 %v7353
    %v8512 = vpop.f32.mrf.mxu0
    %v8513 = vadd.f32 %v8464, %v8512
    %v8514 = vpop.f32.mrf.mxu0
    %v8515 = vadd.f32 %v8466, %v8514
    %8516 = vmatmul.bf16.gmra.mxu0 %v7362
    %v8517 = vpop.f32.mrf.mxu0
    %v8518 = vadd.f32 %v8469, %v8517
    %v8519 = vpop.f32.mrf.mxu0
    %v8520 = vadd.f32 %v8471, %v8519
    %8521 = vmatmul.bf16.gmra.mxu0 %v7371
    %v8522 = vpop.f32.mrf.mxu0
    %v8523 = vadd.f32 %v8474, %v8522
    %v8524 = vpop.f32.mrf.mxu0
    %v8525 = vadd.f32 %v8476, %v8524
    %8526 = vdwg.mxu0
    %8527 = vmatpush.bf16.xpose.msra.mxu0 %v6448
    %8528 = vmatpush.bf16.xpose.msra.mxu0 %v6436
    %8529 = vmatpush.bf16.xpose.msra.mxu0 %v6424
    %8530 = vmatpush.bf16.xpose.msra.mxu0 %v6412
    %8531 = vmatpush.bf16.xpose.msra.mxu0 %v6400
    %8532 = vmatpush.bf16.xpose.msra.mxu0 %v6388
    %8533 = vmatpush.bf16.xpose.msra.mxu0 %v6376
    %8534 = vmatpush.bf16.xpose.msra.mxu0 %v6364
    %8535 = vmatmul.bf16.gmra.mxu0 %v7309
    %v8536 = vpop.f32.mrf.mxu0
    %v8537 = vadd.f32 %v8488, %v8536
    %v8538 = vpop.f32.mrf.mxu0
    %v8539 = vadd.f32 %v8490, %v8538
    %8540 = vmatmul.bf16.gmra.mxu0 %v7318
    %v8541 = vpop.f32.mrf.mxu0
    %v8542 = vadd.f32 %v8493, %v8541
    %v8543 = vpop.f32.mrf.mxu0
    %v8544 = vadd.f32 %v8495, %v8543
    %8545 = vmatmul.bf16.gmra.mxu0 %v7327
    %v8546 = vpop.f32.mrf.mxu0
    %v8547 = vadd.f32 %v8498, %v8546
    %v8548 = vpop.f32.mrf.mxu0
    %v8549 = vadd.f32 %v8500, %v8548
    %8550 = vmatmul.bf16.gmra.mxu0 %v7336
    %v8551 = vpop.f32.mrf.mxu0
    %v8552 = vadd.f32 %v8503, %v8551
    %v8553 = vpop.f32.mrf.mxu0
    %v8554 = vadd.f32 %v8505, %v8553
    %8555 = vmatmul.bf16.gmra.mxu0 %v7345
    %v8556 = vpop.f32.mrf.mxu0
    %v8557 = vadd.f32 %v8508, %v8556
    %v8558 = vpop.f32.mrf.mxu0
    %v8559 = vadd.f32 %v8510, %v8558
    %8560 = vmatmul.bf16.gmra.mxu0 %v7354
    %v8561 = vpop.f32.mrf.mxu0
    %v8562 = vadd.f32 %v8513, %v8561
    %v8563 = vpop.f32.mrf.mxu0
    %v8564 = vadd.f32 %v8515, %v8563
    %8565 = vmatmul.bf16.gmra.mxu0 %v7363
    %v8566 = vpop.f32.mrf.mxu0
    %v8567 = vadd.f32 %v8518, %v8566
    %v8568 = vpop.f32.mrf.mxu0
    %v8569 = vadd.f32 %v8520, %v8568
    %8570 = vmatmul.bf16.gmra.mxu0 %v7372
    %v8571 = vpop.f32.mrf.mxu0
    %v8572 = vadd.f32 %v8523, %v8571
    %v8573 = vpop.f32.mrf.mxu0
    %v8574 = vadd.f32 %v8525, %v8573
    %8575 = vdwg.mxu0
    %8576 = vmatpush.bf16.xpose.msra.mxu0 %v6735
    %8577 = vmatpush.bf16.xpose.msra.mxu0 %v6732
    %8578 = vmatpush.bf16.xpose.msra.mxu0 %v6729
    %8579 = vmatpush.bf16.xpose.msra.mxu0 %v6726
    %8580 = vmatpush.bf16.xpose.msra.mxu0 %v6723
    %8581 = vmatpush.bf16.xpose.msra.mxu0 %v6720
    %8582 = vmatpush.bf16.xpose.msra.mxu0 %v6717
    %8583 = vmatpush.bf16.xpose.msra.mxu0 %v6714
    %8584 = vmatmul.bf16.gmra.mxu0 %v7310
    %v8585 = vpop.f32.mrf.mxu0
    %v8586 = vadd.f32 %v8537, %v8585
    %v8587 = vpop.f32.mrf.mxu0
    %v8588 = vadd.f32 %v8539, %v8587
    %8589 = vmatmul.bf16.gmra.mxu0 %v7319
    %v8590 = vpop.f32.mrf.mxu0
    %v8591 = vadd.f32 %v8542, %v8590
    %v8592 = vpop.f32.mrf.mxu0
    %v8593 = vadd.f32 %v8544, %v8592
    %8594 = vmatmul.bf16.gmra.mxu0 %v7328
    %v8595 = vpop.f32.mrf.mxu0
    %v8596 = vadd.f32 %v8547, %v8595
    %v8597 = vpop.f32.mrf.mxu0
    %v8598 = vadd.f32 %v8549, %v8597
    %8599 = vmatmul.bf16.gmra.mxu0 %v7337
    %v8600 = vpop.f32.mrf.mxu0
    %v8601 = vadd.f32 %v8552, %v8600
    %v8602 = vpop.f32.mrf.mxu0
    %v8603 = vadd.f32 %v8554, %v8602
    %8604 = vmatmul.bf16.gmra.mxu0 %v7346
    %v8605 = vpop.f32.mrf.mxu0
    %v8606 = vadd.f32 %v8557, %v8605
    %v8607 = vpop.f32.mrf.mxu0
    %v8608 = vadd.f32 %v8559, %v8607
    %8609 = vmatmul.bf16.gmra.mxu0 %v7355
    %v8610 = vpop.f32.mrf.mxu0
    %v8611 = vadd.f32 %v8562, %v8610
    %v8612 = vpop.f32.mrf.mxu0
    %v8613 = vadd.f32 %v8564, %v8612
    %8614 = vmatmul.bf16.gmra.mxu0 %v7364
    %v8615 = vpop.f32.mrf.mxu0
    %v8616 = vadd.f32 %v8567, %v8615
    %v8617 = vpop.f32.mrf.mxu0
    %v8618 = vadd.f32 %v8569, %v8617
    %8619 = vmatmul.bf16.gmra.mxu0 %v7373
    %v8620 = vpop.f32.mrf.mxu0
    %v8621 = vadd.f32 %v8572, %v8620
    %v8622 = vpop.f32.mrf.mxu0
    %v8623 = vadd.f32 %v8574, %v8622
    %8624 = vdwg.mxu0
    %8625 = vmatpush.bf16.xpose.msra.mxu0 %v6014
    %8626 = vmatpush.bf16.xpose.msra.mxu0 %v6013
    %8627 = vmatpush.bf16.xpose.msra.mxu0 %v6012
    %8628 = vmatpush.bf16.xpose.msra.mxu0 %v6011
    %8629 = vmatpush.bf16.xpose.msra.mxu0 %v6010
    %8630 = vmatpush.bf16.xpose.msra.mxu0 %v6009
    %8631 = vmatpush.bf16.xpose.msra.mxu0 %v6008
    %8632 = vmatpush.bf16.xpose.msra.mxu0 %v6007
    %8633 = vmatmul.bf16.gmra.mxu0 %v7311
    %v8634 = vpop.f32.mrf.mxu0
    %v8635 = vadd.f32 %v8586, %v8634
    %v8636 = vpop.f32.mrf.mxu0
    %v8637 = vadd.f32 %v8588, %v8636
    %8638 = vmatmul.bf16.gmra.mxu0 %v7320
    %v8639 = vpop.f32.mrf.mxu0
    %v8640 = vadd.f32 %v8591, %v8639
    %v8641 = vpop.f32.mrf.mxu0
    %v8642 = vadd.f32 %v8593, %v8641
    %8643 = vmatmul.bf16.gmra.mxu0 %v7329
    %v8644 = vpop.f32.mrf.mxu0
    %v8645 = vadd.f32 %v8596, %v8644
    %v8646 = vpop.f32.mrf.mxu0
    %v8647 = vadd.f32 %v8598, %v8646
    %8648 = vmatmul.bf16.gmra.mxu0 %v7338
    %v8649 = vpop.f32.mrf.mxu0
    %v8650 = vadd.f32 %v8601, %v8649
    %v8651 = vpop.f32.mrf.mxu0
    %v8652 = vadd.f32 %v8603, %v8651
    %8653 = vmatmul.bf16.gmra.mxu0 %v7347
    %v8654 = vpop.f32.mrf.mxu0
    %v8655 = vadd.f32 %v8606, %v8654
    %v8656 = vpop.f32.mrf.mxu0
    %v8657 = vadd.f32 %v8608, %v8656
    %8658 = vmatmul.bf16.gmra.mxu0 %v7356
    %v8659 = vpop.f32.mrf.mxu0
    %v8660 = vadd.f32 %v8611, %v8659
    %v8661 = vpop.f32.mrf.mxu0
    %v8662 = vadd.f32 %v8613, %v8661
    %8663 = vmatmul.bf16.gmra.mxu0 %v7365
    %v8664 = vpop.f32.mrf.mxu0
    %v8665 = vadd.f32 %v8616, %v8664
    %v8666 = vpop.f32.mrf.mxu0
    %v8667 = vadd.f32 %v8618, %v8666
    %8668 = vmatmul.bf16.gmra.mxu0 %v7374
    %v8669 = vpop.f32.mrf.mxu0
    %v8670 = vadd.f32 %v8621, %v8669
    %v8671 = vpop.f32.mrf.mxu0
    %v8672 = vadd.f32 %v8623, %v8671
    %8673 = vdwg.mxu0
    %8674 = vmatpush.bf16.xpose.msra.mxu0 %v6460
    %8675 = vmatpush.bf16.xpose.msra.mxu0 %v6448
    %8676 = vmatpush.bf16.xpose.msra.mxu0 %v6436
    %8677 = vmatpush.bf16.xpose.msra.mxu0 %v6424
    %8678 = vmatpush.bf16.xpose.msra.mxu0 %v6412
    %8679 = vmatpush.bf16.xpose.msra.mxu0 %v6400
    %8680 = vmatpush.bf16.xpose.msra.mxu0 %v6388
    %8681 = vmatpush.bf16.xpose.msra.mxu0 %v6376
    %8682 = vmatmul.bf16.gmra.mxu0 %v7312
    %v8683 = vpop.f32.mrf.mxu0
    %v8684 = vadd.f32 %v8635, %v8683
    %v8685 = vpop.f32.mrf.mxu0
    %v8686 = vadd.f32 %v8637, %v8685
    %8687 = vmatmul.bf16.gmra.mxu0 %v7321
    %v8688 = vpop.f32.mrf.mxu0
    %v8689 = vadd.f32 %v8640, %v8688
    %v8690 = vpop.f32.mrf.mxu0
    %v8691 = vadd.f32 %v8642, %v8690
    %8692 = vmatmul.bf16.gmra.mxu0 %v7330
    %v8693 = vpop.f32.mrf.mxu0
    %v8694 = vadd.f32 %v8645, %v8693
    %v8695 = vpop.f32.mrf.mxu0
    %v8696 = vadd.f32 %v8647, %v8695
    %8697 = vmatmul.bf16.gmra.mxu0 %v7339
    %v8698 = vpop.f32.mrf.mxu0
    %v8699 = vadd.f32 %v8650, %v8698
    %v8700 = vpop.f32.mrf.mxu0
    %v8701 = vadd.f32 %v8652, %v8700
    %8702 = vmatmul.bf16.gmra.mxu0 %v7348
    %v8703 = vpop.f32.mrf.mxu0
    %v8704 = vadd.f32 %v8655, %v8703
    %v8705 = vpop.f32.mrf.mxu0
    %v8706 = vadd.f32 %v8657, %v8705
    %8707 = vmatmul.bf16.gmra.mxu0 %v7357
    %v8708 = vpop.f32.mrf.mxu0
    %v8709 = vadd.f32 %v8660, %v8708
    %v8710 = vpop.f32.mrf.mxu0
    %v8711 = vadd.f32 %v8662, %v8710
    %8712 = vmatmul.bf16.gmra.mxu0 %v7366
    %v8713 = vpop.f32.mrf.mxu0
    %v8714 = vadd.f32 %v8665, %v8713
    %v8715 = vpop.f32.mrf.mxu0
    %v8716 = vadd.f32 %v8667, %v8715
    %8717 = vmatmul.bf16.gmra.mxu0 %v7375
    %v8718 = vpop.f32.mrf.mxu0
    %v8719 = vadd.f32 %v8670, %v8718
    %v8720 = vpop.f32.mrf.mxu0
    %v8721 = vadd.f32 %v8672, %v8720
    %8722 = vdwg.mxu0
    %8723 = vmatpush.bf16.xpose.msra.mxu0 %v6738
    %8724 = vmatpush.bf16.xpose.msra.mxu0 %v6735
    %8725 = vmatpush.bf16.xpose.msra.mxu0 %v6732
    %8726 = vmatpush.bf16.xpose.msra.mxu0 %v6729
    %8727 = vmatpush.bf16.xpose.msra.mxu0 %v6726
    %8728 = vmatpush.bf16.xpose.msra.mxu0 %v6723
    %8729 = vmatpush.bf16.xpose.msra.mxu0 %v6720
    %8730 = vmatpush.bf16.xpose.msra.mxu0 %v6717
    %8731 = vmatmul.bf16.gmra.mxu0 %v7313
    %v8732 = vpop.f32.mrf.mxu0
    %v8733 = vadd.f32 %v8684, %v8732
    %v8734 = vpop.f32.mrf.mxu0
    %v8735 = vadd.f32 %v8686, %v8734
    %8736 = vmatmul.bf16.gmra.mxu0 %v7322
    %v8737 = vpop.f32.mrf.mxu0
    %v8738 = vadd.f32 %v8689, %v8737
    %v8739 = vpop.f32.mrf.mxu0
    %v8740 = vadd.f32 %v8691, %v8739
    %8741 = vmatmul.bf16.gmra.mxu0 %v7331
    %v8742 = vpop.f32.mrf.mxu0
    %v8743 = vadd.f32 %v8694, %v8742
    %v8744 = vpop.f32.mrf.mxu0
    %v8745 = vadd.f32 %v8696, %v8744
    %8746 = vmatmul.bf16.gmra.mxu0 %v7340
    %v8747 = vpop.f32.mrf.mxu0
    %v8748 = vadd.f32 %v8699, %v8747
    %v8749 = vpop.f32.mrf.mxu0
    %v8750 = vadd.f32 %v8701, %v8749
    %8751 = vmatmul.bf16.gmra.mxu0 %v7349
    %v8752 = vpop.f32.mrf.mxu0
    %v8753 = vadd.f32 %v8704, %v8752
    %v8754 = vpop.f32.mrf.mxu0
    %v8755 = vadd.f32 %v8706, %v8754
    %8756 = vmatmul.bf16.gmra.mxu0 %v7358
    %v8757 = vpop.f32.mrf.mxu0
    %v8758 = vadd.f32 %v8709, %v8757
    %v8759 = vpop.f32.mrf.mxu0
    %v8760 = vadd.f32 %v8711, %v8759
    %8761 = vmatmul.bf16.gmra.mxu0 %v7367
    %v8762 = vpop.f32.mrf.mxu0
    %v8763 = vadd.f32 %v8714, %v8762
    %v8764 = vpop.f32.mrf.mxu0
    %v8765 = vadd.f32 %v8716, %v8764
    %8766 = vmatmul.bf16.gmra.mxu0 %v7376
    %v8767 = vpop.f32.mrf.mxu0
    %v8768 = vadd.f32 %v8719, %v8767
    %v8769 = vpop.f32.mrf.mxu0
    %v8770 = vadd.f32 %v8721, %v8769
    %8771 = vdwg.mxu0
    %8772 = vmatpush.bf16.xpose.msra.mxu0 %v6020
    %8773 = vmatpush.bf16.xpose.msra.mxu0 %v6019
    %8774 = vmatpush.bf16.xpose.msra.mxu0 %v6018
    %8775 = vmatpush.bf16.xpose.msra.mxu0 %v6017
    %8776 = vmatpush.bf16.xpose.msra.mxu0 %v6016
    %8777 = vmatpush.bf16.xpose.msra.mxu0 %v6015
    %8778 = vmatpush.bf16.xpose.msra.mxu0 %v6014
    %8779 = vmatpush.bf16.xpose.msra.mxu0 %v6013
    %8780 = vmatmul.bf16.gmra.mxu0 %v7305
    %v8781 = vpop.f32.mrf.mxu0
    %v8782 = vadd.f32 %v7004, %v8781
    %v8783 = vpop.f32.mrf.mxu0
    %v8784 = vadd.f32 %v7009, %v8783
    %8785 = vmatmul.bf16.gmra.mxu0 %v7314
    %v8786 = vpop.f32.mrf.mxu0
    %v8787 = vadd.f32 %v7014, %v8786
    %v8788 = vpop.f32.mrf.mxu0
    %v8789 = vadd.f32 %v7019, %v8788
    %8790 = vmatmul.bf16.gmra.mxu0 %v7323
    %v8791 = vpop.f32.mrf.mxu0
    %v8792 = vadd.f32 %v7024, %v8791
    %v8793 = vpop.f32.mrf.mxu0
    %v8794 = vadd.f32 %v7029, %v8793
    %8795 = vmatmul.bf16.gmra.mxu0 %v7332
    %v8796 = vpop.f32.mrf.mxu0
    %v8797 = vadd.f32 %v7034, %v8796
    %v8798 = vpop.f32.mrf.mxu0
    %v8799 = vadd.f32 %v7039, %v8798
    %8800 = vmatmul.bf16.gmra.mxu0 %v7341
    %v8801 = vpop.f32.mrf.mxu0
    %v8802 = vadd.f32 %v7044, %v8801
    %v8803 = vpop.f32.mrf.mxu0
    %v8804 = vadd.f32 %v7049, %v8803
    %8805 = vmatmul.bf16.gmra.mxu0 %v7350
    %v8806 = vpop.f32.mrf.mxu0
    %v8807 = vadd.f32 %v7054, %v8806
    %v8808 = vpop.f32.mrf.mxu0
    %v8809 = vadd.f32 %v7059, %v8808
    %8810 = vmatmul.bf16.gmra.mxu0 %v7359
    %v8811 = vpop.f32.mrf.mxu0
    %v8812 = vadd.f32 %v7064, %v8811
    %v8813 = vpop.f32.mrf.mxu0
    %v8814 = vadd.f32 %v7069, %v8813
    %8815 = vmatmul.bf16.gmra.mxu0 %v7368
    %v8816 = vpop.f32.mrf.mxu0
    %v8817 = vadd.f32 %v7074, %v8816
    %v8818 = vpop.f32.mrf.mxu0
    %v8819 = vadd.f32 %v7079, %v8818
    %8820 = vdwg.mxu0
    %8821 = vmatpush.bf16.xpose.msra.mxu0 %v6532
    %8822 = vmatpush.bf16.xpose.msra.mxu0 %v6520
    %8823 = vmatpush.bf16.xpose.msra.mxu0 %v6508
    %8824 = vmatpush.bf16.xpose.msra.mxu0 %v6496
    %8825 = vmatpush.bf16.xpose.msra.mxu0 %v6484
    %8826 = vmatpush.bf16.xpose.msra.mxu0 %v6472
    %8827 = vmatpush.bf16.xpose.msra.mxu0 %v6460
    %8828 = vmatpush.bf16.xpose.msra.mxu0 %v6448
    %8829 = vmatmul.bf16.gmra.mxu0 %v7306
    %v8830 = vpop.f32.mrf.mxu0
    %v8831 = vadd.f32 %v8782, %v8830
    %v8832 = vpop.f32.mrf.mxu0
    %v8833 = vadd.f32 %v8784, %v8832
    %8834 = vmatmul.bf16.gmra.mxu0 %v7315
    %v8835 = vpop.f32.mrf.mxu0
    %v8836 = vadd.f32 %v8787, %v8835
    %v8837 = vpop.f32.mrf.mxu0
    %v8838 = vadd.f32 %v8789, %v8837
    %8839 = vmatmul.bf16.gmra.mxu0 %v7324
    %v8840 = vpop.f32.mrf.mxu0
    %v8841 = vadd.f32 %v8792, %v8840
    %v8842 = vpop.f32.mrf.mxu0
    %v8843 = vadd.f32 %v8794, %v8842
    %8844 = vmatmul.bf16.gmra.mxu0 %v7333
    %v8845 = vpop.f32.mrf.mxu0
    %v8846 = vadd.f32 %v8797, %v8845
    %v8847 = vpop.f32.mrf.mxu0
    %v8848 = vadd.f32 %v8799, %v8847
    %8849 = vmatmul.bf16.gmra.mxu0 %v7342
    %v8850 = vpop.f32.mrf.mxu0
    %v8851 = vadd.f32 %v8802, %v8850
    %v8852 = vpop.f32.mrf.mxu0
    %v8853 = vadd.f32 %v8804, %v8852
    %8854 = vmatmul.bf16.gmra.mxu0 %v7351
    %v8855 = vpop.f32.mrf.mxu0
    %v8856 = vadd.f32 %v8807, %v8855
    %v8857 = vpop.f32.mrf.mxu0
    %v8858 = vadd.f32 %v8809, %v8857
    %8859 = vmatmul.bf16.gmra.mxu0 %v7360
    %v8860 = vpop.f32.mrf.mxu0
    %v8861 = vadd.f32 %v8812, %v8860
    %v8862 = vpop.f32.mrf.mxu0
    %v8863 = vadd.f32 %v8814, %v8862
    %8864 = vmatmul.bf16.gmra.mxu0 %v7369
    %v8865 = vpop.f32.mrf.mxu0
    %v8866 = vadd.f32 %v8817, %v8865
    %v8867 = vpop.f32.mrf.mxu0
    %v8868 = vadd.f32 %v8819, %v8867
    %8869 = vdwg.mxu0
    %8870 = vmatpush.bf16.xpose.msra.mxu0 %v6756
    %8871 = vmatpush.bf16.xpose.msra.mxu0 %v6753
    %8872 = vmatpush.bf16.xpose.msra.mxu0 %v6750
    %8873 = vmatpush.bf16.xpose.msra.mxu0 %v6747
    %8874 = vmatpush.bf16.xpose.msra.mxu0 %v6744
    %8875 = vmatpush.bf16.xpose.msra.mxu0 %v6741
    %8876 = vmatpush.bf16.xpose.msra.mxu0 %v6738
    %8877 = vmatpush.bf16.xpose.msra.mxu0 %v6735
    %8878 = vmatmul.bf16.gmra.mxu0 %v7307
    %v8879 = vpop.f32.mrf.mxu0
    %v8880 = vadd.f32 %v8831, %v8879
    %v8881 = vpop.f32.mrf.mxu0
    %v8882 = vadd.f32 %v8833, %v8881
    %8883 = vmatmul.bf16.gmra.mxu0 %v7316
    %v8884 = vpop.f32.mrf.mxu0
    %v8885 = vadd.f32 %v8836, %v8884
    %v8886 = vpop.f32.mrf.mxu0
    %v8887 = vadd.f32 %v8838, %v8886
    %8888 = vmatmul.bf16.gmra.mxu0 %v7325
    %v8889 = vpop.f32.mrf.mxu0
    %v8890 = vadd.f32 %v8841, %v8889
    %v8891 = vpop.f32.mrf.mxu0
    %v8892 = vadd.f32 %v8843, %v8891
    %8893 = vmatmul.bf16.gmra.mxu0 %v7334
    %v8894 = vpop.f32.mrf.mxu0
    %v8895 = vadd.f32 %v8846, %v8894
    %v8896 = vpop.f32.mrf.mxu0
    %v8897 = vadd.f32 %v8848, %v8896
    %8898 = vmatmul.bf16.gmra.mxu0 %v7343
    %v8899 = vpop.f32.mrf.mxu0
    %v8900 = vadd.f32 %v8851, %v8899
    %v8901 = vpop.f32.mrf.mxu0
    %v8902 = vadd.f32 %v8853, %v8901
    %8903 = vmatmul.bf16.gmra.mxu0 %v7352
    %v8904 = vpop.f32.mrf.mxu0
    %v8905 = vadd.f32 %v8856, %v8904
    %v8906 = vpop.f32.mrf.mxu0
    %v8907 = vadd.f32 %v8858, %v8906
    %8908 = vmatmul.bf16.gmra.mxu0 %v7361
    %v8909 = vpop.f32.mrf.mxu0
    %v8910 = vadd.f32 %v8861, %v8909
    %v8911 = vpop.f32.mrf.mxu0
    %v8912 = vadd.f32 %v8863, %v8911
    %8913 = vmatmul.bf16.gmra.mxu0 %v7370
    %v8914 = vpop.f32.mrf.mxu0
    %v8915 = vadd.f32 %v8866, %v8914
    %v8916 = vpop.f32.mrf.mxu0
    %v8917 = vadd.f32 %v8868, %v8916
    %8918 = vdwg.mxu0
    %8919 = vmatpush.bf16.xpose.msra.mxu0 %v6798
    %8920 = vmatpush.bf16.xpose.msra.mxu0 %v6020
    %8921 = vmatpush.bf16.xpose.msra.mxu0 %v6019
    %8922 = vmatpush.bf16.xpose.msra.mxu0 %v6018
    %8923 = vmatpush.bf16.xpose.msra.mxu0 %v6017
    %8924 = vmatpush.bf16.xpose.msra.mxu0 %v6016
    %8925 = vmatpush.bf16.xpose.msra.mxu0 %v6015
    %8926 = vmatpush.bf16.xpose.msra.mxu0 %v6014
    %8927 = vmatmul.bf16.gmra.mxu0 %v7308
    %v8928 = vpop.f32.mrf.mxu0
    %v8929 = vadd.f32 %v8880, %v8928
    %v8930 = vpop.f32.mrf.mxu0
    %v8931 = vadd.f32 %v8882, %v8930
    %8932 = vmatmul.bf16.gmra.mxu0 %v7317
    %v8933 = vpop.f32.mrf.mxu0
    %v8934 = vadd.f32 %v8885, %v8933
    %v8935 = vpop.f32.mrf.mxu0
    %v8936 = vadd.f32 %v8887, %v8935
    %8937 = vmatmul.bf16.gmra.mxu0 %v7326
    %v8938 = vpop.f32.mrf.mxu0
    %v8939 = vadd.f32 %v8890, %v8938
    %v8940 = vpop.f32.mrf.mxu0
    %v8941 = vadd.f32 %v8892, %v8940
    %8942 = vmatmul.bf16.gmra.mxu0 %v7335
    %v8943 = vpop.f32.mrf.mxu0
    %v8944 = vadd.f32 %v8895, %v8943
    %v8945 = vpop.f32.mrf.mxu0
    %v8946 = vadd.f32 %v8897, %v8945
    %8947 = vmatmul.bf16.gmra.mxu0 %v7344
    %v8948 = vpop.f32.mrf.mxu0
    %v8949 = vadd.f32 %v8900, %v8948
    %v8950 = vpop.f32.mrf.mxu0
    %v8951 = vadd.f32 %v8902, %v8950
    %8952 = vmatmul.bf16.gmra.mxu0 %v7353
    %v8953 = vpop.f32.mrf.mxu0
    %v8954 = vadd.f32 %v8905, %v8953
    %v8955 = vpop.f32.mrf.mxu0
    %v8956 = vadd.f32 %v8907, %v8955
    %8957 = vmatmul.bf16.gmra.mxu0 %v7362
    %v8958 = vpop.f32.mrf.mxu0
    %v8959 = vadd.f32 %v8910, %v8958
    %v8960 = vpop.f32.mrf.mxu0
    %v8961 = vadd.f32 %v8912, %v8960
    %8962 = vmatmul.bf16.gmra.mxu0 %v7371
    %v8963 = vpop.f32.mrf.mxu0
    %v8964 = vadd.f32 %v8915, %v8963
    %v8965 = vpop.f32.mrf.mxu0
    %v8966 = vadd.f32 %v8917, %v8965
    %8967 = vdwg.mxu0
    %8968 = vmatpush.bf16.xpose.msra.mxu0 %v6830
    %8969 = vmatpush.bf16.xpose.msra.mxu0 %v6532
    %8970 = vmatpush.bf16.xpose.msra.mxu0 %v6520
    %8971 = vmatpush.bf16.xpose.msra.mxu0 %v6508
    %8972 = vmatpush.bf16.xpose.msra.mxu0 %v6496
    %8973 = vmatpush.bf16.xpose.msra.mxu0 %v6484
    %8974 = vmatpush.bf16.xpose.msra.mxu0 %v6472
    %8975 = vmatpush.bf16.xpose.msra.mxu0 %v6460
    %8976 = vmatmul.bf16.gmra.mxu0 %v7309
    %v8977 = vpop.f32.mrf.mxu0
    %v8978 = vadd.f32 %v8929, %v8977
    %v8979 = vpop.f32.mrf.mxu0
    %v8980 = vadd.f32 %v8931, %v8979
    %8981 = vmatmul.bf16.gmra.mxu0 %v7318
    %v8982 = vpop.f32.mrf.mxu0
    %v8983 = vadd.f32 %v8934, %v8982
    %v8984 = vpop.f32.mrf.mxu0
    %v8985 = vadd.f32 %v8936, %v8984
    %8986 = vmatmul.bf16.gmra.mxu0 %v7327
    %v8987 = vpop.f32.mrf.mxu0
    %v8988 = vadd.f32 %v8939, %v8987
    %v8989 = vpop.f32.mrf.mxu0
    %v8990 = vadd.f32 %v8941, %v8989
    %8991 = vmatmul.bf16.gmra.mxu0 %v7336
    %v8992 = vpop.f32.mrf.mxu0
    %v8993 = vadd.f32 %v8944, %v8992
    %v8994 = vpop.f32.mrf.mxu0
    %v8995 = vadd.f32 %v8946, %v8994
    %8996 = vmatmul.bf16.gmra.mxu0 %v7345
    %v8997 = vpop.f32.mrf.mxu0
    %v8998 = vadd.f32 %v8949, %v8997
    %v8999 = vpop.f32.mrf.mxu0
    %v9000 = vadd.f32 %v8951, %v8999
    %9001 = vmatmul.bf16.gmra.mxu0 %v7354
    %v9002 = vpop.f32.mrf.mxu0
    %v9003 = vadd.f32 %v8954, %v9002
    %v9004 = vpop.f32.mrf.mxu0
    %v9005 = vadd.f32 %v8956, %v9004
    %9006 = vmatmul.bf16.gmra.mxu0 %v7363
    %v9007 = vpop.f32.mrf.mxu0
    %v9008 = vadd.f32 %v8959, %v9007
    %v9009 = vpop.f32.mrf.mxu0
    %v9010 = vadd.f32 %v8961, %v9009
    %9011 = vmatmul.bf16.gmra.mxu0 %v7372
    %v9012 = vpop.f32.mrf.mxu0
    %v9013 = vadd.f32 %v8964, %v9012
    %v9014 = vpop.f32.mrf.mxu0
    %v9015 = vadd.f32 %v8966, %v9014
    %9016 = vdwg.mxu0
    %9017 = vmatpush.bf16.xpose.msra.mxu0 %v6844
    %9018 = vmatpush.bf16.xpose.msra.mxu0 %v6756
    %9019 = vmatpush.bf16.xpose.msra.mxu0 %v6753
    %9020 = vmatpush.bf16.xpose.msra.mxu0 %v6750
    %9021 = vmatpush.bf16.xpose.msra.mxu0 %v6747
    %9022 = vmatpush.bf16.xpose.msra.mxu0 %v6744
    %9023 = vmatpush.bf16.xpose.msra.mxu0 %v6741
    %9024 = vmatpush.bf16.xpose.msra.mxu0 %v6738
    %9025 = vmatmul.bf16.gmra.mxu0 %v7310
    %v9026 = vpop.f32.mrf.mxu0
    %v9027 = vadd.f32 %v8978, %v9026
    %v9028 = vpop.f32.mrf.mxu0
    %v9029 = vadd.f32 %v8980, %v9028
    %9030 = vmatmul.bf16.gmra.mxu0 %v7319
    %v9031 = vpop.f32.mrf.mxu0
    %v9032 = vadd.f32 %v8983, %v9031
    %v9033 = vpop.f32.mrf.mxu0
    %v9034 = vadd.f32 %v8985, %v9033
    %9035 = vmatmul.bf16.gmra.mxu0 %v7328
    %v9036 = vpop.f32.mrf.mxu0
    %v9037 = vadd.f32 %v8988, %v9036
    %v9038 = vpop.f32.mrf.mxu0
    %v9039 = vadd.f32 %v8990, %v9038
    %9040 = vmatmul.bf16.gmra.mxu0 %v7337
    %v9041 = vpop.f32.mrf.mxu0
    %v9042 = vadd.f32 %v8993, %v9041
    %v9043 = vpop.f32.mrf.mxu0
    %v9044 = vadd.f32 %v8995, %v9043
    %9045 = vmatmul.bf16.gmra.mxu0 %v7346
    %v9046 = vpop.f32.mrf.mxu0
    %v9047 = vadd.f32 %v8998, %v9046
    %v9048 = vpop.f32.mrf.mxu0
    %v9049 = vadd.f32 %v9000, %v9048
    %9050 = vmatmul.bf16.gmra.mxu0 %v7355
    %v9051 = vpop.f32.mrf.mxu0
    %v9052 = vadd.f32 %v9003, %v9051
    %v9053 = vpop.f32.mrf.mxu0
    %v9054 = vadd.f32 %v9005, %v9053
    %9055 = vmatmul.bf16.gmra.mxu0 %v7364
    %v9056 = vpop.f32.mrf.mxu0
    %v9057 = vadd.f32 %v9008, %v9056
    %v9058 = vpop.f32.mrf.mxu0
    %v9059 = vadd.f32 %v9010, %v9058
    %9060 = vmatmul.bf16.gmra.mxu0 %v7373
    %v9061 = vpop.f32.mrf.mxu0
    %v9062 = vadd.f32 %v9013, %v9061
    %v9063 = vpop.f32.mrf.mxu0
    %v9064 = vadd.f32 %v9015, %v9063
    %9065 = vdwg.mxu0
    %9066 = vmatpush.bf16.xpose.msra.mxu0 %v6856
    %9067 = vmatpush.bf16.xpose.msra.mxu0 %v6798
    %9068 = vmatpush.bf16.xpose.msra.mxu0 %v6020
    %9069 = vmatpush.bf16.xpose.msra.mxu0 %v6019
    %9070 = vmatpush.bf16.xpose.msra.mxu0 %v6018
    %9071 = vmatpush.bf16.xpose.msra.mxu0 %v6017
    %9072 = vmatpush.bf16.xpose.msra.mxu0 %v6016
    %9073 = vmatpush.bf16.xpose.msra.mxu0 %v6015
    %9074 = vmatmul.bf16.gmra.mxu0 %v7311
    %v9075 = vpop.f32.mrf.mxu0
    %v9076 = vadd.f32 %v9027, %v9075
    %v9077 = vpop.f32.mrf.mxu0
    %v9078 = vadd.f32 %v9029, %v9077
    %9079 = vmatmul.bf16.gmra.mxu0 %v7320
    %v9080 = vpop.f32.mrf.mxu0
    %v9081 = vadd.f32 %v9032, %v9080
    %v9082 = vpop.f32.mrf.mxu0
    %v9083 = vadd.f32 %v9034, %v9082
    %9084 = vmatmul.bf16.gmra.mxu0 %v7329
    %v9085 = vpop.f32.mrf.mxu0
    %v9086 = vadd.f32 %v9037, %v9085
    %v9087 = vpop.f32.mrf.mxu0
    %v9088 = vadd.f32 %v9039, %v9087
    %9089 = vmatmul.bf16.gmra.mxu0 %v7338
    %v9090 = vpop.f32.mrf.mxu0
    %v9091 = vadd.f32 %v9042, %v9090
    %v9092 = vpop.f32.mrf.mxu0
    %v9093 = vadd.f32 %v9044, %v9092
    %9094 = vmatmul.bf16.gmra.mxu0 %v7347
    %v9095 = vpop.f32.mrf.mxu0
    %v9096 = vadd.f32 %v9047, %v9095
    %v9097 = vpop.f32.mrf.mxu0
    %v9098 = vadd.f32 %v9049, %v9097
    %9099 = vmatmul.bf16.gmra.mxu0 %v7356
    %v9100 = vpop.f32.mrf.mxu0
    %v9101 = vadd.f32 %v9052, %v9100
    %v9102 = vpop.f32.mrf.mxu0
    %v9103 = vadd.f32 %v9054, %v9102
    %9104 = vmatmul.bf16.gmra.mxu0 %v7365
    %v9105 = vpop.f32.mrf.mxu0
    %v9106 = vadd.f32 %v9057, %v9105
    %v9107 = vpop.f32.mrf.mxu0
    %v9108 = vadd.f32 %v9059, %v9107
    %9109 = vmatmul.bf16.gmra.mxu0 %v7374
    %v9110 = vpop.f32.mrf.mxu0
    %v9111 = vadd.f32 %v9062, %v9110
    %v9112 = vpop.f32.mrf.mxu0
    %v9113 = vadd.f32 %v9064, %v9112
    %9114 = vdwg.mxu0
    %9115 = vmatpush.bf16.xpose.msra.mxu0 %v6888
    %9116 = vmatpush.bf16.xpose.msra.mxu0 %v6830
    %9117 = vmatpush.bf16.xpose.msra.mxu0 %v6532
    %9118 = vmatpush.bf16.xpose.msra.mxu0 %v6520
    %9119 = vmatpush.bf16.xpose.msra.mxu0 %v6508
    %9120 = vmatpush.bf16.xpose.msra.mxu0 %v6496
    %9121 = vmatpush.bf16.xpose.msra.mxu0 %v6484
    %9122 = vmatpush.bf16.xpose.msra.mxu0 %v6472
    %9123 = vmatmul.bf16.gmra.mxu0 %v7312
    %v9124 = vpop.f32.mrf.mxu0
    %v9125 = vadd.f32 %v9076, %v9124
    %v9126 = vpop.f32.mrf.mxu0
    %v9127 = vadd.f32 %v9078, %v9126
    %9128 = vmatmul.bf16.gmra.mxu0 %v7321
    %v9129 = vpop.f32.mrf.mxu0
    %v9130 = vadd.f32 %v9081, %v9129
    %v9131 = vpop.f32.mrf.mxu0
    %v9132 = vadd.f32 %v9083, %v9131
    %9133 = vmatmul.bf16.gmra.mxu0 %v7330
    %v9134 = vpop.f32.mrf.mxu0
    %v9135 = vadd.f32 %v9086, %v9134
    %v9136 = vpop.f32.mrf.mxu0
    %v9137 = vadd.f32 %v9088, %v9136
    %9138 = vmatmul.bf16.gmra.mxu0 %v7339
    %v9139 = vpop.f32.mrf.mxu0
    %v9140 = vadd.f32 %v9091, %v9139
    %v9141 = vpop.f32.mrf.mxu0
    %v9142 = vadd.f32 %v9093, %v9141
    %9143 = vmatmul.bf16.gmra.mxu0 %v7348
    %v9144 = vpop.f32.mrf.mxu0
    %v9145 = vadd.f32 %v9096, %v9144
    %v9146 = vpop.f32.mrf.mxu0
    %v9147 = vadd.f32 %v9098, %v9146
    %9148 = vmatmul.bf16.gmra.mxu0 %v7357
    %v9149 = vpop.f32.mrf.mxu0
    %v9150 = vadd.f32 %v9101, %v9149
    %v9151 = vpop.f32.mrf.mxu0
    %v9152 = vadd.f32 %v9103, %v9151
    %9153 = vmatmul.bf16.gmra.mxu0 %v7366
    %v9154 = vpop.f32.mrf.mxu0
    %v9155 = vadd.f32 %v9106, %v9154
    %v9156 = vpop.f32.mrf.mxu0
    %v9157 = vadd.f32 %v9108, %v9156
    %9158 = vmatmul.bf16.gmra.mxu0 %v7375
    %v9159 = vpop.f32.mrf.mxu0
    %v9160 = vadd.f32 %v9111, %v9159
    %v9161 = vpop.f32.mrf.mxu0
    %v9162 = vadd.f32 %v9113, %v9161
    %9163 = vdwg.mxu0
    %9164 = vmatpush.bf16.xpose.msra.mxu0 %v6902
    %9165 = vmatpush.bf16.xpose.msra.mxu0 %v6844
    %9166 = vmatpush.bf16.xpose.msra.mxu0 %v6756
    %9167 = vmatpush.bf16.xpose.msra.mxu0 %v6753
    %9168 = vmatpush.bf16.xpose.msra.mxu0 %v6750
    %9169 = vmatpush.bf16.xpose.msra.mxu0 %v6747
    %9170 = vmatpush.bf16.xpose.msra.mxu0 %v6744
    %9171 = vmatpush.bf16.xpose.msra.mxu0 %v6741
    %9172 = vmatmul.bf16.gmra.mxu0 %v7313
    %v9173 = vpop.f32.mrf.mxu0
    %v9174 = vadd.f32 %v9125, %v9173
    %v9175 = vpop.f32.mrf.mxu0
    %v9176 = vadd.f32 %v9127, %v9175
    %9177 = vmatmul.bf16.gmra.mxu0 %v7322
    %v9178 = vpop.f32.mrf.mxu0
    %v9179 = vadd.f32 %v9130, %v9178
    %v9180 = vpop.f32.mrf.mxu0
    %v9181 = vadd.f32 %v9132, %v9180
    %9182 = vmatmul.bf16.gmra.mxu0 %v7331
    %v9183 = vpop.f32.mrf.mxu0
    %v9184 = vadd.f32 %v9135, %v9183
    %v9185 = vpop.f32.mrf.mxu0
    %v9186 = vadd.f32 %v9137, %v9185
    %9187 = vmatmul.bf16.gmra.mxu0 %v7340
    %v9188 = vpop.f32.mrf.mxu0
    %v9189 = vadd.f32 %v9140, %v9188
    %v9190 = vpop.f32.mrf.mxu0
    %v9191 = vadd.f32 %v9142, %v9190
    %9192 = vmatmul.bf16.gmra.mxu0 %v7349
    %v9193 = vpop.f32.mrf.mxu0
    %v9194 = vadd.f32 %v9145, %v9193
    %v9195 = vpop.f32.mrf.mxu0
    %v9196 = vadd.f32 %v9147, %v9195
    %9197 = vmatmul.bf16.gmra.mxu0 %v7358
    %v9198 = vpop.f32.mrf.mxu0
    %v9199 = vadd.f32 %v9150, %v9198
    %v9200 = vpop.f32.mrf.mxu0
    %v9201 = vadd.f32 %v9152, %v9200
    %9202 = vmatmul.bf16.gmra.mxu0 %v7367
    %v9203 = vpop.f32.mrf.mxu0
    %v9204 = vadd.f32 %v9155, %v9203
    %v9205 = vpop.f32.mrf.mxu0
    %v9206 = vadd.f32 %v9157, %v9205
    %9207 = vmatmul.bf16.gmra.mxu0 %v7376
    %v9208 = vpop.f32.mrf.mxu0
    %v9209 = vadd.f32 %v9160, %v9208
    %v9210 = vpop.f32.mrf.mxu0
    %v9211 = vadd.f32 %v9162, %v9210
    %9212 = vdwg.mxu0
    %v9213 = vmax.f32 %v7851, 0.0
    %v9214 = vmax.f32 %v8292, 0.0
    %v9215 = vmax.f32 %v8733, 0.0
    %v9216 = vmax.f32 %v9174, 0.0
    %v9217 = vmax.f32 %v7853, 0.0
    %v9218 = vmax.f32 %v8294, 0.0
    %v9219 = vmax.f32 %v8735, 0.0
    %v9220 = vmax.f32 %v9176, 0.0
    %v9221 = vmax.f32 %v7856, 0.0
    %v9222 = vmax.f32 %v8297, 0.0
    %v9223 = vmax.f32 %v8738, 0.0
    %v9224 = vmax.f32 %v9179, 0.0
    %v9225 = vmax.f32 %v7858, 0.0
    %v9226 = vmax.f32 %v8299, 0.0
    %v9227 = vmax.f32 %v8740, 0.0
    %v9228 = vmax.f32 %v9181, 0.0
    %v9229 = vmax.f32 %v7861, 0.0
    %v9230 = vmax.f32 %v8302, 0.0
    %v9231 = vmax.f32 %v8743, 0.0
    %v9232 = vmax.f32 %v9184, 0.0
    %v9233 = vmax.f32 %v7863, 0.0
    %v9234 = vmax.f32 %v8304, 0.0
    %v9235 = vmax.f32 %v8745, 0.0
    %v9236 = vmax.f32 %v9186, 0.0
    %v9237 = vmax.f32 %v7866, 0.0
    %v9238 = vmax.f32 %v8307, 0.0
    %v9239 = vmax.f32 %v8748, 0.0
    %v9240 = vmax.f32 %v9189, 0.0
    %v9241 = vmax.f32 %v7868, 0.0
    %v9242 = vmax.f32 %v8309, 0.0
    %v9243 = vmax.f32 %v8750, 0.0
    %v9244 = vmax.f32 %v9191, 0.0
    %v9245 = vmax.f32 %v7871, 0.0
    %v9246 = vmax.f32 %v8312, 0.0
    %v9247 = vmax.f32 %v8753, 0.0
    %v9248 = vmax.f32 %v9194, 0.0
    %v9249 = vmax.f32 %v7873, 0.0
    %v9250 = vmax.f32 %v8314, 0.0
    %v9251 = vmax.f32 %v8755, 0.0
    %v9252 = vmax.f32 %v9196, 0.0
    %v9253 = vmax.f32 %v7876, 0.0
    %v9254 = vmax.f32 %v8317, 0.0
    %v9255 = vmax.f32 %v8758, 0.0
    %v9256 = vmax.f32 %v9199, 0.0
    %v9257 = vmax.f32 %v7878, 0.0
    %v9258 = vmax.f32 %v8319, 0.0
    %v9259 = vmax.f32 %v8760, 0.0
    %v9260 = vmax.f32 %v9201, 0.0
    %v9261 = vmax.f32 %v7881, 0.0
    %v9262 = vmax.f32 %v8322, 0.0
    %v9263 = vmax.f32 %v8763, 0.0
    %v9264 = vmax.f32 %v9204, 0.0
    %v9265 = vmax.f32 %v7883, 0.0
    %v9266 = vmax.f32 %v8324, 0.0
    %v9267 = vmax.f32 %v8765, 0.0
    %v9268 = vmax.f32 %v9206, 0.0
    %v9269 = vmax.f32 %v7886, 0.0
    %v9270 = vmax.f32 %v8327, 0.0
    %v9271 = vmax.f32 %v8768, 0.0
    %v9272 = vmax.f32 %v9209, 0.0
    %v9273 = vmax.f32 %v7888, 0.0
    %v9274 = vmax.f32 %v8329, 0.0
    %v9275 = vmax.f32 %v8770, 0.0
    %v9276 = vmax.f32 %v9211, 0.0
    %9277 = vst [vmem:[%s5] sm:$0xff] %v9213
    %9278 = vst [vmem:[%s5 + $0x8] sm:$0xff] %v9214
    %9279 = vst [vmem:[%s5 + $0x10] sm:$0xff] %v9217
    %9280 = vst [vmem:[%s5 + $0x18] sm:$0xff] %v9218
    %9281 = vst [vmem:[%s5 + $0x20] sm:$0xff] %v9221
    %9282 = vst [vmem:[%s5 + $0x28] sm:$0xff] %v9222
    %9283 = vst [vmem:[%s5 + $0x30] sm:$0xff] %v9225
    %9284 = vst [vmem:[%s5 + $0x38] sm:$0xff] %v9226
    %9285 = vst [vmem:[%s5 + $0x40] sm:$0xff] %v9229
    %9286 = vst [vmem:[%s5 + $0x48] sm:$0xff] %v9230
    %9287 = vst [vmem:[%s5 + $0x50] sm:$0xff] %v9233
    %9288 = vst [vmem:[%s5 + $0x58] sm:$0xff] %v9234
    %9289 = vst [vmem:[%s5 + $0x60] sm:$0xff] %v9237
    %9290 = vst [vmem:[%s5 + $0x68] sm:$0xff] %v9238
    %9291 = vst [vmem:[%s5 + $0x70] sm:$0xff] %v9241
    %9292 = vst [vmem:[%s5 + $0x78] sm:$0xff] %v9242
    %9293 = vst [vmem:[%s5 + $0x80] sm:$0xff] %v9245
    %9294 = vst [vmem:[%s5 + $0x88] sm:$0xff] %v9246
    %9295 = vst [vmem:[%s5 + $0x90] sm:$0xff] %v9249
    %9296 = vst [vmem:[%s5 + $0x98] sm:$0xff] %v9250
    %9297 = vst [vmem:[%s5 + $0xa0] sm:$0xff] %v9253
    %9298 = vst [vmem:[%s5 + $0xa8] sm:$0xff] %v9254
    %9299 = vst [vmem:[%s5 + $0xb0] sm:$0xff] %v9257
    %9300 = vst [vmem:[%s5 + $0xb8] sm:$0xff] %v9258
    %9301 = vst [vmem:[%s5 + $0xc0] sm:$0xff] %v9261
    %9302 = vst [vmem:[%s5 + $0xc8] sm:$0xff] %v9262
    %9303 = vst [vmem:[%s5 + $0xd0] sm:$0xff] %v9265
    %9304 = vst [vmem:[%s5 + $0xd8] sm:$0xff] %v9266
    %9305 = vst [vmem:[%s5 + $0xe0] sm:$0xff] %v9269
    %9306 = vst [vmem:[%s5 + $0xe8] sm:$0xff] %v9270
    %9307 = vst [vmem:[%s5 + $0xf0] sm:$0xff] %v9273
    %9308 = vst [vmem:[%s5 + $0xf8] sm:$0xff] %v9274
    %s9309 = scalar_lea.vmem %s5, 256
    %9310 = vst [vmem:[%s9309] sm:$0xff] %v9215
    %9311 = vst [vmem:[%s9309 + $0x8] sm:$0xff] %v9216
    %9312 = vst [vmem:[%s9309 + $0x10] sm:$0xff] %v9219
    %9313 = vst [vmem:[%s9309 + $0x18] sm:$0xff] %v9220
    %9314 = vst [vmem:[%s9309 + $0x20] sm:$0xff] %v9223
    %9315 = vst [vmem:[%s9309 + $0x28] sm:$0xff] %v9224
    %9316 = vst [vmem:[%s9309 + $0x30] sm:$0xff] %v9227
    %9317 = vst [vmem:[%s9309 + $0x38] sm:$0xff] %v9228
    %9318 = vst [vmem:[%s9309 + $0x40] sm:$0xff] %v9231
    %9319 = vst [vmem:[%s9309 + $0x48] sm:$0xff] %v9232
    %9320 = vst [vmem:[%s9309 + $0x50] sm:$0xff] %v9235
    %9321 = vst [vmem:[%s9309 + $0x58] sm:$0xff] %v9236
    %9322 = vst [vmem:[%s9309 + $0x60] sm:$0xff] %v9239
    %9323 = vst [vmem:[%s9309 + $0x68] sm:$0xff] %v9240
    %9324 = vst [vmem:[%s9309 + $0x70] sm:$0xff] %v9243
    %9325 = vst [vmem:[%s9309 + $0x78] sm:$0xff] %v9244
    %9326 = vst [vmem:[%s9309 + $0x80] sm:$0xff] %v9247
    %9327 = vst [vmem:[%s9309 + $0x88] sm:$0xff] %v9248
    %9328 = vst [vmem:[%s9309 + $0x90] sm:$0xff] %v9251
    %9329 = vst [vmem:[%s9309 + $0x98] sm:$0xff] %v9252
    %9330 = vst [vmem:[%s9309 + $0xa0] sm:$0xff] %v9255
    %9331 = vst [vmem:[%s9309 + $0xa8] sm:$0xff] %v9256
    %9332 = vst [vmem:[%s9309 + $0xb0] sm:$0xff] %v9259
    %9333 = vst [vmem:[%s9309 + $0xb8] sm:$0xff] %v9260
    %9334 = vst [vmem:[%s9309 + $0xc0] sm:$0xff] %v9263
    %9335 = vst [vmem:[%s9309 + $0xc8] sm:$0xff] %v9264
    %9336 = vst [vmem:[%s9309 + $0xd0] sm:$0xff] %v9267
    %9337 = vst [vmem:[%s9309 + $0xd8] sm:$0xff] %v9268
    %9338 = vst [vmem:[%s9309 + $0xe0] sm:$0xff] %v9271
    %9339 = vst [vmem:[%s9309 + $0xe8] sm:$0xff] %v9272
    %9340 = vst [vmem:[%s9309 + $0xf0] sm:$0xff] %v9275
    %9341 = vst [vmem:[%s9309 + $0xf8] sm:$0xff] %v9276
    // Predicated region
    $region26: #{_lambda_.1} parent=1 // pred_check
      _
    $region27: #{_lambda_.1} parent=1 // pred_check_branch
      %9343 = sbr.rel (0) target = $region29
    $region28: #{_lambda_.1} parent=1 // pred_region
      _
    $region29: #{_lambda_.1} parent=1 // pred_fallthru
      _
    // Predicated region
    $region30: #{_lambda_.1} parent=1 // pred_check
      _
    $region31: #{_lambda_.1} parent=1 // pred_check_branch
      %9345 = sbr.rel (0) target = $region33
    $region32: #{_lambda_.1} parent=1 // pred_region
      _
    $region33: #{_lambda_.1} parent=1 // pred_fallthru
      _
    %9346 = vsyncpa [#allocation5], 1

</llo_original>
